<compile_context>
chip_gen: v7x
topology: tpu7x:2x2x1
jax: 0.10.0
libtpu: 0.0.40
codegen_flags: <defaults>
</compile_context>

<pallas_src>
import functools

import jax
import jax.numpy as jnp
from jax.experimental import pallas as pl
from jax.experimental.pallas import tpu as pltpu


# ---------------------------------------------------------------------------
# In-kernel helpers
# ---------------------------------------------------------------------------
def _mhsa_channel_first(x, wqkv, bqkv, mb_ref, wproj, bproj, num_heads):
    """Windowed multi-head self-attention on a channel-first [C, R] slab.

    The window structure is entirely encoded in `mb_ref` ([nH, R, R], f32):
    -1e30 where query/key columns fall in different windows, and the
    relative-position bias where they share a window.  This makes the softmax
    lane-dense (R-wide rows) and the per-window matmuls full [R, R] MXU work
    (the masked FLOPs are free at MXU tile granularity).

    x:           [C, R]  f32, channel-first (pixels on the lane axis)
    wqkv/bqkv:   [3C, C] / [3C, 1]   (q scale already folded in at init)
    mb_ref:      Ref[nH, R, R]       window mask + relative position bias
    wproj/bproj: [C, C] / [C, 1]
    returns:     [C, R]  f32
    """
    C, R = x.shape
    hd = C // num_heads

    qkv = jnp.dot(wqkv.astype(jnp.bfloat16), x.astype(jnp.bfloat16),
                  preferred_element_type=jnp.float32) + bqkv           # [3C, R]

    head_outs = []
    for h in range(num_heads):          # heads unroll; each head's work is a
        lo = h * hd                     # lane-dense [R, R] block
        q_h = qkv[lo:lo + hd, :].astype(jnp.bfloat16)                  # [hd, R]
        k_h = qkv[C + lo:C + lo + hd, :].astype(jnp.bfloat16)          # [hd, R]
        v_h = qkv[2 * C + lo:2 * C + lo + hd, :].astype(jnp.bfloat16)  # [hd, R]

        # s[n, m] = sum_d q_h[d, n] * k_h[d, m]   (q^T k, contract dim 0)
        s = jax.lax.dot_general(q_h, k_h, (((0,), (0,)), ((), ())),
                                preferred_element_type=jnp.float32)    # [R, R]
        s = s + mb_ref[h]               # window mask + relative position bias
        s = s - jnp.max(s, axis=-1, keepdims=True)
        p = jnp.exp(s)
        p = p * pl.reciprocal(jnp.sum(p, axis=-1, keepdims=True), approx=True)

        # o_h[d, n] = sum_m v_h[d, m] * p[n, m]   (v p^T, contract dim 1)
        o_h = jax.lax.dot_general(v_h, p.astype(jnp.bfloat16),
                                  (((1,), (1,)), ((), ())),
                                  preferred_element_type=jnp.float32)  # [hd, R]
        head_outs.append(o_h)

    o = jnp.concatenate(head_outs, axis=0).astype(jnp.bfloat16)        # [C, R]
    return jnp.dot(wproj.astype(jnp.bfloat16), o,
                   preferred_element_type=jnp.float32) + bproj         # [C, R]


def _fused_spectro_temporal_kernel(
        x_ref,
        t_wqkv_ref, t_bqkv_ref, t_mb_ref, t_wproj_ref, t_bproj_ref,
        f_wqkv_ref, f_bqkv_ref, f_mb_ref, f_wproj_ref, f_bproj_ref,
        w1f_ref, w1t_ref, b1_ref, w2_ref, b2_ref,
        o_ref, *, num_heads):
    """Time attention + freq attention + 1x1-conv combine + residual, fused.

    x_ref / o_ref: [1, C, R] blocks; R = Fp*Tp columns in (f, t) order.  The
    same slab feeds both attention branches (their different window structure
    lives entirely in the two mask+bias tensors) and is the residual.
    """
    x = x_ref[0]                                                       # [C, R]

    yt = _mhsa_channel_first(x, t_wqkv_ref[...], t_bqkv_ref[...], t_mb_ref,
                             t_wproj_ref[...], t_bproj_ref[...], num_heads)
    yf = _mhsa_channel_first(x, f_wqkv_ref[...], f_bqkv_ref[...], f_mb_ref,
                             f_wproj_ref[...], f_bproj_ref[...], num_heads)

    # combine = Conv2d(2C, C, 1) -> ReLU -> Conv2d(C, C, 1); the [2C] concat is
    # never materialized (w1 is split into its freq / time halves).
    h = (jnp.dot(w1f_ref[...].astype(jnp.bfloat16), yf.astype(jnp.bfloat16),
                 preferred_element_type=jnp.float32)
         + jnp.dot(w1t_ref[...].astype(jnp.bfloat16), yt.astype(jnp.bfloat16),
                   preferred_element_type=jnp.float32)
         + b1_ref[...])
    h = jnp.maximum(h, 0.0)
    y = jnp.dot(w2_ref[...].astype(jnp.bfloat16), h.astype(jnp.bfloat16),
                preferred_element_type=jnp.float32) + b2_ref[...]
    o_ref[0] = (y + x).astype(o_ref.dtype)                       # + residual


# ---------------------------------------------------------------------------
# Wrapper-side helpers
# ---------------------------------------------------------------------------
def _window_maskbias(bias, Fp, Tp, win, axis):
    """[nH, R, R] mask+bias for block-diagonal-over-windows attention.

    Columns are the pixels of one [Fp, Tp] batch slab in (f, t) order.  Entry
    [h, i, j] is bias[h, pos_i, pos_j] if columns i and j fall in the same 1-D
    window along `axis`, else -1e30.
    """
    R = Fp * Tp
    cols = jnp.arange(R, dtype=jnp.int32)
    f, t = cols // Tp, cols % Tp
    if axis == "time":                      # windows along t, at fixed f
        grp = f * (Tp // win) + t // win
        pos = t % win
    else:                                   # windows along f, at fixed t
        grp = t * (Fp // win) + f // win
        pos = f % win
    same = grp[:, None] == grp[None, :]
    bias_big = bias.astype(jnp.float32)[:, pos[:, None], pos[None, :]]
    return jnp.where(same[None, :, :], bias_big, jnp.float32(-1e30))


def spectro_temporal_attention(x, p, *, freq_window, time_window, num_heads):
    """x: [B, C, F, T] -> [B, C, F, T].  One fused pallas_call, grid over B."""
    B, C, F, T = x.shape
    if F < freq_window or T < time_window:
        # TODO(synk): reference falls back to un-windowed full-sequence
        # attention when L < window_size; not implemented (not hit here).
        raise NotImplementedError("L < window_size branch not implemented")

    Fp = F + (-F) % freq_window
    Tp = T + (-T) % time_window
    if (Fp, Tp) != (F, T):
        x_p = jnp.pad(x, ((0, 0), (0, 0), (0, Fp - F), (0, Tp - T)))
    else:
        x_p = x
    R = Fp * Tp
    # Channel-first per-batch pixel slab, columns in (f, t) order -- a pure
    # reshape (no HBM transpose); it is both branches' input AND the residual.
    x_slab = x_p.reshape(B, C, R)

    # TODO(synk): for large F*T the [R, R] block-diagonal score matrices should
    # be chunked/tiled; at these shapes (R = 256) one slab per batch is optimal.
    t_mb = _window_maskbias(p["time_attn"]["bias"], Fp, Tp, time_window, "time")
    f_mb = _window_maskbias(p["freq_attn"]["bias"], Fp, Tp, freq_window, "freq")

    def rep(shape):               # replicated (weight) input: full-array block
        zeros = (0,) * len(shape)
        return pl.BlockSpec(shape, lambda b, z=zeros: z)

    pt, pf = p["time_attn"], p["freq_attn"]
    kernel = functools.partial(_fused_spectro_temporal_kernel,
                               num_heads=num_heads)
    out = pl.pallas_call(
        kernel,
        out_shape=jax.ShapeDtypeStruct((B, C, R), x.dtype),
        grid=(B,),
        in_specs=[
            pl.BlockSpec((1, C, R), lambda b: (b, 0, 0)),          # x slab
            rep(pt["wqkv"].shape), rep(pt["bqkv"].shape), rep(t_mb.shape),
            rep(pt["wproj"].shape), rep(pt["bproj"].shape),
            rep(pf["wqkv"].shape), rep(pf["bqkv"].shape), rep(f_mb.shape),
            rep(pf["wproj"].shape), rep(pf["bproj"].shape),
            rep(p["w1f"].shape), rep(p["w1t"].shape), rep(p["b1"].shape),
            rep(p["w2"].shape), rep(p["b2"].shape),
        ],
        out_specs=pl.BlockSpec((1, C, R), lambda b: (b, 0, 0)),
        compiler_params=pltpu.CompilerParams(
            dimension_semantics=("parallel",),
            vmem_limit_bytes=32 * 1024 * 1024),
    )(x_slab,
      pt["wqkv"], pt["bqkv"], t_mb, pt["wproj"], pt["bproj"],
      pf["wqkv"], pf["bqkv"], f_mb, pf["wproj"], pf["bproj"],
      p["w1f"], p["w1t"], p["b1"], p["w2"], p["b2"])

    out = out.reshape(B, C, Fp, Tp)
    if (Fp, Tp) != (F, T):
        out = out[:, :, :F, :T]
    return out


# ---------------------------------------------------------------------------
# Parameter initialization (arrays only; structural config like window sizes
# stays static Python and is passed via functools.partial closures)
# ---------------------------------------------------------------------------
def init_windowed_attention_params(key, dim, num_heads, window_size):
    assert dim % num_heads == 0
    k1, k2, k3, k4 = jax.random.split(key, 4)
    head_dim = dim // num_heads
    scale = head_dim ** (-0.5)

    # nn.Linear weights are [out, in]; kept that way (channel-first math).
    wqkv = 0.05 * jax.random.normal(k1, (3 * dim, dim), jnp.float32)
    bqkv = 0.05 * jax.random.normal(k2, (3 * dim, 1), jnp.float32)
    # Fold the q scale into the Q rows once at init (numerically identical to
    # multiplying q by `scale` inside the kernel).
    wqkv = wqkv.at[:dim].multiply(scale)
    bqkv = bqkv.at[:dim].multiply(scale)
    wproj = 0.05 * jax.random.normal(k3, (dim, dim), jnp.float32)
    bproj = 0.05 * jax.random.normal(k4, (dim, 1), jnp.float32)

    # relative_position_bias_table is zero-initialized in the reference module.
    table = jnp.zeros(((2 * window_size - 1) ** 2, num_heads), jnp.float32)
    coords = jnp.stack(jnp.meshgrid(jnp.arange(window_size),
                                    jnp.arange(window_size), indexing="ij"))
    coords_flat = coords.reshape(2, -1)
    rel = coords_flat[:, :, None] - coords_flat[:, None, :]
    rel = jnp.transpose(rel, (1, 2, 0))
    rel = rel.at[:, :, 0].add(window_size - 1)
    rel = rel.at[:, :, 1].add(window_size - 1)
    rel = rel.at[:, :, 0].multiply(2 * window_size - 1)
    rel_index = rel.sum(-1)
    ws2 = window_size * window_size
    bias_full = table[rel_index.reshape(-1)].reshape(ws2, ws2, num_heads)
    bias_full = jnp.transpose(bias_full, (2, 0, 1))        # [nH, ws^2, ws^2]
    # TODO(synk): the reference adds a [nH, ws^2, ws^2] bias to [nH, N, N]
    # logits with N = ws (1-D windows), which would not broadcast in PyTorch;
    # we take the top-left NxN block (numerically identical: table is zero).
    bias = bias_full[:, :window_size, :window_size]
    return dict(wqkv=wqkv, bqkv=bqkv, bias=bias, wproj=wproj, bproj=bproj)


def init_spectro_temporal_params(key, channels, freq_window, time_window,
                                 num_heads):
    # NOTE: self.cross_attention is constructed in the reference __init__ but
    # never used in forward(); dropout layers are inference identities.
    kf, kt, k1, k2, k3, k4, k5 = jax.random.split(key, 7)
    return dict(
        freq_attn=init_windowed_attention_params(kf, channels, num_heads,
                                                 freq_window),
        time_attn=init_windowed_attention_params(kt, channels, num_heads,
                                                 time_window),
        # combine: Conv2d(2C, C, 1) -> ReLU -> Conv2d(C, C, 1), stored as
        # [out, in] matrices / [out, 1] biases, w1 split freq/time halves.
        w1f=0.05 * jax.random.normal(k1, (channels, channels), jnp.float32),
        w1t=0.05 * jax.random.normal(k2, (channels, channels), jnp.float32),
        b1=0.05 * jax.random.normal(k3, (channels, 1), jnp.float32),
        w2=0.05 * jax.random.normal(k4, (channels, channels), jnp.float32),
        b2=0.05 * jax.random.normal(k5, (channels, 1), jnp.float32),
    )


# ---------------------------------------------------------------------------
# Model forward
# ---------------------------------------------------------------------------
def attention_enhanced_sfvnn_forward(x, params, *, freq_window, time_window,
                                     num_heads):
    # use_spectrotemporal_attention=True:  x = self.input_attention(x)
    x = spectro_temporal_attention(x, params["input_attention"],
                                   freq_window=freq_window,
                                   time_window=time_window,
                                   num_heads=num_heads)
    # TODO(synk): VectorNeuronLayer, VectorFieldAttention,
    # AudioStructuralAnalyzer, AdaptiveStructuralAttention and
    # AudioDiscriminatorHead come from external files not provided; the
    # forward returns the attention-enhanced spectrogram.
    return x


# ---------------------------------------------------------------------------
# Pure-JAX reference (numerical cross-check only)
# ---------------------------------------------------------------------------
def _reference_windowed_attention(xw, prm, num_heads):
    NW, N, C = xw.shape
    hd = C // num_heads
    qkv = xw @ prm["wqkv"].T + prm["bqkv"][:, 0]                # [NW, N, 3C]
    qkv = qkv.reshape(NW, N, 3, num_heads, hd).transpose(2, 0, 3, 1, 4)
    q, k, v = qkv[0], qkv[1], qkv[2]                            # [NW, nH, N, hd]
    # q scale is already folded into wqkv/bqkv at init.
    attn = jnp.einsum('bhnd,bhmd->bhnm', q, k) + prm["bias"][None]
    attn = jax.nn.softmax(attn, axis=-1)
    out = jnp.einsum('bhnm,bhmd->bhnd', attn, v)
    out = out.transpose(0, 2, 1, 3).reshape(NW, N, C)
    return out @ prm["wproj"].T + prm["bproj"][:, 0]


def _reference_spectro_temporal(x, p, *, freq_window, time_window, num_heads):
    B, C, F, T = x.shape

    def apply_1d(x_bcl, prm, ws):
        Bc, Cc, L = x_bcl.shape
        pad = (-L) % ws
        if pad:
            x_bcl = jnp.pad(x_bcl, ((0, 0), (0, 0), (0, pad)))
        Lp = L + pad
        xw = (x_bcl.reshape(Bc, Cc, Lp // ws, ws)
              .transpose(0, 2, 3, 1).reshape(-1, ws, Cc))
        yw = _reference_windowed_attention(xw, prm, num_heads)
        y = (yw.reshape(Bc, Lp // ws, ws, Cc)
             .transpose(0, 3, 1, 2).reshape(Bc, Cc, Lp))
        return y[:, :, :L]

    x_freq = x.transpose(0, 3, 1, 2).reshape(B * T, C, F)
    xf = apply_1d(x_freq, p["freq_attn"], freq_window)
    xf = xf.reshape(B, T, C, F).transpose(0, 2, 3, 1)           # [B, C, F, T]

    x_time = x.transpose(0, 2, 1, 3).reshape(B * F, C, T)
    xt = apply_1d(x_time, p["time_attn"], time_window)
    xt = xt.reshape(B, F, C, T).transpose(0, 2, 1, 3)           # [B, C, F, T]

    h = (jnp.einsum('oc,bcft->boft', p["w1f"], xf)
         + jnp.einsum('oc,bcft->boft', p["w1t"], xt)
         + p["b1"].reshape(1, C, 1, 1))
    h = jnp.maximum(h, 0.0)
    y = jnp.einsum('oc,bcft->boft', p["w2"], h) + p["b2"].reshape(1, C, 1, 1)
    return y + x


# ---------------------------------------------------------------------------
# Main
# ---------------------------------------------------------------------------
if __name__ == "__main__":
    key = jax.random.PRNGKey(0)
    kx, kp = jax.random.split(key)

    # Small spectrogram: [B, C, F, T].  C must be divisible by num_heads=4.
    B, C, F, T = 2, 8, 16, 16
    FREQ_WINDOW, TIME_WINDOW, NUM_HEADS = 8, 16, 4

    x = jax.random.normal(kx, (B, C, F, T), jnp.float32)
    params = dict(input_attention=init_spectro_temporal_params(
        kp, C, FREQ_WINDOW, TIME_WINDOW, NUM_HEADS))

    fwd = jax.jit(functools.partial(attention_enhanced_sfvnn_forward,
                                    freq_window=FREQ_WINDOW,
                                    time_window=TIME_WINDOW,
                                    num_heads=NUM_HEADS))
    out = jax.block_until_ready(fwd(x, params))

    assert out.shape == (B, C, F, T), out.shape
    assert bool(jnp.all(jnp.isfinite(out)))

    # Numerical cross-check against a pure-JAX re-implementation.
    ref = _reference_spectro_temporal(x, params["input_attention"],
                                      freq_window=FREQ_WINDOW,
                                      time_window=TIME_WINDOW,
                                      num_heads=NUM_HEADS)
    max_err = float(jnp.max(jnp.abs(out - ref)))
    assert max_err < 2e-2, f"max abs error vs reference: {max_err}"

    print("KERNEL_OK")
</pallas_src>

<mosaic_0001>
module attributes {stable_mosaic.version = 11 : i64} {
  func.func @_fused_spectro_temporal_kernel(%arg0: i32, %arg1: memref<1x8x256xf32, #tpu.memory_space<vmem>>, %arg2: memref<24x8xf32, #tpu.memory_space<vmem>>, %arg3: memref<24x1xf32, #tpu.memory_space<vmem>>, %arg4: memref<4x256x256xf32, #tpu.memory_space<vmem>>, %arg5: memref<8x8xf32, #tpu.memory_space<vmem>>, %arg6: memref<8x1xf32, #tpu.memory_space<vmem>>, %arg7: memref<24x8xf32, #tpu.memory_space<vmem>>, %arg8: memref<24x1xf32, #tpu.memory_space<vmem>>, %arg9: memref<4x256x256xf32, #tpu.memory_space<vmem>>, %arg10: memref<8x8xf32, #tpu.memory_space<vmem>>, %arg11: memref<8x1xf32, #tpu.memory_space<vmem>>, %arg12: memref<8x8xf32, #tpu.memory_space<vmem>>, %arg13: memref<8x8xf32, #tpu.memory_space<vmem>>, %arg14: memref<8x1xf32, #tpu.memory_space<vmem>>, %arg15: memref<8x8xf32, #tpu.memory_space<vmem>>, %arg16: memref<8x1xf32, #tpu.memory_space<vmem>>, %arg17: memref<1x8x256xf32, #tpu.memory_space<vmem>>) attributes {dimension_semantics = [#tpu.dimension_semantics<parallel>], iteration_bounds = array<i64: 2>, scalar_prefetch = 0 : i64, scratch_operands = 0 : i64, tpu.core_type = #tpu.core_type<tc>, window_params = [{transform_indices = @transform_0, window_bounds = array<i64: 1, 8, 256>}, {pipeline_mode = #tpu.pipeline_mode<synchronous>, transform_indices = @transform_1, window_bounds = array<i64: 24, 8>}, {pipeline_mode = #tpu.pipeline_mode<synchronous>, transform_indices = @transform_2, window_bounds = array<i64: 24, 1>}, {pipeline_mode = #tpu.pipeline_mode<synchronous>, transform_indices = @transform_3, window_bounds = array<i64: 4, 256, 256>}, {pipeline_mode = #tpu.pipeline_mode<synchronous>, transform_indices = @transform_4, window_bounds = array<i64: 8, 8>}, {pipeline_mode = #tpu.pipeline_mode<synchronous>, transform_indices = @transform_5, window_bounds = array<i64: 8, 1>}, {pipeline_mode = #tpu.pipeline_mode<synchronous>, transform_indices = @transform_6, window_bounds = array<i64: 24, 8>}, {pipeline_mode = #tpu.pipeline_mode<synchronous>, transform_indices = @transform_7, window_bounds = array<i64: 24, 1>}, {pipeline_mode = #tpu.pipeline_mode<synchronous>, transform_indices = @transform_8, window_bounds = array<i64: 4, 256, 256>}, {pipeline_mode = #tpu.pipeline_mode<synchronous>, transform_indices = @transform_9, window_bounds = array<i64: 8, 8>}, {pipeline_mode = #tpu.pipeline_mode<synchronous>, transform_indices = @transform_10, window_bounds = array<i64: 8, 1>}, {pipeline_mode = #tpu.pipeline_mode<synchronous>, transform_indices = @transform_11, window_bounds = array<i64: 8, 8>}, {pipeline_mode = #tpu.pipeline_mode<synchronous>, transform_indices = @transform_12, window_bounds = array<i64: 8, 8>}, {pipeline_mode = #tpu.pipeline_mode<synchronous>, transform_indices = @transform_13, window_bounds = array<i64: 8, 1>}, {pipeline_mode = #tpu.pipeline_mode<synchronous>, transform_indices = @transform_14, window_bounds = array<i64: 8, 8>}, {pipeline_mode = #tpu.pipeline_mode<synchronous>, transform_indices = @transform_15, window_bounds = array<i64: 8, 1>}, {transform_indices = @transform_16, window_bounds = array<i64: 1, 8, 256>}]} {
    %c0 = arith.constant 0 : index
    %c0_0 = arith.constant 0 : index
    %c0_1 = arith.constant 0 : index
    %0 = vector.load %arg1[%c0, %c0_0, %c0_1] : memref<1x8x256xf32, #tpu.memory_space<vmem>>, vector<1x8x256xf32>
    %1 = vector.shape_cast %0 : vector<1x8x256xf32> to vector<8x256xf32>
    %c0_2 = arith.constant 0 : index
    %c0_3 = arith.constant 0 : index
    %2 = vector.load %arg2[%c0_2, %c0_3] : memref<24x8xf32, #tpu.memory_space<vmem>>, vector<24x8xf32>
    %c0_4 = arith.constant 0 : index
    %c0_5 = arith.constant 0 : index
    %3 = vector.load %arg3[%c0_4, %c0_5] : memref<24x1xf32, #tpu.memory_space<vmem>>, vector<24x1xf32>
    %c0_6 = arith.constant 0 : index
    %c0_7 = arith.constant 0 : index
    %4 = vector.load %arg5[%c0_6, %c0_7] : memref<8x8xf32, #tpu.memory_space<vmem>>, vector<8x8xf32>
    %c0_8 = arith.constant 0 : index
    %c0_9 = arith.constant 0 : index
    %5 = vector.load %arg6[%c0_8, %c0_9] : memref<8x1xf32, #tpu.memory_space<vmem>>, vector<8x1xf32>
    %6 = arith.truncf %2 : vector<24x8xf32> to vector<24x8xbf16>
    %7 = arith.truncf %1 : vector<8x256xf32> to vector<8x256xbf16>
    %cst = arith.constant dense<0.000000e+00> : vector<24x256xf32>
    %8 = tpu.matmul %6, %7, %cst {dimension_numbers = #tpu.dot_dimension_numbers<[1], [0], [0], [1], [0, 0, 1, 1], [], []>} : vector<24x8xbf16>, vector<8x256xbf16>, vector<24x256xf32> -> vector<24x256xf32>
    %9 = vector.broadcast %3 : vector<24x1xf32> to vector<24x256xf32>
    %10 = arith.addf %8, %9 : vector<24x256xf32>
    %11 = vector.extract_strided_slice %10 {offsets = [0, 0], sizes = [2, 256], strides = [1, 1]} : vector<24x256xf32> to vector<2x256xf32>
    %12 = arith.truncf %11 : vector<2x256xf32> to vector<2x256xbf16>
    %13 = vector.extract_strided_slice %10 {offsets = [8, 0], sizes = [2, 256], strides = [1, 1]} : vector<24x256xf32> to vector<2x256xf32>
    %14 = arith.truncf %13 : vector<2x256xf32> to vector<2x256xbf16>
    %15 = vector.extract_strided_slice %10 {offsets = [16, 0], sizes = [2, 256], strides = [1, 1]} : vector<24x256xf32> to vector<2x256xf32>
    %16 = arith.truncf %15 : vector<2x256xf32> to vector<2x256xbf16>
    %cst_10 = arith.constant dense<0.000000e+00> : vector<256x256xf32>
    %17 = tpu.matmul %12, %14, %cst_10 {dimension_numbers = #tpu.dot_dimension_numbers<[0], [0], [1], [1], [0, 1, 1, 1], [], []>} : vector<2x256xbf16>, vector<2x256xbf16>, vector<256x256xf32> -> vector<256x256xf32>
    %c0_11 = arith.constant 0 : index
    %c0_12 = arith.constant 0 : index
    %c0_13 = arith.constant 0 : index
    %18 = vector.load %arg4[%c0_11, %c0_12, %c0_13] : memref<4x256x256xf32, #tpu.memory_space<vmem>>, vector<1x256x256xf32>
    %19 = vector.shape_cast %18 : vector<1x256x256xf32> to vector<256x256xf32>
    %20 = arith.addf %17, %19 : vector<256x256xf32>
    %cst_14 = arith.constant dense<0xFF800000> : vector<256xf32>
    %21 = vector.multi_reduction <maximumf>, %20, %cst_14 [1] : vector<256x256xf32> to vector<256xf32>
    %22 = vector.shape_cast %21 : vector<256xf32> to vector<256x1xf32>
    %23 = vector.broadcast %22 : vector<256x1xf32> to vector<256x256xf32>
    %24 = arith.subf %20, %23 : vector<256x256xf32>
    %25 = math.exp %24 : vector<256x256xf32>
    %cst_15 = arith.constant dense<0.000000e+00> : vector<256xf32>
    %26 = vector.multi_reduction <add>, %25, %cst_15 [1] : vector<256x256xf32> to vector<256xf32>
    %27 = vector.shape_cast %26 : vector<256xf32> to vector<256x1xf32>
    %28 = tpu.reciprocal %27 {approx = true} : vector<256x1xf32> -> vector<256x1xf32>
    %29 = vector.broadcast %28 : vector<256x1xf32> to vector<256x256xf32>
    %30 = arith.mulf %25, %29 : vector<256x256xf32>
    %31 = arith.truncf %30 : vector<256x256xf32> to vector<256x256xbf16>
    %cst_16 = arith.constant dense<0.000000e+00> : vector<2x256xf32>
    %32 = tpu.matmul %16, %31, %cst_16 {dimension_numbers = #tpu.dot_dimension_numbers<[1], [1], [0], [0], [0, 0, 1, 0], [], []>} : vector<2x256xbf16>, vector<256x256xbf16>, vector<2x256xf32> -> vector<2x256xf32>
    %33 = vector.extract_strided_slice %10 {offsets = [2, 0], sizes = [2, 256], strides = [1, 1]} : vector<24x256xf32> to vector<2x256xf32>
    %34 = arith.truncf %33 : vector<2x256xf32> to vector<2x256xbf16>
    %35 = vector.extract_strided_slice %10 {offsets = [10, 0], sizes = [2, 256], strides = [1, 1]} : vector<24x256xf32> to vector<2x256xf32>
    %36 = arith.truncf %35 : vector<2x256xf32> to vector<2x256xbf16>
    %37 = vector.extract_strided_slice %10 {offsets = [18, 0], sizes = [2, 256], strides = [1, 1]} : vector<24x256xf32> to vector<2x256xf32>
    %38 = arith.truncf %37 : vector<2x256xf32> to vector<2x256xbf16>
    %cst_17 = arith.constant dense<0.000000e+00> : vector<256x256xf32>
    %39 = tpu.matmul %34, %36, %cst_17 {dimension_numbers = #tpu.dot_dimension_numbers<[0], [0], [1], [1], [0, 1, 1, 1], [], []>} : vector<2x256xbf16>, vector<2x256xbf16>, vector<256x256xf32> -> vector<256x256xf32>
    %c1 = arith.constant 1 : index
    %c0_18 = arith.constant 0 : index
    %c0_19 = arith.constant 0 : index
    %40 = vector.load %arg4[%c1, %c0_18, %c0_19] : memref<4x256x256xf32, #tpu.memory_space<vmem>>, vector<1x256x256xf32>
    %41 = vector.shape_cast %40 : vector<1x256x256xf32> to vector<256x256xf32>
    %42 = arith.addf %39, %41 : vector<256x256xf32>
    %cst_20 = arith.constant dense<0xFF800000> : vector<256xf32>
    %43 = vector.multi_reduction <maximumf>, %42, %cst_20 [1] : vector<256x256xf32> to vector<256xf32>
    %44 = vector.shape_cast %43 : vector<256xf32> to vector<256x1xf32>
    %45 = vector.broadcast %44 : vector<256x1xf32> to vector<256x256xf32>
    %46 = arith.subf %42, %45 : vector<256x256xf32>
    %47 = math.exp %46 : vector<256x256xf32>
    %cst_21 = arith.constant dense<0.000000e+00> : vector<256xf32>
    %48 = vector.multi_reduction <add>, %47, %cst_21 [1] : vector<256x256xf32> to vector<256xf32>
    %49 = vector.shape_cast %48 : vector<256xf32> to vector<256x1xf32>
    %50 = tpu.reciprocal %49 {approx = true} : vector<256x1xf32> -> vector<256x1xf32>
    %51 = vector.broadcast %50 : vector<256x1xf32> to vector<256x256xf32>
    %52 = arith.mulf %47, %51 : vector<256x256xf32>
    %53 = arith.truncf %52 : vector<256x256xf32> to vector<256x256xbf16>
    %cst_22 = arith.constant dense<0.000000e+00> : vector<2x256xf32>
    %54 = tpu.matmul %38, %53, %cst_22 {dimension_numbers = #tpu.dot_dimension_numbers<[1], [1], [0], [0], [0, 0, 1, 0], [], []>} : vector<2x256xbf16>, vector<256x256xbf16>, vector<2x256xf32> -> vector<2x256xf32>
    %55 = vector.extract_strided_slice %10 {offsets = [4, 0], sizes = [2, 256], strides = [1, 1]} : vector<24x256xf32> to vector<2x256xf32>
    %56 = arith.truncf %55 : vector<2x256xf32> to vector<2x256xbf16>
    %57 = vector.extract_strided_slice %10 {offsets = [12, 0], sizes = [2, 256], strides = [1, 1]} : vector<24x256xf32> to vector<2x256xf32>
    %58 = arith.truncf %57 : vector<2x256xf32> to vector<2x256xbf16>
    %59 = vector.extract_strided_slice %10 {offsets = [20, 0], sizes = [2, 256], strides = [1, 1]} : vector<24x256xf32> to vector<2x256xf32>
    %60 = arith.truncf %59 : vector<2x256xf32> to vector<2x256xbf16>
    %cst_23 = arith.constant dense<0.000000e+00> : vector<256x256xf32>
    %61 = tpu.matmul %56, %58, %cst_23 {dimension_numbers = #tpu.dot_dimension_numbers<[0], [0], [1], [1], [0, 1, 1, 1], [], []>} : vector<2x256xbf16>, vector<2x256xbf16>, vector<256x256xf32> -> vector<256x256xf32>
    %c2 = arith.constant 2 : index
    %c0_24 = arith.constant 0 : index
    %c0_25 = arith.constant 0 : index
    %62 = vector.load %arg4[%c2, %c0_24, %c0_25] : memref<4x256x256xf32, #tpu.memory_space<vmem>>, vector<1x256x256xf32>
    %63 = vector.shape_cast %62 : vector<1x256x256xf32> to vector<256x256xf32>
    %64 = arith.addf %61, %63 : vector<256x256xf32>
    %cst_26 = arith.constant dense<0xFF800000> : vector<256xf32>
    %65 = vector.multi_reduction <maximumf>, %64, %cst_26 [1] : vector<256x256xf32> to vector<256xf32>
    %66 = vector.shape_cast %65 : vector<256xf32> to vector<256x1xf32>
    %67 = vector.broadcast %66 : vector<256x1xf32> to vector<256x256xf32>
    %68 = arith.subf %64, %67 : vector<256x256xf32>
    %69 = math.exp %68 : vector<256x256xf32>
    %cst_27 = arith.constant dense<0.000000e+00> : vector<256xf32>
    %70 = vector.multi_reduction <add>, %69, %cst_27 [1] : vector<256x256xf32> to vector<256xf32>
    %71 = vector.shape_cast %70 : vector<256xf32> to vector<256x1xf32>
    %72 = tpu.reciprocal %71 {approx = true} : vector<256x1xf32> -> vector<256x1xf32>
    %73 = vector.broadcast %72 : vector<256x1xf32> to vector<256x256xf32>
    %74 = arith.mulf %69, %73 : vector<256x256xf32>
    %75 = arith.truncf %74 : vector<256x256xf32> to vector<256x256xbf16>
    %cst_28 = arith.constant dense<0.000000e+00> : vector<2x256xf32>
    %76 = tpu.matmul %60, %75, %cst_28 {dimension_numbers = #tpu.dot_dimension_numbers<[1], [1], [0], [0], [0, 0, 1, 0], [], []>} : vector<2x256xbf16>, vector<256x256xbf16>, vector<2x256xf32> -> vector<2x256xf32>
    %77 = vector.extract_strided_slice %10 {offsets = [6, 0], sizes = [2, 256], strides = [1, 1]} : vector<24x256xf32> to vector<2x256xf32>
    %78 = arith.truncf %77 : vector<2x256xf32> to vector<2x256xbf16>
    %79 = vector.extract_strided_slice %10 {offsets = [14, 0], sizes = [2, 256], strides = [1, 1]} : vector<24x256xf32> to vector<2x256xf32>
    %80 = arith.truncf %79 : vector<2x256xf32> to vector<2x256xbf16>
    %81 = vector.extract_strided_slice %10 {offsets = [22, 0], sizes = [2, 256], strides = [1, 1]} : vector<24x256xf32> to vector<2x256xf32>
    %82 = arith.truncf %81 : vector<2x256xf32> to vector<2x256xbf16>
    %cst_29 = arith.constant dense<0.000000e+00> : vector<256x256xf32>
    %83 = tpu.matmul %78, %80, %cst_29 {dimension_numbers = #tpu.dot_dimension_numbers<[0], [0], [1], [1], [0, 1, 1, 1], [], []>} : vector<2x256xbf16>, vector<2x256xbf16>, vector<256x256xf32> -> vector<256x256xf32>
    %c3 = arith.constant 3 : index
    %c0_30 = arith.constant 0 : index
    %c0_31 = arith.constant 0 : index
    %84 = vector.load %arg4[%c3, %c0_30, %c0_31] : memref<4x256x256xf32, #tpu.memory_space<vmem>>, vector<1x256x256xf32>
    %85 = vector.shape_cast %84 : vector<1x256x256xf32> to vector<256x256xf32>
    %86 = arith.addf %83, %85 : vector<256x256xf32>
    %cst_32 = arith.constant dense<0xFF800000> : vector<256xf32>
    %87 = vector.multi_reduction <maximumf>, %86, %cst_32 [1] : vector<256x256xf32> to vector<256xf32>
    %88 = vector.shape_cast %87 : vector<256xf32> to vector<256x1xf32>
    %89 = vector.broadcast %88 : vector<256x1xf32> to vector<256x256xf32>
    %90 = arith.subf %86, %89 : vector<256x256xf32>
    %91 = math.exp %90 : vector<256x256xf32>
    %cst_33 = arith.constant dense<0.000000e+00> : vector<256xf32>
    %92 = vector.multi_reduction <add>, %91, %cst_33 [1] : vector<256x256xf32> to vector<256xf32>
    %93 = vector.shape_cast %92 : vector<256xf32> to vector<256x1xf32>
    %94 = tpu.reciprocal %93 {approx = true} : vector<256x1xf32> -> vector<256x1xf32>
    %95 = vector.broadcast %94 : vector<256x1xf32> to vector<256x256xf32>
    %96 = arith.mulf %91, %95 : vector<256x256xf32>
    %97 = arith.truncf %96 : vector<256x256xf32> to vector<256x256xbf16>
    %cst_34 = arith.constant dense<0.000000e+00> : vector<2x256xf32>
    %98 = tpu.matmul %82, %97, %cst_34 {dimension_numbers = #tpu.dot_dimension_numbers<[1], [1], [0], [0], [0, 0, 1, 0], [], []>} : vector<2x256xbf16>, vector<256x256xbf16>, vector<2x256xf32> -> vector<2x256xf32>
    %99 = tpu.concatenate %32, %54, %76, %98 in 0 : vector<2x256xf32>, vector<2x256xf32>, vector<2x256xf32>, vector<2x256xf32> -> vector<8x256xf32>
    %100 = arith.truncf %99 : vector<8x256xf32> to vector<8x256xbf16>
    %101 = arith.truncf %4 : vector<8x8xf32> to vector<8x8xbf16>
    %cst_35 = arith.constant dense<0.000000e+00> : vector<8x256xf32>
    %102 = tpu.matmul %101, %100, %cst_35 {dimension_numbers = #tpu.dot_dimension_numbers<[1], [0], [0], [1], [0, 0, 1, 1], [], []>} : vector<8x8xbf16>, vector<8x256xbf16>, vector<8x256xf32> -> vector<8x256xf32>
    %103 = vector.broadcast %5 : vector<8x1xf32> to vector<8x256xf32>
    %104 = arith.addf %102, %103 : vector<8x256xf32>
    %c0_36 = arith.constant 0 : index
    %c0_37 = arith.constant 0 : index
    %105 = vector.load %arg7[%c0_36, %c0_37] : memref<24x8xf32, #tpu.memory_space<vmem>>, vector<24x8xf32>
    %c0_38 = arith.constant 0 : index
    %c0_39 = arith.constant 0 : index
    %106 = vector.load %arg8[%c0_38, %c0_39] : memref<24x1xf32, #tpu.memory_space<vmem>>, vector<24x1xf32>
    %c0_40 = arith.constant 0 : index
    %c0_41 = arith.constant 0 : index
    %107 = vector.load %arg10[%c0_40, %c0_41] : memref<8x8xf32, #tpu.memory_space<vmem>>, vector<8x8xf32>
    %c0_42 = arith.constant 0 : index
    %c0_43 = arith.constant 0 : index
    %108 = vector.load %arg11[%c0_42, %c0_43] : memref<8x1xf32, #tpu.memory_space<vmem>>, vector<8x1xf32>
    %109 = arith.truncf %105 : vector<24x8xf32> to vector<24x8xbf16>
    %110 = arith.truncf %1 : vector<8x256xf32> to vector<8x256xbf16>
    %cst_44 = arith.constant dense<0.000000e+00> : vector<24x256xf32>
    %111 = tpu.matmul %109, %110, %cst_44 {dimension_numbers = #tpu.dot_dimension_numbers<[1], [0], [0], [1], [0, 0, 1, 1], [], []>} : vector<24x8xbf16>, vector<8x256xbf16>, vector<24x256xf32> -> vector<24x256xf32>
    %112 = vector.broadcast %106 : vector<24x1xf32> to vector<24x256xf32>
    %113 = arith.addf %111, %112 : vector<24x256xf32>
    %114 = vector.extract_strided_slice %113 {offsets = [0, 0], sizes = [2, 256], strides = [1, 1]} : vector<24x256xf32> to vector<2x256xf32>
    %115 = arith.truncf %114 : vector<2x256xf32> to vector<2x256xbf16>
    %116 = vector.extract_strided_slice %113 {offsets = [8, 0], sizes = [2, 256], strides = [1, 1]} : vector<24x256xf32> to vector<2x256xf32>
    %117 = arith.truncf %116 : vector<2x256xf32> to vector<2x256xbf16>
    %118 = vector.extract_strided_slice %113 {offsets = [16, 0], sizes = [2, 256], strides = [1, 1]} : vector<24x256xf32> to vector<2x256xf32>
    %119 = arith.truncf %118 : vector<2x256xf32> to vector<2x256xbf16>
    %cst_45 = arith.constant dense<0.000000e+00> : vector<256x256xf32>
    %120 = tpu.matmul %115, %117, %cst_45 {dimension_numbers = #tpu.dot_dimension_numbers<[0], [0], [1], [1], [0, 1, 1, 1], [], []>} : vector<2x256xbf16>, vector<2x256xbf16>, vector<256x256xf32> -> vector<256x256xf32>
    %c0_46 = arith.constant 0 : index
    %c0_47 = arith.constant 0 : index
    %c0_48 = arith.constant 0 : index
    %121 = vector.load %arg9[%c0_46, %c0_47, %c0_48] : memref<4x256x256xf32, #tpu.memory_space<vmem>>, vector<1x256x256xf32>
    %122 = vector.shape_cast %121 : vector<1x256x256xf32> to vector<256x256xf32>
    %123 = arith.addf %120, %122 : vector<256x256xf32>
    %cst_49 = arith.constant dense<0xFF800000> : vector<256xf32>
    %124 = vector.multi_reduction <maximumf>, %123, %cst_49 [1] : vector<256x256xf32> to vector<256xf32>
    %125 = vector.shape_cast %124 : vector<256xf32> to vector<256x1xf32>
    %126 = vector.broadcast %125 : vector<256x1xf32> to vector<256x256xf32>
    %127 = arith.subf %123, %126 : vector<256x256xf32>
    %128 = math.exp %127 : vector<256x256xf32>
    %cst_50 = arith.constant dense<0.000000e+00> : vector<256xf32>
    %129 = vector.multi_reduction <add>, %128, %cst_50 [1] : vector<256x256xf32> to vector<256xf32>
    %130 = vector.shape_cast %129 : vector<256xf32> to vector<256x1xf32>
    %131 = tpu.reciprocal %130 {approx = true} : vector<256x1xf32> -> vector<256x1xf32>
    %132 = vector.broadcast %131 : vector<256x1xf32> to vector<256x256xf32>
    %133 = arith.mulf %128, %132 : vector<256x256xf32>
    %134 = arith.truncf %133 : vector<256x256xf32> to vector<256x256xbf16>
    %cst_51 = arith.constant dense<0.000000e+00> : vector<2x256xf32>
    %135 = tpu.matmul %119, %134, %cst_51 {dimension_numbers = #tpu.dot_dimension_numbers<[1], [1], [0], [0], [0, 0, 1, 0], [], []>} : vector<2x256xbf16>, vector<256x256xbf16>, vector<2x256xf32> -> vector<2x256xf32>
    %136 = vector.extract_strided_slice %113 {offsets = [2, 0], sizes = [2, 256], strides = [1, 1]} : vector<24x256xf32> to vector<2x256xf32>
    %137 = arith.truncf %136 : vector<2x256xf32> to vector<2x256xbf16>
    %138 = vector.extract_strided_slice %113 {offsets = [10, 0], sizes = [2, 256], strides = [1, 1]} : vector<24x256xf32> to vector<2x256xf32>
    %139 = arith.truncf %138 : vector<2x256xf32> to vector<2x256xbf16>
    %140 = vector.extract_strided_slice %113 {offsets = [18, 0], sizes = [2, 256], strides = [1, 1]} : vector<24x256xf32> to vector<2x256xf32>
    %141 = arith.truncf %140 : vector<2x256xf32> to vector<2x256xbf16>
    %cst_52 = arith.constant dense<0.000000e+00> : vector<256x256xf32>
    %142 = tpu.matmul %137, %139, %cst_52 {dimension_numbers = #tpu.dot_dimension_numbers<[0], [0], [1], [1], [0, 1, 1, 1], [], []>} : vector<2x256xbf16>, vector<2x256xbf16>, vector<256x256xf32> -> vector<256x256xf32>
    %c1_53 = arith.constant 1 : index
    %c0_54 = arith.constant 0 : index
    %c0_55 = arith.constant 0 : index
    %143 = vector.load %arg9[%c1_53, %c0_54, %c0_55] : memref<4x256x256xf32, #tpu.memory_space<vmem>>, vector<1x256x256xf32>
    %144 = vector.shape_cast %143 : vector<1x256x256xf32> to vector<256x256xf32>
    %145 = arith.addf %142, %144 : vector<256x256xf32>
    %cst_56 = arith.constant dense<0xFF800000> : vector<256xf32>
    %146 = vector.multi_reduction <maximumf>, %145, %cst_56 [1] : vector<256x256xf32> to vector<256xf32>
    %147 = vector.shape_cast %146 : vector<256xf32> to vector<256x1xf32>
    %148 = vector.broadcast %147 : vector<256x1xf32> to vector<256x256xf32>
    %149 = arith.subf %145, %148 : vector<256x256xf32>
    %150 = math.exp %149 : vector<256x256xf32>
    %cst_57 = arith.constant dense<0.000000e+00> : vector<256xf32>
    %151 = vector.multi_reduction <add>, %150, %cst_57 [1] : vector<256x256xf32> to vector<256xf32>
    %152 = vector.shape_cast %151 : vector<256xf32> to vector<256x1xf32>
    %153 = tpu.reciprocal %152 {approx = true} : vector<256x1xf32> -> vector<256x1xf32>
    %154 = vector.broadcast %153 : vector<256x1xf32> to vector<256x256xf32>
    %155 = arith.mulf %150, %154 : vector<256x256xf32>
    %156 = arith.truncf %155 : vector<256x256xf32> to vector<256x256xbf16>
    %cst_58 = arith.constant dense<0.000000e+00> : vector<2x256xf32>
    %157 = tpu.matmul %141, %156, %cst_58 {dimension_numbers = #tpu.dot_dimension_numbers<[1], [1], [0], [0], [0, 0, 1, 0], [], []>} : vector<2x256xbf16>, vector<256x256xbf16>, vector<2x256xf32> -> vector<2x256xf32>
    %158 = vector.extract_strided_slice %113 {offsets = [4, 0], sizes = [2, 256], strides = [1, 1]} : vector<24x256xf32> to vector<2x256xf32>
    %159 = arith.truncf %158 : vector<2x256xf32> to vector<2x256xbf16>
    %160 = vector.extract_strided_slice %113 {offsets = [12, 0], sizes = [2, 256], strides = [1, 1]} : vector<24x256xf32> to vector<2x256xf32>
    %161 = arith.truncf %160 : vector<2x256xf32> to vector<2x256xbf16>
    %162 = vector.extract_strided_slice %113 {offsets = [20, 0], sizes = [2, 256], strides = [1, 1]} : vector<24x256xf32> to vector<2x256xf32>
    %163 = arith.truncf %162 : vector<2x256xf32> to vector<2x256xbf16>
    %cst_59 = arith.constant dense<0.000000e+00> : vector<256x256xf32>
    %164 = tpu.matmul %159, %161, %cst_59 {dimension_numbers = #tpu.dot_dimension_numbers<[0], [0], [1], [1], [0, 1, 1, 1], [], []>} : vector<2x256xbf16>, vector<2x256xbf16>, vector<256x256xf32> -> vector<256x256xf32>
    %c2_60 = arith.constant 2 : index
    %c0_61 = arith.constant 0 : index
    %c0_62 = arith.constant 0 : index
    %165 = vector.load %arg9[%c2_60, %c0_61, %c0_62] : memref<4x256x256xf32, #tpu.memory_space<vmem>>, vector<1x256x256xf32>
    %166 = vector.shape_cast %165 : vector<1x256x256xf32> to vector<256x256xf32>
    %167 = arith.addf %164, %166 : vector<256x256xf32>
    %cst_63 = arith.constant dense<0xFF800000> : vector<256xf32>
    %168 = vector.multi_reduction <maximumf>, %167, %cst_63 [1] : vector<256x256xf32> to vector<256xf32>
    %169 = vector.shape_cast %168 : vector<256xf32> to vector<256x1xf32>
    %170 = vector.broadcast %169 : vector<256x1xf32> to vector<256x256xf32>
    %171 = arith.subf %167, %170 : vector<256x256xf32>
    %172 = math.exp %171 : vector<256x256xf32>
    %cst_64 = arith.constant dense<0.000000e+00> : vector<256xf32>
    %173 = vector.multi_reduction <add>, %172, %cst_64 [1] : vector<256x256xf32> to vector<256xf32>
    %174 = vector.shape_cast %173 : vector<256xf32> to vector<256x1xf32>
    %175 = tpu.reciprocal %174 {approx = true} : vector<256x1xf32> -> vector<256x1xf32>
    %176 = vector.broadcast %175 : vector<256x1xf32> to vector<256x256xf32>
    %177 = arith.mulf %172, %176 : vector<256x256xf32>
    %178 = arith.truncf %177 : vector<256x256xf32> to vector<256x256xbf16>
    %cst_65 = arith.constant dense<0.000000e+00> : vector<2x256xf32>
    %179 = tpu.matmul %163, %178, %cst_65 {dimension_numbers = #tpu.dot_dimension_numbers<[1], [1], [0], [0], [0, 0, 1, 0], [], []>} : vector<2x256xbf16>, vector<256x256xbf16>, vector<2x256xf32> -> vector<2x256xf32>
    %180 = vector.extract_strided_slice %113 {offsets = [6, 0], sizes = [2, 256], strides = [1, 1]} : vector<24x256xf32> to vector<2x256xf32>
    %181 = arith.truncf %180 : vector<2x256xf32> to vector<2x256xbf16>
    %182 = vector.extract_strided_slice %113 {offsets = [14, 0], sizes = [2, 256], strides = [1, 1]} : vector<24x256xf32> to vector<2x256xf32>
    %183 = arith.truncf %182 : vector<2x256xf32> to vector<2x256xbf16>
    %184 = vector.extract_strided_slice %113 {offsets = [22, 0], sizes = [2, 256], strides = [1, 1]} : vector<24x256xf32> to vector<2x256xf32>
    %185 = arith.truncf %184 : vector<2x256xf32> to vector<2x256xbf16>
    %cst_66 = arith.constant dense<0.000000e+00> : vector<256x256xf32>
    %186 = tpu.matmul %181, %183, %cst_66 {dimension_numbers = #tpu.dot_dimension_numbers<[0], [0], [1], [1], [0, 1, 1, 1], [], []>} : vector<2x256xbf16>, vector<2x256xbf16>, vector<256x256xf32> -> vector<256x256xf32>
    %c3_67 = arith.constant 3 : index
    %c0_68 = arith.constant 0 : index
    %c0_69 = arith.constant 0 : index
    %187 = vector.load %arg9[%c3_67, %c0_68, %c0_69] : memref<4x256x256xf32, #tpu.memory_space<vmem>>, vector<1x256x256xf32>
    %188 = vector.shape_cast %187 : vector<1x256x256xf32> to vector<256x256xf32>
    %189 = arith.addf %186, %188 : vector<256x256xf32>
    %cst_70 = arith.constant dense<0xFF800000> : vector<256xf32>
    %190 = vector.multi_reduction <maximumf>, %189, %cst_70 [1] : vector<256x256xf32> to vector<256xf32>
    %191 = vector.shape_cast %190 : vector<256xf32> to vector<256x1xf32>
    %192 = vector.broadcast %191 : vector<256x1xf32> to vector<256x256xf32>
    %193 = arith.subf %189, %192 : vector<256x256xf32>
    %194 = math.exp %193 : vector<256x256xf32>
    %cst_71 = arith.constant dense<0.000000e+00> : vector<256xf32>
    %195 = vector.multi_reduction <add>, %194, %cst_71 [1] : vector<256x256xf32> to vector<256xf32>
    %196 = vector.shape_cast %195 : vector<256xf32> to vector<256x1xf32>
    %197 = tpu.reciprocal %196 {approx = true} : vector<256x1xf32> -> vector<256x1xf32>
    %198 = vector.broadcast %197 : vector<256x1xf32> to vector<256x256xf32>
    %199 = arith.mulf %194, %198 : vector<256x256xf32>
    %200 = arith.truncf %199 : vector<256x256xf32> to vector<256x256xbf16>
    %cst_72 = arith.constant dense<0.000000e+00> : vector<2x256xf32>
    %201 = tpu.matmul %185, %200, %cst_72 {dimension_numbers = #tpu.dot_dimension_numbers<[1], [1], [0], [0], [0, 0, 1, 0], [], []>} : vector<2x256xbf16>, vector<256x256xbf16>, vector<2x256xf32> -> vector<2x256xf32>
    %202 = tpu.concatenate %135, %157, %179, %201 in 0 : vector<2x256xf32>, vector<2x256xf32>, vector<2x256xf32>, vector<2x256xf32> -> vector<8x256xf32>
    %203 = arith.truncf %202 : vector<8x256xf32> to vector<8x256xbf16>
    %204 = arith.truncf %107 : vector<8x8xf32> to vector<8x8xbf16>
    %cst_73 = arith.constant dense<0.000000e+00> : vector<8x256xf32>
    %205 = tpu.matmul %204, %203, %cst_73 {dimension_numbers = #tpu.dot_dimension_numbers<[1], [0], [0], [1], [0, 0, 1, 1], [], []>} : vector<8x8xbf16>, vector<8x256xbf16>, vector<8x256xf32> -> vector<8x256xf32>
    %206 = vector.broadcast %108 : vector<8x1xf32> to vector<8x256xf32>
    %207 = arith.addf %205, %206 : vector<8x256xf32>
    %c0_74 = arith.constant 0 : index
    %c0_75 = arith.constant 0 : index
    %208 = vector.load %arg12[%c0_74, %c0_75] : memref<8x8xf32, #tpu.memory_space<vmem>>, vector<8x8xf32>
    %209 = arith.truncf %208 : vector<8x8xf32> to vector<8x8xbf16>
    %210 = arith.truncf %207 : vector<8x256xf32> to vector<8x256xbf16>
    %cst_76 = arith.constant dense<0.000000e+00> : vector<8x256xf32>
    %211 = tpu.matmul %209, %210, %cst_76 {dimension_numbers = #tpu.dot_dimension_numbers<[1], [0], [0], [1], [0, 0, 1, 1], [], []>} : vector<8x8xbf16>, vector<8x256xbf16>, vector<8x256xf32> -> vector<8x256xf32>
    %c0_77 = arith.constant 0 : index
    %c0_78 = arith.constant 0 : index
    %212 = vector.load %arg13[%c0_77, %c0_78] : memref<8x8xf32, #tpu.memory_space<vmem>>, vector<8x8xf32>
    %213 = arith.truncf %212 : vector<8x8xf32> to vector<8x8xbf16>
    %214 = arith.truncf %104 : vector<8x256xf32> to vector<8x256xbf16>
    %cst_79 = arith.constant dense<0.000000e+00> : vector<8x256xf32>
    %215 = tpu.matmul %213, %214, %cst_79 {dimension_numbers = #tpu.dot_dimension_numbers<[1], [0], [0], [1], [0, 0, 1, 1], [], []>} : vector<8x8xbf16>, vector<8x256xbf16>, vector<8x256xf32> -> vector<8x256xf32>
    %216 = arith.addf %211, %215 : vector<8x256xf32>
    %c0_80 = arith.constant 0 : index
    %c0_81 = arith.constant 0 : index
    %217 = vector.load %arg14[%c0_80, %c0_81] : memref<8x1xf32, #tpu.memory_space<vmem>>, vector<8x1xf32>
    %218 = vector.broadcast %217 : vector<8x1xf32> to vector<8x256xf32>
    %219 = arith.addf %216, %218 : vector<8x256xf32>
    %cst_82 = arith.constant 0.000000e+00 : f32
    %220 = vector.broadcast %cst_82 : f32 to vector<8x256xf32>
    %221 = arith.maximumf %219, %220 : vector<8x256xf32>
    %c0_83 = arith.constant 0 : index
    %c0_84 = arith.constant 0 : index
    %222 = vector.load %arg15[%c0_83, %c0_84] : memref<8x8xf32, #tpu.memory_space<vmem>>, vector<8x8xf32>
    %223 = arith.truncf %222 : vector<8x8xf32> to vector<8x8xbf16>
    %224 = arith.truncf %221 : vector<8x256xf32> to vector<8x256xbf16>
    %cst_85 = arith.constant dense<0.000000e+00> : vector<8x256xf32>
    %225 = tpu.matmul %223, %224, %cst_85 {dimension_numbers = #tpu.dot_dimension_numbers<[1], [0], [0], [1], [0, 0, 1, 1], [], []>} : vector<8x8xbf16>, vector<8x256xbf16>, vector<8x256xf32> -> vector<8x256xf32>
    %c0_86 = arith.constant 0 : index
    %c0_87 = arith.constant 0 : index
    %226 = vector.load %arg16[%c0_86, %c0_87] : memref<8x1xf32, #tpu.memory_space<vmem>>, vector<8x1xf32>
    %227 = vector.broadcast %226 : vector<8x1xf32> to vector<8x256xf32>
    %228 = arith.addf %225, %227 : vector<8x256xf32>
    %229 = arith.addf %228, %1 : vector<8x256xf32>
    %c0_88 = arith.constant 0 : index
    %c0_89 = arith.constant 0 : index
    %c0_90 = arith.constant 0 : index
    %230 = vector.load %arg17[%c0_88, %c0_89, %c0_90] : memref<1x8x256xf32, #tpu.memory_space<vmem>>, vector<1x8x256xf32>
    %231 = vector.shape_cast %230 : vector<1x8x256xf32> to vector<8x256xf32>
    %232 = vector.shape_cast %229 : vector<8x256xf32> to vector<1x8x256xf32>
    tpu.vector_store %arg17[%c0_88, %c0_89, %c0_90], %232 {strides = array<i32>} : memref<1x8x256xf32, #tpu.memory_space<vmem>>, vector<1x8x256xf32>,
    return
  }
  func.func @transform_0(%arg0: i32) -> (i32, i32, i32) {
    %c0_i32 = arith.constant 0 : i32
    %c0_i32_0 = arith.constant 0 : i32
    %c0_i32_1 = arith.constant 0 : i32
    return %arg0, %c0_i32, %c0_i32_0 : i32, i32, i32
  }
  func.func @transform_1(%arg0: i32) -> (i32, i32) {
    %c0_i32 = arith.constant 0 : i32
    %c0_i32_0 = arith.constant 0 : i32
    %c0_i32_1 = arith.constant 0 : i32
    return %c0_i32, %c0_i32_0 : i32, i32
  }
  func.func @transform_2(%arg0: i32) -> (i32, i32) {
    %c0_i32 = arith.constant 0 : i32
    %c0_i32_0 = arith.constant 0 : i32
    %c0_i32_1 = arith.constant 0 : i32
    return %c0_i32, %c0_i32_0 : i32, i32
  }
  func.func @transform_3(%arg0: i32) -> (i32, i32, i32) {
    %c0_i32 = arith.constant 0 : i32
    %c0_i32_0 = arith.constant 0 : i32
    %c0_i32_1 = arith.constant 0 : i32
    %c0_i32_2 = arith.constant 0 : i32
    return %c0_i32, %c0_i32_0, %c0_i32_1 : i32, i32, i32
  }
  func.func @transform_4(%arg0: i32) -> (i32, i32) {
    %c0_i32 = arith.constant 0 : i32
    %c0_i32_0 = arith.constant 0 : i32
    %c0_i32_1 = arith.constant 0 : i32
    return %c0_i32, %c0_i32_0 : i32, i32
  }
  func.func @transform_5(%arg0: i32) -> (i32, i32) {
    %c0_i32 = arith.constant 0 : i32
    %c0_i32_0 = arith.constant 0 : i32
    %c0_i32_1 = arith.constant 0 : i32
    return %c0_i32, %c0_i32_0 : i32, i32
  }
  func.func @transform_6(%arg0: i32) -> (i32, i32) {
    %c0_i32 = arith.constant 0 : i32
    %c0_i32_0 = arith.constant 0 : i32
    %c0_i32_1 = arith.constant 0 : i32
    return %c0_i32, %c0_i32_0 : i32, i32
  }
  func.func @transform_7(%arg0: i32) -> (i32, i32) {
    %c0_i32 = arith.constant 0 : i32
    %c0_i32_0 = arith.constant 0 : i32
    %c0_i32_1 = arith.constant 0 : i32
    return %c0_i32, %c0_i32_0 : i32, i32
  }
  func.func @transform_8(%arg0: i32) -> (i32, i32, i32) {
    %c0_i32 = arith.constant 0 : i32
    %c0_i32_0 = arith.constant 0 : i32
    %c0_i32_1 = arith.constant 0 : i32
    %c0_i32_2 = arith.constant 0 : i32
    return %c0_i32, %c0_i32_0, %c0_i32_1 : i32, i32, i32
  }
  func.func @transform_9(%arg0: i32) -> (i32, i32) {
    %c0_i32 = arith.constant 0 : i32
    %c0_i32_0 = arith.constant 0 : i32
    %c0_i32_1 = arith.constant 0 : i32
    return %c0_i32, %c0_i32_0 : i32, i32
  }
  func.func @transform_10(%arg0: i32) -> (i32, i32) {
    %c0_i32 = arith.constant 0 : i32
    %c0_i32_0 = arith.constant 0 : i32
    %c0_i32_1 = arith.constant 0 : i32
    return %c0_i32, %c0_i32_0 : i32, i32
  }
  func.func @transform_11(%arg0: i32) -> (i32, i32) {
    %c0_i32 = arith.constant 0 : i32
    %c0_i32_0 = arith.constant 0 : i32
    %c0_i32_1 = arith.constant 0 : i32
    return %c0_i32, %c0_i32_0 : i32, i32
  }
  func.func @transform_12(%arg0: i32) -> (i32, i32) {
    %c0_i32 = arith.constant 0 : i32
    %c0_i32_0 = arith.constant 0 : i32
    %c0_i32_1 = arith.constant 0 : i32
    return %c0_i32, %c0_i32_0 : i32, i32
  }
  func.func @transform_13(%arg0: i32) -> (i32, i32) {
    %c0_i32 = arith.constant 0 : i32
    %c0_i32_0 = arith.constant 0 : i32
    %c0_i32_1 = arith.constant 0 : i32
    return %c0_i32, %c0_i32_0 : i32, i32
  }
  func.func @transform_14(%arg0: i32) -> (i32, i32) {
    %c0_i32 = arith.constant 0 : i32
    %c0_i32_0 = arith.constant 0 : i32
    %c0_i32_1 = arith.constant 0 : i32
    return %c0_i32, %c0_i32_0 : i32, i32
  }
  func.func @transform_15(%arg0: i32) -> (i32, i32) {
    %c0_i32 = arith.constant 0 : i32
    %c0_i32_0 = arith.constant 0 : i32
    %c0_i32_1 = arith.constant 0 : i32
    return %c0_i32, %c0_i32_0 : i32, i32
  }
  func.func @transform_16(%arg0: i32) -> (i32, i32, i32) {
    %c0_i32 = arith.constant 0 : i32
    %c0_i32_0 = arith.constant 0 : i32
    %c0_i32_1 = arith.constant 0 : i32
    return %arg0, %c0_i32, %c0_i32_0 : i32, i32, i32
  }
}

</mosaic_0001>

<llo_original>
// kernel: attention_enhanced_sfvnn_forward.1
$region0: #{attention_enhanced_sfvnn_forward.1}
  #allocation0 [shape = 'u32[]', space=smem, size = 0x4, offset = 0x4, fixed_abs, tag = 'smem constant byte address 0x4 - core index']
  #allocation1 [shape = 'u32[144,128]{1,0:T(1,128)}', space=vmem, size = 0x12000, scoped, tag = 'internal scratch']
  %s0 = inlined_call_operand.vmem [shape: f32[2,8,256], index: 0, kind: input, shape index: {}]
  %s1 = inlined_call_operand.vmem [shape: f32[24,8], index: 1, kind: input, shape index: {}]
  %s2 = inlined_call_operand.vmem [shape: f32[24,1], index: 2, kind: input, shape index: {}]
  %s3 = inlined_call_operand.vmem [shape: f32[4,256,256], index: 3, kind: input, shape index: {}]
  %s4 = inlined_call_operand.vmem [shape: f32[8,8], index: 4, kind: input, shape index: {}]
  %s5 = inlined_call_operand.vmem [shape: f32[8,1], index: 5, kind: input, shape index: {}]
  %s6 = inlined_call_operand.vmem [shape: f32[24,8], index: 6, kind: input, shape index: {}]
  %s7 = inlined_call_operand.vmem [shape: f32[24,1], index: 7, kind: input, shape index: {}]
  %s8 = inlined_call_operand.vmem [shape: f32[4,256,256], index: 8, kind: input, shape index: {}]
  %s9 = inlined_call_operand.vmem [shape: f32[8,8], index: 9, kind: input, shape index: {}]
  %s10 = inlined_call_operand.vmem [shape: f32[8,1], index: 10, kind: input, shape index: {}]
  %s11 = inlined_call_operand.vmem [shape: f32[8,8], index: 11, kind: input, shape index: {}]
  %s12 = inlined_call_operand.vmem [shape: f32[8,8], index: 12, kind: input, shape index: {}]
  %s13 = inlined_call_operand.vmem [shape: f32[8,1], index: 13, kind: input, shape index: {}]
  %s14 = inlined_call_operand.vmem [shape: f32[8,8], index: 14, kind: input, shape index: {}]
  %s15 = inlined_call_operand.vmem [shape: f32[8,1], index: 15, kind: input, shape index: {}]
  %s16 = inlined_call_operand.vmem [shape: f32[2,8,256], index: 16, kind: output, shape index: {}]
  %s17 = sld [smem:[#allocation0]]
  $region97: #{attention_enhanced_sfvnn_forward.1} parent=0
    _
  %s19 = ssub.s32 1, %s17
  %s20 = scalar_select 0, %s19, %s17
  loop: start=0, step=1, limit=4
  $region2: #{attention_enhanced_sfvnn_forward.1} parent=0 // loop_pre_header
    _
  $region3: #{attention_enhanced_sfvnn_forward.1} parent=0 // loop_header
    %s22 = sphi 0, %s26
    %p23 = scmp.ge.s32.totalorder %s22, 4
    %s32 = sphi 0, %s34
    %s35 = sphi 0, %s32
    %s36 = sphi 0, %s35
    %s52 = sphi 0, %s36
    %s56 = sphi 0, %s56
    %s58 = sphi 0, %s56
    %s59 = sphi 0, %s58
    %s73 = sphi 0, %s59
    %s77 = sphi 0, %s77
    %s79 = sphi 0, %s77
    %s80 = sphi 0, %s79
    %s94 = sphi 0, %s80
    %s98 = sphi 0, %s98
    %s100 = sphi 0, %s98
    %s101 = sphi 0, %s100
    %s115 = sphi 0, %s101
    %s119 = sphi 0, %s119
    %s121 = sphi 0, %s119
    %s122 = sphi 0, %s121
    %s136 = sphi 0, %s122
    %s140 = sphi 0, %s140
    %s142 = sphi 0, %s140
    %s143 = sphi 0, %s142
    %s157 = sphi 0, %s143
    %s161 = sphi 0, %s161
    %s163 = sphi 0, %s161
    %s164 = sphi 0, %s163
    %s178 = sphi 0, %s164
    %s182 = sphi 0, %s182
    %s184 = sphi 0, %s182
    %s185 = sphi 0, %s184
    %s199 = sphi 0, %s185
    %s203 = sphi 0, %s203
    %s205 = sphi 0, %s203
    %s206 = sphi 0, %s205
    %s220 = sphi 0, %s206
    %s224 = sphi 0, %s224
    %s226 = sphi 0, %s224
    %s227 = sphi 0, %s226
    %s241 = sphi 0, %s227
    %s245 = sphi 0, %s245
    %s247 = sphi 0, %s245
    %s248 = sphi 0, %s247
    %s262 = sphi 0, %s248
    %s266 = sphi 0, %s266
    %s268 = sphi 0, %s266
    %s269 = sphi 0, %s268
    %s283 = sphi 0, %s269
    %s287 = sphi 0, %s287
    %s289 = sphi 0, %s287
    %s290 = sphi 0, %s289
    %s304 = sphi 0, %s290
    %s308 = sphi 0, %s308
    %s310 = sphi 0, %s308
    %s311 = sphi 0, %s310
    %s325 = sphi 0, %s311
    %s329 = sphi 0, %s329
    %s331 = sphi 0, %s329
    %s332 = sphi 0, %s331
    %s346 = sphi 0, %s332
    %s350 = sphi 0, %s350
    %s352 = sphi 0, %s350
    %s353 = sphi 0, %s352
    %s367 = sphi 0, %s353
    %s373 = sphi 0, %s375
    %s376 = sphi 0, %s373
    %s377 = sphi 0, %s376
    %s393 = sphi 0, %s377
  $region4: #{attention_enhanced_sfvnn_forward.1} parent=0 // loop_header_branch
    %25 = sbr.rel (%p23) target = $region8
  $region5: #{attention_enhanced_sfvnn_forward.1} parent=0 // loop_body
    %s27 = ssub.s32 %s22, 1
    %s28 = ssub.s32 %s22, 2
    %s29 = sadd.s32 %s22, 1
    %s30 = ssub.s32 %s22, %s29
    %p31 = scmp.eq.s32.totalorder %s30, 0
    %s33 = sadd.s32 %s32, 1
    %s34 = scalar_select %p31, %s32, %s33
    %p37 = pneg %p31
    %p38 = scmp.eq.s32.totalorder %s22, 1
    %p39 = por %p37, %p38
    %p40 = scmp.ne.s32.totalorder %s32, %s35
    %p41 = scmp.eq.s32.totalorder %s22, 0
    %p42 = por %p40, %p41
    %p43 = scmp.ne.s32.totalorder %s32, %s35
    %p44 = scmp.eq.s32.totalorder %s27, 1
    %p45 = por %p43, %p44
    %p46 = scmp.ne.s32.totalorder %s35, %s36
    %p47 = scmp.eq.s32.totalorder %s27, 0
    %p48 = por %p46, %p47
    %p49 = scmp.ne.s32.totalorder %s35, %s36
    %p50 = scmp.eq.s32.totalorder %s28, 1
    %p51 = por %p49, %p50
    %p53 = scmp.ne.s32.totalorder %s36, %s52
    %p54 = scmp.eq.s32.totalorder %s28, 0
    %p55 = por %p53, %p54
    %s57 = sadd.s32 %s56, 1
    %p60 = scmp.eq.s32.totalorder %s22, 1
    %p61 = scmp.ne.s32.totalorder %s56, %s58
    %p62 = scmp.eq.s32.totalorder %s22, 0
    %p63 = por %p61, %p62
    %p64 = scmp.ne.s32.totalorder %s56, %s58
    %p65 = scmp.eq.s32.totalorder %s27, 1
    %p66 = por %p64, %p65
    %p67 = scmp.ne.s32.totalorder %s58, %s59
    %p68 = scmp.eq.s32.totalorder %s27, 0
    %p69 = por %p67, %p68
    %p70 = scmp.ne.s32.totalorder %s58, %s59
    %p71 = scmp.eq.s32.totalorder %s28, 1
    %p72 = por %p70, %p71
    %p74 = scmp.ne.s32.totalorder %s59, %s73
    %p75 = scmp.eq.s32.totalorder %s28, 0
    %p76 = por %p74, %p75
    %s78 = sadd.s32 %s77, 1
    %p81 = scmp.eq.s32.totalorder %s22, 1
    %p82 = scmp.ne.s32.totalorder %s77, %s79
    %p83 = scmp.eq.s32.totalorder %s22, 0
    %p84 = por %p82, %p83
    %p85 = scmp.ne.s32.totalorder %s77, %s79
    %p86 = scmp.eq.s32.totalorder %s27, 1
    %p87 = por %p85, %p86
    %p88 = scmp.ne.s32.totalorder %s79, %s80
    %p89 = scmp.eq.s32.totalorder %s27, 0
    %p90 = por %p88, %p89
    %p91 = scmp.ne.s32.totalorder %s79, %s80
    %p92 = scmp.eq.s32.totalorder %s28, 1
    %p93 = por %p91, %p92
    %p95 = scmp.ne.s32.totalorder %s80, %s94
    %p96 = scmp.eq.s32.totalorder %s28, 0
    %p97 = por %p95, %p96
    %s99 = sadd.s32 %s98, 1
    %p102 = scmp.eq.s32.totalorder %s22, 1
    %p103 = scmp.ne.s32.totalorder %s98, %s100
    %p104 = scmp.eq.s32.totalorder %s22, 0
    %p105 = por %p103, %p104
    %p106 = scmp.ne.s32.totalorder %s98, %s100
    %p107 = scmp.eq.s32.totalorder %s27, 1
    %p108 = por %p106, %p107
    %p109 = scmp.ne.s32.totalorder %s100, %s101
    %p110 = scmp.eq.s32.totalorder %s27, 0
    %p111 = por %p109, %p110
    %p112 = scmp.ne.s32.totalorder %s100, %s101
    %p113 = scmp.eq.s32.totalorder %s28, 1
    %p114 = por %p112, %p113
    %p116 = scmp.ne.s32.totalorder %s101, %s115
    %p117 = scmp.eq.s32.totalorder %s28, 0
    %p118 = por %p116, %p117
    %s120 = sadd.s32 %s119, 1
    %p123 = scmp.eq.s32.totalorder %s22, 1
    %p124 = scmp.ne.s32.totalorder %s119, %s121
    %p125 = scmp.eq.s32.totalorder %s22, 0
    %p126 = por %p124, %p125
    %p127 = scmp.ne.s32.totalorder %s119, %s121
    %p128 = scmp.eq.s32.totalorder %s27, 1
    %p129 = por %p127, %p128
    %p130 = scmp.ne.s32.totalorder %s121, %s122
    %p131 = scmp.eq.s32.totalorder %s27, 0
    %p132 = por %p130, %p131
    %p133 = scmp.ne.s32.totalorder %s121, %s122
    %p134 = scmp.eq.s32.totalorder %s28, 1
    %p135 = por %p133, %p134
    %p137 = scmp.ne.s32.totalorder %s122, %s136
    %p138 = scmp.eq.s32.totalorder %s28, 0
    %p139 = por %p137, %p138
    %s141 = sadd.s32 %s140, 1
    %p144 = scmp.eq.s32.totalorder %s22, 1
    %p145 = scmp.ne.s32.totalorder %s140, %s142
    %p146 = scmp.eq.s32.totalorder %s22, 0
    %p147 = por %p145, %p146
    %p148 = scmp.ne.s32.totalorder %s140, %s142
    %p149 = scmp.eq.s32.totalorder %s27, 1
    %p150 = por %p148, %p149
    %p151 = scmp.ne.s32.totalorder %s142, %s143
    %p152 = scmp.eq.s32.totalorder %s27, 0
    %p153 = por %p151, %p152
    %p154 = scmp.ne.s32.totalorder %s142, %s143
    %p155 = scmp.eq.s32.totalorder %s28, 1
    %p156 = por %p154, %p155
    %p158 = scmp.ne.s32.totalorder %s143, %s157
    %p159 = scmp.eq.s32.totalorder %s28, 0
    %p160 = por %p158, %p159
    %s162 = sadd.s32 %s161, 1
    %p165 = scmp.eq.s32.totalorder %s22, 1
    %p166 = scmp.ne.s32.totalorder %s161, %s163
    %p167 = scmp.eq.s32.totalorder %s22, 0
    %p168 = por %p166, %p167
    %p169 = scmp.ne.s32.totalorder %s161, %s163
    %p170 = scmp.eq.s32.totalorder %s27, 1
    %p171 = por %p169, %p170
    %p172 = scmp.ne.s32.totalorder %s163, %s164
    %p173 = scmp.eq.s32.totalorder %s27, 0
    %p174 = por %p172, %p173
    %p175 = scmp.ne.s32.totalorder %s163, %s164
    %p176 = scmp.eq.s32.totalorder %s28, 1
    %p177 = por %p175, %p176
    %p179 = scmp.ne.s32.totalorder %s164, %s178
    %p180 = scmp.eq.s32.totalorder %s28, 0
    %p181 = por %p179, %p180
    %s183 = sadd.s32 %s182, 1
    %p186 = scmp.eq.s32.totalorder %s22, 1
    %p187 = scmp.ne.s32.totalorder %s182, %s184
    %p188 = scmp.eq.s32.totalorder %s22, 0
    %p189 = por %p187, %p188
    %p190 = scmp.ne.s32.totalorder %s182, %s184
    %p191 = scmp.eq.s32.totalorder %s27, 1
    %p192 = por %p190, %p191
    %p193 = scmp.ne.s32.totalorder %s184, %s185
    %p194 = scmp.eq.s32.totalorder %s27, 0
    %p195 = por %p193, %p194
    %p196 = scmp.ne.s32.totalorder %s184, %s185
    %p197 = scmp.eq.s32.totalorder %s28, 1
    %p198 = por %p196, %p197
    %p200 = scmp.ne.s32.totalorder %s185, %s199
    %p201 = scmp.eq.s32.totalorder %s28, 0
    %p202 = por %p200, %p201
    %s204 = sadd.s32 %s203, 1
    %p207 = scmp.eq.s32.totalorder %s22, 1
    %p208 = scmp.ne.s32.totalorder %s203, %s205
    %p209 = scmp.eq.s32.totalorder %s22, 0
    %p210 = por %p208, %p209
    %p211 = scmp.ne.s32.totalorder %s203, %s205
    %p212 = scmp.eq.s32.totalorder %s27, 1
    %p213 = por %p211, %p212
    %p214 = scmp.ne.s32.totalorder %s205, %s206
    %p215 = scmp.eq.s32.totalorder %s27, 0
    %p216 = por %p214, %p215
    %p217 = scmp.ne.s32.totalorder %s205, %s206
    %p218 = scmp.eq.s32.totalorder %s28, 1
    %p219 = por %p217, %p218
    %p221 = scmp.ne.s32.totalorder %s206, %s220
    %p222 = scmp.eq.s32.totalorder %s28, 0
    %p223 = por %p221, %p222
    %s225 = sadd.s32 %s224, 1
    %p228 = scmp.eq.s32.totalorder %s22, 1
    %p229 = scmp.ne.s32.totalorder %s224, %s226
    %p230 = scmp.eq.s32.totalorder %s22, 0
    %p231 = por %p229, %p230
    %p232 = scmp.ne.s32.totalorder %s224, %s226
    %p233 = scmp.eq.s32.totalorder %s27, 1
    %p234 = por %p232, %p233
    %p235 = scmp.ne.s32.totalorder %s226, %s227
    %p236 = scmp.eq.s32.totalorder %s27, 0
    %p237 = por %p235, %p236
    %p238 = scmp.ne.s32.totalorder %s226, %s227
    %p239 = scmp.eq.s32.totalorder %s28, 1
    %p240 = por %p238, %p239
    %p242 = scmp.ne.s32.totalorder %s227, %s241
    %p243 = scmp.eq.s32.totalorder %s28, 0
    %p244 = por %p242, %p243
    %s246 = sadd.s32 %s245, 1
    %p249 = scmp.eq.s32.totalorder %s22, 1
    %p250 = scmp.ne.s32.totalorder %s245, %s247
    %p251 = scmp.eq.s32.totalorder %s22, 0
    %p252 = por %p250, %p251
    %p253 = scmp.ne.s32.totalorder %s245, %s247
    %p254 = scmp.eq.s32.totalorder %s27, 1
    %p255 = por %p253, %p254
    %p256 = scmp.ne.s32.totalorder %s247, %s248
    %p257 = scmp.eq.s32.totalorder %s27, 0
    %p258 = por %p256, %p257
    %p259 = scmp.ne.s32.totalorder %s247, %s248
    %p260 = scmp.eq.s32.totalorder %s28, 1
    %p261 = por %p259, %p260
    %p263 = scmp.ne.s32.totalorder %s248, %s262
    %p264 = scmp.eq.s32.totalorder %s28, 0
    %p265 = por %p263, %p264
    %s267 = sadd.s32 %s266, 1
    %p270 = scmp.eq.s32.totalorder %s22, 1
    %p271 = scmp.ne.s32.totalorder %s266, %s268
    %p272 = scmp.eq.s32.totalorder %s22, 0
    %p273 = por %p271, %p272
    %p274 = scmp.ne.s32.totalorder %s266, %s268
    %p275 = scmp.eq.s32.totalorder %s27, 1
    %p276 = por %p274, %p275
    %p277 = scmp.ne.s32.totalorder %s268, %s269
    %p278 = scmp.eq.s32.totalorder %s27, 0
    %p279 = por %p277, %p278
    %p280 = scmp.ne.s32.totalorder %s268, %s269
    %p281 = scmp.eq.s32.totalorder %s28, 1
    %p282 = por %p280, %p281
    %p284 = scmp.ne.s32.totalorder %s269, %s283
    %p285 = scmp.eq.s32.totalorder %s28, 0
    %p286 = por %p284, %p285
    %s288 = sadd.s32 %s287, 1
    %p291 = scmp.eq.s32.totalorder %s22, 1
    %p292 = scmp.ne.s32.totalorder %s287, %s289
    %p293 = scmp.eq.s32.totalorder %s22, 0
    %p294 = por %p292, %p293
    %p295 = scmp.ne.s32.totalorder %s287, %s289
    %p296 = scmp.eq.s32.totalorder %s27, 1
    %p297 = por %p295, %p296
    %p298 = scmp.ne.s32.totalorder %s289, %s290
    %p299 = scmp.eq.s32.totalorder %s27, 0
    %p300 = por %p298, %p299
    %p301 = scmp.ne.s32.totalorder %s289, %s290
    %p302 = scmp.eq.s32.totalorder %s28, 1
    %p303 = por %p301, %p302
    %p305 = scmp.ne.s32.totalorder %s290, %s304
    %p306 = scmp.eq.s32.totalorder %s28, 0
    %p307 = por %p305, %p306
    %s309 = sadd.s32 %s308, 1
    %p312 = scmp.eq.s32.totalorder %s22, 1
    %p313 = scmp.ne.s32.totalorder %s308, %s310
    %p314 = scmp.eq.s32.totalorder %s22, 0
    %p315 = por %p313, %p314
    %p316 = scmp.ne.s32.totalorder %s308, %s310
    %p317 = scmp.eq.s32.totalorder %s27, 1
    %p318 = por %p316, %p317
    %p319 = scmp.ne.s32.totalorder %s310, %s311
    %p320 = scmp.eq.s32.totalorder %s27, 0
    %p321 = por %p319, %p320
    %p322 = scmp.ne.s32.totalorder %s310, %s311
    %p323 = scmp.eq.s32.totalorder %s28, 1
    %p324 = por %p322, %p323
    %p326 = scmp.ne.s32.totalorder %s311, %s325
    %p327 = scmp.eq.s32.totalorder %s28, 0
    %p328 = por %p326, %p327
    %s330 = sadd.s32 %s329, 1
    %p333 = scmp.eq.s32.totalorder %s22, 1
    %p334 = scmp.ne.s32.totalorder %s329, %s331
    %p335 = scmp.eq.s32.totalorder %s22, 0
    %p336 = por %p334, %p335
    %p337 = scmp.ne.s32.totalorder %s329, %s331
    %p338 = scmp.eq.s32.totalorder %s27, 1
    %p339 = por %p337, %p338
    %p340 = scmp.ne.s32.totalorder %s331, %s332
    %p341 = scmp.eq.s32.totalorder %s27, 0
    %p342 = por %p340, %p341
    %p343 = scmp.ne.s32.totalorder %s331, %s332
    %p344 = scmp.eq.s32.totalorder %s28, 1
    %p345 = por %p343, %p344
    %p347 = scmp.ne.s32.totalorder %s332, %s346
    %p348 = scmp.eq.s32.totalorder %s28, 0
    %p349 = por %p347, %p348
    %s351 = sadd.s32 %s350, 1
    %p354 = scmp.eq.s32.totalorder %s22, 1
    %p355 = scmp.ne.s32.totalorder %s350, %s352
    %p356 = scmp.eq.s32.totalorder %s22, 0
    %p357 = por %p355, %p356
    %p358 = scmp.ne.s32.totalorder %s350, %s352
    %p359 = scmp.eq.s32.totalorder %s27, 1
    %p360 = por %p358, %p359
    %p361 = scmp.ne.s32.totalorder %s352, %s353
    %p362 = scmp.eq.s32.totalorder %s27, 0
    %p363 = por %p361, %p362
    %p364 = scmp.ne.s32.totalorder %s352, %s353
    %p365 = scmp.eq.s32.totalorder %s28, 1
    %p366 = por %p364, %p365
    %p368 = scmp.ne.s32.totalorder %s353, %s367
    %p369 = scmp.eq.s32.totalorder %s28, 0
    %p370 = por %p368, %p369
    %s371 = ssub.s32 %s22, %s29
    %p372 = scmp.eq.s32.totalorder %s371, 0
    %s374 = sadd.s32 %s373, 1
    %s375 = scalar_select %p372, %s373, %s374
    %p378 = pneg %p372
    %p379 = scmp.eq.s32.totalorder %s22, 1
    %p380 = por %p378, %p379
    %p381 = scmp.ne.s32.totalorder %s373, %s376
    %p382 = scmp.eq.s32.totalorder %s22, 0
    %p383 = por %p381, %p382
    %p384 = scmp.ne.s32.totalorder %s373, %s376
    %p385 = scmp.eq.s32.totalorder %s27, 1
    %p386 = por %p384, %p385
    %p387 = scmp.ne.s32.totalorder %s376, %s377
    %p388 = scmp.eq.s32.totalorder %s27, 0
    %p389 = por %p387, %p388
    %p390 = scmp.ne.s32.totalorder %s376, %s377
    %p391 = scmp.eq.s32.totalorder %s28, 1
    %p392 = por %p390, %p391
    %p394 = scmp.ne.s32.totalorder %s377, %s393
    %p395 = scmp.eq.s32.totalorder %s28, 0
    %p396 = por %p394, %p395
    %p397 = scmp.le.s32.totalorder 1, %s22
    %p398 = scmp.lt.s32.totalorder %s22, 3
    %p399 = pnand %p397, %p398
    %p400 = pneg %p399
    // Predicated region
    $region9: #{attention_enhanced_sfvnn_forward.1} parent=5 // pred_check
      _
    $region10: #{attention_enhanced_sfvnn_forward.1} parent=5 // pred_check_branch
      %402 = sbr.rel (%p399) target = $region12
    $region11: #{attention_enhanced_sfvnn_forward.1} parent=5 // pred_region
      %s403 = ssub.s32 %s22, 1
      // Predicated region
      $region13: #{attention_enhanced_sfvnn_forward.1} parent=11 // pred_check
        %p404 = pneg %p69
      $region14: #{attention_enhanced_sfvnn_forward.1} parent=11 // pred_check_branch
        %406 = sbr.rel (%p404) target = $region16
      $region15: #{attention_enhanced_sfvnn_forward.1} parent=11 // pred_region
        _
      $region16: #{attention_enhanced_sfvnn_forward.1} parent=11 // pred_fallthru
        _
      // Predicated region
      $region17: #{attention_enhanced_sfvnn_forward.1} parent=11 // pred_check
        %p407 = pneg %p90
      $region18: #{attention_enhanced_sfvnn_forward.1} parent=11 // pred_check_branch
        %409 = sbr.rel (%p407) target = $region20
      $region19: #{attention_enhanced_sfvnn_forward.1} parent=11 // pred_region
        _
      $region20: #{attention_enhanced_sfvnn_forward.1} parent=11 // pred_fallthru
        _
      // Predicated region
      $region21: #{attention_enhanced_sfvnn_forward.1} parent=11 // pred_check
        %p410 = pneg %p111
      $region22: #{attention_enhanced_sfvnn_forward.1} parent=11 // pred_check_branch
        %412 = sbr.rel (%p410) target = $region24
      $region23: #{attention_enhanced_sfvnn_forward.1} parent=11 // pred_region
        _
      $region24: #{attention_enhanced_sfvnn_forward.1} parent=11 // pred_fallthru
        _
      // Predicated region
      $region25: #{attention_enhanced_sfvnn_forward.1} parent=11 // pred_check
        %p413 = pneg %p132
      $region26: #{attention_enhanced_sfvnn_forward.1} parent=11 // pred_check_branch
        %415 = sbr.rel (%p413) target = $region28
      $region27: #{attention_enhanced_sfvnn_forward.1} parent=11 // pred_region
        _
      $region28: #{attention_enhanced_sfvnn_forward.1} parent=11 // pred_fallthru
        _
      // Predicated region
      $region29: #{attention_enhanced_sfvnn_forward.1} parent=11 // pred_check
        %p416 = pneg %p153
      $region30: #{attention_enhanced_sfvnn_forward.1} parent=11 // pred_check_branch
        %418 = sbr.rel (%p416) target = $region32
      $region31: #{attention_enhanced_sfvnn_forward.1} parent=11 // pred_region
        _
      $region32: #{attention_enhanced_sfvnn_forward.1} parent=11 // pred_fallthru
        _
      // Predicated region
      $region33: #{attention_enhanced_sfvnn_forward.1} parent=11 // pred_check
        %p419 = pneg %p174
      $region34: #{attention_enhanced_sfvnn_forward.1} parent=11 // pred_check_branch
        %421 = sbr.rel (%p419) target = $region36
      $region35: #{attention_enhanced_sfvnn_forward.1} parent=11 // pred_region
        _
      $region36: #{attention_enhanced_sfvnn_forward.1} parent=11 // pred_fallthru
        _
      // Predicated region
      $region37: #{attention_enhanced_sfvnn_forward.1} parent=11 // pred_check
        %p422 = pneg %p195
      $region38: #{attention_enhanced_sfvnn_forward.1} parent=11 // pred_check_branch
        %424 = sbr.rel (%p422) target = $region40
      $region39: #{attention_enhanced_sfvnn_forward.1} parent=11 // pred_region
        _
      $region40: #{attention_enhanced_sfvnn_forward.1} parent=11 // pred_fallthru
        _
      // Predicated region
      $region41: #{attention_enhanced_sfvnn_forward.1} parent=11 // pred_check
        %p425 = pneg %p216
      $region42: #{attention_enhanced_sfvnn_forward.1} parent=11 // pred_check_branch
        %427 = sbr.rel (%p425) target = $region44
      $region43: #{attention_enhanced_sfvnn_forward.1} parent=11 // pred_region
        _
      $region44: #{attention_enhanced_sfvnn_forward.1} parent=11 // pred_fallthru
        _
      // Predicated region
      $region45: #{attention_enhanced_sfvnn_forward.1} parent=11 // pred_check
        %p428 = pneg %p237
      $region46: #{attention_enhanced_sfvnn_forward.1} parent=11 // pred_check_branch
        %430 = sbr.rel (%p428) target = $region48
      $region47: #{attention_enhanced_sfvnn_forward.1} parent=11 // pred_region
        _
      $region48: #{attention_enhanced_sfvnn_forward.1} parent=11 // pred_fallthru
        _
      // Predicated region
      $region49: #{attention_enhanced_sfvnn_forward.1} parent=11 // pred_check
        %p431 = pneg %p258
      $region50: #{attention_enhanced_sfvnn_forward.1} parent=11 // pred_check_branch
        %433 = sbr.rel (%p431) target = $region52
      $region51: #{attention_enhanced_sfvnn_forward.1} parent=11 // pred_region
        _
      $region52: #{attention_enhanced_sfvnn_forward.1} parent=11 // pred_fallthru
        _
      // Predicated region
      $region53: #{attention_enhanced_sfvnn_forward.1} parent=11 // pred_check
        %p434 = pneg %p279
      $region54: #{attention_enhanced_sfvnn_forward.1} parent=11 // pred_check_branch
        %436 = sbr.rel (%p434) target = $region56
      $region55: #{attention_enhanced_sfvnn_forward.1} parent=11 // pred_region
        _
      $region56: #{attention_enhanced_sfvnn_forward.1} parent=11 // pred_fallthru
        _
      // Predicated region
      $region57: #{attention_enhanced_sfvnn_forward.1} parent=11 // pred_check
        %p437 = pneg %p300
      $region58: #{attention_enhanced_sfvnn_forward.1} parent=11 // pred_check_branch
        %439 = sbr.rel (%p437) target = $region60
      $region59: #{attention_enhanced_sfvnn_forward.1} parent=11 // pred_region
        _
      $region60: #{attention_enhanced_sfvnn_forward.1} parent=11 // pred_fallthru
        _
      // Predicated region
      $region61: #{attention_enhanced_sfvnn_forward.1} parent=11 // pred_check
        %p440 = pneg %p321
      $region62: #{attention_enhanced_sfvnn_forward.1} parent=11 // pred_check_branch
        %442 = sbr.rel (%p440) target = $region64
      $region63: #{attention_enhanced_sfvnn_forward.1} parent=11 // pred_region
        _
      $region64: #{attention_enhanced_sfvnn_forward.1} parent=11 // pred_fallthru
        _
      // Predicated region
      $region65: #{attention_enhanced_sfvnn_forward.1} parent=11 // pred_check
        %p443 = pneg %p342
      $region66: #{attention_enhanced_sfvnn_forward.1} parent=11 // pred_check_branch
        %445 = sbr.rel (%p443) target = $region68
      $region67: #{attention_enhanced_sfvnn_forward.1} parent=11 // pred_region
        _
      $region68: #{attention_enhanced_sfvnn_forward.1} parent=11 // pred_fallthru
        _
      // Predicated region
      $region69: #{attention_enhanced_sfvnn_forward.1} parent=11 // pred_check
        %p446 = pneg %p363
      $region70: #{attention_enhanced_sfvnn_forward.1} parent=11 // pred_check_branch
        %448 = sbr.rel (%p446) target = $region72
      $region71: #{attention_enhanced_sfvnn_forward.1} parent=11 // pred_region
        _
      $region72: #{attention_enhanced_sfvnn_forward.1} parent=11 // pred_fallthru
        _
    $region12: #{attention_enhanced_sfvnn_forward.1} parent=5 // pred_fallthru
      _
    %p449 = scmp.lt.s32.totalorder %s22, 2
    // Predicated region
    $region73: #{attention_enhanced_sfvnn_forward.1} parent=5 // pred_check
      %p450 = pneg %p449
    $region74: #{attention_enhanced_sfvnn_forward.1} parent=5 // pred_check_branch
      %452 = sbr.rel (%p450) target = $region76
    $region75: #{attention_enhanced_sfvnn_forward.1} parent=5 // pred_region
      // Predicated region
      $region77: #{attention_enhanced_sfvnn_forward.1} parent=75 // pred_check
        %p453 = pneg %p42
      $region78: #{attention_enhanced_sfvnn_forward.1} parent=75 // pred_check_branch
        %455 = sbr.rel (%p453) target = $region80
      $region79: #{attention_enhanced_sfvnn_forward.1} parent=75 // pred_region
        %p456 = scmp.lt.s32.totalorder %s22, 1
        %s457 = scalar_select %p456, %s22, 1
        %s458 = smul.addr %s457, 2
        %s459 = smul.addr %s458, 8
        %s460 = scalar_lea.vmem %s0, %s459
      $region80: #{attention_enhanced_sfvnn_forward.1} parent=75 // pred_fallthru
        _
    $region76: #{attention_enhanced_sfvnn_forward.1} parent=5 // pred_fallthru
      _
    %p461 = scmp.le.s32.totalorder 1, %s22
    %p462 = scmp.lt.s32.totalorder %s22, 3
    %p463 = pnand %p461, %p462
    %p464 = pneg %p463
    // Predicated region
    $region81: #{attention_enhanced_sfvnn_forward.1} parent=5 // pred_check
      _
    $region82: #{attention_enhanced_sfvnn_forward.1} parent=5 // pred_check_branch
      %466 = sbr.rel (%p463) target = $region84
    $region83: #{attention_enhanced_sfvnn_forward.1} parent=5 // pred_region
      %s467 = ssub.s32 %s22, 1
      %p468 = scmp.lt.s32.totalorder %s27, 1
      %s469 = scalar_select %p468, %s27, 1
      %s470 = smul.addr %s469, 2
      %s471 = smul.addr %s470, 8
      %s472 = scalar_lea.vmem %s0, %s471
      %p473 = pneg %p48
      %p474 = pneg %p45
      %p475 = pneg %p69
      %p476 = pneg %p66
      %p477 = pneg %p90
      %p478 = pneg %p87
      %p479 = pneg %p111
      %p480 = pneg %p108
      %p481 = pneg %p132
      %p482 = pneg %p129
      %p483 = pneg %p153
      %p484 = pneg %p150
      %p485 = pneg %p174
      %p486 = pneg %p171
      %p487 = pneg %p195
      %p488 = pneg %p192
      %p489 = pneg %p216
      %p490 = pneg %p213
      %p491 = pneg %p237
      %p492 = pneg %p234
      %p493 = pneg %p258
      %p494 = pneg %p255
      %p495 = pneg %p279
      %p496 = pneg %p276
      %p497 = pneg %p300
      %p498 = pneg %p297
      %p499 = pneg %p321
      %p500 = pneg %p318
      %p501 = pneg %p342
      %p502 = pneg %p339
      %p503 = pneg %p363
      %p504 = pneg %p360
      %p505 = pneg %p389
      %p506 = pneg %p386
      %p507 = scmp.lt.s32.totalorder %s27, 1
      %s508 = scalar_select %p507, %s27, 1
      %s509 = smul.addr %s508, 2
      %s510 = smul.addr %s509, 8
      %s511 = scalar_lea.vmem %s16, %s510
      %p512 = scmp.lt.s32.totalorder %s27, 1
      %s513 = scalar_select %p512, %s27, 1
      %s514 = smul.addr %s513, 2
      %s515 = smul.addr %s514, 8
      %s516 = scalar_lea.vmem %s0, %s515
      %p517 = scmp.lt.s32.totalorder %s27, 1
      %s518 = scalar_select %p517, %s27, 1
      %s519 = smul.addr %s518, 2
      %s520 = smul.addr %s519, 8
      %s521 = scalar_lea.vmem %s16, %s520
      %v523 = vld [vmem:[%s516] sm:$0xff]
      %v524 = vld [vmem:[%s516 + $0x8] sm:$0xff]
      %v525 = vld [vmem:[%s1] sm:$0xff]
      %v526 = vld [vmem:[%s1 + $0x8] sm:$0xff]
      %v527 = vld [vmem:[%s1 + $0x10] sm:$0xff]
      %v528 = vld [vmem:[%s2] sm:$0xff]
      %v529 = vld [vmem:[%s2 + $0x8] sm:$0xff]
      %v530 = vld [vmem:[%s2 + $0x10] sm:$0xff]
      %v531 = vld [vmem:[%s4] sm:$0xff]
      %v532 = vld [vmem:[%s5] sm:$0xff]
      %v533 = vpack.c.bf16 %v526, %v525
      %v534 = vpack.c.bf16 %v527, %v527
      %v535 = vpack.c.bf16 %v523, %v523
      %v536 = vpack.c.bf16 %v524, %v524
      %538 = vset.pattern.permute.xlu0 0
      %539 = vperm.xlu0 %538, %v528
      %v540 = vpop.permute.xlu0 %539
      %543 = vset.pattern.permute.xlu0 0
      %544 = vperm.xlu0 %543, %v529
      %v545 = vpop.permute.xlu0 %544
      %548 = vset.pattern.permute.xlu0 0
      %549 = vperm.xlu0 %548, %v530
      %v550 = vpop.permute.xlu0 %549
      %vm552 = vcmask 64512
      %v554 = vsel %vm552, %v533, 0
      %v557 = vsel %vm552, %v534, 0
      %vm559 = vcmask 1043456
      %v561 = vsel %vm559, %v535, 0
      %v564 = vsel %vm559, %v536, 0
      %566 = vmatprep.subr.bf16.mxu0 %v564
      %567 = vmatpush1.bf16.msra.mxu0 %v561
      %568 = vmatprep.subr.bf16.mxu0 0
      %569 = vmatpush1.bf16.msra.mxu0 0
      %570 = vmatprep.subr.bf16.mxu0 0
      %571 = vmatpush1.bf16.msra.mxu0 0
      %572 = vmatprep.subr.bf16.mxu0 0
      %573 = vmatpush1.bf16.msra.mxu0 0
      %574 = vmatprep.subr.bf16.mxu0 0
      %575 = vmatpush1.bf16.msra.mxu0 0
      %576 = vmatprep.subr.bf16.mxu0 0
      %577 = vmatpush1.bf16.msra.mxu0 0
      %578 = vmatprep.subr.bf16.mxu0 0
      %579 = vmatpush1.bf16.msra.mxu0 0
      %580 = vmatprep.subr.bf16.mxu0 0
      %581 = vmatpush1.bf16.msra.mxu0 0
      %582 = vmatprep.subr.bf16.mxu0 0
      %583 = vmatpush1.bf16.msra.mxu0 0
      %584 = vmatprep.subr.bf16.mxu0 0
      %585 = vmatpush1.bf16.msra.mxu0 0
      %586 = vmatprep.subr.bf16.mxu0 0
      %587 = vmatpush1.bf16.msra.mxu0 0
      %588 = vmatprep.subr.bf16.mxu0 0
      %589 = vmatpush1.bf16.msra.mxu0 0
      %590 = vmatprep.subr.bf16.mxu0 0
      %591 = vmatpush1.bf16.msra.mxu0 0
      %592 = vmatprep.subr.bf16.mxu0 0
      %593 = vmatpush1.bf16.msra.mxu0 0
      %594 = vmatprep.subr.bf16.mxu0 0
      %595 = vmatpush1.bf16.msra.mxu0 0
      %596 = vmatprep.subr.bf16.mxu0 0
      %597 = vmatpush1.bf16.msra.mxu0 0
      %598 = vmatprep.mubr.bf16.mxu0 0
      %599 = vmatmul.mubr.bf16.gmra.mrb[0].mxu0 %v554
      %v600 = vpop.f32.mrb[0].mxu0
      %v601 = vadd.f32 %v540, %v600
      %v602 = vpop.f32.mrb[0].mxu0
      %v603 = vadd.f32 %v540, %v602
      %v604 = vpop.f32.mrb[0].mxu0
      %v605 = vadd.f32 %v545, %v604
      %v606 = vpop.f32.mrb[0].mxu0
      %v607 = vadd.f32 %v545, %v606
      %608 = vmatprep.mubr.bf16.mxu0 0
      %609 = vmatmul.mubr.bf16.gmra.mrb[0].mxu0 %v557
      %v610 = vpop.f32.mrb[0].mxu0
      %v611 = vadd.f32 %v550, %v610
      %v612 = vpop.f32.mrb[0].mxu0
      %v613 = vadd.f32 %v550, %v612
      %v614 = vpop.f32.mrb[0].mxu0
      %v615 = vpop.f32.mrb[0].mxu0
      %616 = vdwg.mxu0
      %v617 = vpack.c.bf16 %v601, %v601
      %v618 = vpack.c.bf16 %v603, %v603
      %v619 = vpack.c.bf16 %v605, %v605
      %v620 = vpack.c.bf16 %v607, %v607
      %v621 = vpack.c.bf16 %v611, %v611
      %v622 = vpack.c.bf16 %v613, %v613
      %v623 = vld [vmem:[%s3] sm:$0xff]
      %v624 = vld [vmem:[%s3 + $0x8] sm:$0xff]
      %v625 = vld [vmem:[%s3 + $0x10] sm:$0xff]
      %v626 = vld [vmem:[%s3 + $0x18] sm:$0xff]
      %v627 = vld [vmem:[%s3 + $0x20] sm:$0xff]
      %v628 = vld [vmem:[%s3 + $0x28] sm:$0xff]
      %v629 = vld [vmem:[%s3 + $0x30] sm:$0xff]
      %v630 = vld [vmem:[%s3 + $0x38] sm:$0xff]
      %v631 = vld [vmem:[%s3 + $0x40] sm:$0xff]
      %v632 = vld [vmem:[%s3 + $0x48] sm:$0xff]
      %v633 = vld [vmem:[%s3 + $0x50] sm:$0xff]
      %v634 = vld [vmem:[%s3 + $0x58] sm:$0xff]
      %v635 = vld [vmem:[%s3 + $0x60] sm:$0xff]
      %v636 = vld [vmem:[%s3 + $0x68] sm:$0xff]
      %v637 = vld [vmem:[%s3 + $0x70] sm:$0xff]
      %v638 = vld [vmem:[%s3 + $0x78] sm:$0xff]
      %v639 = vld [vmem:[%s3 + $0x80] sm:$0xff]
      %v640 = vld [vmem:[%s3 + $0x88] sm:$0xff]
      %v641 = vld [vmem:[%s3 + $0x90] sm:$0xff]
      %v642 = vld [vmem:[%s3 + $0x98] sm:$0xff]
      %v643 = vld [vmem:[%s3 + $0xa0] sm:$0xff]
      %v644 = vld [vmem:[%s3 + $0xa8] sm:$0xff]
      %v645 = vld [vmem:[%s3 + $0xb0] sm:$0xff]
      %v646 = vld [vmem:[%s3 + $0xb8] sm:$0xff]
      %v647 = vld [vmem:[%s3 + $0xc0] sm:$0xff]
      %v648 = vld [vmem:[%s3 + $0xc8] sm:$0xff]
      %v649 = vld [vmem:[%s3 + $0xd0] sm:$0xff]
      %v650 = vld [vmem:[%s3 + $0xd8] sm:$0xff]
      %v651 = vld [vmem:[%s3 + $0xe0] sm:$0xff]
      %v652 = vld [vmem:[%s3 + $0xe8] sm:$0xff]
      %v653 = vld [vmem:[%s3 + $0xf0] sm:$0xff]
      %v654 = vld [vmem:[%s3 + $0xf8] sm:$0xff]
      %v655 = vld [vmem:[%s3 + $0x100] sm:$0xff]
      %v656 = vld [vmem:[%s3 + $0x108] sm:$0xff]
      %v657 = vld [vmem:[%s3 + $0x110] sm:$0xff]
      %v658 = vld [vmem:[%s3 + $0x118] sm:$0xff]
      %v659 = vld [vmem:[%s3 + $0x120] sm:$0xff]
      %v660 = vld [vmem:[%s3 + $0x128] sm:$0xff]
      %v661 = vld [vmem:[%s3 + $0x130] sm:$0xff]
      %v662 = vld [vmem:[%s3 + $0x138] sm:$0xff]
      %v663 = vld [vmem:[%s3 + $0x140] sm:$0xff]
      %v664 = vld [vmem:[%s3 + $0x148] sm:$0xff]
      %v665 = vld [vmem:[%s3 + $0x150] sm:$0xff]
      %v666 = vld [vmem:[%s3 + $0x158] sm:$0xff]
      %v667 = vld [vmem:[%s3 + $0x160] sm:$0xff]
      %v668 = vld [vmem:[%s3 + $0x168] sm:$0xff]
      %v669 = vld [vmem:[%s3 + $0x170] sm:$0xff]
      %v670 = vld [vmem:[%s3 + $0x178] sm:$0xff]
      %v671 = vld [vmem:[%s3 + $0x180] sm:$0xff]
      %v672 = vld [vmem:[%s3 + $0x188] sm:$0xff]
      %v673 = vld [vmem:[%s3 + $0x190] sm:$0xff]
      %v674 = vld [vmem:[%s3 + $0x198] sm:$0xff]
      %v675 = vld [vmem:[%s3 + $0x1a0] sm:$0xff]
      %v676 = vld [vmem:[%s3 + $0x1a8] sm:$0xff]
      %v677 = vld [vmem:[%s3 + $0x1b0] sm:$0xff]
      %v678 = vld [vmem:[%s3 + $0x1b8] sm:$0xff]
      %v679 = vld [vmem:[%s3 + $0x1c0] sm:$0xff]
      %v680 = vld [vmem:[%s3 + $0x1c8] sm:$0xff]
      %v681 = vld [vmem:[%s3 + $0x1d0] sm:$0xff]
      %v682 = vld [vmem:[%s3 + $0x1d8] sm:$0xff]
      %v683 = vld [vmem:[%s3 + $0x1e0] sm:$0xff]
      %v684 = vld [vmem:[%s3 + $0x1e8] sm:$0xff]
      %v685 = vld [vmem:[%s3 + $0x1f0] sm:$0xff]
      %v686 = vld [vmem:[%s3 + $0x1f8] sm:$0xff]
      %687 = vxpose.xlu0.c.b16.start [1/8] %v617, 128
      %688 = vxpose.xlu0.c.b16.cont [2/8] 0, 128
      %689 = vxpose.xlu0.c.b16.cont [3/8] 0, 128
      %690 = vxpose.xlu0.c.b16.cont [4/8] 0, 128
      %691 = vxpose.xlu0.c.b16.cont [5/8] 0, 128
      %692 = vxpose.xlu0.c.b16.cont [6/8] 0, 128
      %693 = vxpose.xlu0.c.b16.cont [7/8] 0, 128
      %694 = vxpose.xlu0.c.b16.end [8/8] 0, 128
      %v695 = vpop.trf.xlu0
      %v696 = vpop.trf.xlu0
      %v697 = vpop.trf.xlu0
      %v698 = vpop.trf.xlu0
      %v699 = vpop.trf.xlu0
      %v700 = vpop.trf.xlu0
      %v701 = vpop.trf.xlu0
      %v702 = vpop.trf.xlu0
      %703 = vxpose.xlu0.c.b16.start [1/8] %v618, 128
      %704 = vxpose.xlu0.c.b16.cont [2/8] 0, 128
      %705 = vxpose.xlu0.c.b16.cont [3/8] 0, 128
      %706 = vxpose.xlu0.c.b16.cont [4/8] 0, 128
      %707 = vxpose.xlu0.c.b16.cont [5/8] 0, 128
      %708 = vxpose.xlu0.c.b16.cont [6/8] 0, 128
      %709 = vxpose.xlu0.c.b16.cont [7/8] 0, 128
      %710 = vxpose.xlu0.c.b16.end [8/8] 0, 128
      %v711 = vpop.trf.xlu0
      %v712 = vpop.trf.xlu0
      %v713 = vpop.trf.xlu0
      %v714 = vpop.trf.xlu0
      %v715 = vpop.trf.xlu0
      %v716 = vpop.trf.xlu0
      %v717 = vpop.trf.xlu0
      %v718 = vpop.trf.xlu0
      %vm719 = vcmask 15360
      %v721 = vsel %vm719, %v695, 0
      %v724 = vsel %vm719, %v696, 0
      %v727 = vsel %vm719, %v697, 0
      %v730 = vsel %vm719, %v698, 0
      %v733 = vsel %vm719, %v699, 0
      %v736 = vsel %vm719, %v700, 0
      %v739 = vsel %vm719, %v701, 0
      %v742 = vsel %vm719, %v702, 0
      %v745 = vsel %vm719, %v711, 0
      %v748 = vsel %vm719, %v712, 0
      %v751 = vsel %vm719, %v713, 0
      %v754 = vsel %vm719, %v714, 0
      %v757 = vsel %vm719, %v715, 0
      %v760 = vsel %vm719, %v716, 0
      %v763 = vsel %vm719, %v717, 0
      %v766 = vsel %vm719, %v718, 0
      %vm768 = vcmask 1040384
      %v770 = vsel %vm768, %v619, 0
      %v773 = vsel %vm768, %v620, 0
      %775 = vmatprep.subr.bf16.mxu0 %v773
      %776 = vmatpush1.bf16.msra.mxu0 %v770
      %777 = vmatprep.subr.bf16.mxu0 0
      %778 = vmatpush1.bf16.msra.mxu0 0
      %779 = vmatprep.subr.bf16.mxu0 0
      %780 = vmatpush1.bf16.msra.mxu0 0
      %781 = vmatprep.subr.bf16.mxu0 0
      %782 = vmatpush1.bf16.msra.mxu0 0
      %783 = vmatprep.subr.bf16.mxu0 0
      %784 = vmatpush1.bf16.msra.mxu0 0
      %785 = vmatprep.subr.bf16.mxu0 0
      %786 = vmatpush1.bf16.msra.mxu0 0
      %787 = vmatprep.subr.bf16.mxu0 0
      %788 = vmatpush1.bf16.msra.mxu0 0
      %789 = vmatprep.subr.bf16.mxu0 0
      %790 = vmatpush1.bf16.msra.mxu0 0
      %791 = vmatprep.subr.bf16.mxu0 0
      %792 = vmatpush1.bf16.msra.mxu0 0
      %793 = vmatprep.subr.bf16.mxu0 0
      %794 = vmatpush1.bf16.msra.mxu0 0
      %795 = vmatprep.subr.bf16.mxu0 0
      %796 = vmatpush1.bf16.msra.mxu0 0
      %797 = vmatprep.subr.bf16.mxu0 0
      %798 = vmatpush1.bf16.msra.mxu0 0
      %799 = vmatprep.subr.bf16.mxu0 0
      %800 = vmatpush1.bf16.msra.mxu0 0
      %801 = vmatprep.subr.bf16.mxu0 0
      %802 = vmatpush1.bf16.msra.mxu0 0
      %803 = vmatprep.subr.bf16.mxu0 0
      %804 = vmatpush1.bf16.msra.mxu0 0
      %805 = vmatprep.subr.bf16.mxu0 0
      %806 = vmatpush1.bf16.msra.mxu0 0
      %807 = vmatprep.mubr.bf16.mxu0 0
      %808 = vmatmul.mubr.bf16.gmra.mrb[0].mxu0 %v721
      %v809 = vpop.f32.mrb[0].mxu0
      %v810 = vadd.f32 %v623, %v809
      %v811 = vpop.f32.mrb[0].mxu0
      %v812 = vadd.f32 %v624, %v811
      %v813 = vpop.f32.mrb[0].mxu0
      %v814 = vadd.f32 %v625, %v813
      %v815 = vpop.f32.mrb[0].mxu0
      %v816 = vadd.f32 %v626, %v815
      %817 = vmatprep.mubr.bf16.mxu0 0
      %818 = vmatmul.mubr.bf16.gmra.mrb[0].mxu0 %v724
      %v819 = vpop.f32.mrb[0].mxu0
      %v820 = vadd.f32 %v627, %v819
      %v821 = vpop.f32.mrb[0].mxu0
      %v822 = vadd.f32 %v628, %v821
      %v823 = vpop.f32.mrb[0].mxu0
      %v824 = vadd.f32 %v629, %v823
      %v825 = vpop.f32.mrb[0].mxu0
      %v826 = vadd.f32 %v630, %v825
      %827 = vmatprep.mubr.bf16.mxu0 0
      %828 = vmatmul.mubr.bf16.gmra.mrb[0].mxu0 %v727
      %v829 = vpop.f32.mrb[0].mxu0
      %v830 = vadd.f32 %v631, %v829
      %v831 = vpop.f32.mrb[0].mxu0
      %v832 = vadd.f32 %v632, %v831
      %v833 = vpop.f32.mrb[0].mxu0
      %v834 = vadd.f32 %v633, %v833
      %v835 = vpop.f32.mrb[0].mxu0
      %v836 = vadd.f32 %v634, %v835
      %837 = vmatprep.mubr.bf16.mxu0 0
      %838 = vmatmul.mubr.bf16.gmra.mrb[0].mxu0 %v730
      %v839 = vpop.f32.mrb[0].mxu0
      %v840 = vadd.f32 %v635, %v839
      %v841 = vpop.f32.mrb[0].mxu0
      %v842 = vadd.f32 %v636, %v841
      %v843 = vpop.f32.mrb[0].mxu0
      %v844 = vadd.f32 %v637, %v843
      %v845 = vpop.f32.mrb[0].mxu0
      %v846 = vadd.f32 %v638, %v845
      %847 = vmatprep.mubr.bf16.mxu0 0
      %848 = vmatmul.mubr.bf16.gmra.mrb[0].mxu0 %v733
      %v849 = vpop.f32.mrb[0].mxu0
      %v850 = vadd.f32 %v639, %v849
      %v851 = vpop.f32.mrb[0].mxu0
      %v852 = vadd.f32 %v640, %v851
      %v853 = vpop.f32.mrb[0].mxu0
      %v854 = vadd.f32 %v641, %v853
      %v855 = vpop.f32.mrb[0].mxu0
      %v856 = vadd.f32 %v642, %v855
      %857 = vmatprep.mubr.bf16.mxu0 0
      %858 = vmatmul.mubr.bf16.gmra.mrb[0].mxu0 %v736
      %v859 = vpop.f32.mrb[0].mxu0
      %v860 = vadd.f32 %v643, %v859
      %v861 = vpop.f32.mrb[0].mxu0
      %v862 = vadd.f32 %v644, %v861
      %v863 = vpop.f32.mrb[0].mxu0
      %v864 = vadd.f32 %v645, %v863
      %v865 = vpop.f32.mrb[0].mxu0
      %v866 = vadd.f32 %v646, %v865
      %867 = vmatprep.mubr.bf16.mxu0 0
      %868 = vmatmul.mubr.bf16.gmra.mrb[0].mxu0 %v739
      %v869 = vpop.f32.mrb[0].mxu0
      %v870 = vadd.f32 %v647, %v869
      %v871 = vpop.f32.mrb[0].mxu0
      %v872 = vadd.f32 %v648, %v871
      %v873 = vpop.f32.mrb[0].mxu0
      %v874 = vadd.f32 %v649, %v873
      %v875 = vpop.f32.mrb[0].mxu0
      %v876 = vadd.f32 %v650, %v875
      %877 = vmatprep.mubr.bf16.mxu0 0
      %878 = vmatmul.mubr.bf16.gmra.mrb[0].mxu0 %v742
      %v879 = vpop.f32.mrb[0].mxu0
      %v880 = vadd.f32 %v651, %v879
      %v881 = vpop.f32.mrb[0].mxu0
      %v882 = vadd.f32 %v652, %v881
      %v883 = vpop.f32.mrb[0].mxu0
      %v884 = vadd.f32 %v653, %v883
      %v885 = vpop.f32.mrb[0].mxu0
      %v886 = vadd.f32 %v654, %v885
      %887 = vmatprep.mubr.bf16.mxu0 0
      %888 = vmatmul.mubr.bf16.gmra.mrb[0].mxu0 %v745
      %v889 = vpop.f32.mrb[0].mxu0
      %v890 = vadd.f32 %v655, %v889
      %v891 = vpop.f32.mrb[0].mxu0
      %v892 = vadd.f32 %v656, %v891
      %v893 = vpop.f32.mrb[0].mxu0
      %v894 = vadd.f32 %v657, %v893
      %v895 = vpop.f32.mrb[0].mxu0
      %v896 = vadd.f32 %v658, %v895
      %897 = vmatprep.mubr.bf16.mxu0 0
      %898 = vmatmul.mubr.bf16.gmra.mrb[0].mxu0 %v748
      %v899 = vpop.f32.mrb[0].mxu0
      %v900 = vadd.f32 %v659, %v899
      %v901 = vpop.f32.mrb[0].mxu0
      %v902 = vadd.f32 %v660, %v901
      %v903 = vpop.f32.mrb[0].mxu0
      %v904 = vadd.f32 %v661, %v903
      %v905 = vpop.f32.mrb[0].mxu0
      %v906 = vadd.f32 %v662, %v905
      %907 = vmatprep.mubr.bf16.mxu0 0
      %908 = vmatmul.mubr.bf16.gmra.mrb[0].mxu0 %v751
      %v909 = vpop.f32.mrb[0].mxu0
      %v910 = vadd.f32 %v663, %v909
      %v911 = vpop.f32.mrb[0].mxu0
      %v912 = vadd.f32 %v664, %v911
      %v913 = vpop.f32.mrb[0].mxu0
      %v914 = vadd.f32 %v665, %v913
      %v915 = vpop.f32.mrb[0].mxu0
      %v916 = vadd.f32 %v666, %v915
      %917 = vmatprep.mubr.bf16.mxu0 0
      %918 = vmatmul.mubr.bf16.gmra.mrb[0].mxu0 %v754
      %v919 = vpop.f32.mrb[0].mxu0
      %v920 = vadd.f32 %v667, %v919
      %v921 = vpop.f32.mrb[0].mxu0
      %v922 = vadd.f32 %v668, %v921
      %v923 = vpop.f32.mrb[0].mxu0
      %v924 = vadd.f32 %v669, %v923
      %v925 = vpop.f32.mrb[0].mxu0
      %v926 = vadd.f32 %v670, %v925
      %927 = vmatprep.mubr.bf16.mxu0 0
      %928 = vmatmul.mubr.bf16.gmra.mrb[0].mxu0 %v757
      %v929 = vpop.f32.mrb[0].mxu0
      %v930 = vadd.f32 %v671, %v929
      %v931 = vpop.f32.mrb[0].mxu0
      %v932 = vadd.f32 %v672, %v931
      %v933 = vpop.f32.mrb[0].mxu0
      %v934 = vadd.f32 %v673, %v933
      %v935 = vpop.f32.mrb[0].mxu0
      %v936 = vadd.f32 %v674, %v935
      %937 = vmatprep.mubr.bf16.mxu0 0
      %938 = vmatmul.mubr.bf16.gmra.mrb[0].mxu0 %v760
      %v939 = vpop.f32.mrb[0].mxu0
      %v940 = vadd.f32 %v675, %v939
      %v941 = vpop.f32.mrb[0].mxu0
      %v942 = vadd.f32 %v676, %v941
      %v943 = vpop.f32.mrb[0].mxu0
      %v944 = vadd.f32 %v677, %v943
      %v945 = vpop.f32.mrb[0].mxu0
      %v946 = vadd.f32 %v678, %v945
      %947 = vmatprep.mubr.bf16.mxu0 0
      %948 = vmatmul.mubr.bf16.gmra.mrb[0].mxu0 %v763
      %v949 = vpop.f32.mrb[0].mxu0
      %v950 = vadd.f32 %v679, %v949
      %v951 = vpop.f32.mrb[0].mxu0
      %v952 = vadd.f32 %v680, %v951
      %v953 = vpop.f32.mrb[0].mxu0
      %v954 = vadd.f32 %v681, %v953
      %v955 = vpop.f32.mrb[0].mxu0
      %v956 = vadd.f32 %v682, %v955
      %957 = vmatprep.mubr.bf16.mxu0 0
      %958 = vmatmul.mubr.bf16.gmra.mrb[0].mxu0 %v766
      %v959 = vpop.f32.mrb[0].mxu0
      %v960 = vadd.f32 %v683, %v959
      %v961 = vpop.f32.mrb[0].mxu0
      %v962 = vadd.f32 %v684, %v961
      %v963 = vpop.f32.mrb[0].mxu0
      %v964 = vadd.f32 %v685, %v963
      %v965 = vpop.f32.mrb[0].mxu0
      %v966 = vadd.f32 %v686, %v965
      %967 = vdwg.mxu0
      %v968 = vmax.f32 %v810, %v812
      %969 = vmax.xlane.f32.xlu0 %v968
      %v970 = vpop.xlane.xlu0 %969
      %v971 = vmax.f32 %v814, %v816
      %972 = vmax.xlane.f32.xlu0 %v971
      %v973 = vpop.xlane.xlu0 %972
      %v974 = vmax.f32 %v820, %v822
      %975 = vmax.xlane.f32.xlu0 %v974
      %v976 = vpop.xlane.xlu0 %975
      %v977 = vmax.f32 %v824, %v826
      %978 = vmax.xlane.f32.xlu0 %v977
      %v979 = vpop.xlane.xlu0 %978
      %v980 = vmax.f32 %v830, %v832
      %981 = vmax.xlane.f32.xlu0 %v980
      %v982 = vpop.xlane.xlu0 %981
      %v983 = vmax.f32 %v834, %v836
      %984 = vmax.xlane.f32.xlu0 %v983
      %v985 = vpop.xlane.xlu0 %984
      %v986 = vmax.f32 %v840, %v842
      %987 = vmax.xlane.f32.xlu0 %v986
      %v988 = vpop.xlane.xlu0 %987
      %v989 = vmax.f32 %v844, %v846
      %990 = vmax.xlane.f32.xlu0 %v989
      %v991 = vpop.xlane.xlu0 %990
      %v992 = vmax.f32 %v850, %v852
      %993 = vmax.xlane.f32.xlu0 %v992
      %v994 = vpop.xlane.xlu0 %993
      %v995 = vmax.f32 %v854, %v856
      %996 = vmax.xlane.f32.xlu0 %v995
      %v997 = vpop.xlane.xlu0 %996
      %v998 = vmax.f32 %v860, %v862
      %999 = vmax.xlane.f32.xlu0 %v998
      %v1000 = vpop.xlane.xlu0 %999
      %v1001 = vmax.f32 %v864, %v866
      %1002 = vmax.xlane.f32.xlu0 %v1001
      %v1003 = vpop.xlane.xlu0 %1002
      %v1004 = vmax.f32 %v870, %v872
      %1005 = vmax.xlane.f32.xlu0 %v1004
      %v1006 = vpop.xlane.xlu0 %1005
      %v1007 = vmax.f32 %v874, %v876
      %1008 = vmax.xlane.f32.xlu0 %v1007
      %v1009 = vpop.xlane.xlu0 %1008
      %v1010 = vmax.f32 %v880, %v882
      %1011 = vmax.xlane.f32.xlu0 %v1010
      %v1012 = vpop.xlane.xlu0 %1011
      %v1013 = vmax.f32 %v884, %v886
      %1014 = vmax.xlane.f32.xlu0 %v1013
      %v1015 = vpop.xlane.xlu0 %1014
      %v1016 = vmax.f32 %v890, %v892
      %1017 = vmax.xlane.f32.xlu0 %v1016
      %v1018 = vpop.xlane.xlu0 %1017
      %v1019 = vmax.f32 %v894, %v896
      %1020 = vmax.xlane.f32.xlu0 %v1019
      %v1021 = vpop.xlane.xlu0 %1020
      %v1022 = vmax.f32 %v900, %v902
      %1023 = vmax.xlane.f32.xlu0 %v1022
      %v1024 = vpop.xlane.xlu0 %1023
      %v1025 = vmax.f32 %v904, %v906
      %1026 = vmax.xlane.f32.xlu0 %v1025
      %v1027 = vpop.xlane.xlu0 %1026
      %v1028 = vmax.f32 %v910, %v912
      %1029 = vmax.xlane.f32.xlu0 %v1028
      %v1030 = vpop.xlane.xlu0 %1029
      %v1031 = vmax.f32 %v914, %v916
      %1032 = vmax.xlane.f32.xlu0 %v1031
      %v1033 = vpop.xlane.xlu0 %1032
      %v1034 = vmax.f32 %v920, %v922
      %1035 = vmax.xlane.f32.xlu0 %v1034
      %v1036 = vpop.xlane.xlu0 %1035
      %v1037 = vmax.f32 %v924, %v926
      %1038 = vmax.xlane.f32.xlu0 %v1037
      %v1039 = vpop.xlane.xlu0 %1038
      %v1040 = vmax.f32 %v930, %v932
      %1041 = vmax.xlane.f32.xlu0 %v1040
      %v1042 = vpop.xlane.xlu0 %1041
      %v1043 = vmax.f32 %v934, %v936
      %1044 = vmax.xlane.f32.xlu0 %v1043
      %v1045 = vpop.xlane.xlu0 %1044
      %v1046 = vmax.f32 %v940, %v942
      %1047 = vmax.xlane.f32.xlu0 %v1046
      %v1048 = vpop.xlane.xlu0 %1047
      %v1049 = vmax.f32 %v944, %v946
      %1050 = vmax.xlane.f32.xlu0 %v1049
      %v1051 = vpop.xlane.xlu0 %1050
      %v1052 = vmax.f32 %v950, %v952
      %1053 = vmax.xlane.f32.xlu0 %v1052
      %v1054 = vpop.xlane.xlu0 %1053
      %v1055 = vmax.f32 %v954, %v956
      %1056 = vmax.xlane.f32.xlu0 %v1055
      %v1057 = vpop.xlane.xlu0 %1056
      %v1058 = vmax.f32 %v960, %v962
      %1059 = vmax.xlane.f32.xlu0 %v1058
      %v1060 = vpop.xlane.xlu0 %1059
      %v1061 = vmax.f32 %v964, %v966
      %1062 = vmax.xlane.f32.xlu0 %v1061
      %v1063 = vpop.xlane.xlu0 %1062
      %v1064 = vsub.f32 %v810, %v970
      %v1065 = vsub.f32 %v812, %v970
      %v1066 = vsub.f32 %v814, %v973
      %v1067 = vsub.f32 %v816, %v973
      %v1068 = vsub.f32 %v820, %v976
      %v1069 = vsub.f32 %v822, %v976
      %v1070 = vsub.f32 %v824, %v979
      %v1071 = vsub.f32 %v826, %v979
      %v1072 = vsub.f32 %v830, %v982
      %v1073 = vsub.f32 %v832, %v982
      %v1074 = vsub.f32 %v834, %v985
      %v1075 = vsub.f32 %v836, %v985
      %v1076 = vsub.f32 %v840, %v988
      %v1077 = vsub.f32 %v842, %v988
      %v1078 = vsub.f32 %v844, %v991
      %v1079 = vsub.f32 %v846, %v991
      %v1080 = vsub.f32 %v850, %v994
      %v1081 = vsub.f32 %v852, %v994
      %v1082 = vsub.f32 %v854, %v997
      %v1083 = vsub.f32 %v856, %v997
      %v1084 = vsub.f32 %v860, %v1000
      %v1085 = vsub.f32 %v862, %v1000
      %v1086 = vsub.f32 %v864, %v1003
      %v1087 = vsub.f32 %v866, %v1003
      %v1088 = vsub.f32 %v870, %v1006
      %v1089 = vsub.f32 %v872, %v1006
      %v1090 = vsub.f32 %v874, %v1009
      %v1091 = vsub.f32 %v876, %v1009
      %v1092 = vsub.f32 %v880, %v1012
      %v1093 = vsub.f32 %v882, %v1012
      %v1094 = vsub.f32 %v884, %v1015
      %v1095 = vsub.f32 %v886, %v1015
      %v1096 = vsub.f32 %v890, %v1018
      %v1097 = vsub.f32 %v892, %v1018
      %v1098 = vsub.f32 %v894, %v1021
      %v1099 = vsub.f32 %v896, %v1021
      %v1100 = vsub.f32 %v900, %v1024
      %v1101 = vsub.f32 %v902, %v1024
      %v1102 = vsub.f32 %v904, %v1027
      %v1103 = vsub.f32 %v906, %v1027
      %v1104 = vsub.f32 %v910, %v1030
      %v1105 = vsub.f32 %v912, %v1030
      %v1106 = vsub.f32 %v914, %v1033
      %v1107 = vsub.f32 %v916, %v1033
      %v1108 = vsub.f32 %v920, %v1036
      %v1109 = vsub.f32 %v922, %v1036
      %v1110 = vsub.f32 %v924, %v1039
      %v1111 = vsub.f32 %v926, %v1039
      %v1112 = vsub.f32 %v930, %v1042
      %v1113 = vsub.f32 %v932, %v1042
      %v1114 = vsub.f32 %v934, %v1045
      %v1115 = vsub.f32 %v936, %v1045
      %v1116 = vsub.f32 %v940, %v1048
      %v1117 = vsub.f32 %v942, %v1048
      %v1118 = vsub.f32 %v944, %v1051
      %v1119 = vsub.f32 %v946, %v1051
      %v1120 = vsub.f32 %v950, %v1054
      %v1121 = vsub.f32 %v952, %v1054
      %v1122 = vsub.f32 %v954, %v1057
      %v1123 = vsub.f32 %v956, %v1057
      %v1124 = vsub.f32 %v960, %v1060
      %v1125 = vsub.f32 %v962, %v1060
      %v1126 = vsub.f32 %v964, %v1063
      %v1127 = vsub.f32 %v966, %v1063
      %v1128 = vmul.f32 %v1064, 1.442695
      %v1129 = vpow.pop %v1128
      %v1130 = vmul.f32 %v1065, 1.442695
      %v1131 = vpow.pop %v1130
      %v1132 = vmul.f32 %v1066, 1.442695
      %v1133 = vpow.pop %v1132
      %v1134 = vmul.f32 %v1067, 1.442695
      %v1135 = vpow.pop %v1134
      %v1136 = vmul.f32 %v1068, 1.442695
      %v1137 = vpow.pop %v1136
      %v1138 = vmul.f32 %v1069, 1.442695
      %v1139 = vpow.pop %v1138
      %v1140 = vmul.f32 %v1070, 1.442695
      %v1141 = vpow.pop %v1140
      %v1142 = vmul.f32 %v1071, 1.442695
      %v1143 = vpow.pop %v1142
      %v1144 = vmul.f32 %v1072, 1.442695
      %v1145 = vpow.pop %v1144
      %v1146 = vmul.f32 %v1073, 1.442695
      %v1147 = vpow.pop %v1146
      %v1148 = vmul.f32 %v1074, 1.442695
      %v1149 = vpow.pop %v1148
      %v1150 = vmul.f32 %v1075, 1.442695
      %v1151 = vpow.pop %v1150
      %v1152 = vmul.f32 %v1076, 1.442695
      %v1153 = vpow.pop %v1152
      %v1154 = vmul.f32 %v1077, 1.442695
      %v1155 = vpow.pop %v1154
      %v1156 = vmul.f32 %v1078, 1.442695
      %v1157 = vpow.pop %v1156
      %v1158 = vmul.f32 %v1079, 1.442695
      %v1159 = vpow.pop %v1158
      %v1160 = vmul.f32 %v1080, 1.442695
      %v1161 = vpow.pop %v1160
      %v1162 = vmul.f32 %v1081, 1.442695
      %v1163 = vpow.pop %v1162
      %v1164 = vmul.f32 %v1082, 1.442695
      %v1165 = vpow.pop %v1164
      %v1166 = vmul.f32 %v1083, 1.442695
      %v1167 = vpow.pop %v1166
      %v1168 = vmul.f32 %v1084, 1.442695
      %v1169 = vpow.pop %v1168
      %v1170 = vmul.f32 %v1085, 1.442695
      %v1171 = vpow.pop %v1170
      %v1172 = vmul.f32 %v1086, 1.442695
      %v1173 = vpow.pop %v1172
      %v1174 = vmul.f32 %v1087, 1.442695
      %v1175 = vpow.pop %v1174
      %v1176 = vmul.f32 %v1088, 1.442695
      %v1177 = vpow.pop %v1176
      %v1178 = vmul.f32 %v1089, 1.442695
      %v1179 = vpow.pop %v1178
      %v1180 = vmul.f32 %v1090, 1.442695
      %v1181 = vpow.pop %v1180
      %v1182 = vmul.f32 %v1091, 1.442695
      %v1183 = vpow.pop %v1182
      %v1184 = vmul.f32 %v1092, 1.442695
      %v1185 = vpow.pop %v1184
      %v1186 = vmul.f32 %v1093, 1.442695
      %v1187 = vpow.pop %v1186
      %v1188 = vmul.f32 %v1094, 1.442695
      %v1189 = vpow.pop %v1188
      %v1190 = vmul.f32 %v1095, 1.442695
      %v1191 = vpow.pop %v1190
      %v1192 = vmul.f32 %v1096, 1.442695
      %v1193 = vpow.pop %v1192
      %v1194 = vmul.f32 %v1097, 1.442695
      %v1195 = vpow.pop %v1194
      %v1196 = vmul.f32 %v1098, 1.442695
      %v1197 = vpow.pop %v1196
      %v1198 = vmul.f32 %v1099, 1.442695
      %v1199 = vpow.pop %v1198
      %v1200 = vmul.f32 %v1100, 1.442695
      %v1201 = vpow.pop %v1200
      %v1202 = vmul.f32 %v1101, 1.442695
      %v1203 = vpow.pop %v1202
      %v1204 = vmul.f32 %v1102, 1.442695
      %v1205 = vpow.pop %v1204
      %v1206 = vmul.f32 %v1103, 1.442695
      %v1207 = vpow.pop %v1206
      %v1208 = vmul.f32 %v1104, 1.442695
      %v1209 = vpow.pop %v1208
      %v1210 = vmul.f32 %v1105, 1.442695
      %v1211 = vpow.pop %v1210
      %v1212 = vmul.f32 %v1106, 1.442695
      %v1213 = vpow.pop %v1212
      %v1214 = vmul.f32 %v1107, 1.442695
      %v1215 = vpow.pop %v1214
      %v1216 = vmul.f32 %v1108, 1.442695
      %v1217 = vpow.pop %v1216
      %v1218 = vmul.f32 %v1109, 1.442695
      %v1219 = vpow.pop %v1218
      %v1220 = vmul.f32 %v1110, 1.442695
      %v1221 = vpow.pop %v1220
      %v1222 = vmul.f32 %v1111, 1.442695
      %v1223 = vpow.pop %v1222
      %v1224 = vmul.f32 %v1112, 1.442695
      %v1225 = vpow.pop %v1224
      %v1226 = vmul.f32 %v1113, 1.442695
      %v1227 = vpow.pop %v1226
      %v1228 = vmul.f32 %v1114, 1.442695
      %v1229 = vpow.pop %v1228
      %v1230 = vmul.f32 %v1115, 1.442695
      %v1231 = vpow.pop %v1230
      %v1232 = vmul.f32 %v1116, 1.442695
      %v1233 = vpow.pop %v1232
      %v1234 = vmul.f32 %v1117, 1.442695
      %v1235 = vpow.pop %v1234
      %v1236 = vmul.f32 %v1118, 1.442695
      %v1237 = vpow.pop %v1236
      %v1238 = vmul.f32 %v1119, 1.442695
      %v1239 = vpow.pop %v1238
      %v1240 = vmul.f32 %v1120, 1.442695
      %v1241 = vpow.pop %v1240
      %v1242 = vmul.f32 %v1121, 1.442695
      %v1243 = vpow.pop %v1242
      %v1244 = vmul.f32 %v1122, 1.442695
      %v1245 = vpow.pop %v1244
      %v1246 = vmul.f32 %v1123, 1.442695
      %v1247 = vpow.pop %v1246
      %v1248 = vmul.f32 %v1124, 1.442695
      %v1249 = vpow.pop %v1248
      %v1250 = vmul.f32 %v1125, 1.442695
      %v1251 = vpow.pop %v1250
      %v1252 = vmul.f32 %v1126, 1.442695
      %v1253 = vpow.pop %v1252
      %v1254 = vmul.f32 %v1127, 1.442695
      %v1255 = vpow.pop %v1254
      %v1256 = vadd.f32 %v1129, %v1131
      %1257 = vadd.xlane.f32.xlu0 %v1256
      %v1258 = vpop.xlane.xlu0 %1257
      %v1259 = vadd.f32 %v1133, %v1135
      %1260 = vadd.xlane.f32.xlu0 %v1259
      %v1261 = vpop.xlane.xlu0 %1260
      %v1262 = vadd.f32 %v1137, %v1139
      %1263 = vadd.xlane.f32.xlu0 %v1262
      %v1264 = vpop.xlane.xlu0 %1263
      %v1265 = vadd.f32 %v1141, %v1143
      %1266 = vadd.xlane.f32.xlu0 %v1265
      %v1267 = vpop.xlane.xlu0 %1266
      %v1268 = vadd.f32 %v1145, %v1147
      %1269 = vadd.xlane.f32.xlu0 %v1268
      %v1270 = vpop.xlane.xlu0 %1269
      %v1271 = vadd.f32 %v1149, %v1151
      %1272 = vadd.xlane.f32.xlu0 %v1271
      %v1273 = vpop.xlane.xlu0 %1272
      %v1274 = vadd.f32 %v1153, %v1155
      %1275 = vadd.xlane.f32.xlu0 %v1274
      %v1276 = vpop.xlane.xlu0 %1275
      %v1277 = vadd.f32 %v1157, %v1159
      %1278 = vadd.xlane.f32.xlu0 %v1277
      %v1279 = vpop.xlane.xlu0 %1278
      %v1280 = vadd.f32 %v1161, %v1163
      %1281 = vadd.xlane.f32.xlu0 %v1280
      %v1282 = vpop.xlane.xlu0 %1281
      %v1283 = vadd.f32 %v1165, %v1167
      %1284 = vadd.xlane.f32.xlu0 %v1283
      %v1285 = vpop.xlane.xlu0 %1284
      %v1286 = vadd.f32 %v1169, %v1171
      %1287 = vadd.xlane.f32.xlu0 %v1286
      %v1288 = vpop.xlane.xlu0 %1287
      %v1289 = vadd.f32 %v1173, %v1175
      %1290 = vadd.xlane.f32.xlu0 %v1289
      %v1291 = vpop.xlane.xlu0 %1290
      %v1292 = vadd.f32 %v1177, %v1179
      %1293 = vadd.xlane.f32.xlu0 %v1292
      %v1294 = vpop.xlane.xlu0 %1293
      %v1295 = vadd.f32 %v1181, %v1183
      %1296 = vadd.xlane.f32.xlu0 %v1295
      %v1297 = vpop.xlane.xlu0 %1296
      %v1298 = vadd.f32 %v1185, %v1187
      %1299 = vadd.xlane.f32.xlu0 %v1298
      %v1300 = vpop.xlane.xlu0 %1299
      %v1301 = vadd.f32 %v1189, %v1191
      %1302 = vadd.xlane.f32.xlu0 %v1301
      %v1303 = vpop.xlane.xlu0 %1302
      %v1304 = vadd.f32 %v1193, %v1195
      %1305 = vadd.xlane.f32.xlu0 %v1304
      %v1306 = vpop.xlane.xlu0 %1305
      %v1307 = vadd.f32 %v1197, %v1199
      %1308 = vadd.xlane.f32.xlu0 %v1307
      %v1309 = vpop.xlane.xlu0 %1308
      %v1310 = vadd.f32 %v1201, %v1203
      %1311 = vadd.xlane.f32.xlu0 %v1310
      %v1312 = vpop.xlane.xlu0 %1311
      %v1313 = vadd.f32 %v1205, %v1207
      %1314 = vadd.xlane.f32.xlu0 %v1313
      %v1315 = vpop.xlane.xlu0 %1314
      %v1316 = vadd.f32 %v1209, %v1211
      %1317 = vadd.xlane.f32.xlu0 %v1316
      %v1318 = vpop.xlane.xlu0 %1317
      %v1319 = vadd.f32 %v1213, %v1215
      %1320 = vadd.xlane.f32.xlu0 %v1319
      %v1321 = vpop.xlane.xlu0 %1320
      %v1322 = vadd.f32 %v1217, %v1219
      %1323 = vadd.xlane.f32.xlu0 %v1322
      %v1324 = vpop.xlane.xlu0 %1323
      %v1325 = vadd.f32 %v1221, %v1223
      %1326 = vadd.xlane.f32.xlu0 %v1325
      %v1327 = vpop.xlane.xlu0 %1326
      %v1328 = vadd.f32 %v1225, %v1227
      %1329 = vadd.xlane.f32.xlu0 %v1328
      %v1330 = vpop.xlane.xlu0 %1329
      %v1331 = vadd.f32 %v1229, %v1231
      %1332 = vadd.xlane.f32.xlu0 %v1331
      %v1333 = vpop.xlane.xlu0 %1332
      %v1334 = vadd.f32 %v1233, %v1235
      %1335 = vadd.xlane.f32.xlu0 %v1334
      %v1336 = vpop.xlane.xlu0 %1335
      %v1337 = vadd.f32 %v1237, %v1239
      %1338 = vadd.xlane.f32.xlu0 %v1337
      %v1339 = vpop.xlane.xlu0 %1338
      %v1340 = vadd.f32 %v1241, %v1243
      %1341 = vadd.xlane.f32.xlu0 %v1340
      %v1342 = vpop.xlane.xlu0 %1341
      %v1343 = vadd.f32 %v1245, %v1247
      %1344 = vadd.xlane.f32.xlu0 %v1343
      %v1345 = vpop.xlane.xlu0 %1344
      %v1346 = vadd.f32 %v1249, %v1251
      %1347 = vadd.xlane.f32.xlu0 %v1346
      %v1348 = vpop.xlane.xlu0 %1347
      %v1349 = vadd.f32 %v1253, %v1255
      %1350 = vadd.xlane.f32.xlu0 %v1349
      %v1351 = vpop.xlane.xlu0 %1350
      %v1352 = vrcp.pop %v1258
      %v1353 = vrcp.pop %v1261
      %v1354 = vrcp.pop %v1264
      %v1355 = vrcp.pop %v1267
      %v1356 = vrcp.pop %v1270
      %v1357 = vrcp.pop %v1273
      %v1358 = vrcp.pop %v1276
      %v1359 = vrcp.pop %v1279
      %v1360 = vrcp.pop %v1282
      %v1361 = vrcp.pop %v1285
      %v1362 = vrcp.pop %v1288
      %v1363 = vrcp.pop %v1291
      %v1364 = vrcp.pop %v1294
      %v1365 = vrcp.pop %v1297
      %v1366 = vrcp.pop %v1300
      %v1367 = vrcp.pop %v1303
      %v1368 = vrcp.pop %v1306
      %v1369 = vrcp.pop %v1309
      %v1370 = vrcp.pop %v1312
      %v1371 = vrcp.pop %v1315
      %v1372 = vrcp.pop %v1318
      %v1373 = vrcp.pop %v1321
      %v1374 = vrcp.pop %v1324
      %v1375 = vrcp.pop %v1327
      %v1376 = vrcp.pop %v1330
      %v1377 = vrcp.pop %v1333
      %v1378 = vrcp.pop %v1336
      %v1379 = vrcp.pop %v1339
      %v1380 = vrcp.pop %v1342
      %v1381 = vrcp.pop %v1345
      %v1382 = vrcp.pop %v1348
      %v1383 = vrcp.pop %v1351
      %v1384 = vmul.f32 %v1129, %v1352
      %v1385 = vmul.f32 %v1131, %v1352
      %v1386 = vmul.f32 %v1133, %v1353
      %v1387 = vmul.f32 %v1135, %v1353
      %v1388 = vmul.f32 %v1137, %v1354
      %v1389 = vmul.f32 %v1139, %v1354
      %v1390 = vmul.f32 %v1141, %v1355
      %v1391 = vmul.f32 %v1143, %v1355
      %v1392 = vmul.f32 %v1145, %v1356
      %v1393 = vmul.f32 %v1147, %v1356
      %v1394 = vmul.f32 %v1149, %v1357
      %v1395 = vmul.f32 %v1151, %v1357
      %v1396 = vmul.f32 %v1153, %v1358
      %v1397 = vmul.f32 %v1155, %v1358
      %v1398 = vmul.f32 %v1157, %v1359
      %v1399 = vmul.f32 %v1159, %v1359
      %v1400 = vmul.f32 %v1161, %v1360
      %v1401 = vmul.f32 %v1163, %v1360
      %v1402 = vmul.f32 %v1165, %v1361
      %v1403 = vmul.f32 %v1167, %v1361
      %v1404 = vmul.f32 %v1169, %v1362
      %v1405 = vmul.f32 %v1171, %v1362
      %v1406 = vmul.f32 %v1173, %v1363
      %v1407 = vmul.f32 %v1175, %v1363
      %v1408 = vmul.f32 %v1177, %v1364
      %v1409 = vmul.f32 %v1179, %v1364
      %v1410 = vmul.f32 %v1181, %v1365
      %v1411 = vmul.f32 %v1183, %v1365
      %v1412 = vmul.f32 %v1185, %v1366
      %v1413 = vmul.f32 %v1187, %v1366
      %v1414 = vmul.f32 %v1189, %v1367
      %v1415 = vmul.f32 %v1191, %v1367
      %v1416 = vmul.f32 %v1193, %v1368
      %v1417 = vmul.f32 %v1195, %v1368
      %v1418 = vmul.f32 %v1197, %v1369
      %v1419 = vmul.f32 %v1199, %v1369
      %v1420 = vmul.f32 %v1201, %v1370
      %v1421 = vmul.f32 %v1203, %v1370
      %v1422 = vmul.f32 %v1205, %v1371
      %v1423 = vmul.f32 %v1207, %v1371
      %v1424 = vmul.f32 %v1209, %v1372
      %v1425 = vmul.f32 %v1211, %v1372
      %v1426 = vmul.f32 %v1213, %v1373
      %v1427 = vmul.f32 %v1215, %v1373
      %v1428 = vmul.f32 %v1217, %v1374
      %v1429 = vmul.f32 %v1219, %v1374
      %v1430 = vmul.f32 %v1221, %v1375
      %v1431 = vmul.f32 %v1223, %v1375
      %v1432 = vmul.f32 %v1225, %v1376
      %v1433 = vmul.f32 %v1227, %v1376
      %v1434 = vmul.f32 %v1229, %v1377
      %v1435 = vmul.f32 %v1231, %v1377
      %v1436 = vmul.f32 %v1233, %v1378
      %v1437 = vmul.f32 %v1235, %v1378
      %v1438 = vmul.f32 %v1237, %v1379
      %v1439 = vmul.f32 %v1239, %v1379
      %v1440 = vmul.f32 %v1241, %v1380
      %v1441 = vmul.f32 %v1243, %v1380
      %v1442 = vmul.f32 %v1245, %v1381
      %v1443 = vmul.f32 %v1247, %v1381
      %v1444 = vmul.f32 %v1249, %v1382
      %v1445 = vmul.f32 %v1251, %v1382
      %v1446 = vmul.f32 %v1253, %v1383
      %v1447 = vmul.f32 %v1255, %v1383
      %v1448 = vpack.c.bf16 %v1386, %v1384
      %v1449 = vpack.c.bf16 %v1387, %v1385
      %v1450 = vpack.c.bf16 %v1390, %v1388
      %v1451 = vpack.c.bf16 %v1391, %v1389
      %v1452 = vpack.c.bf16 %v1394, %v1392
      %v1453 = vpack.c.bf16 %v1395, %v1393
      %v1454 = vpack.c.bf16 %v1398, %v1396
      %v1455 = vpack.c.bf16 %v1399, %v1397
      %v1456 = vpack.c.bf16 %v1402, %v1400
      %v1457 = vpack.c.bf16 %v1403, %v1401
      %v1458 = vpack.c.bf16 %v1406, %v1404
      %v1459 = vpack.c.bf16 %v1407, %v1405
      %v1460 = vpack.c.bf16 %v1410, %v1408
      %v1461 = vpack.c.bf16 %v1411, %v1409
      %v1462 = vpack.c.bf16 %v1414, %v1412
      %v1463 = vpack.c.bf16 %v1415, %v1413
      %v1464 = vpack.c.bf16 %v1418, %v1416
      %v1465 = vpack.c.bf16 %v1419, %v1417
      %v1466 = vpack.c.bf16 %v1422, %v1420
      %v1467 = vpack.c.bf16 %v1423, %v1421
      %v1468 = vpack.c.bf16 %v1426, %v1424
      %v1469 = vpack.c.bf16 %v1427, %v1425
      %v1470 = vpack.c.bf16 %v1430, %v1428
      %v1471 = vpack.c.bf16 %v1431, %v1429
      %v1472 = vpack.c.bf16 %v1434, %v1432
      %v1473 = vpack.c.bf16 %v1435, %v1433
      %v1474 = vpack.c.bf16 %v1438, %v1436
      %v1475 = vpack.c.bf16 %v1439, %v1437
      %v1476 = vpack.c.bf16 %v1442, %v1440
      %v1477 = vpack.c.bf16 %v1443, %v1441
      %v1478 = vpack.c.bf16 %v1446, %v1444
      %v1479 = vpack.c.bf16 %v1447, %v1445
      %1480 = vmatprep.subr.bf16.mxu0 %v1449
      %1481 = vmatpush1.bf16.xpose.msra.mxu0 %v1448
      %1482 = vmatprep.subr.bf16.mxu0 %v1451
      %1483 = vmatpush1.bf16.xpose.msra.mxu0 %v1450
      %1484 = vmatprep.subr.bf16.mxu0 %v1453
      %1485 = vmatpush1.bf16.xpose.msra.mxu0 %v1452
      %1486 = vmatprep.subr.bf16.mxu0 %v1455
      %1487 = vmatpush1.bf16.xpose.msra.mxu0 %v1454
      %1488 = vmatprep.subr.bf16.mxu0 %v1457
      %1489 = vmatpush1.bf16.xpose.msra.mxu0 %v1456
      %1490 = vmatprep.subr.bf16.mxu0 %v1459
      %1491 = vmatpush1.bf16.xpose.msra.mxu0 %v1458
      %1492 = vmatprep.subr.bf16.mxu0 %v1461
      %1493 = vmatpush1.bf16.xpose.msra.mxu0 %v1460
      %1494 = vmatprep.subr.bf16.mxu0 %v1463
      %1495 = vmatpush1.bf16.xpose.msra.mxu0 %v1462
      %1496 = vmatprep.subr.bf16.mxu0 %v1465
      %1497 = vmatpush1.bf16.xpose.msra.mxu0 %v1464
      %1498 = vmatprep.subr.bf16.mxu0 %v1467
      %1499 = vmatpush1.bf16.xpose.msra.mxu0 %v1466
      %1500 = vmatprep.subr.bf16.mxu0 %v1469
      %1501 = vmatpush1.bf16.xpose.msra.mxu0 %v1468
      %1502 = vmatprep.subr.bf16.mxu0 %v1471
      %1503 = vmatpush1.bf16.xpose.msra.mxu0 %v1470
      %1504 = vmatprep.subr.bf16.mxu0 %v1473
      %1505 = vmatpush1.bf16.xpose.msra.mxu0 %v1472
      %1506 = vmatprep.subr.bf16.mxu0 %v1475
      %1507 = vmatpush1.bf16.xpose.msra.mxu0 %v1474
      %1508 = vmatprep.subr.bf16.mxu0 %v1477
      %1509 = vmatpush1.bf16.xpose.msra.mxu0 %v1476
      %1510 = vmatprep.subr.bf16.mxu0 %v1479
      %1511 = vmatpush1.bf16.xpose.msra.mxu0 %v1478
      %1512 = vmatprep.mubr.bf16.mxu0 %v622
      %1513 = vmatmul.mubr.bf16.gmra.mrb[0].mxu0 %v621
      %v1514 = vpop.f32.mrb[0].mxu0
      %v1515 = vadd.f32 0.0, %v1514
      %v1516 = vpop.f32.mrb[0].mxu0
      %v1517 = vadd.f32 0.0, %v1516
      %v1518 = vpop.f32.mrb[0].mxu0
      %v1519 = vpop.f32.mrb[0].mxu0
      %1520 = vdwg.mxu0
      %s1521 = scalar_lea.vmem %s3, 512
      %v1522 = vld [vmem:[%s1521] sm:$0xff]
      %v1523 = vld [vmem:[%s1521 + $0x8] sm:$0xff]
      %v1524 = vld [vmem:[%s1521 + $0x10] sm:$0xff]
      %v1525 = vld [vmem:[%s1521 + $0x18] sm:$0xff]
      %v1526 = vld [vmem:[%s1521 + $0x20] sm:$0xff]
      %v1527 = vld [vmem:[%s1521 + $0x28] sm:$0xff]
      %v1528 = vld [vmem:[%s1521 + $0x30] sm:$0xff]
      %v1529 = vld [vmem:[%s1521 + $0x38] sm:$0xff]
      %v1530 = vld [vmem:[%s1521 + $0x40] sm:$0xff]
      %v1531 = vld [vmem:[%s1521 + $0x48] sm:$0xff]
      %v1532 = vld [vmem:[%s1521 + $0x50] sm:$0xff]
      %v1533 = vld [vmem:[%s1521 + $0x58] sm:$0xff]
      %v1534 = vld [vmem:[%s1521 + $0x60] sm:$0xff]
      %v1535 = vld [vmem:[%s1521 + $0x68] sm:$0xff]
      %v1536 = vld [vmem:[%s1521 + $0x70] sm:$0xff]
      %v1537 = vld [vmem:[%s1521 + $0x78] sm:$0xff]
      %v1538 = vld [vmem:[%s1521 + $0x80] sm:$0xff]
      %v1539 = vld [vmem:[%s1521 + $0x88] sm:$0xff]
      %v1540 = vld [vmem:[%s1521 + $0x90] sm:$0xff]
      %v1541 = vld [vmem:[%s1521 + $0x98] sm:$0xff]
      %v1542 = vld [vmem:[%s1521 + $0xa0] sm:$0xff]
      %v1543 = vld [vmem:[%s1521 + $0xa8] sm:$0xff]
      %v1544 = vld [vmem:[%s1521 + $0xb0] sm:$0xff]
      %v1545 = vld [vmem:[%s1521 + $0xb8] sm:$0xff]
      %v1546 = vld [vmem:[%s1521 + $0xc0] sm:$0xff]
      %v1547 = vld [vmem:[%s1521 + $0xc8] sm:$0xff]
      %v1548 = vld [vmem:[%s1521 + $0xd0] sm:$0xff]
      %v1549 = vld [vmem:[%s1521 + $0xd8] sm:$0xff]
      %v1550 = vld [vmem:[%s1521 + $0xe0] sm:$0xff]
      %v1551 = vld [vmem:[%s1521 + $0xe8] sm:$0xff]
      %v1552 = vld [vmem:[%s1521 + $0xf0] sm:$0xff]
      %v1553 = vld [vmem:[%s1521 + $0xf8] sm:$0xff]
      %v1554 = vld [vmem:[%s1521 + $0x100] sm:$0xff]
      %v1555 = vld [vmem:[%s1521 + $0x108] sm:$0xff]
      %v1556 = vld [vmem:[%s1521 + $0x110] sm:$0xff]
      %v1557 = vld [vmem:[%s1521 + $0x118] sm:$0xff]
      %v1558 = vld [vmem:[%s1521 + $0x120] sm:$0xff]
      %v1559 = vld [vmem:[%s1521 + $0x128] sm:$0xff]
      %v1560 = vld [vmem:[%s1521 + $0x130] sm:$0xff]
      %v1561 = vld [vmem:[%s1521 + $0x138] sm:$0xff]
      %v1562 = vld [vmem:[%s1521 + $0x140] sm:$0xff]
      %v1563 = vld [vmem:[%s1521 + $0x148] sm:$0xff]
      %v1564 = vld [vmem:[%s1521 + $0x150] sm:$0xff]
      %v1565 = vld [vmem:[%s1521 + $0x158] sm:$0xff]
      %v1566 = vld [vmem:[%s1521 + $0x160] sm:$0xff]
      %v1567 = vld [vmem:[%s1521 + $0x168] sm:$0xff]
      %v1568 = vld [vmem:[%s1521 + $0x170] sm:$0xff]
      %v1569 = vld [vmem:[%s1521 + $0x178] sm:$0xff]
      %v1570 = vld [vmem:[%s1521 + $0x180] sm:$0xff]
      %v1571 = vld [vmem:[%s1521 + $0x188] sm:$0xff]
      %v1572 = vld [vmem:[%s1521 + $0x190] sm:$0xff]
      %v1573 = vld [vmem:[%s1521 + $0x198] sm:$0xff]
      %v1574 = vld [vmem:[%s1521 + $0x1a0] sm:$0xff]
      %v1575 = vld [vmem:[%s1521 + $0x1a8] sm:$0xff]
      %v1576 = vld [vmem:[%s1521 + $0x1b0] sm:$0xff]
      %v1577 = vld [vmem:[%s1521 + $0x1b8] sm:$0xff]
      %v1578 = vld [vmem:[%s1521 + $0x1c0] sm:$0xff]
      %v1579 = vld [vmem:[%s1521 + $0x1c8] sm:$0xff]
      %v1580 = vld [vmem:[%s1521 + $0x1d0] sm:$0xff]
      %v1581 = vld [vmem:[%s1521 + $0x1d8] sm:$0xff]
      %v1582 = vld [vmem:[%s1521 + $0x1e0] sm:$0xff]
      %v1583 = vld [vmem:[%s1521 + $0x1e8] sm:$0xff]
      %v1584 = vld [vmem:[%s1521 + $0x1f0] sm:$0xff]
      %v1585 = vld [vmem:[%s1521 + $0x1f8] sm:$0xff]
      %v1588 = vrot.slane %v617, 1
      %v1589 = vrot.slane %v618, 1
      %1592 = vxpose.xlu0.c.b16.start [1/8] %v1588, 128
      %1593 = vxpose.xlu0.c.b16.cont [2/8] 0, 128
      %1594 = vxpose.xlu0.c.b16.cont [3/8] 0, 128
      %1595 = vxpose.xlu0.c.b16.cont [4/8] 0, 128
      %1596 = vxpose.xlu0.c.b16.cont [5/8] 0, 128
      %1597 = vxpose.xlu0.c.b16.cont [6/8] 0, 128
      %1598 = vxpose.xlu0.c.b16.cont [7/8] 0, 128
      %1599 = vxpose.xlu0.c.b16.end [8/8] 0, 128
      %v1600 = vpop.trf.xlu0
      %v1601 = vpop.trf.xlu0
      %v1602 = vpop.trf.xlu0
      %v1603 = vpop.trf.xlu0
      %v1604 = vpop.trf.xlu0
      %v1605 = vpop.trf.xlu0
      %v1606 = vpop.trf.xlu0
      %v1607 = vpop.trf.xlu0
      %1608 = vxpose.xlu0.c.b16.start [1/8] %v1589, 128
      %1609 = vxpose.xlu0.c.b16.cont [2/8] 0, 128
      %1610 = vxpose.xlu0.c.b16.cont [3/8] 0, 128
      %1611 = vxpose.xlu0.c.b16.cont [4/8] 0, 128
      %1612 = vxpose.xlu0.c.b16.cont [5/8] 0, 128
      %1613 = vxpose.xlu0.c.b16.cont [6/8] 0, 128
      %1614 = vxpose.xlu0.c.b16.cont [7/8] 0, 128
      %1615 = vxpose.xlu0.c.b16.end [8/8] 0, 128
      %v1616 = vpop.trf.xlu0
      %v1617 = vpop.trf.xlu0
      %v1618 = vpop.trf.xlu0
      %v1619 = vpop.trf.xlu0
      %v1620 = vpop.trf.xlu0
      %v1621 = vpop.trf.xlu0
      %v1622 = vpop.trf.xlu0
      %v1623 = vpop.trf.xlu0
      %v1626 = vrot.slane %v619, 1
      %v1627 = vrot.slane %v620, 1
      %v1629 = vsel %vm719, %v1600, 0
      %v1632 = vsel %vm719, %v1601, 0
      %v1635 = vsel %vm719, %v1602, 0
      %v1638 = vsel %vm719, %v1603, 0
      %v1641 = vsel %vm719, %v1604, 0
      %v1644 = vsel %vm719, %v1605, 0
      %v1647 = vsel %vm719, %v1606, 0
      %v1650 = vsel %vm719, %v1607, 0
      %v1653 = vsel %vm719, %v1616, 0
      %v1656 = vsel %vm719, %v1617, 0
      %v1659 = vsel %vm719, %v1618, 0
      %v1662 = vsel %vm719, %v1619, 0
      %v1665 = vsel %vm719, %v1620, 0
      %v1668 = vsel %vm719, %v1621, 0
      %v1671 = vsel %vm719, %v1622, 0
      %v1674 = vsel %vm719, %v1623, 0
      %v1677 = vsel %vm768, %v1626, 0
      %v1680 = vsel %vm768, %v1627, 0
      %1682 = vmatprep.subr.bf16.mxu0 %v1680
      %1683 = vmatpush1.bf16.msra.mxu0 %v1677
      %1684 = vmatprep.subr.bf16.mxu0 0
      %1685 = vmatpush1.bf16.msra.mxu0 0
      %1686 = vmatprep.subr.bf16.mxu0 0
      %1687 = vmatpush1.bf16.msra.mxu0 0
      %1688 = vmatprep.subr.bf16.mxu0 0
      %1689 = vmatpush1.bf16.msra.mxu0 0
      %1690 = vmatprep.subr.bf16.mxu0 0
      %1691 = vmatpush1.bf16.msra.mxu0 0
      %1692 = vmatprep.subr.bf16.mxu0 0
      %1693 = vmatpush1.bf16.msra.mxu0 0
      %1694 = vmatprep.subr.bf16.mxu0 0
      %1695 = vmatpush1.bf16.msra.mxu0 0
      %1696 = vmatprep.subr.bf16.mxu0 0
      %1697 = vmatpush1.bf16.msra.mxu0 0
      %1698 = vmatprep.subr.bf16.mxu0 0
      %1699 = vmatpush1.bf16.msra.mxu0 0
      %1700 = vmatprep.subr.bf16.mxu0 0
      %1701 = vmatpush1.bf16.msra.mxu0 0
      %1702 = vmatprep.subr.bf16.mxu0 0
      %1703 = vmatpush1.bf16.msra.mxu0 0
      %1704 = vmatprep.subr.bf16.mxu0 0
      %1705 = vmatpush1.bf16.msra.mxu0 0
      %1706 = vmatprep.subr.bf16.mxu0 0
      %1707 = vmatpush1.bf16.msra.mxu0 0
      %1708 = vmatprep.subr.bf16.mxu0 0
      %1709 = vmatpush1.bf16.msra.mxu0 0
      %1710 = vmatprep.subr.bf16.mxu0 0
      %1711 = vmatpush1.bf16.msra.mxu0 0
      %1712 = vmatprep.subr.bf16.mxu0 0
      %1713 = vmatpush1.bf16.msra.mxu0 0
      %1714 = vmatprep.mubr.bf16.mxu0 0
      %1715 = vmatmul.mubr.bf16.gmra.mrb[0].mxu0 %v1629
      %v1716 = vpop.f32.mrb[0].mxu0
      %v1717 = vadd.f32 %v1522, %v1716
      %v1718 = vpop.f32.mrb[0].mxu0
      %v1719 = vadd.f32 %v1523, %v1718
      %v1720 = vpop.f32.mrb[0].mxu0
      %v1721 = vadd.f32 %v1524, %v1720
      %v1722 = vpop.f32.mrb[0].mxu0
      %v1723 = vadd.f32 %v1525, %v1722
      %1724 = vmatprep.mubr.bf16.mxu0 0
      %1725 = vmatmul.mubr.bf16.gmra.mrb[0].mxu0 %v1632
      %v1726 = vpop.f32.mrb[0].mxu0
      %v1727 = vadd.f32 %v1526, %v1726
      %v1728 = vpop.f32.mrb[0].mxu0
      %v1729 = vadd.f32 %v1527, %v1728
      %v1730 = vpop.f32.mrb[0].mxu0
      %v1731 = vadd.f32 %v1528, %v1730
      %v1732 = vpop.f32.mrb[0].mxu0
      %v1733 = vadd.f32 %v1529, %v1732
      %1734 = vmatprep.mubr.bf16.mxu0 0
      %1735 = vmatmul.mubr.bf16.gmra.mrb[0].mxu0 %v1635
      %v1736 = vpop.f32.mrb[0].mxu0
      %v1737 = vadd.f32 %v1530, %v1736
      %v1738 = vpop.f32.mrb[0].mxu0
      %v1739 = vadd.f32 %v1531, %v1738
      %v1740 = vpop.f32.mrb[0].mxu0
      %v1741 = vadd.f32 %v1532, %v1740
      %v1742 = vpop.f32.mrb[0].mxu0
      %v1743 = vadd.f32 %v1533, %v1742
      %1744 = vmatprep.mubr.bf16.mxu0 0
      %1745 = vmatmul.mubr.bf16.gmra.mrb[0].mxu0 %v1638
      %v1746 = vpop.f32.mrb[0].mxu0
      %v1747 = vadd.f32 %v1534, %v1746
      %v1748 = vpop.f32.mrb[0].mxu0
      %v1749 = vadd.f32 %v1535, %v1748
      %v1750 = vpop.f32.mrb[0].mxu0
      %v1751 = vadd.f32 %v1536, %v1750
      %v1752 = vpop.f32.mrb[0].mxu0
      %v1753 = vadd.f32 %v1537, %v1752
      %1754 = vmatprep.mubr.bf16.mxu0 0
      %1755 = vmatmul.mubr.bf16.gmra.mrb[0].mxu0 %v1641
      %v1756 = vpop.f32.mrb[0].mxu0
      %v1757 = vadd.f32 %v1538, %v1756
      %v1758 = vpop.f32.mrb[0].mxu0
      %v1759 = vadd.f32 %v1539, %v1758
      %v1760 = vpop.f32.mrb[0].mxu0
      %v1761 = vadd.f32 %v1540, %v1760
      %v1762 = vpop.f32.mrb[0].mxu0
      %v1763 = vadd.f32 %v1541, %v1762
      %1764 = vmatprep.mubr.bf16.mxu0 0
      %1765 = vmatmul.mubr.bf16.gmra.mrb[0].mxu0 %v1644
      %v1766 = vpop.f32.mrb[0].mxu0
      %v1767 = vadd.f32 %v1542, %v1766
      %v1768 = vpop.f32.mrb[0].mxu0
      %v1769 = vadd.f32 %v1543, %v1768
      %v1770 = vpop.f32.mrb[0].mxu0
      %v1771 = vadd.f32 %v1544, %v1770
      %v1772 = vpop.f32.mrb[0].mxu0
      %v1773 = vadd.f32 %v1545, %v1772
      %1774 = vmatprep.mubr.bf16.mxu0 0
      %1775 = vmatmul.mubr.bf16.gmra.mrb[0].mxu0 %v1647
      %v1776 = vpop.f32.mrb[0].mxu0
      %v1777 = vadd.f32 %v1546, %v1776
      %v1778 = vpop.f32.mrb[0].mxu0
      %v1779 = vadd.f32 %v1547, %v1778
      %v1780 = vpop.f32.mrb[0].mxu0
      %v1781 = vadd.f32 %v1548, %v1780
      %v1782 = vpop.f32.mrb[0].mxu0
      %v1783 = vadd.f32 %v1549, %v1782
      %1784 = vmatprep.mubr.bf16.mxu0 0
      %1785 = vmatmul.mubr.bf16.gmra.mrb[0].mxu0 %v1650
      %v1786 = vpop.f32.mrb[0].mxu0
      %v1787 = vadd.f32 %v1550, %v1786
      %v1788 = vpop.f32.mrb[0].mxu0
      %v1789 = vadd.f32 %v1551, %v1788
      %v1790 = vpop.f32.mrb[0].mxu0
      %v1791 = vadd.f32 %v1552, %v1790
      %v1792 = vpop.f32.mrb[0].mxu0
      %v1793 = vadd.f32 %v1553, %v1792
      %1794 = vmatprep.mubr.bf16.mxu0 0
      %1795 = vmatmul.mubr.bf16.gmra.mrb[0].mxu0 %v1653
      %v1796 = vpop.f32.mrb[0].mxu0
      %v1797 = vadd.f32 %v1554, %v1796
      %v1798 = vpop.f32.mrb[0].mxu0
      %v1799 = vadd.f32 %v1555, %v1798
      %v1800 = vpop.f32.mrb[0].mxu0
      %v1801 = vadd.f32 %v1556, %v1800
      %v1802 = vpop.f32.mrb[0].mxu0
      %v1803 = vadd.f32 %v1557, %v1802
      %1804 = vmatprep.mubr.bf16.mxu0 0
      %1805 = vmatmul.mubr.bf16.gmra.mrb[0].mxu0 %v1656
      %v1806 = vpop.f32.mrb[0].mxu0
      %v1807 = vadd.f32 %v1558, %v1806
      %v1808 = vpop.f32.mrb[0].mxu0
      %v1809 = vadd.f32 %v1559, %v1808
      %v1810 = vpop.f32.mrb[0].mxu0
      %v1811 = vadd.f32 %v1560, %v1810
      %v1812 = vpop.f32.mrb[0].mxu0
      %v1813 = vadd.f32 %v1561, %v1812
      %1814 = vmatprep.mubr.bf16.mxu0 0
      %1815 = vmatmul.mubr.bf16.gmra.mrb[0].mxu0 %v1659
      %v1816 = vpop.f32.mrb[0].mxu0
      %v1817 = vadd.f32 %v1562, %v1816
      %v1818 = vpop.f32.mrb[0].mxu0
      %v1819 = vadd.f32 %v1563, %v1818
      %v1820 = vpop.f32.mrb[0].mxu0
      %v1821 = vadd.f32 %v1564, %v1820
      %v1822 = vpop.f32.mrb[0].mxu0
      %v1823 = vadd.f32 %v1565, %v1822
      %1824 = vmatprep.mubr.bf16.mxu0 0
      %1825 = vmatmul.mubr.bf16.gmra.mrb[0].mxu0 %v1662
      %v1826 = vpop.f32.mrb[0].mxu0
      %v1827 = vadd.f32 %v1566, %v1826
      %v1828 = vpop.f32.mrb[0].mxu0
      %v1829 = vadd.f32 %v1567, %v1828
      %v1830 = vpop.f32.mrb[0].mxu0
      %v1831 = vadd.f32 %v1568, %v1830
      %v1832 = vpop.f32.mrb[0].mxu0
      %v1833 = vadd.f32 %v1569, %v1832
      %1834 = vmatprep.mubr.bf16.mxu0 0
      %1835 = vmatmul.mubr.bf16.gmra.mrb[0].mxu0 %v1665
      %v1836 = vpop.f32.mrb[0].mxu0
      %v1837 = vadd.f32 %v1570, %v1836
      %v1838 = vpop.f32.mrb[0].mxu0
      %v1839 = vadd.f32 %v1571, %v1838
      %v1840 = vpop.f32.mrb[0].mxu0
      %v1841 = vadd.f32 %v1572, %v1840
      %v1842 = vpop.f32.mrb[0].mxu0
      %v1843 = vadd.f32 %v1573, %v1842
      %1844 = vmatprep.mubr.bf16.mxu0 0
      %1845 = vmatmul.mubr.bf16.gmra.mrb[0].mxu0 %v1668
      %v1846 = vpop.f32.mrb[0].mxu0
      %v1847 = vadd.f32 %v1574, %v1846
      %v1848 = vpop.f32.mrb[0].mxu0
      %v1849 = vadd.f32 %v1575, %v1848
      %v1850 = vpop.f32.mrb[0].mxu0
      %v1851 = vadd.f32 %v1576, %v1850
      %v1852 = vpop.f32.mrb[0].mxu0
      %v1853 = vadd.f32 %v1577, %v1852
      %1854 = vmatprep.mubr.bf16.mxu0 0
      %1855 = vmatmul.mubr.bf16.gmra.mrb[0].mxu0 %v1671
      %v1856 = vpop.f32.mrb[0].mxu0
      %v1857 = vadd.f32 %v1578, %v1856
      %v1858 = vpop.f32.mrb[0].mxu0
      %v1859 = vadd.f32 %v1579, %v1858
      %v1860 = vpop.f32.mrb[0].mxu0
      %v1861 = vadd.f32 %v1580, %v1860
      %v1862 = vpop.f32.mrb[0].mxu0
      %v1863 = vadd.f32 %v1581, %v1862
      %1864 = vmatprep.mubr.bf16.mxu0 0
      %1865 = vmatmul.mubr.bf16.gmra.mrb[0].mxu0 %v1674
      %v1866 = vpop.f32.mrb[0].mxu0
      %v1867 = vadd.f32 %v1582, %v1866
      %v1868 = vpop.f32.mrb[0].mxu0
      %v1869 = vadd.f32 %v1583, %v1868
      %v1870 = vpop.f32.mrb[0].mxu0
      %v1871 = vadd.f32 %v1584, %v1870
      %v1872 = vpop.f32.mrb[0].mxu0
      %v1873 = vadd.f32 %v1585, %v1872
      %1874 = vdwg.mxu0
      %v1875 = vmax.f32 %v1717, %v1719
      %1876 = vmax.xlane.f32.xlu0 %v1875
      %v1877 = vpop.xlane.xlu0 %1876
      %v1878 = vmax.f32 %v1721, %v1723
      %1879 = vmax.xlane.f32.xlu0 %v1878
      %v1880 = vpop.xlane.xlu0 %1879
      %v1881 = vmax.f32 %v1727, %v1729
      %1882 = vmax.xlane.f32.xlu0 %v1881
      %v1883 = vpop.xlane.xlu0 %1882
      %v1884 = vmax.f32 %v1731, %v1733
      %1885 = vmax.xlane.f32.xlu0 %v1884
      %v1886 = vpop.xlane.xlu0 %1885
      %v1887 = vmax.f32 %v1737, %v1739
      %1888 = vmax.xlane.f32.xlu0 %v1887
      %v1889 = vpop.xlane.xlu0 %1888
      %v1890 = vmax.f32 %v1741, %v1743
      %1891 = vmax.xlane.f32.xlu0 %v1890
      %v1892 = vpop.xlane.xlu0 %1891
      %v1893 = vmax.f32 %v1747, %v1749
      %1894 = vmax.xlane.f32.xlu0 %v1893
      %v1895 = vpop.xlane.xlu0 %1894
      %v1896 = vmax.f32 %v1751, %v1753
      %1897 = vmax.xlane.f32.xlu0 %v1896
      %v1898 = vpop.xlane.xlu0 %1897
      %v1899 = vmax.f32 %v1757, %v1759
      %1900 = vmax.xlane.f32.xlu0 %v1899
      %v1901 = vpop.xlane.xlu0 %1900
      %v1902 = vmax.f32 %v1761, %v1763
      %1903 = vmax.xlane.f32.xlu0 %v1902
      %v1904 = vpop.xlane.xlu0 %1903
      %v1905 = vmax.f32 %v1767, %v1769
      %1906 = vmax.xlane.f32.xlu0 %v1905
      %v1907 = vpop.xlane.xlu0 %1906
      %v1908 = vmax.f32 %v1771, %v1773
      %1909 = vmax.xlane.f32.xlu0 %v1908
      %v1910 = vpop.xlane.xlu0 %1909
      %v1911 = vmax.f32 %v1777, %v1779
      %1912 = vmax.xlane.f32.xlu0 %v1911
      %v1913 = vpop.xlane.xlu0 %1912
      %v1914 = vmax.f32 %v1781, %v1783
      %1915 = vmax.xlane.f32.xlu0 %v1914
      %v1916 = vpop.xlane.xlu0 %1915
      %v1917 = vmax.f32 %v1787, %v1789
      %1918 = vmax.xlane.f32.xlu0 %v1917
      %v1919 = vpop.xlane.xlu0 %1918
      %v1920 = vmax.f32 %v1791, %v1793
      %1921 = vmax.xlane.f32.xlu0 %v1920
      %v1922 = vpop.xlane.xlu0 %1921
      %v1923 = vmax.f32 %v1797, %v1799
      %1924 = vmax.xlane.f32.xlu0 %v1923
      %v1925 = vpop.xlane.xlu0 %1924
      %v1926 = vmax.f32 %v1801, %v1803
      %1927 = vmax.xlane.f32.xlu0 %v1926
      %v1928 = vpop.xlane.xlu0 %1927
      %v1929 = vmax.f32 %v1807, %v1809
      %1930 = vmax.xlane.f32.xlu0 %v1929
      %v1931 = vpop.xlane.xlu0 %1930
      %v1932 = vmax.f32 %v1811, %v1813
      %1933 = vmax.xlane.f32.xlu0 %v1932
      %v1934 = vpop.xlane.xlu0 %1933
      %v1935 = vmax.f32 %v1817, %v1819
      %1936 = vmax.xlane.f32.xlu0 %v1935
      %v1937 = vpop.xlane.xlu0 %1936
      %v1938 = vmax.f32 %v1821, %v1823
      %1939 = vmax.xlane.f32.xlu0 %v1938
      %v1940 = vpop.xlane.xlu0 %1939
      %v1941 = vmax.f32 %v1827, %v1829
      %1942 = vmax.xlane.f32.xlu0 %v1941
      %v1943 = vpop.xlane.xlu0 %1942
      %v1944 = vmax.f32 %v1831, %v1833
      %1945 = vmax.xlane.f32.xlu0 %v1944
      %v1946 = vpop.xlane.xlu0 %1945
      %v1947 = vmax.f32 %v1837, %v1839
      %1948 = vmax.xlane.f32.xlu0 %v1947
      %v1949 = vpop.xlane.xlu0 %1948
      %v1950 = vmax.f32 %v1841, %v1843
      %1951 = vmax.xlane.f32.xlu0 %v1950
      %v1952 = vpop.xlane.xlu0 %1951
      %v1953 = vmax.f32 %v1847, %v1849
      %1954 = vmax.xlane.f32.xlu0 %v1953
      %v1955 = vpop.xlane.xlu0 %1954
      %v1956 = vmax.f32 %v1851, %v1853
      %1957 = vmax.xlane.f32.xlu0 %v1956
      %v1958 = vpop.xlane.xlu0 %1957
      %v1959 = vmax.f32 %v1857, %v1859
      %1960 = vmax.xlane.f32.xlu0 %v1959
      %v1961 = vpop.xlane.xlu0 %1960
      %v1962 = vmax.f32 %v1861, %v1863
      %1963 = vmax.xlane.f32.xlu0 %v1962
      %v1964 = vpop.xlane.xlu0 %1963
      %v1965 = vmax.f32 %v1867, %v1869
      %1966 = vmax.xlane.f32.xlu0 %v1965
      %v1967 = vpop.xlane.xlu0 %1966
      %v1968 = vmax.f32 %v1871, %v1873
      %1969 = vmax.xlane.f32.xlu0 %v1968
      %v1970 = vpop.xlane.xlu0 %1969
      %v1971 = vsub.f32 %v1717, %v1877
      %v1972 = vsub.f32 %v1719, %v1877
      %v1973 = vsub.f32 %v1721, %v1880
      %v1974 = vsub.f32 %v1723, %v1880
      %v1975 = vsub.f32 %v1727, %v1883
      %v1976 = vsub.f32 %v1729, %v1883
      %v1977 = vsub.f32 %v1731, %v1886
      %v1978 = vsub.f32 %v1733, %v1886
      %v1979 = vsub.f32 %v1737, %v1889
      %v1980 = vsub.f32 %v1739, %v1889
      %v1981 = vsub.f32 %v1741, %v1892
      %v1982 = vsub.f32 %v1743, %v1892
      %v1983 = vsub.f32 %v1747, %v1895
      %v1984 = vsub.f32 %v1749, %v1895
      %v1985 = vsub.f32 %v1751, %v1898
      %v1986 = vsub.f32 %v1753, %v1898
      %v1987 = vsub.f32 %v1757, %v1901
      %v1988 = vsub.f32 %v1759, %v1901
      %v1989 = vsub.f32 %v1761, %v1904
      %v1990 = vsub.f32 %v1763, %v1904
      %v1991 = vsub.f32 %v1767, %v1907
      %v1992 = vsub.f32 %v1769, %v1907
      %v1993 = vsub.f32 %v1771, %v1910
      %v1994 = vsub.f32 %v1773, %v1910
      %v1995 = vsub.f32 %v1777, %v1913
      %v1996 = vsub.f32 %v1779, %v1913
      %v1997 = vsub.f32 %v1781, %v1916
      %v1998 = vsub.f32 %v1783, %v1916
      %v1999 = vsub.f32 %v1787, %v1919
      %v2000 = vsub.f32 %v1789, %v1919
      %v2001 = vsub.f32 %v1791, %v1922
      %v2002 = vsub.f32 %v1793, %v1922
      %v2003 = vsub.f32 %v1797, %v1925
      %v2004 = vsub.f32 %v1799, %v1925
      %v2005 = vsub.f32 %v1801, %v1928
      %v2006 = vsub.f32 %v1803, %v1928
      %v2007 = vsub.f32 %v1807, %v1931
      %v2008 = vsub.f32 %v1809, %v1931
      %v2009 = vsub.f32 %v1811, %v1934
      %v2010 = vsub.f32 %v1813, %v1934
      %v2011 = vsub.f32 %v1817, %v1937
      %v2012 = vsub.f32 %v1819, %v1937
      %v2013 = vsub.f32 %v1821, %v1940
      %v2014 = vsub.f32 %v1823, %v1940
      %v2015 = vsub.f32 %v1827, %v1943
      %v2016 = vsub.f32 %v1829, %v1943
      %v2017 = vsub.f32 %v1831, %v1946
      %v2018 = vsub.f32 %v1833, %v1946
      %v2019 = vsub.f32 %v1837, %v1949
      %v2020 = vsub.f32 %v1839, %v1949
      %v2021 = vsub.f32 %v1841, %v1952
      %v2022 = vsub.f32 %v1843, %v1952
      %v2023 = vsub.f32 %v1847, %v1955
      %v2024 = vsub.f32 %v1849, %v1955
      %v2025 = vsub.f32 %v1851, %v1958
      %v2026 = vsub.f32 %v1853, %v1958
      %v2027 = vsub.f32 %v1857, %v1961
      %v2028 = vsub.f32 %v1859, %v1961
      %v2029 = vsub.f32 %v1861, %v1964
      %v2030 = vsub.f32 %v1863, %v1964
      %v2031 = vsub.f32 %v1867, %v1967
      %v2032 = vsub.f32 %v1869, %v1967
      %v2033 = vsub.f32 %v1871, %v1970
      %v2034 = vsub.f32 %v1873, %v1970
      %v2035 = vmul.f32 %v1971, 1.442695
      %v2036 = vpow.pop %v2035
      %v2037 = vmul.f32 %v1972, 1.442695
      %v2038 = vpow.pop %v2037
      %v2039 = vmul.f32 %v1973, 1.442695
      %v2040 = vpow.pop %v2039
      %v2041 = vmul.f32 %v1974, 1.442695
      %v2042 = vpow.pop %v2041
      %v2043 = vmul.f32 %v1975, 1.442695
      %v2044 = vpow.pop %v2043
      %v2045 = vmul.f32 %v1976, 1.442695
      %v2046 = vpow.pop %v2045
      %v2047 = vmul.f32 %v1977, 1.442695
      %v2048 = vpow.pop %v2047
      %v2049 = vmul.f32 %v1978, 1.442695
      %v2050 = vpow.pop %v2049
      %v2051 = vmul.f32 %v1979, 1.442695
      %v2052 = vpow.pop %v2051
      %v2053 = vmul.f32 %v1980, 1.442695
      %v2054 = vpow.pop %v2053
      %v2055 = vmul.f32 %v1981, 1.442695
      %v2056 = vpow.pop %v2055
      %v2057 = vmul.f32 %v1982, 1.442695
      %v2058 = vpow.pop %v2057
      %v2059 = vmul.f32 %v1983, 1.442695
      %v2060 = vpow.pop %v2059
      %v2061 = vmul.f32 %v1984, 1.442695
      %v2062 = vpow.pop %v2061
      %v2063 = vmul.f32 %v1985, 1.442695
      %v2064 = vpow.pop %v2063
      %v2065 = vmul.f32 %v1986, 1.442695
      %v2066 = vpow.pop %v2065
      %v2067 = vmul.f32 %v1987, 1.442695
      %v2068 = vpow.pop %v2067
      %v2069 = vmul.f32 %v1988, 1.442695
      %v2070 = vpow.pop %v2069
      %v2071 = vmul.f32 %v1989, 1.442695
      %v2072 = vpow.pop %v2071
      %v2073 = vmul.f32 %v1990, 1.442695
      %v2074 = vpow.pop %v2073
      %v2075 = vmul.f32 %v1991, 1.442695
      %v2076 = vpow.pop %v2075
      %v2077 = vmul.f32 %v1992, 1.442695
      %v2078 = vpow.pop %v2077
      %v2079 = vmul.f32 %v1993, 1.442695
      %v2080 = vpow.pop %v2079
      %v2081 = vmul.f32 %v1994, 1.442695
      %v2082 = vpow.pop %v2081
      %v2083 = vmul.f32 %v1995, 1.442695
      %v2084 = vpow.pop %v2083
      %v2085 = vmul.f32 %v1996, 1.442695
      %v2086 = vpow.pop %v2085
      %v2087 = vmul.f32 %v1997, 1.442695
      %v2088 = vpow.pop %v2087
      %v2089 = vmul.f32 %v1998, 1.442695
      %v2090 = vpow.pop %v2089
      %v2091 = vmul.f32 %v1999, 1.442695
      %v2092 = vpow.pop %v2091
      %v2093 = vmul.f32 %v2000, 1.442695
      %v2094 = vpow.pop %v2093
      %v2095 = vmul.f32 %v2001, 1.442695
      %v2096 = vpow.pop %v2095
      %v2097 = vmul.f32 %v2002, 1.442695
      %v2098 = vpow.pop %v2097
      %v2099 = vmul.f32 %v2003, 1.442695
      %v2100 = vpow.pop %v2099
      %v2101 = vmul.f32 %v2004, 1.442695
      %v2102 = vpow.pop %v2101
      %v2103 = vmul.f32 %v2005, 1.442695
      %v2104 = vpow.pop %v2103
      %v2105 = vmul.f32 %v2006, 1.442695
      %v2106 = vpow.pop %v2105
      %v2107 = vmul.f32 %v2007, 1.442695
      %v2108 = vpow.pop %v2107
      %v2109 = vmul.f32 %v2008, 1.442695
      %v2110 = vpow.pop %v2109
      %v2111 = vmul.f32 %v2009, 1.442695
      %v2112 = vpow.pop %v2111
      %v2113 = vmul.f32 %v2010, 1.442695
      %v2114 = vpow.pop %v2113
      %v2115 = vmul.f32 %v2011, 1.442695
      %v2116 = vpow.pop %v2115
      %v2117 = vmul.f32 %v2012, 1.442695
      %v2118 = vpow.pop %v2117
      %v2119 = vmul.f32 %v2013, 1.442695
      %v2120 = vpow.pop %v2119
      %v2121 = vmul.f32 %v2014, 1.442695
      %v2122 = vpow.pop %v2121
      %v2123 = vmul.f32 %v2015, 1.442695
      %v2124 = vpow.pop %v2123
      %v2125 = vmul.f32 %v2016, 1.442695
      %v2126 = vpow.pop %v2125
      %v2127 = vmul.f32 %v2017, 1.442695
      %v2128 = vpow.pop %v2127
      %v2129 = vmul.f32 %v2018, 1.442695
      %v2130 = vpow.pop %v2129
      %v2131 = vmul.f32 %v2019, 1.442695
      %v2132 = vpow.pop %v2131
      %v2133 = vmul.f32 %v2020, 1.442695
      %v2134 = vpow.pop %v2133
      %v2135 = vmul.f32 %v2021, 1.442695
      %v2136 = vpow.pop %v2135
      %v2137 = vmul.f32 %v2022, 1.442695
      %v2138 = vpow.pop %v2137
      %v2139 = vmul.f32 %v2023, 1.442695
      %v2140 = vpow.pop %v2139
      %v2141 = vmul.f32 %v2024, 1.442695
      %v2142 = vpow.pop %v2141
      %v2143 = vmul.f32 %v2025, 1.442695
      %v2144 = vpow.pop %v2143
      %v2145 = vmul.f32 %v2026, 1.442695
      %v2146 = vpow.pop %v2145
      %v2147 = vmul.f32 %v2027, 1.442695
      %v2148 = vpow.pop %v2147
      %v2149 = vmul.f32 %v2028, 1.442695
      %v2150 = vpow.pop %v2149
      %v2151 = vmul.f32 %v2029, 1.442695
      %v2152 = vpow.pop %v2151
      %v2153 = vmul.f32 %v2030, 1.442695
      %v2154 = vpow.pop %v2153
      %v2155 = vmul.f32 %v2031, 1.442695
      %v2156 = vpow.pop %v2155
      %v2157 = vmul.f32 %v2032, 1.442695
      %v2158 = vpow.pop %v2157
      %v2159 = vmul.f32 %v2033, 1.442695
      %v2160 = vpow.pop %v2159
      %v2161 = vmul.f32 %v2034, 1.442695
      %v2162 = vpow.pop %v2161
      %v2163 = vadd.f32 %v2036, %v2038
      %2164 = vadd.xlane.f32.xlu0 %v2163
      %v2165 = vpop.xlane.xlu0 %2164
      %v2166 = vadd.f32 %v2040, %v2042
      %2167 = vadd.xlane.f32.xlu0 %v2166
      %v2168 = vpop.xlane.xlu0 %2167
      %v2169 = vadd.f32 %v2044, %v2046
      %2170 = vadd.xlane.f32.xlu0 %v2169
      %v2171 = vpop.xlane.xlu0 %2170
      %v2172 = vadd.f32 %v2048, %v2050
      %2173 = vadd.xlane.f32.xlu0 %v2172
      %v2174 = vpop.xlane.xlu0 %2173
      %v2175 = vadd.f32 %v2052, %v2054
      %2176 = vadd.xlane.f32.xlu0 %v2175
      %v2177 = vpop.xlane.xlu0 %2176
      %v2178 = vadd.f32 %v2056, %v2058
      %2179 = vadd.xlane.f32.xlu0 %v2178
      %v2180 = vpop.xlane.xlu0 %2179
      %v2181 = vadd.f32 %v2060, %v2062
      %2182 = vadd.xlane.f32.xlu0 %v2181
      %v2183 = vpop.xlane.xlu0 %2182
      %v2184 = vadd.f32 %v2064, %v2066
      %2185 = vadd.xlane.f32.xlu0 %v2184
      %v2186 = vpop.xlane.xlu0 %2185
      %v2187 = vadd.f32 %v2068, %v2070
      %2188 = vadd.xlane.f32.xlu0 %v2187
      %v2189 = vpop.xlane.xlu0 %2188
      %v2190 = vadd.f32 %v2072, %v2074
      %2191 = vadd.xlane.f32.xlu0 %v2190
      %v2192 = vpop.xlane.xlu0 %2191
      %v2193 = vadd.f32 %v2076, %v2078
      %2194 = vadd.xlane.f32.xlu0 %v2193
      %v2195 = vpop.xlane.xlu0 %2194
      %v2196 = vadd.f32 %v2080, %v2082
      %2197 = vadd.xlane.f32.xlu0 %v2196
      %v2198 = vpop.xlane.xlu0 %2197
      %v2199 = vadd.f32 %v2084, %v2086
      %2200 = vadd.xlane.f32.xlu0 %v2199
      %v2201 = vpop.xlane.xlu0 %2200
      %v2202 = vadd.f32 %v2088, %v2090
      %2203 = vadd.xlane.f32.xlu0 %v2202
      %v2204 = vpop.xlane.xlu0 %2203
      %v2205 = vadd.f32 %v2092, %v2094
      %2206 = vadd.xlane.f32.xlu0 %v2205
      %v2207 = vpop.xlane.xlu0 %2206
      %v2208 = vadd.f32 %v2096, %v2098
      %2209 = vadd.xlane.f32.xlu0 %v2208
      %v2210 = vpop.xlane.xlu0 %2209
      %v2211 = vadd.f32 %v2100, %v2102
      %2212 = vadd.xlane.f32.xlu0 %v2211
      %v2213 = vpop.xlane.xlu0 %2212
      %v2214 = vadd.f32 %v2104, %v2106
      %2215 = vadd.xlane.f32.xlu0 %v2214
      %v2216 = vpop.xlane.xlu0 %2215
      %v2217 = vadd.f32 %v2108, %v2110
      %2218 = vadd.xlane.f32.xlu0 %v2217
      %v2219 = vpop.xlane.xlu0 %2218
      %v2220 = vadd.f32 %v2112, %v2114
      %2221 = vadd.xlane.f32.xlu0 %v2220
      %v2222 = vpop.xlane.xlu0 %2221
      %v2223 = vadd.f32 %v2116, %v2118
      %2224 = vadd.xlane.f32.xlu0 %v2223
      %v2225 = vpop.xlane.xlu0 %2224
      %v2226 = vadd.f32 %v2120, %v2122
      %2227 = vadd.xlane.f32.xlu0 %v2226
      %v2228 = vpop.xlane.xlu0 %2227
      %v2229 = vadd.f32 %v2124, %v2126
      %2230 = vadd.xlane.f32.xlu0 %v2229
      %v2231 = vpop.xlane.xlu0 %2230
      %v2232 = vadd.f32 %v2128, %v2130
      %2233 = vadd.xlane.f32.xlu0 %v2232
      %v2234 = vpop.xlane.xlu0 %2233
      %v2235 = vadd.f32 %v2132, %v2134
      %2236 = vadd.xlane.f32.xlu0 %v2235
      %v2237 = vpop.xlane.xlu0 %2236
      %v2238 = vadd.f32 %v2136, %v2138
      %2239 = vadd.xlane.f32.xlu0 %v2238
      %v2240 = vpop.xlane.xlu0 %2239
      %v2241 = vadd.f32 %v2140, %v2142
      %2242 = vadd.xlane.f32.xlu0 %v2241
      %v2243 = vpop.xlane.xlu0 %2242
      %v2244 = vadd.f32 %v2144, %v2146
      %2245 = vadd.xlane.f32.xlu0 %v2244
      %v2246 = vpop.xlane.xlu0 %2245
      %v2247 = vadd.f32 %v2148, %v2150
      %2248 = vadd.xlane.f32.xlu0 %v2247
      %v2249 = vpop.xlane.xlu0 %2248
      %v2250 = vadd.f32 %v2152, %v2154
      %2251 = vadd.xlane.f32.xlu0 %v2250
      %v2252 = vpop.xlane.xlu0 %2251
      %v2253 = vadd.f32 %v2156, %v2158
      %2254 = vadd.xlane.f32.xlu0 %v2253
      %v2255 = vpop.xlane.xlu0 %2254
      %v2256 = vadd.f32 %v2160, %v2162
      %2257 = vadd.xlane.f32.xlu0 %v2256
      %v2258 = vpop.xlane.xlu0 %2257
      %v2259 = vrcp.pop %v2165
      %v2260 = vrcp.pop %v2168
      %v2261 = vrcp.pop %v2171
      %v2262 = vrcp.pop %v2174
      %v2263 = vrcp.pop %v2177
      %v2264 = vrcp.pop %v2180
      %v2265 = vrcp.pop %v2183
      %v2266 = vrcp.pop %v2186
      %v2267 = vrcp.pop %v2189
      %v2268 = vrcp.pop %v2192
      %v2269 = vrcp.pop %v2195
      %v2270 = vrcp.pop %v2198
      %v2271 = vrcp.pop %v2201
      %v2272 = vrcp.pop %v2204
      %v2273 = vrcp.pop %v2207
      %v2274 = vrcp.pop %v2210
      %v2275 = vrcp.pop %v2213
      %v2276 = vrcp.pop %v2216
      %v2277 = vrcp.pop %v2219
      %v2278 = vrcp.pop %v2222
      %v2279 = vrcp.pop %v2225
      %v2280 = vrcp.pop %v2228
      %v2281 = vrcp.pop %v2231
      %v2282 = vrcp.pop %v2234
      %v2283 = vrcp.pop %v2237
      %v2284 = vrcp.pop %v2240
      %v2285 = vrcp.pop %v2243
      %v2286 = vrcp.pop %v2246
      %v2287 = vrcp.pop %v2249
      %v2288 = vrcp.pop %v2252
      %v2289 = vrcp.pop %v2255
      %v2290 = vrcp.pop %v2258
      %v2291 = vmul.f32 %v2036, %v2259
      %v2292 = vmul.f32 %v2038, %v2259
      %v2293 = vmul.f32 %v2040, %v2260
      %v2294 = vmul.f32 %v2042, %v2260
      %v2295 = vmul.f32 %v2044, %v2261
      %v2296 = vmul.f32 %v2046, %v2261
      %v2297 = vmul.f32 %v2048, %v2262
      %v2298 = vmul.f32 %v2050, %v2262
      %v2299 = vmul.f32 %v2052, %v2263
      %v2300 = vmul.f32 %v2054, %v2263
      %v2301 = vmul.f32 %v2056, %v2264
      %v2302 = vmul.f32 %v2058, %v2264
      %v2303 = vmul.f32 %v2060, %v2265
      %v2304 = vmul.f32 %v2062, %v2265
      %v2305 = vmul.f32 %v2064, %v2266
      %v2306 = vmul.f32 %v2066, %v2266
      %v2307 = vmul.f32 %v2068, %v2267
      %v2308 = vmul.f32 %v2070, %v2267
      %v2309 = vmul.f32 %v2072, %v2268
      %v2310 = vmul.f32 %v2074, %v2268
      %v2311 = vmul.f32 %v2076, %v2269
      %v2312 = vmul.f32 %v2078, %v2269
      %v2313 = vmul.f32 %v2080, %v2270
      %v2314 = vmul.f32 %v2082, %v2270
      %v2315 = vmul.f32 %v2084, %v2271
      %v2316 = vmul.f32 %v2086, %v2271
      %v2317 = vmul.f32 %v2088, %v2272
      %v2318 = vmul.f32 %v2090, %v2272
      %v2319 = vmul.f32 %v2092, %v2273
      %v2320 = vmul.f32 %v2094, %v2273
      %v2321 = vmul.f32 %v2096, %v2274
      %v2322 = vmul.f32 %v2098, %v2274
      %v2323 = vmul.f32 %v2100, %v2275
      %v2324 = vmul.f32 %v2102, %v2275
      %v2325 = vmul.f32 %v2104, %v2276
      %v2326 = vmul.f32 %v2106, %v2276
      %v2327 = vmul.f32 %v2108, %v2277
      %v2328 = vmul.f32 %v2110, %v2277
      %v2329 = vmul.f32 %v2112, %v2278
      %v2330 = vmul.f32 %v2114, %v2278
      %v2331 = vmul.f32 %v2116, %v2279
      %v2332 = vmul.f32 %v2118, %v2279
      %v2333 = vmul.f32 %v2120, %v2280
      %v2334 = vmul.f32 %v2122, %v2280
      %v2335 = vmul.f32 %v2124, %v2281
      %v2336 = vmul.f32 %v2126, %v2281
      %v2337 = vmul.f32 %v2128, %v2282
      %v2338 = vmul.f32 %v2130, %v2282
      %v2339 = vmul.f32 %v2132, %v2283
      %v2340 = vmul.f32 %v2134, %v2283
      %v2341 = vmul.f32 %v2136, %v2284
      %v2342 = vmul.f32 %v2138, %v2284
      %v2343 = vmul.f32 %v2140, %v2285
      %v2344 = vmul.f32 %v2142, %v2285
      %v2345 = vmul.f32 %v2144, %v2286
      %v2346 = vmul.f32 %v2146, %v2286
      %v2347 = vmul.f32 %v2148, %v2287
      %v2348 = vmul.f32 %v2150, %v2287
      %v2349 = vmul.f32 %v2152, %v2288
      %v2350 = vmul.f32 %v2154, %v2288
      %v2351 = vmul.f32 %v2156, %v2289
      %v2352 = vmul.f32 %v2158, %v2289
      %v2353 = vmul.f32 %v2160, %v2290
      %v2354 = vmul.f32 %v2162, %v2290
      %v2355 = vpack.c.bf16 %v2293, %v2291
      %v2356 = vpack.c.bf16 %v2294, %v2292
      %v2357 = vpack.c.bf16 %v2297, %v2295
      %v2358 = vpack.c.bf16 %v2298, %v2296
      %v2359 = vpack.c.bf16 %v2301, %v2299
      %v2360 = vpack.c.bf16 %v2302, %v2300
      %v2361 = vpack.c.bf16 %v2305, %v2303
      %v2362 = vpack.c.bf16 %v2306, %v2304
      %v2363 = vpack.c.bf16 %v2309, %v2307
      %v2364 = vpack.c.bf16 %v2310, %v2308
      %v2365 = vpack.c.bf16 %v2313, %v2311
      %v2366 = vpack.c.bf16 %v2314, %v2312
      %v2367 = vpack.c.bf16 %v2317, %v2315
      %v2368 = vpack.c.bf16 %v2318, %v2316
      %v2369 = vpack.c.bf16 %v2321, %v2319
      %v2370 = vpack.c.bf16 %v2322, %v2320
      %v2371 = vpack.c.bf16 %v2325, %v2323
      %v2372 = vpack.c.bf16 %v2326, %v2324
      %v2373 = vpack.c.bf16 %v2329, %v2327
      %v2374 = vpack.c.bf16 %v2330, %v2328
      %v2375 = vpack.c.bf16 %v2333, %v2331
      %v2376 = vpack.c.bf16 %v2334, %v2332
      %v2377 = vpack.c.bf16 %v2337, %v2335
      %v2378 = vpack.c.bf16 %v2338, %v2336
      %v2379 = vpack.c.bf16 %v2341, %v2339
      %v2380 = vpack.c.bf16 %v2342, %v2340
      %v2381 = vpack.c.bf16 %v2345, %v2343
      %v2382 = vpack.c.bf16 %v2346, %v2344
      %v2383 = vpack.c.bf16 %v2349, %v2347
      %v2384 = vpack.c.bf16 %v2350, %v2348
      %v2385 = vpack.c.bf16 %v2353, %v2351
      %v2386 = vpack.c.bf16 %v2354, %v2352
      %v2389 = vrot.slane %v621, 1
      %v2390 = vrot.slane %v622, 1
      %2393 = vmatprep.subr.bf16.mxu0 %v2356
      %2394 = vmatpush1.bf16.xpose.msra.mxu0 %v2355
      %2395 = vmatprep.subr.bf16.mxu0 %v2358
      %2396 = vmatpush1.bf16.xpose.msra.mxu0 %v2357
      %2397 = vmatprep.subr.bf16.mxu0 %v2360
      %2398 = vmatpush1.bf16.xpose.msra.mxu0 %v2359
      %2399 = vmatprep.subr.bf16.mxu0 %v2362
      %2400 = vmatpush1.bf16.xpose.msra.mxu0 %v2361
      %2401 = vmatprep.subr.bf16.mxu0 %v2364
      %2402 = vmatpush1.bf16.xpose.msra.mxu0 %v2363
      %2403 = vmatprep.subr.bf16.mxu0 %v2366
      %2404 = vmatpush1.bf16.xpose.msra.mxu0 %v2365
      %2405 = vmatprep.subr.bf16.mxu0 %v2368
      %2406 = vmatpush1.bf16.xpose.msra.mxu0 %v2367
      %2407 = vmatprep.subr.bf16.mxu0 %v2370
      %2408 = vmatpush1.bf16.xpose.msra.mxu0 %v2369
      %2409 = vmatprep.subr.bf16.mxu0 %v2372
      %2410 = vmatpush1.bf16.xpose.msra.mxu0 %v2371
      %2411 = vmatprep.subr.bf16.mxu0 %v2374
      %2412 = vmatpush1.bf16.xpose.msra.mxu0 %v2373
      %2413 = vmatprep.subr.bf16.mxu0 %v2376
      %2414 = vmatpush1.bf16.xpose.msra.mxu0 %v2375
      %2415 = vmatprep.subr.bf16.mxu0 %v2378
      %2416 = vmatpush1.bf16.xpose.msra.mxu0 %v2377
      %2417 = vmatprep.subr.bf16.mxu0 %v2380
      %2418 = vmatpush1.bf16.xpose.msra.mxu0 %v2379
      %2419 = vmatprep.subr.bf16.mxu0 %v2382
      %2420 = vmatpush1.bf16.xpose.msra.mxu0 %v2381
      %2421 = vmatprep.subr.bf16.mxu0 %v2384
      %2422 = vmatpush1.bf16.xpose.msra.mxu0 %v2383
      %2423 = vmatprep.subr.bf16.mxu0 %v2386
      %2424 = vmatpush1.bf16.xpose.msra.mxu0 %v2385
      %2425 = vmatprep.mubr.bf16.mxu0 %v2390
      %2426 = vmatmul.mubr.bf16.gmra.mrb[0].mxu0 %v2389
      %v2427 = vpop.f32.mrb[0].mxu0
      %v2428 = vadd.f32 0.0, %v2427
      %v2429 = vpop.f32.mrb[0].mxu0
      %v2430 = vadd.f32 0.0, %v2429
      %v2431 = vpop.f32.mrb[0].mxu0
      %v2432 = vpop.f32.mrb[0].mxu0
      %2433 = vdwg.mxu0
      %s2434 = scalar_lea.vmem %s3, 1024
      %v2435 = vld [vmem:[%s2434] sm:$0xff]
      %v2436 = vld [vmem:[%s2434 + $0x8] sm:$0xff]
      %v2437 = vld [vmem:[%s2434 + $0x10] sm:$0xff]
      %v2438 = vld [vmem:[%s2434 + $0x18] sm:$0xff]
      %v2439 = vld [vmem:[%s2434 + $0x20] sm:$0xff]
      %v2440 = vld [vmem:[%s2434 + $0x28] sm:$0xff]
      %v2441 = vld [vmem:[%s2434 + $0x30] sm:$0xff]
      %v2442 = vld [vmem:[%s2434 + $0x38] sm:$0xff]
      %v2443 = vld [vmem:[%s2434 + $0x40] sm:$0xff]
      %v2444 = vld [vmem:[%s2434 + $0x48] sm:$0xff]
      %v2445 = vld [vmem:[%s2434 + $0x50] sm:$0xff]
      %v2446 = vld [vmem:[%s2434 + $0x58] sm:$0xff]
      %v2447 = vld [vmem:[%s2434 + $0x60] sm:$0xff]
      %v2448 = vld [vmem:[%s2434 + $0x68] sm:$0xff]
      %v2449 = vld [vmem:[%s2434 + $0x70] sm:$0xff]
      %v2450 = vld [vmem:[%s2434 + $0x78] sm:$0xff]
      %v2451 = vld [vmem:[%s2434 + $0x80] sm:$0xff]
      %v2452 = vld [vmem:[%s2434 + $0x88] sm:$0xff]
      %v2453 = vld [vmem:[%s2434 + $0x90] sm:$0xff]
      %v2454 = vld [vmem:[%s2434 + $0x98] sm:$0xff]
      %v2455 = vld [vmem:[%s2434 + $0xa0] sm:$0xff]
      %v2456 = vld [vmem:[%s2434 + $0xa8] sm:$0xff]
      %v2457 = vld [vmem:[%s2434 + $0xb0] sm:$0xff]
      %v2458 = vld [vmem:[%s2434 + $0xb8] sm:$0xff]
      %v2459 = vld [vmem:[%s2434 + $0xc0] sm:$0xff]
      %v2460 = vld [vmem:[%s2434 + $0xc8] sm:$0xff]
      %v2461 = vld [vmem:[%s2434 + $0xd0] sm:$0xff]
      %v2462 = vld [vmem:[%s2434 + $0xd8] sm:$0xff]
      %v2463 = vld [vmem:[%s2434 + $0xe0] sm:$0xff]
      %v2464 = vld [vmem:[%s2434 + $0xe8] sm:$0xff]
      %v2465 = vld [vmem:[%s2434 + $0xf0] sm:$0xff]
      %v2466 = vld [vmem:[%s2434 + $0xf8] sm:$0xff]
      %v2467 = vld [vmem:[%s2434 + $0x100] sm:$0xff]
      %v2468 = vld [vmem:[%s2434 + $0x108] sm:$0xff]
      %v2469 = vld [vmem:[%s2434 + $0x110] sm:$0xff]
      %v2470 = vld [vmem:[%s2434 + $0x118] sm:$0xff]
      %v2471 = vld [vmem:[%s2434 + $0x120] sm:$0xff]
      %v2472 = vld [vmem:[%s2434 + $0x128] sm:$0xff]
      %v2473 = vld [vmem:[%s2434 + $0x130] sm:$0xff]
      %v2474 = vld [vmem:[%s2434 + $0x138] sm:$0xff]
      %v2475 = vld [vmem:[%s2434 + $0x140] sm:$0xff]
      %v2476 = vld [vmem:[%s2434 + $0x148] sm:$0xff]
      %v2477 = vld [vmem:[%s2434 + $0x150] sm:$0xff]
      %v2478 = vld [vmem:[%s2434 + $0x158] sm:$0xff]
      %v2479 = vld [vmem:[%s2434 + $0x160] sm:$0xff]
      %v2480 = vld [vmem:[%s2434 + $0x168] sm:$0xff]
      %v2481 = vld [vmem:[%s2434 + $0x170] sm:$0xff]
      %v2482 = vld [vmem:[%s2434 + $0x178] sm:$0xff]
      %v2483 = vld [vmem:[%s2434 + $0x180] sm:$0xff]
      %v2484 = vld [vmem:[%s2434 + $0x188] sm:$0xff]
      %v2485 = vld [vmem:[%s2434 + $0x190] sm:$0xff]
      %v2486 = vld [vmem:[%s2434 + $0x198] sm:$0xff]
      %v2487 = vld [vmem:[%s2434 + $0x1a0] sm:$0xff]
      %v2488 = vld [vmem:[%s2434 + $0x1a8] sm:$0xff]
      %v2489 = vld [vmem:[%s2434 + $0x1b0] sm:$0xff]
      %v2490 = vld [vmem:[%s2434 + $0x1b8] sm:$0xff]
      %v2491 = vld [vmem:[%s2434 + $0x1c0] sm:$0xff]
      %v2492 = vld [vmem:[%s2434 + $0x1c8] sm:$0xff]
      %v2493 = vld [vmem:[%s2434 + $0x1d0] sm:$0xff]
      %v2494 = vld [vmem:[%s2434 + $0x1d8] sm:$0xff]
      %v2495 = vld [vmem:[%s2434 + $0x1e0] sm:$0xff]
      %v2496 = vld [vmem:[%s2434 + $0x1e8] sm:$0xff]
      %v2497 = vld [vmem:[%s2434 + $0x1f0] sm:$0xff]
      %v2498 = vld [vmem:[%s2434 + $0x1f8] sm:$0xff]
      %v2499 = vrot.slane %v617, 2
      %v2500 = vrot.slane %v618, 2
      %2503 = vxpose.xlu0.c.b16.start [1/8] %v2499, 128
      %2504 = vxpose.xlu0.c.b16.cont [2/8] 0, 128
      %2505 = vxpose.xlu0.c.b16.cont [3/8] 0, 128
      %2506 = vxpose.xlu0.c.b16.cont [4/8] 0, 128
      %2507 = vxpose.xlu0.c.b16.cont [5/8] 0, 128
      %2508 = vxpose.xlu0.c.b16.cont [6/8] 0, 128
      %2509 = vxpose.xlu0.c.b16.cont [7/8] 0, 128
      %2510 = vxpose.xlu0.c.b16.end [8/8] 0, 128
      %v2511 = vpop.trf.xlu0
      %v2512 = vpop.trf.xlu0
      %v2513 = vpop.trf.xlu0
      %v2514 = vpop.trf.xlu0
      %v2515 = vpop.trf.xlu0
      %v2516 = vpop.trf.xlu0
      %v2517 = vpop.trf.xlu0
      %v2518 = vpop.trf.xlu0
      %2519 = vxpose.xlu0.c.b16.start [1/8] %v2500, 128
      %2520 = vxpose.xlu0.c.b16.cont [2/8] 0, 128
      %2521 = vxpose.xlu0.c.b16.cont [3/8] 0, 128
      %2522 = vxpose.xlu0.c.b16.cont [4/8] 0, 128
      %2523 = vxpose.xlu0.c.b16.cont [5/8] 0, 128
      %2524 = vxpose.xlu0.c.b16.cont [6/8] 0, 128
      %2525 = vxpose.xlu0.c.b16.cont [7/8] 0, 128
      %2526 = vxpose.xlu0.c.b16.end [8/8] 0, 128
      %v2527 = vpop.trf.xlu0
      %v2528 = vpop.trf.xlu0
      %v2529 = vpop.trf.xlu0
      %v2530 = vpop.trf.xlu0
      %v2531 = vpop.trf.xlu0
      %v2532 = vpop.trf.xlu0
      %v2533 = vpop.trf.xlu0
      %v2534 = vpop.trf.xlu0
      %v2535 = vrot.slane %v619, 2
      %v2536 = vrot.slane %v620, 2
      %v2538 = vsel %vm719, %v2511, 0
      %v2541 = vsel %vm719, %v2512, 0
      %v2544 = vsel %vm719, %v2513, 0
      %v2547 = vsel %vm719, %v2514, 0
      %v2550 = vsel %vm719, %v2515, 0
      %v2553 = vsel %vm719, %v2516, 0
      %v2556 = vsel %vm719, %v2517, 0
      %v2559 = vsel %vm719, %v2518, 0
      %v2562 = vsel %vm719, %v2527, 0
      %v2565 = vsel %vm719, %v2528, 0
      %v2568 = vsel %vm719, %v2529, 0
      %v2571 = vsel %vm719, %v2530, 0
      %v2574 = vsel %vm719, %v2531, 0
      %v2577 = vsel %vm719, %v2532, 0
      %v2580 = vsel %vm719, %v2533, 0
      %v2583 = vsel %vm719, %v2534, 0
      %v2586 = vsel %vm768, %v2535, 0
      %v2589 = vsel %vm768, %v2536, 0
      %2591 = vmatprep.subr.bf16.mxu0 %v2589
      %2592 = vmatpush1.bf16.msra.mxu0 %v2586
      %2593 = vmatprep.subr.bf16.mxu0 0
      %2594 = vmatpush1.bf16.msra.mxu0 0
      %2595 = vmatprep.subr.bf16.mxu0 0
      %2596 = vmatpush1.bf16.msra.mxu0 0
      %2597 = vmatprep.subr.bf16.mxu0 0
      %2598 = vmatpush1.bf16.msra.mxu0 0
      %2599 = vmatprep.subr.bf16.mxu0 0
      %2600 = vmatpush1.bf16.msra.mxu0 0
      %2601 = vmatprep.subr.bf16.mxu0 0
      %2602 = vmatpush1.bf16.msra.mxu0 0
      %2603 = vmatprep.subr.bf16.mxu0 0
      %2604 = vmatpush1.bf16.msra.mxu0 0
      %2605 = vmatprep.subr.bf16.mxu0 0
      %2606 = vmatpush1.bf16.msra.mxu0 0
      %2607 = vmatprep.subr.bf16.mxu0 0
      %2608 = vmatpush1.bf16.msra.mxu0 0
      %2609 = vmatprep.subr.bf16.mxu0 0
      %2610 = vmatpush1.bf16.msra.mxu0 0
      %2611 = vmatprep.subr.bf16.mxu0 0
      %2612 = vmatpush1.bf16.msra.mxu0 0
      %2613 = vmatprep.subr.bf16.mxu0 0
      %2614 = vmatpush1.bf16.msra.mxu0 0
      %2615 = vmatprep.subr.bf16.mxu0 0
      %2616 = vmatpush1.bf16.msra.mxu0 0
      %2617 = vmatprep.subr.bf16.mxu0 0
      %2618 = vmatpush1.bf16.msra.mxu0 0
      %2619 = vmatprep.subr.bf16.mxu0 0
      %2620 = vmatpush1.bf16.msra.mxu0 0
      %2621 = vmatprep.subr.bf16.mxu0 0
      %2622 = vmatpush1.bf16.msra.mxu0 0
      %2623 = vmatprep.mubr.bf16.mxu0 0
      %2624 = vmatmul.mubr.bf16.gmra.mrb[0].mxu0 %v2538
      %v2625 = vpop.f32.mrb[0].mxu0
      %v2626 = vadd.f32 %v2435, %v2625
      %v2627 = vpop.f32.mrb[0].mxu0
      %v2628 = vadd.f32 %v2436, %v2627
      %v2629 = vpop.f32.mrb[0].mxu0
      %v2630 = vadd.f32 %v2437, %v2629
      %v2631 = vpop.f32.mrb[0].mxu0
      %v2632 = vadd.f32 %v2438, %v2631
      %2633 = vmatprep.mubr.bf16.mxu0 0
      %2634 = vmatmul.mubr.bf16.gmra.mrb[0].mxu0 %v2541
      %v2635 = vpop.f32.mrb[0].mxu0
      %v2636 = vadd.f32 %v2439, %v2635
      %v2637 = vpop.f32.mrb[0].mxu0
      %v2638 = vadd.f32 %v2440, %v2637
      %v2639 = vpop.f32.mrb[0].mxu0
      %v2640 = vadd.f32 %v2441, %v2639
      %v2641 = vpop.f32.mrb[0].mxu0
      %v2642 = vadd.f32 %v2442, %v2641
      %2643 = vmatprep.mubr.bf16.mxu0 0
      %2644 = vmatmul.mubr.bf16.gmra.mrb[0].mxu0 %v2544
      %v2645 = vpop.f32.mrb[0].mxu0
      %v2646 = vadd.f32 %v2443, %v2645
      %v2647 = vpop.f32.mrb[0].mxu0
      %v2648 = vadd.f32 %v2444, %v2647
      %v2649 = vpop.f32.mrb[0].mxu0
      %v2650 = vadd.f32 %v2445, %v2649
      %v2651 = vpop.f32.mrb[0].mxu0
      %v2652 = vadd.f32 %v2446, %v2651
      %2653 = vmatprep.mubr.bf16.mxu0 0
      %2654 = vmatmul.mubr.bf16.gmra.mrb[0].mxu0 %v2547
      %v2655 = vpop.f32.mrb[0].mxu0
      %v2656 = vadd.f32 %v2447, %v2655
      %v2657 = vpop.f32.mrb[0].mxu0
      %v2658 = vadd.f32 %v2448, %v2657
      %v2659 = vpop.f32.mrb[0].mxu0
      %v2660 = vadd.f32 %v2449, %v2659
      %v2661 = vpop.f32.mrb[0].mxu0
      %v2662 = vadd.f32 %v2450, %v2661
      %2663 = vmatprep.mubr.bf16.mxu0 0
      %2664 = vmatmul.mubr.bf16.gmra.mrb[0].mxu0 %v2550
      %v2665 = vpop.f32.mrb[0].mxu0
      %v2666 = vadd.f32 %v2451, %v2665
      %v2667 = vpop.f32.mrb[0].mxu0
      %v2668 = vadd.f32 %v2452, %v2667
      %v2669 = vpop.f32.mrb[0].mxu0
      %v2670 = vadd.f32 %v2453, %v2669
      %v2671 = vpop.f32.mrb[0].mxu0
      %v2672 = vadd.f32 %v2454, %v2671
      %2673 = vmatprep.mubr.bf16.mxu0 0
      %2674 = vmatmul.mubr.bf16.gmra.mrb[0].mxu0 %v2553
      %v2675 = vpop.f32.mrb[0].mxu0
      %v2676 = vadd.f32 %v2455, %v2675
      %v2677 = vpop.f32.mrb[0].mxu0
      %v2678 = vadd.f32 %v2456, %v2677
      %v2679 = vpop.f32.mrb[0].mxu0
      %v2680 = vadd.f32 %v2457, %v2679
      %v2681 = vpop.f32.mrb[0].mxu0
      %v2682 = vadd.f32 %v2458, %v2681
      %2683 = vmatprep.mubr.bf16.mxu0 0
      %2684 = vmatmul.mubr.bf16.gmra.mrb[0].mxu0 %v2556
      %v2685 = vpop.f32.mrb[0].mxu0
      %v2686 = vadd.f32 %v2459, %v2685
      %v2687 = vpop.f32.mrb[0].mxu0
      %v2688 = vadd.f32 %v2460, %v2687
      %v2689 = vpop.f32.mrb[0].mxu0
      %v2690 = vadd.f32 %v2461, %v2689
      %v2691 = vpop.f32.mrb[0].mxu0
      %v2692 = vadd.f32 %v2462, %v2691
      %2693 = vmatprep.mubr.bf16.mxu0 0
      %2694 = vmatmul.mubr.bf16.gmra.mrb[0].mxu0 %v2559
      %v2695 = vpop.f32.mrb[0].mxu0
      %v2696 = vadd.f32 %v2463, %v2695
      %v2697 = vpop.f32.mrb[0].mxu0
      %v2698 = vadd.f32 %v2464, %v2697
      %v2699 = vpop.f32.mrb[0].mxu0
      %v2700 = vadd.f32 %v2465, %v2699
      %v2701 = vpop.f32.mrb[0].mxu0
      %v2702 = vadd.f32 %v2466, %v2701
      %2703 = vmatprep.mubr.bf16.mxu0 0
      %2704 = vmatmul.mubr.bf16.gmra.mrb[0].mxu0 %v2562
      %v2705 = vpop.f32.mrb[0].mxu0
      %v2706 = vadd.f32 %v2467, %v2705
      %v2707 = vpop.f32.mrb[0].mxu0
      %v2708 = vadd.f32 %v2468, %v2707
      %v2709 = vpop.f32.mrb[0].mxu0
      %v2710 = vadd.f32 %v2469, %v2709
      %v2711 = vpop.f32.mrb[0].mxu0
      %v2712 = vadd.f32 %v2470, %v2711
      %2713 = vmatprep.mubr.bf16.mxu0 0
      %2714 = vmatmul.mubr.bf16.gmra.mrb[0].mxu0 %v2565
      %v2715 = vpop.f32.mrb[0].mxu0
      %v2716 = vadd.f32 %v2471, %v2715
      %v2717 = vpop.f32.mrb[0].mxu0
      %v2718 = vadd.f32 %v2472, %v2717
      %v2719 = vpop.f32.mrb[0].mxu0
      %v2720 = vadd.f32 %v2473, %v2719
      %v2721 = vpop.f32.mrb[0].mxu0
      %v2722 = vadd.f32 %v2474, %v2721
      %2723 = vmatprep.mubr.bf16.mxu0 0
      %2724 = vmatmul.mubr.bf16.gmra.mrb[0].mxu0 %v2568
      %v2725 = vpop.f32.mrb[0].mxu0
      %v2726 = vadd.f32 %v2475, %v2725
      %v2727 = vpop.f32.mrb[0].mxu0
      %v2728 = vadd.f32 %v2476, %v2727
      %v2729 = vpop.f32.mrb[0].mxu0
      %v2730 = vadd.f32 %v2477, %v2729
      %v2731 = vpop.f32.mrb[0].mxu0
      %v2732 = vadd.f32 %v2478, %v2731
      %2733 = vmatprep.mubr.bf16.mxu0 0
      %2734 = vmatmul.mubr.bf16.gmra.mrb[0].mxu0 %v2571
      %v2735 = vpop.f32.mrb[0].mxu0
      %v2736 = vadd.f32 %v2479, %v2735
      %v2737 = vpop.f32.mrb[0].mxu0
      %v2738 = vadd.f32 %v2480, %v2737
      %v2739 = vpop.f32.mrb[0].mxu0
      %v2740 = vadd.f32 %v2481, %v2739
      %v2741 = vpop.f32.mrb[0].mxu0
      %v2742 = vadd.f32 %v2482, %v2741
      %2743 = vmatprep.mubr.bf16.mxu0 0
      %2744 = vmatmul.mubr.bf16.gmra.mrb[0].mxu0 %v2574
      %v2745 = vpop.f32.mrb[0].mxu0
      %v2746 = vadd.f32 %v2483, %v2745
      %v2747 = vpop.f32.mrb[0].mxu0
      %v2748 = vadd.f32 %v2484, %v2747
      %v2749 = vpop.f32.mrb[0].mxu0
      %v2750 = vadd.f32 %v2485, %v2749
      %v2751 = vpop.f32.mrb[0].mxu0
      %v2752 = vadd.f32 %v2486, %v2751
      %2753 = vmatprep.mubr.bf16.mxu0 0
      %2754 = vmatmul.mubr.bf16.gmra.mrb[0].mxu0 %v2577
      %v2755 = vpop.f32.mrb[0].mxu0
      %v2756 = vadd.f32 %v2487, %v2755
      %v2757 = vpop.f32.mrb[0].mxu0
      %v2758 = vadd.f32 %v2488, %v2757
      %v2759 = vpop.f32.mrb[0].mxu0
      %v2760 = vadd.f32 %v2489, %v2759
      %v2761 = vpop.f32.mrb[0].mxu0
      %v2762 = vadd.f32 %v2490, %v2761
      %2763 = vmatprep.mubr.bf16.mxu0 0
      %2764 = vmatmul.mubr.bf16.gmra.mrb[0].mxu0 %v2580
      %v2765 = vpop.f32.mrb[0].mxu0
      %v2766 = vadd.f32 %v2491, %v2765
      %v2767 = vpop.f32.mrb[0].mxu0
      %v2768 = vadd.f32 %v2492, %v2767
      %v2769 = vpop.f32.mrb[0].mxu0
      %v2770 = vadd.f32 %v2493, %v2769
      %v2771 = vpop.f32.mrb[0].mxu0
      %v2772 = vadd.f32 %v2494, %v2771
      %2773 = vmatprep.mubr.bf16.mxu0 0
      %2774 = vmatmul.mubr.bf16.gmra.mrb[0].mxu0 %v2583
      %v2775 = vpop.f32.mrb[0].mxu0
      %v2776 = vadd.f32 %v2495, %v2775
      %v2777 = vpop.f32.mrb[0].mxu0
      %v2778 = vadd.f32 %v2496, %v2777
      %v2779 = vpop.f32.mrb[0].mxu0
      %v2780 = vadd.f32 %v2497, %v2779
      %v2781 = vpop.f32.mrb[0].mxu0
      %v2782 = vadd.f32 %v2498, %v2781
      %2783 = vdwg.mxu0
      %v2784 = vmax.f32 %v2626, %v2628
      %2785 = vmax.xlane.f32.xlu0 %v2784
      %v2786 = vpop.xlane.xlu0 %2785
      %v2787 = vmax.f32 %v2630, %v2632
      %2788 = vmax.xlane.f32.xlu0 %v2787
      %v2789 = vpop.xlane.xlu0 %2788
      %v2790 = vmax.f32 %v2636, %v2638
      %2791 = vmax.xlane.f32.xlu0 %v2790
      %v2792 = vpop.xlane.xlu0 %2791
      %v2793 = vmax.f32 %v2640, %v2642
      %2794 = vmax.xlane.f32.xlu0 %v2793
      %v2795 = vpop.xlane.xlu0 %2794
      %v2796 = vmax.f32 %v2646, %v2648
      %2797 = vmax.xlane.f32.xlu0 %v2796
      %v2798 = vpop.xlane.xlu0 %2797
      %v2799 = vmax.f32 %v2650, %v2652
      %2800 = vmax.xlane.f32.xlu0 %v2799
      %v2801 = vpop.xlane.xlu0 %2800
      %v2802 = vmax.f32 %v2656, %v2658
      %2803 = vmax.xlane.f32.xlu0 %v2802
      %v2804 = vpop.xlane.xlu0 %2803
      %v2805 = vmax.f32 %v2660, %v2662
      %2806 = vmax.xlane.f32.xlu0 %v2805
      %v2807 = vpop.xlane.xlu0 %2806
      %v2808 = vmax.f32 %v2666, %v2668
      %2809 = vmax.xlane.f32.xlu0 %v2808
      %v2810 = vpop.xlane.xlu0 %2809
      %v2811 = vmax.f32 %v2670, %v2672
      %2812 = vmax.xlane.f32.xlu0 %v2811
      %v2813 = vpop.xlane.xlu0 %2812
      %v2814 = vmax.f32 %v2676, %v2678
      %2815 = vmax.xlane.f32.xlu0 %v2814
      %v2816 = vpop.xlane.xlu0 %2815
      %v2817 = vmax.f32 %v2680, %v2682
      %2818 = vmax.xlane.f32.xlu0 %v2817
      %v2819 = vpop.xlane.xlu0 %2818
      %v2820 = vmax.f32 %v2686, %v2688
      %2821 = vmax.xlane.f32.xlu0 %v2820
      %v2822 = vpop.xlane.xlu0 %2821
      %v2823 = vmax.f32 %v2690, %v2692
      %2824 = vmax.xlane.f32.xlu0 %v2823
      %v2825 = vpop.xlane.xlu0 %2824
      %v2826 = vmax.f32 %v2696, %v2698
      %2827 = vmax.xlane.f32.xlu0 %v2826
      %v2828 = vpop.xlane.xlu0 %2827
      %v2829 = vmax.f32 %v2700, %v2702
      %2830 = vmax.xlane.f32.xlu0 %v2829
      %v2831 = vpop.xlane.xlu0 %2830
      %v2832 = vmax.f32 %v2706, %v2708
      %2833 = vmax.xlane.f32.xlu0 %v2832
      %v2834 = vpop.xlane.xlu0 %2833
      %v2835 = vmax.f32 %v2710, %v2712
      %2836 = vmax.xlane.f32.xlu0 %v2835
      %v2837 = vpop.xlane.xlu0 %2836
      %v2838 = vmax.f32 %v2716, %v2718
      %2839 = vmax.xlane.f32.xlu0 %v2838
      %v2840 = vpop.xlane.xlu0 %2839
      %v2841 = vmax.f32 %v2720, %v2722
      %2842 = vmax.xlane.f32.xlu0 %v2841
      %v2843 = vpop.xlane.xlu0 %2842
      %v2844 = vmax.f32 %v2726, %v2728
      %2845 = vmax.xlane.f32.xlu0 %v2844
      %v2846 = vpop.xlane.xlu0 %2845
      %v2847 = vmax.f32 %v2730, %v2732
      %2848 = vmax.xlane.f32.xlu0 %v2847
      %v2849 = vpop.xlane.xlu0 %2848
      %v2850 = vmax.f32 %v2736, %v2738
      %2851 = vmax.xlane.f32.xlu0 %v2850
      %v2852 = vpop.xlane.xlu0 %2851
      %v2853 = vmax.f32 %v2740, %v2742
      %2854 = vmax.xlane.f32.xlu0 %v2853
      %v2855 = vpop.xlane.xlu0 %2854
      %v2856 = vmax.f32 %v2746, %v2748
      %2857 = vmax.xlane.f32.xlu0 %v2856
      %v2858 = vpop.xlane.xlu0 %2857
      %v2859 = vmax.f32 %v2750, %v2752
      %2860 = vmax.xlane.f32.xlu0 %v2859
      %v2861 = vpop.xlane.xlu0 %2860
      %v2862 = vmax.f32 %v2756, %v2758
      %2863 = vmax.xlane.f32.xlu0 %v2862
      %v2864 = vpop.xlane.xlu0 %2863
      %v2865 = vmax.f32 %v2760, %v2762
      %2866 = vmax.xlane.f32.xlu0 %v2865
      %v2867 = vpop.xlane.xlu0 %2866
      %v2868 = vmax.f32 %v2766, %v2768
      %2869 = vmax.xlane.f32.xlu0 %v2868
      %v2870 = vpop.xlane.xlu0 %2869
      %v2871 = vmax.f32 %v2770, %v2772
      %2872 = vmax.xlane.f32.xlu0 %v2871
      %v2873 = vpop.xlane.xlu0 %2872
      %v2874 = vmax.f32 %v2776, %v2778
      %2875 = vmax.xlane.f32.xlu0 %v2874
      %v2876 = vpop.xlane.xlu0 %2875
      %v2877 = vmax.f32 %v2780, %v2782
      %2878 = vmax.xlane.f32.xlu0 %v2877
      %v2879 = vpop.xlane.xlu0 %2878
      %v2880 = vsub.f32 %v2626, %v2786
      %v2881 = vsub.f32 %v2628, %v2786
      %v2882 = vsub.f32 %v2630, %v2789
      %v2883 = vsub.f32 %v2632, %v2789
      %v2884 = vsub.f32 %v2636, %v2792
      %v2885 = vsub.f32 %v2638, %v2792
      %v2886 = vsub.f32 %v2640, %v2795
      %v2887 = vsub.f32 %v2642, %v2795
      %v2888 = vsub.f32 %v2646, %v2798
      %v2889 = vsub.f32 %v2648, %v2798
      %v2890 = vsub.f32 %v2650, %v2801
      %v2891 = vsub.f32 %v2652, %v2801
      %v2892 = vsub.f32 %v2656, %v2804
      %v2893 = vsub.f32 %v2658, %v2804
      %v2894 = vsub.f32 %v2660, %v2807
      %v2895 = vsub.f32 %v2662, %v2807
      %v2896 = vsub.f32 %v2666, %v2810
      %v2897 = vsub.f32 %v2668, %v2810
      %v2898 = vsub.f32 %v2670, %v2813
      %v2899 = vsub.f32 %v2672, %v2813
      %v2900 = vsub.f32 %v2676, %v2816
      %v2901 = vsub.f32 %v2678, %v2816
      %v2902 = vsub.f32 %v2680, %v2819
      %v2903 = vsub.f32 %v2682, %v2819
      %v2904 = vsub.f32 %v2686, %v2822
      %v2905 = vsub.f32 %v2688, %v2822
      %v2906 = vsub.f32 %v2690, %v2825
      %v2907 = vsub.f32 %v2692, %v2825
      %v2908 = vsub.f32 %v2696, %v2828
      %v2909 = vsub.f32 %v2698, %v2828
      %v2910 = vsub.f32 %v2700, %v2831
      %v2911 = vsub.f32 %v2702, %v2831
      %v2912 = vsub.f32 %v2706, %v2834
      %v2913 = vsub.f32 %v2708, %v2834
      %v2914 = vsub.f32 %v2710, %v2837
      %v2915 = vsub.f32 %v2712, %v2837
      %v2916 = vsub.f32 %v2716, %v2840
      %v2917 = vsub.f32 %v2718, %v2840
      %v2918 = vsub.f32 %v2720, %v2843
      %v2919 = vsub.f32 %v2722, %v2843
      %v2920 = vsub.f32 %v2726, %v2846
      %v2921 = vsub.f32 %v2728, %v2846
      %v2922 = vsub.f32 %v2730, %v2849
      %v2923 = vsub.f32 %v2732, %v2849
      %v2924 = vsub.f32 %v2736, %v2852
      %v2925 = vsub.f32 %v2738, %v2852
      %v2926 = vsub.f32 %v2740, %v2855
      %v2927 = vsub.f32 %v2742, %v2855
      %v2928 = vsub.f32 %v2746, %v2858
      %v2929 = vsub.f32 %v2748, %v2858
      %v2930 = vsub.f32 %v2750, %v2861
      %v2931 = vsub.f32 %v2752, %v2861
      %v2932 = vsub.f32 %v2756, %v2864
      %v2933 = vsub.f32 %v2758, %v2864
      %v2934 = vsub.f32 %v2760, %v2867
      %v2935 = vsub.f32 %v2762, %v2867
      %v2936 = vsub.f32 %v2766, %v2870
      %v2937 = vsub.f32 %v2768, %v2870
      %v2938 = vsub.f32 %v2770, %v2873
      %v2939 = vsub.f32 %v2772, %v2873
      %v2940 = vsub.f32 %v2776, %v2876
      %v2941 = vsub.f32 %v2778, %v2876
      %v2942 = vsub.f32 %v2780, %v2879
      %v2943 = vsub.f32 %v2782, %v2879
      %v2944 = vmul.f32 %v2880, 1.442695
      %v2945 = vpow.pop %v2944
      %v2946 = vmul.f32 %v2881, 1.442695
      %v2947 = vpow.pop %v2946
      %v2948 = vmul.f32 %v2882, 1.442695
      %v2949 = vpow.pop %v2948
      %v2950 = vmul.f32 %v2883, 1.442695
      %v2951 = vpow.pop %v2950
      %v2952 = vmul.f32 %v2884, 1.442695
      %v2953 = vpow.pop %v2952
      %v2954 = vmul.f32 %v2885, 1.442695
      %v2955 = vpow.pop %v2954
      %v2956 = vmul.f32 %v2886, 1.442695
      %v2957 = vpow.pop %v2956
      %v2958 = vmul.f32 %v2887, 1.442695
      %v2959 = vpow.pop %v2958
      %v2960 = vmul.f32 %v2888, 1.442695
      %v2961 = vpow.pop %v2960
      %v2962 = vmul.f32 %v2889, 1.442695
      %v2963 = vpow.pop %v2962
      %v2964 = vmul.f32 %v2890, 1.442695
      %v2965 = vpow.pop %v2964
      %v2966 = vmul.f32 %v2891, 1.442695
      %v2967 = vpow.pop %v2966
      %v2968 = vmul.f32 %v2892, 1.442695
      %v2969 = vpow.pop %v2968
      %v2970 = vmul.f32 %v2893, 1.442695
      %v2971 = vpow.pop %v2970
      %v2972 = vmul.f32 %v2894, 1.442695
      %v2973 = vpow.pop %v2972
      %v2974 = vmul.f32 %v2895, 1.442695
      %v2975 = vpow.pop %v2974
      %v2976 = vmul.f32 %v2896, 1.442695
      %v2977 = vpow.pop %v2976
      %v2978 = vmul.f32 %v2897, 1.442695
      %v2979 = vpow.pop %v2978
      %v2980 = vmul.f32 %v2898, 1.442695
      %v2981 = vpow.pop %v2980
      %v2982 = vmul.f32 %v2899, 1.442695
      %v2983 = vpow.pop %v2982
      %v2984 = vmul.f32 %v2900, 1.442695
      %v2985 = vpow.pop %v2984
      %v2986 = vmul.f32 %v2901, 1.442695
      %v2987 = vpow.pop %v2986
      %v2988 = vmul.f32 %v2902, 1.442695
      %v2989 = vpow.pop %v2988
      %v2990 = vmul.f32 %v2903, 1.442695
      %v2991 = vpow.pop %v2990
      %v2992 = vmul.f32 %v2904, 1.442695
      %v2993 = vpow.pop %v2992
      %v2994 = vmul.f32 %v2905, 1.442695
      %v2995 = vpow.pop %v2994
      %v2996 = vmul.f32 %v2906, 1.442695
      %v2997 = vpow.pop %v2996
      %v2998 = vmul.f32 %v2907, 1.442695
      %v2999 = vpow.pop %v2998
      %v3000 = vmul.f32 %v2908, 1.442695
      %v3001 = vpow.pop %v3000
      %v3002 = vmul.f32 %v2909, 1.442695
      %v3003 = vpow.pop %v3002
      %v3004 = vmul.f32 %v2910, 1.442695
      %v3005 = vpow.pop %v3004
      %v3006 = vmul.f32 %v2911, 1.442695
      %v3007 = vpow.pop %v3006
      %v3008 = vmul.f32 %v2912, 1.442695
      %v3009 = vpow.pop %v3008
      %v3010 = vmul.f32 %v2913, 1.442695
      %v3011 = vpow.pop %v3010
      %v3012 = vmul.f32 %v2914, 1.442695
      %v3013 = vpow.pop %v3012
      %v3014 = vmul.f32 %v2915, 1.442695
      %v3015 = vpow.pop %v3014
      %v3016 = vmul.f32 %v2916, 1.442695
      %v3017 = vpow.pop %v3016
      %v3018 = vmul.f32 %v2917, 1.442695
      %v3019 = vpow.pop %v3018
      %v3020 = vmul.f32 %v2918, 1.442695
      %v3021 = vpow.pop %v3020
      %v3022 = vmul.f32 %v2919, 1.442695
      %v3023 = vpow.pop %v3022
      %v3024 = vmul.f32 %v2920, 1.442695
      %v3025 = vpow.pop %v3024
      %v3026 = vmul.f32 %v2921, 1.442695
      %v3027 = vpow.pop %v3026
      %v3028 = vmul.f32 %v2922, 1.442695
      %v3029 = vpow.pop %v3028
      %v3030 = vmul.f32 %v2923, 1.442695
      %v3031 = vpow.pop %v3030
      %v3032 = vmul.f32 %v2924, 1.442695
      %v3033 = vpow.pop %v3032
      %v3034 = vmul.f32 %v2925, 1.442695
      %v3035 = vpow.pop %v3034
      %v3036 = vmul.f32 %v2926, 1.442695
      %v3037 = vpow.pop %v3036
      %v3038 = vmul.f32 %v2927, 1.442695
      %v3039 = vpow.pop %v3038
      %v3040 = vmul.f32 %v2928, 1.442695
      %v3041 = vpow.pop %v3040
      %v3042 = vmul.f32 %v2929, 1.442695
      %v3043 = vpow.pop %v3042
      %v3044 = vmul.f32 %v2930, 1.442695
      %v3045 = vpow.pop %v3044
      %v3046 = vmul.f32 %v2931, 1.442695
      %v3047 = vpow.pop %v3046
      %v3048 = vmul.f32 %v2932, 1.442695
      %v3049 = vpow.pop %v3048
      %v3050 = vmul.f32 %v2933, 1.442695
      %v3051 = vpow.pop %v3050
      %v3052 = vmul.f32 %v2934, 1.442695
      %v3053 = vpow.pop %v3052
      %v3054 = vmul.f32 %v2935, 1.442695
      %v3055 = vpow.pop %v3054
      %v3056 = vmul.f32 %v2936, 1.442695
      %v3057 = vpow.pop %v3056
      %v3058 = vmul.f32 %v2937, 1.442695
      %v3059 = vpow.pop %v3058
      %v3060 = vmul.f32 %v2938, 1.442695
      %v3061 = vpow.pop %v3060
      %v3062 = vmul.f32 %v2939, 1.442695
      %v3063 = vpow.pop %v3062
      %v3064 = vmul.f32 %v2940, 1.442695
      %v3065 = vpow.pop %v3064
      %v3066 = vmul.f32 %v2941, 1.442695
      %v3067 = vpow.pop %v3066
      %v3068 = vmul.f32 %v2942, 1.442695
      %v3069 = vpow.pop %v3068
      %v3070 = vmul.f32 %v2943, 1.442695
      %v3071 = vpow.pop %v3070
      %v3072 = vadd.f32 %v2945, %v2947
      %3073 = vadd.xlane.f32.xlu0 %v3072
      %v3074 = vpop.xlane.xlu0 %3073
      %v3075 = vadd.f32 %v2949, %v2951
      %3076 = vadd.xlane.f32.xlu0 %v3075
      %v3077 = vpop.xlane.xlu0 %3076
      %v3078 = vadd.f32 %v2953, %v2955
      %3079 = vadd.xlane.f32.xlu0 %v3078
      %v3080 = vpop.xlane.xlu0 %3079
      %v3081 = vadd.f32 %v2957, %v2959
      %3082 = vadd.xlane.f32.xlu0 %v3081
      %v3083 = vpop.xlane.xlu0 %3082
      %v3084 = vadd.f32 %v2961, %v2963
      %3085 = vadd.xlane.f32.xlu0 %v3084
      %v3086 = vpop.xlane.xlu0 %3085
      %v3087 = vadd.f32 %v2965, %v2967
      %3088 = vadd.xlane.f32.xlu0 %v3087
      %v3089 = vpop.xlane.xlu0 %3088
      %v3090 = vadd.f32 %v2969, %v2971
      %3091 = vadd.xlane.f32.xlu0 %v3090
      %v3092 = vpop.xlane.xlu0 %3091
      %v3093 = vadd.f32 %v2973, %v2975
      %3094 = vadd.xlane.f32.xlu0 %v3093
      %v3095 = vpop.xlane.xlu0 %3094
      %v3096 = vadd.f32 %v2977, %v2979
      %3097 = vadd.xlane.f32.xlu0 %v3096
      %v3098 = vpop.xlane.xlu0 %3097
      %v3099 = vadd.f32 %v2981, %v2983
      %3100 = vadd.xlane.f32.xlu0 %v3099
      %v3101 = vpop.xlane.xlu0 %3100
      %v3102 = vadd.f32 %v2985, %v2987
      %3103 = vadd.xlane.f32.xlu0 %v3102
      %v3104 = vpop.xlane.xlu0 %3103
      %v3105 = vadd.f32 %v2989, %v2991
      %3106 = vadd.xlane.f32.xlu0 %v3105
      %v3107 = vpop.xlane.xlu0 %3106
      %v3108 = vadd.f32 %v2993, %v2995
      %3109 = vadd.xlane.f32.xlu0 %v3108
      %v3110 = vpop.xlane.xlu0 %3109
      %v3111 = vadd.f32 %v2997, %v2999
      %3112 = vadd.xlane.f32.xlu0 %v3111
      %v3113 = vpop.xlane.xlu0 %3112
      %v3114 = vadd.f32 %v3001, %v3003
      %3115 = vadd.xlane.f32.xlu0 %v3114
      %v3116 = vpop.xlane.xlu0 %3115
      %v3117 = vadd.f32 %v3005, %v3007
      %3118 = vadd.xlane.f32.xlu0 %v3117
      %v3119 = vpop.xlane.xlu0 %3118
      %v3120 = vadd.f32 %v3009, %v3011
      %3121 = vadd.xlane.f32.xlu0 %v3120
      %v3122 = vpop.xlane.xlu0 %3121
      %v3123 = vadd.f32 %v3013, %v3015
      %3124 = vadd.xlane.f32.xlu0 %v3123
      %v3125 = vpop.xlane.xlu0 %3124
      %v3126 = vadd.f32 %v3017, %v3019
      %3127 = vadd.xlane.f32.xlu0 %v3126
      %v3128 = vpop.xlane.xlu0 %3127
      %v3129 = vadd.f32 %v3021, %v3023
      %3130 = vadd.xlane.f32.xlu0 %v3129
      %v3131 = vpop.xlane.xlu0 %3130
      %v3132 = vadd.f32 %v3025, %v3027
      %3133 = vadd.xlane.f32.xlu0 %v3132
      %v3134 = vpop.xlane.xlu0 %3133
      %v3135 = vadd.f32 %v3029, %v3031
      %3136 = vadd.xlane.f32.xlu0 %v3135
      %v3137 = vpop.xlane.xlu0 %3136
      %v3138 = vadd.f32 %v3033, %v3035
      %3139 = vadd.xlane.f32.xlu0 %v3138
      %v3140 = vpop.xlane.xlu0 %3139
      %v3141 = vadd.f32 %v3037, %v3039
      %3142 = vadd.xlane.f32.xlu0 %v3141
      %v3143 = vpop.xlane.xlu0 %3142
      %v3144 = vadd.f32 %v3041, %v3043
      %3145 = vadd.xlane.f32.xlu0 %v3144
      %v3146 = vpop.xlane.xlu0 %3145
      %v3147 = vadd.f32 %v3045, %v3047
      %3148 = vadd.xlane.f32.xlu0 %v3147
      %v3149 = vpop.xlane.xlu0 %3148
      %v3150 = vadd.f32 %v3049, %v3051
      %3151 = vadd.xlane.f32.xlu0 %v3150
      %v3152 = vpop.xlane.xlu0 %3151
      %v3153 = vadd.f32 %v3053, %v3055
      %3154 = vadd.xlane.f32.xlu0 %v3153
      %v3155 = vpop.xlane.xlu0 %3154
      %v3156 = vadd.f32 %v3057, %v3059
      %3157 = vadd.xlane.f32.xlu0 %v3156
      %v3158 = vpop.xlane.xlu0 %3157
      %v3159 = vadd.f32 %v3061, %v3063
      %3160 = vadd.xlane.f32.xlu0 %v3159
      %v3161 = vpop.xlane.xlu0 %3160
      %v3162 = vadd.f32 %v3065, %v3067
      %3163 = vadd.xlane.f32.xlu0 %v3162
      %v3164 = vpop.xlane.xlu0 %3163
      %v3165 = vadd.f32 %v3069, %v3071
      %3166 = vadd.xlane.f32.xlu0 %v3165
      %v3167 = vpop.xlane.xlu0 %3166
      %v3168 = vrcp.pop %v3074
      %v3169 = vrcp.pop %v3077
      %v3170 = vrcp.pop %v3080
      %v3171 = vrcp.pop %v3083
      %v3172 = vrcp.pop %v3086
      %v3173 = vrcp.pop %v3089
      %v3174 = vrcp.pop %v3092
      %v3175 = vrcp.pop %v3095
      %v3176 = vrcp.pop %v3098
      %v3177 = vrcp.pop %v3101
      %v3178 = vrcp.pop %v3104
      %v3179 = vrcp.pop %v3107
      %v3180 = vrcp.pop %v3110
      %v3181 = vrcp.pop %v3113
      %v3182 = vrcp.pop %v3116
      %v3183 = vrcp.pop %v3119
      %v3184 = vrcp.pop %v3122
      %v3185 = vrcp.pop %v3125
      %v3186 = vrcp.pop %v3128
      %v3187 = vrcp.pop %v3131
      %v3188 = vrcp.pop %v3134
      %v3189 = vrcp.pop %v3137
      %v3190 = vrcp.pop %v3140
      %v3191 = vrcp.pop %v3143
      %v3192 = vrcp.pop %v3146
      %v3193 = vrcp.pop %v3149
      %v3194 = vrcp.pop %v3152
      %v3195 = vrcp.pop %v3155
      %v3196 = vrcp.pop %v3158
      %v3197 = vrcp.pop %v3161
      %v3198 = vrcp.pop %v3164
      %v3199 = vrcp.pop %v3167
      %v3200 = vmul.f32 %v2945, %v3168
      %v3201 = vmul.f32 %v2947, %v3168
      %v3202 = vmul.f32 %v2949, %v3169
      %v3203 = vmul.f32 %v2951, %v3169
      %v3204 = vmul.f32 %v2953, %v3170
      %v3205 = vmul.f32 %v2955, %v3170
      %v3206 = vmul.f32 %v2957, %v3171
      %v3207 = vmul.f32 %v2959, %v3171
      %v3208 = vmul.f32 %v2961, %v3172
      %v3209 = vmul.f32 %v2963, %v3172
      %v3210 = vmul.f32 %v2965, %v3173
      %v3211 = vmul.f32 %v2967, %v3173
      %v3212 = vmul.f32 %v2969, %v3174
      %v3213 = vmul.f32 %v2971, %v3174
      %v3214 = vmul.f32 %v2973, %v3175
      %v3215 = vmul.f32 %v2975, %v3175
      %v3216 = vmul.f32 %v2977, %v3176
      %v3217 = vmul.f32 %v2979, %v3176
      %v3218 = vmul.f32 %v2981, %v3177
      %v3219 = vmul.f32 %v2983, %v3177
      %v3220 = vmul.f32 %v2985, %v3178
      %v3221 = vmul.f32 %v2987, %v3178
      %v3222 = vmul.f32 %v2989, %v3179
      %v3223 = vmul.f32 %v2991, %v3179
      %v3224 = vmul.f32 %v2993, %v3180
      %v3225 = vmul.f32 %v2995, %v3180
      %v3226 = vmul.f32 %v2997, %v3181
      %v3227 = vmul.f32 %v2999, %v3181
      %v3228 = vmul.f32 %v3001, %v3182
      %v3229 = vmul.f32 %v3003, %v3182
      %v3230 = vmul.f32 %v3005, %v3183
      %v3231 = vmul.f32 %v3007, %v3183
      %v3232 = vmul.f32 %v3009, %v3184
      %v3233 = vmul.f32 %v3011, %v3184
      %v3234 = vmul.f32 %v3013, %v3185
      %v3235 = vmul.f32 %v3015, %v3185
      %v3236 = vmul.f32 %v3017, %v3186
      %v3237 = vmul.f32 %v3019, %v3186
      %v3238 = vmul.f32 %v3021, %v3187
      %v3239 = vmul.f32 %v3023, %v3187
      %v3240 = vmul.f32 %v3025, %v3188
      %v3241 = vmul.f32 %v3027, %v3188
      %v3242 = vmul.f32 %v3029, %v3189
      %v3243 = vmul.f32 %v3031, %v3189
      %v3244 = vmul.f32 %v3033, %v3190
      %v3245 = vmul.f32 %v3035, %v3190
      %v3246 = vmul.f32 %v3037, %v3191
      %v3247 = vmul.f32 %v3039, %v3191
      %v3248 = vmul.f32 %v3041, %v3192
      %v3249 = vmul.f32 %v3043, %v3192
      %v3250 = vmul.f32 %v3045, %v3193
      %v3251 = vmul.f32 %v3047, %v3193
      %v3252 = vmul.f32 %v3049, %v3194
      %v3253 = vmul.f32 %v3051, %v3194
      %v3254 = vmul.f32 %v3053, %v3195
      %v3255 = vmul.f32 %v3055, %v3195
      %v3256 = vmul.f32 %v3057, %v3196
      %v3257 = vmul.f32 %v3059, %v3196
      %v3258 = vmul.f32 %v3061, %v3197
      %v3259 = vmul.f32 %v3063, %v3197
      %v3260 = vmul.f32 %v3065, %v3198
      %v3261 = vmul.f32 %v3067, %v3198
      %v3262 = vmul.f32 %v3069, %v3199
      %v3263 = vmul.f32 %v3071, %v3199
      %v3264 = vpack.c.bf16 %v3202, %v3200
      %v3265 = vpack.c.bf16 %v3203, %v3201
      %v3266 = vpack.c.bf16 %v3206, %v3204
      %v3267 = vpack.c.bf16 %v3207, %v3205
      %v3268 = vpack.c.bf16 %v3210, %v3208
      %v3269 = vpack.c.bf16 %v3211, %v3209
      %v3270 = vpack.c.bf16 %v3214, %v3212
      %v3271 = vpack.c.bf16 %v3215, %v3213
      %v3272 = vpack.c.bf16 %v3218, %v3216
      %v3273 = vpack.c.bf16 %v3219, %v3217
      %v3274 = vpack.c.bf16 %v3222, %v3220
      %v3275 = vpack.c.bf16 %v3223, %v3221
      %v3276 = vpack.c.bf16 %v3226, %v3224
      %v3277 = vpack.c.bf16 %v3227, %v3225
      %v3278 = vpack.c.bf16 %v3230, %v3228
      %v3279 = vpack.c.bf16 %v3231, %v3229
      %v3280 = vpack.c.bf16 %v3234, %v3232
      %v3281 = vpack.c.bf16 %v3235, %v3233
      %v3282 = vpack.c.bf16 %v3238, %v3236
      %v3283 = vpack.c.bf16 %v3239, %v3237
      %v3284 = vpack.c.bf16 %v3242, %v3240
      %v3285 = vpack.c.bf16 %v3243, %v3241
      %v3286 = vpack.c.bf16 %v3246, %v3244
      %v3287 = vpack.c.bf16 %v3247, %v3245
      %v3288 = vpack.c.bf16 %v3250, %v3248
      %v3289 = vpack.c.bf16 %v3251, %v3249
      %v3290 = vpack.c.bf16 %v3254, %v3252
      %v3291 = vpack.c.bf16 %v3255, %v3253
      %v3292 = vpack.c.bf16 %v3258, %v3256
      %v3293 = vpack.c.bf16 %v3259, %v3257
      %v3294 = vpack.c.bf16 %v3262, %v3260
      %v3295 = vpack.c.bf16 %v3263, %v3261
      %v3296 = vrot.slane %v621, 2
      %v3297 = vrot.slane %v622, 2
      %3300 = vmatprep.subr.bf16.mxu0 %v3265
      %3301 = vmatpush1.bf16.xpose.msra.mxu0 %v3264
      %3302 = vmatprep.subr.bf16.mxu0 %v3267
      %3303 = vmatpush1.bf16.xpose.msra.mxu0 %v3266
      %3304 = vmatprep.subr.bf16.mxu0 %v3269
      %3305 = vmatpush1.bf16.xpose.msra.mxu0 %v3268
      %3306 = vmatprep.subr.bf16.mxu0 %v3271
      %3307 = vmatpush1.bf16.xpose.msra.mxu0 %v3270
      %3308 = vmatprep.subr.bf16.mxu0 %v3273
      %3309 = vmatpush1.bf16.xpose.msra.mxu0 %v3272
      %3310 = vmatprep.subr.bf16.mxu0 %v3275
      %3311 = vmatpush1.bf16.xpose.msra.mxu0 %v3274
      %3312 = vmatprep.subr.bf16.mxu0 %v3277
      %3313 = vmatpush1.bf16.xpose.msra.mxu0 %v3276
      %3314 = vmatprep.subr.bf16.mxu0 %v3279
      %3315 = vmatpush1.bf16.xpose.msra.mxu0 %v3278
      %3316 = vmatprep.subr.bf16.mxu0 %v3281
      %3317 = vmatpush1.bf16.xpose.msra.mxu0 %v3280
      %3318 = vmatprep.subr.bf16.mxu0 %v3283
      %3319 = vmatpush1.bf16.xpose.msra.mxu0 %v3282
      %3320 = vmatprep.subr.bf16.mxu0 %v3285
      %3321 = vmatpush1.bf16.xpose.msra.mxu0 %v3284
      %3322 = vmatprep.subr.bf16.mxu0 %v3287
      %3323 = vmatpush1.bf16.xpose.msra.mxu0 %v3286
      %3324 = vmatprep.subr.bf16.mxu0 %v3289
      %3325 = vmatpush1.bf16.xpose.msra.mxu0 %v3288
      %3326 = vmatprep.subr.bf16.mxu0 %v3291
      %3327 = vmatpush1.bf16.xpose.msra.mxu0 %v3290
      %3328 = vmatprep.subr.bf16.mxu0 %v3293
      %3329 = vmatpush1.bf16.xpose.msra.mxu0 %v3292
      %3330 = vmatprep.subr.bf16.mxu0 %v3295
      %3331 = vmatpush1.bf16.xpose.msra.mxu0 %v3294
      %3332 = vmatprep.mubr.bf16.mxu0 %v3297
      %3333 = vmatmul.mubr.bf16.gmra.mrb[0].mxu0 %v3296
      %v3334 = vpop.f32.mrb[0].mxu0
      %v3335 = vadd.f32 0.0, %v3334
      %v3336 = vpop.f32.mrb[0].mxu0
      %v3337 = vadd.f32 0.0, %v3336
      %v3338 = vpop.f32.mrb[0].mxu0
      %v3339 = vpop.f32.mrb[0].mxu0
      %3340 = vdwg.mxu0
      %s3341 = scalar_lea.vmem %s3, 1536
      %v3342 = vld [vmem:[%s3341] sm:$0xff]
      %v3343 = vld [vmem:[%s3341 + $0x8] sm:$0xff]
      %v3344 = vld [vmem:[%s3341 + $0x10] sm:$0xff]
      %v3345 = vld [vmem:[%s3341 + $0x18] sm:$0xff]
      %v3346 = vld [vmem:[%s3341 + $0x20] sm:$0xff]
      %v3347 = vld [vmem:[%s3341 + $0x28] sm:$0xff]
      %v3348 = vld [vmem:[%s3341 + $0x30] sm:$0xff]
      %v3349 = vld [vmem:[%s3341 + $0x38] sm:$0xff]
      %v3350 = vld [vmem:[%s3341 + $0x40] sm:$0xff]
      %v3351 = vld [vmem:[%s3341 + $0x48] sm:$0xff]
      %v3352 = vld [vmem:[%s3341 + $0x50] sm:$0xff]
      %v3353 = vld [vmem:[%s3341 + $0x58] sm:$0xff]
      %v3354 = vld [vmem:[%s3341 + $0x60] sm:$0xff]
      %v3355 = vld [vmem:[%s3341 + $0x68] sm:$0xff]
      %v3356 = vld [vmem:[%s3341 + $0x70] sm:$0xff]
      %v3357 = vld [vmem:[%s3341 + $0x78] sm:$0xff]
      %v3358 = vld [vmem:[%s3341 + $0x80] sm:$0xff]
      %v3359 = vld [vmem:[%s3341 + $0x88] sm:$0xff]
      %v3360 = vld [vmem:[%s3341 + $0x90] sm:$0xff]
      %v3361 = vld [vmem:[%s3341 + $0x98] sm:$0xff]
      %v3362 = vld [vmem:[%s3341 + $0xa0] sm:$0xff]
      %v3363 = vld [vmem:[%s3341 + $0xa8] sm:$0xff]
      %v3364 = vld [vmem:[%s3341 + $0xb0] sm:$0xff]
      %v3365 = vld [vmem:[%s3341 + $0xb8] sm:$0xff]
      %v3366 = vld [vmem:[%s3341 + $0xc0] sm:$0xff]
      %v3367 = vld [vmem:[%s3341 + $0xc8] sm:$0xff]
      %v3368 = vld [vmem:[%s3341 + $0xd0] sm:$0xff]
      %v3369 = vld [vmem:[%s3341 + $0xd8] sm:$0xff]
      %v3370 = vld [vmem:[%s3341 + $0xe0] sm:$0xff]
      %v3371 = vld [vmem:[%s3341 + $0xe8] sm:$0xff]
      %v3372 = vld [vmem:[%s3341 + $0xf0] sm:$0xff]
      %v3373 = vld [vmem:[%s3341 + $0xf8] sm:$0xff]
      %v3374 = vld [vmem:[%s3341 + $0x100] sm:$0xff]
      %v3375 = vld [vmem:[%s3341 + $0x108] sm:$0xff]
      %v3376 = vld [vmem:[%s3341 + $0x110] sm:$0xff]
      %v3377 = vld [vmem:[%s3341 + $0x118] sm:$0xff]
      %v3378 = vld [vmem:[%s3341 + $0x120] sm:$0xff]
      %v3379 = vld [vmem:[%s3341 + $0x128] sm:$0xff]
      %v3380 = vld [vmem:[%s3341 + $0x130] sm:$0xff]
      %v3381 = vld [vmem:[%s3341 + $0x138] sm:$0xff]
      %v3382 = vld [vmem:[%s3341 + $0x140] sm:$0xff]
      %v3383 = vld [vmem:[%s3341 + $0x148] sm:$0xff]
      %v3384 = vld [vmem:[%s3341 + $0x150] sm:$0xff]
      %v3385 = vld [vmem:[%s3341 + $0x158] sm:$0xff]
      %v3386 = vld [vmem:[%s3341 + $0x160] sm:$0xff]
      %v3387 = vld [vmem:[%s3341 + $0x168] sm:$0xff]
      %v3388 = vld [vmem:[%s3341 + $0x170] sm:$0xff]
      %v3389 = vld [vmem:[%s3341 + $0x178] sm:$0xff]
      %v3390 = vld [vmem:[%s3341 + $0x180] sm:$0xff]
      %v3391 = vld [vmem:[%s3341 + $0x188] sm:$0xff]
      %v3392 = vld [vmem:[%s3341 + $0x190] sm:$0xff]
      %v3393 = vld [vmem:[%s3341 + $0x198] sm:$0xff]
      %v3394 = vld [vmem:[%s3341 + $0x1a0] sm:$0xff]
      %v3395 = vld [vmem:[%s3341 + $0x1a8] sm:$0xff]
      %v3396 = vld [vmem:[%s3341 + $0x1b0] sm:$0xff]
      %v3397 = vld [vmem:[%s3341 + $0x1b8] sm:$0xff]
      %v3398 = vld [vmem:[%s3341 + $0x1c0] sm:$0xff]
      %v3399 = vld [vmem:[%s3341 + $0x1c8] sm:$0xff]
      %v3400 = vld [vmem:[%s3341 + $0x1d0] sm:$0xff]
      %v3401 = vld [vmem:[%s3341 + $0x1d8] sm:$0xff]
      %v3402 = vld [vmem:[%s3341 + $0x1e0] sm:$0xff]
      %v3403 = vld [vmem:[%s3341 + $0x1e8] sm:$0xff]
      %v3404 = vld [vmem:[%s3341 + $0x1f0] sm:$0xff]
      %v3405 = vld [vmem:[%s3341 + $0x1f8] sm:$0xff]
      %v3406 = vrot.slane %v617, 3
      %v3407 = vrot.slane %v618, 3
      %3410 = vxpose.xlu0.c.b16.start [1/8] %v3406, 128
      %3411 = vxpose.xlu0.c.b16.cont [2/8] 0, 128
      %3412 = vxpose.xlu0.c.b16.cont [3/8] 0, 128
      %3413 = vxpose.xlu0.c.b16.cont [4/8] 0, 128
      %3414 = vxpose.xlu0.c.b16.cont [5/8] 0, 128
      %3415 = vxpose.xlu0.c.b16.cont [6/8] 0, 128
      %3416 = vxpose.xlu0.c.b16.cont [7/8] 0, 128
      %3417 = vxpose.xlu0.c.b16.end [8/8] 0, 128
      %v3418 = vpop.trf.xlu0
      %v3419 = vpop.trf.xlu0
      %v3420 = vpop.trf.xlu0
      %v3421 = vpop.trf.xlu0
      %v3422 = vpop.trf.xlu0
      %v3423 = vpop.trf.xlu0
      %v3424 = vpop.trf.xlu0
      %v3425 = vpop.trf.xlu0
      %3426 = vxpose.xlu0.c.b16.start [1/8] %v3407, 128
      %3427 = vxpose.xlu0.c.b16.cont [2/8] 0, 128
      %3428 = vxpose.xlu0.c.b16.cont [3/8] 0, 128
      %3429 = vxpose.xlu0.c.b16.cont [4/8] 0, 128
      %3430 = vxpose.xlu0.c.b16.cont [5/8] 0, 128
      %3431 = vxpose.xlu0.c.b16.cont [6/8] 0, 128
      %3432 = vxpose.xlu0.c.b16.cont [7/8] 0, 128
      %3433 = vxpose.xlu0.c.b16.end [8/8] 0, 128
      %v3434 = vpop.trf.xlu0
      %v3435 = vpop.trf.xlu0
      %v3436 = vpop.trf.xlu0
      %v3437 = vpop.trf.xlu0
      %v3438 = vpop.trf.xlu0
      %v3439 = vpop.trf.xlu0
      %v3440 = vpop.trf.xlu0
      %v3441 = vpop.trf.xlu0
      %v3442 = vrot.slane %v619, 3
      %v3443 = vrot.slane %v620, 3
      %v3445 = vsel %vm719, %v3418, 0
      %v3448 = vsel %vm719, %v3419, 0
      %v3451 = vsel %vm719, %v3420, 0
      %v3454 = vsel %vm719, %v3421, 0
      %v3457 = vsel %vm719, %v3422, 0
      %v3460 = vsel %vm719, %v3423, 0
      %v3463 = vsel %vm719, %v3424, 0
      %v3466 = vsel %vm719, %v3425, 0
      %v3469 = vsel %vm719, %v3434, 0
      %v3472 = vsel %vm719, %v3435, 0
      %v3475 = vsel %vm719, %v3436, 0
      %v3478 = vsel %vm719, %v3437, 0
      %v3481 = vsel %vm719, %v3438, 0
      %v3484 = vsel %vm719, %v3439, 0
      %v3487 = vsel %vm719, %v3440, 0
      %v3490 = vsel %vm719, %v3441, 0
      %v3493 = vsel %vm768, %v3442, 0
      %v3496 = vsel %vm768, %v3443, 0
      %3498 = vmatprep.subr.bf16.mxu0 %v3496
      %3499 = vmatpush1.bf16.msra.mxu0 %v3493
      %3500 = vmatprep.subr.bf16.mxu0 0
      %3501 = vmatpush1.bf16.msra.mxu0 0
      %3502 = vmatprep.subr.bf16.mxu0 0
      %3503 = vmatpush1.bf16.msra.mxu0 0
      %3504 = vmatprep.subr.bf16.mxu0 0
      %3505 = vmatpush1.bf16.msra.mxu0 0
      %3506 = vmatprep.subr.bf16.mxu0 0
      %3507 = vmatpush1.bf16.msra.mxu0 0
      %3508 = vmatprep.subr.bf16.mxu0 0
      %3509 = vmatpush1.bf16.msra.mxu0 0
      %3510 = vmatprep.subr.bf16.mxu0 0
      %3511 = vmatpush1.bf16.msra.mxu0 0
      %3512 = vmatprep.subr.bf16.mxu0 0
      %3513 = vmatpush1.bf16.msra.mxu0 0
      %3514 = vmatprep.subr.bf16.mxu0 0
      %3515 = vmatpush1.bf16.msra.mxu0 0
      %3516 = vmatprep.subr.bf16.mxu0 0
      %3517 = vmatpush1.bf16.msra.mxu0 0
      %3518 = vmatprep.subr.bf16.mxu0 0
      %3519 = vmatpush1.bf16.msra.mxu0 0
      %3520 = vmatprep.subr.bf16.mxu0 0
      %3521 = vmatpush1.bf16.msra.mxu0 0
      %3522 = vmatprep.subr.bf16.mxu0 0
      %3523 = vmatpush1.bf16.msra.mxu0 0
      %3524 = vmatprep.subr.bf16.mxu0 0
      %3525 = vmatpush1.bf16.msra.mxu0 0
      %3526 = vmatprep.subr.bf16.mxu0 0
      %3527 = vmatpush1.bf16.msra.mxu0 0
      %3528 = vmatprep.subr.bf16.mxu0 0
      %3529 = vmatpush1.bf16.msra.mxu0 0
      %3530 = vmatprep.mubr.bf16.mxu0 0
      %3531 = vmatmul.mubr.bf16.gmra.mrb[0].mxu0 %v3445
      %v3532 = vpop.f32.mrb[0].mxu0
      %v3533 = vadd.f32 %v3342, %v3532
      %v3534 = vpop.f32.mrb[0].mxu0
      %v3535 = vadd.f32 %v3343, %v3534
      %v3536 = vpop.f32.mrb[0].mxu0
      %v3537 = vadd.f32 %v3344, %v3536
      %v3538 = vpop.f32.mrb[0].mxu0
      %v3539 = vadd.f32 %v3345, %v3538
      %3540 = vmatprep.mubr.bf16.mxu0 0
      %3541 = vmatmul.mubr.bf16.gmra.mrb[0].mxu0 %v3448
      %v3542 = vpop.f32.mrb[0].mxu0
      %v3543 = vadd.f32 %v3346, %v3542
      %v3544 = vpop.f32.mrb[0].mxu0
      %v3545 = vadd.f32 %v3347, %v3544
      %v3546 = vpop.f32.mrb[0].mxu0
      %v3547 = vadd.f32 %v3348, %v3546
      %v3548 = vpop.f32.mrb[0].mxu0
      %v3549 = vadd.f32 %v3349, %v3548
      %3550 = vmatprep.mubr.bf16.mxu0 0
      %3551 = vmatmul.mubr.bf16.gmra.mrb[0].mxu0 %v3451
      %v3552 = vpop.f32.mrb[0].mxu0
      %v3553 = vadd.f32 %v3350, %v3552
      %v3554 = vpop.f32.mrb[0].mxu0
      %v3555 = vadd.f32 %v3351, %v3554
      %v3556 = vpop.f32.mrb[0].mxu0
      %v3557 = vadd.f32 %v3352, %v3556
      %v3558 = vpop.f32.mrb[0].mxu0
      %v3559 = vadd.f32 %v3353, %v3558
      %3560 = vmatprep.mubr.bf16.mxu0 0
      %3561 = vmatmul.mubr.bf16.gmra.mrb[0].mxu0 %v3454
      %v3562 = vpop.f32.mrb[0].mxu0
      %v3563 = vadd.f32 %v3354, %v3562
      %v3564 = vpop.f32.mrb[0].mxu0
      %v3565 = vadd.f32 %v3355, %v3564
      %v3566 = vpop.f32.mrb[0].mxu0
      %v3567 = vadd.f32 %v3356, %v3566
      %v3568 = vpop.f32.mrb[0].mxu0
      %v3569 = vadd.f32 %v3357, %v3568
      %3570 = vmatprep.mubr.bf16.mxu0 0
      %3571 = vmatmul.mubr.bf16.gmra.mrb[0].mxu0 %v3457
      %v3572 = vpop.f32.mrb[0].mxu0
      %v3573 = vadd.f32 %v3358, %v3572
      %v3574 = vpop.f32.mrb[0].mxu0
      %v3575 = vadd.f32 %v3359, %v3574
      %v3576 = vpop.f32.mrb[0].mxu0
      %v3577 = vadd.f32 %v3360, %v3576
      %v3578 = vpop.f32.mrb[0].mxu0
      %v3579 = vadd.f32 %v3361, %v3578
      %3580 = vmatprep.mubr.bf16.mxu0 0
      %3581 = vmatmul.mubr.bf16.gmra.mrb[0].mxu0 %v3460
      %v3582 = vpop.f32.mrb[0].mxu0
      %v3583 = vadd.f32 %v3362, %v3582
      %v3584 = vpop.f32.mrb[0].mxu0
      %v3585 = vadd.f32 %v3363, %v3584
      %v3586 = vpop.f32.mrb[0].mxu0
      %v3587 = vadd.f32 %v3364, %v3586
      %v3588 = vpop.f32.mrb[0].mxu0
      %v3589 = vadd.f32 %v3365, %v3588
      %3590 = vmatprep.mubr.bf16.mxu0 0
      %3591 = vmatmul.mubr.bf16.gmra.mrb[0].mxu0 %v3463
      %v3592 = vpop.f32.mrb[0].mxu0
      %v3593 = vadd.f32 %v3366, %v3592
      %v3594 = vpop.f32.mrb[0].mxu0
      %v3595 = vadd.f32 %v3367, %v3594
      %v3596 = vpop.f32.mrb[0].mxu0
      %v3597 = vadd.f32 %v3368, %v3596
      %v3598 = vpop.f32.mrb[0].mxu0
      %v3599 = vadd.f32 %v3369, %v3598
      %3600 = vmatprep.mubr.bf16.mxu0 0
      %3601 = vmatmul.mubr.bf16.gmra.mrb[0].mxu0 %v3466
      %v3602 = vpop.f32.mrb[0].mxu0
      %v3603 = vadd.f32 %v3370, %v3602
      %v3604 = vpop.f32.mrb[0].mxu0
      %v3605 = vadd.f32 %v3371, %v3604
      %v3606 = vpop.f32.mrb[0].mxu0
      %v3607 = vadd.f32 %v3372, %v3606
      %v3608 = vpop.f32.mrb[0].mxu0
      %v3609 = vadd.f32 %v3373, %v3608
      %3610 = vmatprep.mubr.bf16.mxu0 0
      %3611 = vmatmul.mubr.bf16.gmra.mrb[0].mxu0 %v3469
      %v3612 = vpop.f32.mrb[0].mxu0
      %v3613 = vadd.f32 %v3374, %v3612
      %v3614 = vpop.f32.mrb[0].mxu0
      %v3615 = vadd.f32 %v3375, %v3614
      %v3616 = vpop.f32.mrb[0].mxu0
      %v3617 = vadd.f32 %v3376, %v3616
      %v3618 = vpop.f32.mrb[0].mxu0
      %v3619 = vadd.f32 %v3377, %v3618
      %3620 = vmatprep.mubr.bf16.mxu0 0
      %3621 = vmatmul.mubr.bf16.gmra.mrb[0].mxu0 %v3472
      %v3622 = vpop.f32.mrb[0].mxu0
      %v3623 = vadd.f32 %v3378, %v3622
      %v3624 = vpop.f32.mrb[0].mxu0
      %v3625 = vadd.f32 %v3379, %v3624
      %v3626 = vpop.f32.mrb[0].mxu0
      %v3627 = vadd.f32 %v3380, %v3626
      %v3628 = vpop.f32.mrb[0].mxu0
      %v3629 = vadd.f32 %v3381, %v3628
      %3630 = vmatprep.mubr.bf16.mxu0 0
      %3631 = vmatmul.mubr.bf16.gmra.mrb[0].mxu0 %v3475
      %v3632 = vpop.f32.mrb[0].mxu0
      %v3633 = vadd.f32 %v3382, %v3632
      %v3634 = vpop.f32.mrb[0].mxu0
      %v3635 = vadd.f32 %v3383, %v3634
      %v3636 = vpop.f32.mrb[0].mxu0
      %v3637 = vadd.f32 %v3384, %v3636
      %v3638 = vpop.f32.mrb[0].mxu0
      %v3639 = vadd.f32 %v3385, %v3638
      %3640 = vmatprep.mubr.bf16.mxu0 0
      %3641 = vmatmul.mubr.bf16.gmra.mrb[0].mxu0 %v3478
      %v3642 = vpop.f32.mrb[0].mxu0
      %v3643 = vadd.f32 %v3386, %v3642
      %v3644 = vpop.f32.mrb[0].mxu0
      %v3645 = vadd.f32 %v3387, %v3644
      %v3646 = vpop.f32.mrb[0].mxu0
      %v3647 = vadd.f32 %v3388, %v3646
      %v3648 = vpop.f32.mrb[0].mxu0
      %v3649 = vadd.f32 %v3389, %v3648
      %3650 = vmatprep.mubr.bf16.mxu0 0
      %3651 = vmatmul.mubr.bf16.gmra.mrb[0].mxu0 %v3481
      %v3652 = vpop.f32.mrb[0].mxu0
      %v3653 = vadd.f32 %v3390, %v3652
      %v3654 = vpop.f32.mrb[0].mxu0
      %v3655 = vadd.f32 %v3391, %v3654
      %v3656 = vpop.f32.mrb[0].mxu0
      %v3657 = vadd.f32 %v3392, %v3656
      %v3658 = vpop.f32.mrb[0].mxu0
      %v3659 = vadd.f32 %v3393, %v3658
      %3660 = vmatprep.mubr.bf16.mxu0 0
      %3661 = vmatmul.mubr.bf16.gmra.mrb[0].mxu0 %v3484
      %v3662 = vpop.f32.mrb[0].mxu0
      %v3663 = vadd.f32 %v3394, %v3662
      %v3664 = vpop.f32.mrb[0].mxu0
      %v3665 = vadd.f32 %v3395, %v3664
      %v3666 = vpop.f32.mrb[0].mxu0
      %v3667 = vadd.f32 %v3396, %v3666
      %v3668 = vpop.f32.mrb[0].mxu0
      %v3669 = vadd.f32 %v3397, %v3668
      %3670 = vmatprep.mubr.bf16.mxu0 0
      %3671 = vmatmul.mubr.bf16.gmra.mrb[0].mxu0 %v3487
      %v3672 = vpop.f32.mrb[0].mxu0
      %v3673 = vadd.f32 %v3398, %v3672
      %v3674 = vpop.f32.mrb[0].mxu0
      %v3675 = vadd.f32 %v3399, %v3674
      %v3676 = vpop.f32.mrb[0].mxu0
      %v3677 = vadd.f32 %v3400, %v3676
      %v3678 = vpop.f32.mrb[0].mxu0
      %v3679 = vadd.f32 %v3401, %v3678
      %3680 = vmatprep.mubr.bf16.mxu0 0
      %3681 = vmatmul.mubr.bf16.gmra.mrb[0].mxu0 %v3490
      %v3682 = vpop.f32.mrb[0].mxu0
      %v3683 = vadd.f32 %v3402, %v3682
      %v3684 = vpop.f32.mrb[0].mxu0
      %v3685 = vadd.f32 %v3403, %v3684
      %v3686 = vpop.f32.mrb[0].mxu0
      %v3687 = vadd.f32 %v3404, %v3686
      %v3688 = vpop.f32.mrb[0].mxu0
      %v3689 = vadd.f32 %v3405, %v3688
      %3690 = vdwg.mxu0
      %v3691 = vmax.f32 %v3533, %v3535
      %3692 = vmax.xlane.f32.xlu0 %v3691
      %v3693 = vpop.xlane.xlu0 %3692
      %v3694 = vmax.f32 %v3537, %v3539
      %3695 = vmax.xlane.f32.xlu0 %v3694
      %v3696 = vpop.xlane.xlu0 %3695
      %v3697 = vmax.f32 %v3543, %v3545
      %3698 = vmax.xlane.f32.xlu0 %v3697
      %v3699 = vpop.xlane.xlu0 %3698
      %v3700 = vmax.f32 %v3547, %v3549
      %3701 = vmax.xlane.f32.xlu0 %v3700
      %v3702 = vpop.xlane.xlu0 %3701
      %v3703 = vmax.f32 %v3553, %v3555
      %3704 = vmax.xlane.f32.xlu0 %v3703
      %v3705 = vpop.xlane.xlu0 %3704
      %v3706 = vmax.f32 %v3557, %v3559
      %3707 = vmax.xlane.f32.xlu0 %v3706
      %v3708 = vpop.xlane.xlu0 %3707
      %v3709 = vmax.f32 %v3563, %v3565
      %3710 = vmax.xlane.f32.xlu0 %v3709
      %v3711 = vpop.xlane.xlu0 %3710
      %v3712 = vmax.f32 %v3567, %v3569
      %3713 = vmax.xlane.f32.xlu0 %v3712
      %v3714 = vpop.xlane.xlu0 %3713
      %v3715 = vmax.f32 %v3573, %v3575
      %3716 = vmax.xlane.f32.xlu0 %v3715
      %v3717 = vpop.xlane.xlu0 %3716
      %v3718 = vmax.f32 %v3577, %v3579
      %3719 = vmax.xlane.f32.xlu0 %v3718
      %v3720 = vpop.xlane.xlu0 %3719
      %v3721 = vmax.f32 %v3583, %v3585
      %3722 = vmax.xlane.f32.xlu0 %v3721
      %v3723 = vpop.xlane.xlu0 %3722
      %v3724 = vmax.f32 %v3587, %v3589
      %3725 = vmax.xlane.f32.xlu0 %v3724
      %v3726 = vpop.xlane.xlu0 %3725
      %v3727 = vmax.f32 %v3593, %v3595
      %3728 = vmax.xlane.f32.xlu0 %v3727
      %v3729 = vpop.xlane.xlu0 %3728
      %v3730 = vmax.f32 %v3597, %v3599
      %3731 = vmax.xlane.f32.xlu0 %v3730
      %v3732 = vpop.xlane.xlu0 %3731
      %v3733 = vmax.f32 %v3603, %v3605
      %3734 = vmax.xlane.f32.xlu0 %v3733
      %v3735 = vpop.xlane.xlu0 %3734
      %v3736 = vmax.f32 %v3607, %v3609
      %3737 = vmax.xlane.f32.xlu0 %v3736
      %v3738 = vpop.xlane.xlu0 %3737
      %v3739 = vmax.f32 %v3613, %v3615
      %3740 = vmax.xlane.f32.xlu0 %v3739
      %v3741 = vpop.xlane.xlu0 %3740
      %v3742 = vmax.f32 %v3617, %v3619
      %3743 = vmax.xlane.f32.xlu0 %v3742
      %v3744 = vpop.xlane.xlu0 %3743
      %v3745 = vmax.f32 %v3623, %v3625
      %3746 = vmax.xlane.f32.xlu0 %v3745
      %v3747 = vpop.xlane.xlu0 %3746
      %v3748 = vmax.f32 %v3627, %v3629
      %3749 = vmax.xlane.f32.xlu0 %v3748
      %v3750 = vpop.xlane.xlu0 %3749
      %v3751 = vmax.f32 %v3633, %v3635
      %3752 = vmax.xlane.f32.xlu0 %v3751
      %v3753 = vpop.xlane.xlu0 %3752
      %v3754 = vmax.f32 %v3637, %v3639
      %3755 = vmax.xlane.f32.xlu0 %v3754
      %v3756 = vpop.xlane.xlu0 %3755
      %v3757 = vmax.f32 %v3643, %v3645
      %3758 = vmax.xlane.f32.xlu0 %v3757
      %v3759 = vpop.xlane.xlu0 %3758
      %v3760 = vmax.f32 %v3647, %v3649
      %3761 = vmax.xlane.f32.xlu0 %v3760
      %v3762 = vpop.xlane.xlu0 %3761
      %v3763 = vmax.f32 %v3653, %v3655
      %3764 = vmax.xlane.f32.xlu0 %v3763
      %v3765 = vpop.xlane.xlu0 %3764
      %v3766 = vmax.f32 %v3657, %v3659
      %3767 = vmax.xlane.f32.xlu0 %v3766
      %v3768 = vpop.xlane.xlu0 %3767
      %v3769 = vmax.f32 %v3663, %v3665
      %3770 = vmax.xlane.f32.xlu0 %v3769
      %v3771 = vpop.xlane.xlu0 %3770
      %v3772 = vmax.f32 %v3667, %v3669
      %3773 = vmax.xlane.f32.xlu0 %v3772
      %v3774 = vpop.xlane.xlu0 %3773
      %v3775 = vmax.f32 %v3673, %v3675
      %3776 = vmax.xlane.f32.xlu0 %v3775
      %v3777 = vpop.xlane.xlu0 %3776
      %v3778 = vmax.f32 %v3677, %v3679
      %3779 = vmax.xlane.f32.xlu0 %v3778
      %v3780 = vpop.xlane.xlu0 %3779
      %v3781 = vmax.f32 %v3683, %v3685
      %3782 = vmax.xlane.f32.xlu0 %v3781
      %v3783 = vpop.xlane.xlu0 %3782
      %v3784 = vmax.f32 %v3687, %v3689
      %3785 = vmax.xlane.f32.xlu0 %v3784
      %v3786 = vpop.xlane.xlu0 %3785
      %v3787 = vsub.f32 %v3533, %v3693
      %v3788 = vsub.f32 %v3535, %v3693
      %v3789 = vsub.f32 %v3537, %v3696
      %v3790 = vsub.f32 %v3539, %v3696
      %v3791 = vsub.f32 %v3543, %v3699
      %v3792 = vsub.f32 %v3545, %v3699
      %v3793 = vsub.f32 %v3547, %v3702
      %v3794 = vsub.f32 %v3549, %v3702
      %v3795 = vsub.f32 %v3553, %v3705
      %v3796 = vsub.f32 %v3555, %v3705
      %v3797 = vsub.f32 %v3557, %v3708
      %v3798 = vsub.f32 %v3559, %v3708
      %v3799 = vsub.f32 %v3563, %v3711
      %v3800 = vsub.f32 %v3565, %v3711
      %v3801 = vsub.f32 %v3567, %v3714
      %v3802 = vsub.f32 %v3569, %v3714
      %v3803 = vsub.f32 %v3573, %v3717
      %v3804 = vsub.f32 %v3575, %v3717
      %v3805 = vsub.f32 %v3577, %v3720
      %v3806 = vsub.f32 %v3579, %v3720
      %v3807 = vsub.f32 %v3583, %v3723
      %v3808 = vsub.f32 %v3585, %v3723
      %v3809 = vsub.f32 %v3587, %v3726
      %v3810 = vsub.f32 %v3589, %v3726
      %v3811 = vsub.f32 %v3593, %v3729
      %v3812 = vsub.f32 %v3595, %v3729
      %v3813 = vsub.f32 %v3597, %v3732
      %v3814 = vsub.f32 %v3599, %v3732
      %v3815 = vsub.f32 %v3603, %v3735
      %v3816 = vsub.f32 %v3605, %v3735
      %v3817 = vsub.f32 %v3607, %v3738
      %v3818 = vsub.f32 %v3609, %v3738
      %v3819 = vsub.f32 %v3613, %v3741
      %v3820 = vsub.f32 %v3615, %v3741
      %v3821 = vsub.f32 %v3617, %v3744
      %v3822 = vsub.f32 %v3619, %v3744
      %v3823 = vsub.f32 %v3623, %v3747
      %v3824 = vsub.f32 %v3625, %v3747
      %v3825 = vsub.f32 %v3627, %v3750
      %v3826 = vsub.f32 %v3629, %v3750
      %v3827 = vsub.f32 %v3633, %v3753
      %v3828 = vsub.f32 %v3635, %v3753
      %v3829 = vsub.f32 %v3637, %v3756
      %v3830 = vsub.f32 %v3639, %v3756
      %v3831 = vsub.f32 %v3643, %v3759
      %v3832 = vsub.f32 %v3645, %v3759
      %v3833 = vsub.f32 %v3647, %v3762
      %v3834 = vsub.f32 %v3649, %v3762
      %v3835 = vsub.f32 %v3653, %v3765
      %v3836 = vsub.f32 %v3655, %v3765
      %v3837 = vsub.f32 %v3657, %v3768
      %v3838 = vsub.f32 %v3659, %v3768
      %v3839 = vsub.f32 %v3663, %v3771
      %v3840 = vsub.f32 %v3665, %v3771
      %v3841 = vsub.f32 %v3667, %v3774
      %v3842 = vsub.f32 %v3669, %v3774
      %v3843 = vsub.f32 %v3673, %v3777
      %v3844 = vsub.f32 %v3675, %v3777
      %v3845 = vsub.f32 %v3677, %v3780
      %v3846 = vsub.f32 %v3679, %v3780
      %v3847 = vsub.f32 %v3683, %v3783
      %v3848 = vsub.f32 %v3685, %v3783
      %v3849 = vsub.f32 %v3687, %v3786
      %v3850 = vsub.f32 %v3689, %v3786
      %v3851 = vmul.f32 %v3787, 1.442695
      %v3852 = vpow.pop %v3851
      %v3853 = vmul.f32 %v3788, 1.442695
      %v3854 = vpow.pop %v3853
      %v3855 = vmul.f32 %v3789, 1.442695
      %v3856 = vpow.pop %v3855
      %v3857 = vmul.f32 %v3790, 1.442695
      %v3858 = vpow.pop %v3857
      %v3859 = vmul.f32 %v3791, 1.442695
      %v3860 = vpow.pop %v3859
      %v3861 = vmul.f32 %v3792, 1.442695
      %v3862 = vpow.pop %v3861
      %v3863 = vmul.f32 %v3793, 1.442695
      %v3864 = vpow.pop %v3863
      %v3865 = vmul.f32 %v3794, 1.442695
      %v3866 = vpow.pop %v3865
      %v3867 = vmul.f32 %v3795, 1.442695
      %v3868 = vpow.pop %v3867
      %v3869 = vmul.f32 %v3796, 1.442695
      %v3870 = vpow.pop %v3869
      %v3871 = vmul.f32 %v3797, 1.442695
      %v3872 = vpow.pop %v3871
      %v3873 = vmul.f32 %v3798, 1.442695
      %v3874 = vpow.pop %v3873
      %v3875 = vmul.f32 %v3799, 1.442695
      %v3876 = vpow.pop %v3875
      %v3877 = vmul.f32 %v3800, 1.442695
      %v3878 = vpow.pop %v3877
      %v3879 = vmul.f32 %v3801, 1.442695
      %v3880 = vpow.pop %v3879
      %v3881 = vmul.f32 %v3802, 1.442695
      %v3882 = vpow.pop %v3881
      %v3883 = vmul.f32 %v3803, 1.442695
      %v3884 = vpow.pop %v3883
      %v3885 = vmul.f32 %v3804, 1.442695
      %v3886 = vpow.pop %v3885
      %v3887 = vmul.f32 %v3805, 1.442695
      %v3888 = vpow.pop %v3887
      %v3889 = vmul.f32 %v3806, 1.442695
      %v3890 = vpow.pop %v3889
      %v3891 = vmul.f32 %v3807, 1.442695
      %v3892 = vpow.pop %v3891
      %v3893 = vmul.f32 %v3808, 1.442695
      %v3894 = vpow.pop %v3893
      %v3895 = vmul.f32 %v3809, 1.442695
      %v3896 = vpow.pop %v3895
      %v3897 = vmul.f32 %v3810, 1.442695
      %v3898 = vpow.pop %v3897
      %v3899 = vmul.f32 %v3811, 1.442695
      %v3900 = vpow.pop %v3899
      %v3901 = vmul.f32 %v3812, 1.442695
      %v3902 = vpow.pop %v3901
      %v3903 = vmul.f32 %v3813, 1.442695
      %v3904 = vpow.pop %v3903
      %v3905 = vmul.f32 %v3814, 1.442695
      %v3906 = vpow.pop %v3905
      %v3907 = vmul.f32 %v3815, 1.442695
      %v3908 = vpow.pop %v3907
      %v3909 = vmul.f32 %v3816, 1.442695
      %v3910 = vpow.pop %v3909
      %v3911 = vmul.f32 %v3817, 1.442695
      %v3912 = vpow.pop %v3911
      %v3913 = vmul.f32 %v3818, 1.442695
      %v3914 = vpow.pop %v3913
      %v3915 = vmul.f32 %v3819, 1.442695
      %v3916 = vpow.pop %v3915
      %v3917 = vmul.f32 %v3820, 1.442695
      %v3918 = vpow.pop %v3917
      %v3919 = vmul.f32 %v3821, 1.442695
      %v3920 = vpow.pop %v3919
      %v3921 = vmul.f32 %v3822, 1.442695
      %v3922 = vpow.pop %v3921
      %v3923 = vmul.f32 %v3823, 1.442695
      %v3924 = vpow.pop %v3923
      %v3925 = vmul.f32 %v3824, 1.442695
      %v3926 = vpow.pop %v3925
      %v3927 = vmul.f32 %v3825, 1.442695
      %v3928 = vpow.pop %v3927
      %v3929 = vmul.f32 %v3826, 1.442695
      %v3930 = vpow.pop %v3929
      %v3931 = vmul.f32 %v3827, 1.442695
      %v3932 = vpow.pop %v3931
      %v3933 = vmul.f32 %v3828, 1.442695
      %v3934 = vpow.pop %v3933
      %v3935 = vmul.f32 %v3829, 1.442695
      %v3936 = vpow.pop %v3935
      %v3937 = vmul.f32 %v3830, 1.442695
      %v3938 = vpow.pop %v3937
      %v3939 = vmul.f32 %v3831, 1.442695
      %v3940 = vpow.pop %v3939
      %v3941 = vmul.f32 %v3832, 1.442695
      %v3942 = vpow.pop %v3941
      %v3943 = vmul.f32 %v3833, 1.442695
      %v3944 = vpow.pop %v3943
      %v3945 = vmul.f32 %v3834, 1.442695
      %v3946 = vpow.pop %v3945
      %v3947 = vmul.f32 %v3835, 1.442695
      %v3948 = vpow.pop %v3947
      %v3949 = vmul.f32 %v3836, 1.442695
      %v3950 = vpow.pop %v3949
      %v3951 = vmul.f32 %v3837, 1.442695
      %v3952 = vpow.pop %v3951
      %v3953 = vmul.f32 %v3838, 1.442695
      %v3954 = vpow.pop %v3953
      %v3955 = vmul.f32 %v3839, 1.442695
      %v3956 = vpow.pop %v3955
      %v3957 = vmul.f32 %v3840, 1.442695
      %v3958 = vpow.pop %v3957
      %v3959 = vmul.f32 %v3841, 1.442695
      %v3960 = vpow.pop %v3959
      %v3961 = vmul.f32 %v3842, 1.442695
      %v3962 = vpow.pop %v3961
      %v3963 = vmul.f32 %v3843, 1.442695
      %v3964 = vpow.pop %v3963
      %v3965 = vmul.f32 %v3844, 1.442695
      %v3966 = vpow.pop %v3965
      %v3967 = vmul.f32 %v3845, 1.442695
      %v3968 = vpow.pop %v3967
      %v3969 = vmul.f32 %v3846, 1.442695
      %v3970 = vpow.pop %v3969
      %v3971 = vmul.f32 %v3847, 1.442695
      %v3972 = vpow.pop %v3971
      %v3973 = vmul.f32 %v3848, 1.442695
      %v3974 = vpow.pop %v3973
      %v3975 = vmul.f32 %v3849, 1.442695
      %v3976 = vpow.pop %v3975
      %v3977 = vmul.f32 %v3850, 1.442695
      %v3978 = vpow.pop %v3977
      %v3979 = vadd.f32 %v3852, %v3854
      %3980 = vadd.xlane.f32.xlu0 %v3979
      %v3981 = vpop.xlane.xlu0 %3980
      %v3982 = vadd.f32 %v3856, %v3858
      %3983 = vadd.xlane.f32.xlu0 %v3982
      %v3984 = vpop.xlane.xlu0 %3983
      %v3985 = vadd.f32 %v3860, %v3862
      %3986 = vadd.xlane.f32.xlu0 %v3985
      %v3987 = vpop.xlane.xlu0 %3986
      %v3988 = vadd.f32 %v3864, %v3866
      %3989 = vadd.xlane.f32.xlu0 %v3988
      %v3990 = vpop.xlane.xlu0 %3989
      %v3991 = vadd.f32 %v3868, %v3870
      %3992 = vadd.xlane.f32.xlu0 %v3991
      %v3993 = vpop.xlane.xlu0 %3992
      %v3994 = vadd.f32 %v3872, %v3874
      %3995 = vadd.xlane.f32.xlu0 %v3994
      %v3996 = vpop.xlane.xlu0 %3995
      %v3997 = vadd.f32 %v3876, %v3878
      %3998 = vadd.xlane.f32.xlu0 %v3997
      %v3999 = vpop.xlane.xlu0 %3998
      %v4000 = vadd.f32 %v3880, %v3882
      %4001 = vadd.xlane.f32.xlu0 %v4000
      %v4002 = vpop.xlane.xlu0 %4001
      %v4003 = vadd.f32 %v3884, %v3886
      %4004 = vadd.xlane.f32.xlu0 %v4003
      %v4005 = vpop.xlane.xlu0 %4004
      %v4006 = vadd.f32 %v3888, %v3890
      %4007 = vadd.xlane.f32.xlu0 %v4006
      %v4008 = vpop.xlane.xlu0 %4007
      %v4009 = vadd.f32 %v3892, %v3894
      %4010 = vadd.xlane.f32.xlu0 %v4009
      %v4011 = vpop.xlane.xlu0 %4010
      %v4012 = vadd.f32 %v3896, %v3898
      %4013 = vadd.xlane.f32.xlu0 %v4012
      %v4014 = vpop.xlane.xlu0 %4013
      %v4015 = vadd.f32 %v3900, %v3902
      %4016 = vadd.xlane.f32.xlu0 %v4015
      %v4017 = vpop.xlane.xlu0 %4016
      %v4018 = vadd.f32 %v3904, %v3906
      %4019 = vadd.xlane.f32.xlu0 %v4018
      %v4020 = vpop.xlane.xlu0 %4019
      %v4021 = vadd.f32 %v3908, %v3910
      %4022 = vadd.xlane.f32.xlu0 %v4021
      %v4023 = vpop.xlane.xlu0 %4022
      %v4024 = vadd.f32 %v3912, %v3914
      %4025 = vadd.xlane.f32.xlu0 %v4024
      %v4026 = vpop.xlane.xlu0 %4025
      %v4027 = vadd.f32 %v3916, %v3918
      %4028 = vadd.xlane.f32.xlu0 %v4027
      %v4029 = vpop.xlane.xlu0 %4028
      %v4030 = vadd.f32 %v3920, %v3922
      %4031 = vadd.xlane.f32.xlu0 %v4030
      %v4032 = vpop.xlane.xlu0 %4031
      %v4033 = vadd.f32 %v3924, %v3926
      %4034 = vadd.xlane.f32.xlu0 %v4033
      %v4035 = vpop.xlane.xlu0 %4034
      %v4036 = vadd.f32 %v3928, %v3930
      %4037 = vadd.xlane.f32.xlu0 %v4036
      %v4038 = vpop.xlane.xlu0 %4037
      %v4039 = vadd.f32 %v3932, %v3934
      %4040 = vadd.xlane.f32.xlu0 %v4039
      %v4041 = vpop.xlane.xlu0 %4040
      %v4042 = vadd.f32 %v3936, %v3938
      %4043 = vadd.xlane.f32.xlu0 %v4042
      %v4044 = vpop.xlane.xlu0 %4043
      %v4045 = vadd.f32 %v3940, %v3942
      %4046 = vadd.xlane.f32.xlu0 %v4045
      %v4047 = vpop.xlane.xlu0 %4046
      %v4048 = vadd.f32 %v3944, %v3946
      %4049 = vadd.xlane.f32.xlu0 %v4048
      %v4050 = vpop.xlane.xlu0 %4049
      %v4051 = vadd.f32 %v3948, %v3950
      %4052 = vadd.xlane.f32.xlu0 %v4051
      %v4053 = vpop.xlane.xlu0 %4052
      %v4054 = vadd.f32 %v3952, %v3954
      %4055 = vadd.xlane.f32.xlu0 %v4054
      %v4056 = vpop.xlane.xlu0 %4055
      %v4057 = vadd.f32 %v3956, %v3958
      %4058 = vadd.xlane.f32.xlu0 %v4057
      %v4059 = vpop.xlane.xlu0 %4058
      %v4060 = vadd.f32 %v3960, %v3962
      %4061 = vadd.xlane.f32.xlu0 %v4060
      %v4062 = vpop.xlane.xlu0 %4061
      %v4063 = vadd.f32 %v3964, %v3966
      %4064 = vadd.xlane.f32.xlu0 %v4063
      %v4065 = vpop.xlane.xlu0 %4064
      %v4066 = vadd.f32 %v3968, %v3970
      %4067 = vadd.xlane.f32.xlu0 %v4066
      %v4068 = vpop.xlane.xlu0 %4067
      %v4069 = vadd.f32 %v3972, %v3974
      %4070 = vadd.xlane.f32.xlu0 %v4069
      %v4071 = vpop.xlane.xlu0 %4070
      %v4072 = vadd.f32 %v3976, %v3978
      %4073 = vadd.xlane.f32.xlu0 %v4072
      %v4074 = vpop.xlane.xlu0 %4073
      %v4075 = vrcp.pop %v3981
      %v4076 = vrcp.pop %v3984
      %v4077 = vrcp.pop %v3987
      %v4078 = vrcp.pop %v3990
      %v4079 = vrcp.pop %v3993
      %v4080 = vrcp.pop %v3996
      %v4081 = vrcp.pop %v3999
      %v4082 = vrcp.pop %v4002
      %v4083 = vrcp.pop %v4005
      %v4084 = vrcp.pop %v4008
      %v4085 = vrcp.pop %v4011
      %v4086 = vrcp.pop %v4014
      %v4087 = vrcp.pop %v4017
      %v4088 = vrcp.pop %v4020
      %v4089 = vrcp.pop %v4023
      %v4090 = vrcp.pop %v4026
      %v4091 = vrcp.pop %v4029
      %v4092 = vrcp.pop %v4032
      %v4093 = vrcp.pop %v4035
      %v4094 = vrcp.pop %v4038
      %v4095 = vrcp.pop %v4041
      %v4096 = vrcp.pop %v4044
      %v4097 = vrcp.pop %v4047
      %v4098 = vrcp.pop %v4050
      %v4099 = vrcp.pop %v4053
      %v4100 = vrcp.pop %v4056
      %v4101 = vrcp.pop %v4059
      %v4102 = vrcp.pop %v4062
      %v4103 = vrcp.pop %v4065
      %v4104 = vrcp.pop %v4068
      %v4105 = vrcp.pop %v4071
      %v4106 = vrcp.pop %v4074
      %v4107 = vmul.f32 %v3852, %v4075
      %v4108 = vmul.f32 %v3854, %v4075
      %v4109 = vmul.f32 %v3856, %v4076
      %v4110 = vmul.f32 %v3858, %v4076
      %v4111 = vmul.f32 %v3860, %v4077
      %v4112 = vmul.f32 %v3862, %v4077
      %v4113 = vmul.f32 %v3864, %v4078
      %v4114 = vmul.f32 %v3866, %v4078
      %v4115 = vmul.f32 %v3868, %v4079
      %v4116 = vmul.f32 %v3870, %v4079
      %v4117 = vmul.f32 %v3872, %v4080
      %v4118 = vmul.f32 %v3874, %v4080
      %v4119 = vmul.f32 %v3876, %v4081
      %v4120 = vmul.f32 %v3878, %v4081
      %v4121 = vmul.f32 %v3880, %v4082
      %v4122 = vmul.f32 %v3882, %v4082
      %v4123 = vmul.f32 %v3884, %v4083
      %v4124 = vmul.f32 %v3886, %v4083
      %v4125 = vmul.f32 %v3888, %v4084
      %v4126 = vmul.f32 %v3890, %v4084
      %v4127 = vmul.f32 %v3892, %v4085
      %v4128 = vmul.f32 %v3894, %v4085
      %v4129 = vmul.f32 %v3896, %v4086
      %v4130 = vmul.f32 %v3898, %v4086
      %v4131 = vmul.f32 %v3900, %v4087
      %v4132 = vmul.f32 %v3902, %v4087
      %v4133 = vmul.f32 %v3904, %v4088
      %v4134 = vmul.f32 %v3906, %v4088
      %v4135 = vmul.f32 %v3908, %v4089
      %v4136 = vmul.f32 %v3910, %v4089
      %v4137 = vmul.f32 %v3912, %v4090
      %v4138 = vmul.f32 %v3914, %v4090
      %v4139 = vmul.f32 %v3916, %v4091
      %v4140 = vmul.f32 %v3918, %v4091
      %v4141 = vmul.f32 %v3920, %v4092
      %v4142 = vmul.f32 %v3922, %v4092
      %v4143 = vmul.f32 %v3924, %v4093
      %v4144 = vmul.f32 %v3926, %v4093
      %v4145 = vmul.f32 %v3928, %v4094
      %v4146 = vmul.f32 %v3930, %v4094
      %v4147 = vmul.f32 %v3932, %v4095
      %v4148 = vmul.f32 %v3934, %v4095
      %v4149 = vmul.f32 %v3936, %v4096
      %v4150 = vmul.f32 %v3938, %v4096
      %v4151 = vmul.f32 %v3940, %v4097
      %v4152 = vmul.f32 %v3942, %v4097
      %v4153 = vmul.f32 %v3944, %v4098
      %v4154 = vmul.f32 %v3946, %v4098
      %v4155 = vmul.f32 %v3948, %v4099
      %v4156 = vmul.f32 %v3950, %v4099
      %v4157 = vmul.f32 %v3952, %v4100
      %v4158 = vmul.f32 %v3954, %v4100
      %v4159 = vmul.f32 %v3956, %v4101
      %v4160 = vmul.f32 %v3958, %v4101
      %v4161 = vmul.f32 %v3960, %v4102
      %v4162 = vmul.f32 %v3962, %v4102
      %v4163 = vmul.f32 %v3964, %v4103
      %v4164 = vmul.f32 %v3966, %v4103
      %v4165 = vmul.f32 %v3968, %v4104
      %v4166 = vmul.f32 %v3970, %v4104
      %v4167 = vmul.f32 %v3972, %v4105
      %v4168 = vmul.f32 %v3974, %v4105
      %v4169 = vmul.f32 %v3976, %v4106
      %v4170 = vmul.f32 %v3978, %v4106
      %v4171 = vpack.c.bf16 %v4109, %v4107
      %v4172 = vpack.c.bf16 %v4110, %v4108
      %v4173 = vpack.c.bf16 %v4113, %v4111
      %v4174 = vpack.c.bf16 %v4114, %v4112
      %v4175 = vpack.c.bf16 %v4117, %v4115
      %v4176 = vpack.c.bf16 %v4118, %v4116
      %v4177 = vpack.c.bf16 %v4121, %v4119
      %v4178 = vpack.c.bf16 %v4122, %v4120
      %v4179 = vpack.c.bf16 %v4125, %v4123
      %v4180 = vpack.c.bf16 %v4126, %v4124
      %v4181 = vpack.c.bf16 %v4129, %v4127
      %v4182 = vpack.c.bf16 %v4130, %v4128
      %v4183 = vpack.c.bf16 %v4133, %v4131
      %v4184 = vpack.c.bf16 %v4134, %v4132
      %v4185 = vpack.c.bf16 %v4137, %v4135
      %v4186 = vpack.c.bf16 %v4138, %v4136
      %v4187 = vpack.c.bf16 %v4141, %v4139
      %v4188 = vpack.c.bf16 %v4142, %v4140
      %v4189 = vpack.c.bf16 %v4145, %v4143
      %v4190 = vpack.c.bf16 %v4146, %v4144
      %v4191 = vpack.c.bf16 %v4149, %v4147
      %v4192 = vpack.c.bf16 %v4150, %v4148
      %v4193 = vpack.c.bf16 %v4153, %v4151
      %v4194 = vpack.c.bf16 %v4154, %v4152
      %v4195 = vpack.c.bf16 %v4157, %v4155
      %v4196 = vpack.c.bf16 %v4158, %v4156
      %v4197 = vpack.c.bf16 %v4161, %v4159
      %v4198 = vpack.c.bf16 %v4162, %v4160
      %v4199 = vpack.c.bf16 %v4165, %v4163
      %v4200 = vpack.c.bf16 %v4166, %v4164
      %v4201 = vpack.c.bf16 %v4169, %v4167
      %v4202 = vpack.c.bf16 %v4170, %v4168
      %v4203 = vrot.slane %v621, 3
      %v4204 = vrot.slane %v622, 3
      %4207 = vmatprep.subr.bf16.mxu0 %v4172
      %4208 = vmatpush1.bf16.xpose.msra.mxu0 %v4171
      %4209 = vmatprep.subr.bf16.mxu0 %v4174
      %4210 = vmatpush1.bf16.xpose.msra.mxu0 %v4173
      %4211 = vmatprep.subr.bf16.mxu0 %v4176
      %4212 = vmatpush1.bf16.xpose.msra.mxu0 %v4175
      %4213 = vmatprep.subr.bf16.mxu0 %v4178
      %4214 = vmatpush1.bf16.xpose.msra.mxu0 %v4177
      %4215 = vmatprep.subr.bf16.mxu0 %v4180
      %4216 = vmatpush1.bf16.xpose.msra.mxu0 %v4179
      %4217 = vmatprep.subr.bf16.mxu0 %v4182
      %4218 = vmatpush1.bf16.xpose.msra.mxu0 %v4181
      %4219 = vmatprep.subr.bf16.mxu0 %v4184
      %4220 = vmatpush1.bf16.xpose.msra.mxu0 %v4183
      %4221 = vmatprep.subr.bf16.mxu0 %v4186
      %4222 = vmatpush1.bf16.xpose.msra.mxu0 %v4185
      %4223 = vmatprep.subr.bf16.mxu0 %v4188
      %4224 = vmatpush1.bf16.xpose.msra.mxu0 %v4187
      %4225 = vmatprep.subr.bf16.mxu0 %v4190
      %4226 = vmatpush1.bf16.xpose.msra.mxu0 %v4189
      %4227 = vmatprep.subr.bf16.mxu0 %v4192
      %4228 = vmatpush1.bf16.xpose.msra.mxu0 %v4191
      %4229 = vmatprep.subr.bf16.mxu0 %v4194
      %4230 = vmatpush1.bf16.xpose.msra.mxu0 %v4193
      %4231 = vmatprep.subr.bf16.mxu0 %v4196
      %4232 = vmatpush1.bf16.xpose.msra.mxu0 %v4195
      %4233 = vmatprep.subr.bf16.mxu0 %v4198
      %4234 = vmatpush1.bf16.xpose.msra.mxu0 %v4197
      %4235 = vmatprep.subr.bf16.mxu0 %v4200
      %4236 = vmatpush1.bf16.xpose.msra.mxu0 %v4199
      %4237 = vmatprep.subr.bf16.mxu0 %v4202
      %4238 = vmatpush1.bf16.xpose.msra.mxu0 %v4201
      %4239 = vmatprep.mubr.bf16.mxu0 %v4204
      %4240 = vmatmul.mubr.bf16.gmra.mrb[0].mxu0 %v4203
      %v4241 = vpop.f32.mrb[0].mxu0
      %v4242 = vadd.f32 0.0, %v4241
      %v4243 = vpop.f32.mrb[0].mxu0
      %v4244 = vadd.f32 0.0, %v4243
      %v4245 = vpop.f32.mrb[0].mxu0
      %v4246 = vpop.f32.mrb[0].mxu0
      %4247 = vdwg.mxu0
      %v4250 = vrot.slane %v2428, 6
      %v4251 = vrot.slane %v2430, 6
      %v4256 = vrot.slane %v3335, 4
      %v4257 = vrot.slane %v3337, 4
      %v4262 = vrot.slane %v4242, 2
      %v4263 = vrot.slane %v4244, 2
      %vm4266 = vcmask 1041408
      %v4267 = vsel %vm4266, %v1515, %v4250
      %v4268 = vsel %vm4266, %v1517, %v4251
      %v4269 = vsel %vm559, %v4267, %v4256
      %v4270 = vsel %vm559, %v4268, %v4257
      %vm4271 = vcmask 1045504
      %v4272 = vsel %vm4271, %v4269, %v4262
      %v4273 = vsel %vm4271, %v4270, %v4263
      %v4274 = vpack.c.bf16 %v4272, %v4272
      %v4275 = vpack.c.bf16 %v4273, %v4273
      %v4276 = vpack.c.bf16 %v531, %v531
      %4278 = vset.pattern.permute.xlu0 0
      %4279 = vperm.xlu0 %4278, %v532
      %v4280 = vpop.permute.xlu0 %4279
      %v4283 = vsel %vm552, %v4276, 0
      %v4286 = vsel %vm559, %v4274, 0
      %v4289 = vsel %vm559, %v4275, 0
      %4291 = vmatprep.subr.bf16.mxu0 %v4289
      %4292 = vmatpush1.bf16.msra.mxu0 %v4286
      %4293 = vmatprep.subr.bf16.mxu0 0
      %4294 = vmatpush1.bf16.msra.mxu0 0
      %4295 = vmatprep.subr.bf16.mxu0 0
      %4296 = vmatpush1.bf16.msra.mxu0 0
      %4297 = vmatprep.subr.bf16.mxu0 0
      %4298 = vmatpush1.bf16.msra.mxu0 0
      %4299 = vmatprep.subr.bf16.mxu0 0
      %4300 = vmatpush1.bf16.msra.mxu0 0
      %4301 = vmatprep.subr.bf16.mxu0 0
      %4302 = vmatpush1.bf16.msra.mxu0 0
      %4303 = vmatprep.subr.bf16.mxu0 0
      %4304 = vmatpush1.bf16.msra.mxu0 0
      %4305 = vmatprep.subr.bf16.mxu0 0
      %4306 = vmatpush1.bf16.msra.mxu0 0
      %4307 = vmatprep.subr.bf16.mxu0 0
      %4308 = vmatpush1.bf16.msra.mxu0 0
      %4309 = vmatprep.subr.bf16.mxu0 0
      %4310 = vmatpush1.bf16.msra.mxu0 0
      %4311 = vmatprep.subr.bf16.mxu0 0
      %4312 = vmatpush1.bf16.msra.mxu0 0
      %4313 = vmatprep.subr.bf16.mxu0 0
      %4314 = vmatpush1.bf16.msra.mxu0 0
      %4315 = vmatprep.subr.bf16.mxu0 0
      %4316 = vmatpush1.bf16.msra.mxu0 0
      %4317 = vmatprep.subr.bf16.mxu0 0
      %4318 = vmatpush1.bf16.msra.mxu0 0
      %4319 = vmatprep.subr.bf16.mxu0 0
      %4320 = vmatpush1.bf16.msra.mxu0 0
      %4321 = vmatprep.subr.bf16.mxu0 0
      %4322 = vmatpush1.bf16.msra.mxu0 0
      %4323 = vmatprep.mubr.bf16.mxu0 0
      %4324 = vmatmul.mubr.bf16.gmra.mrb[0].mxu0 %v4283
      %v4325 = vpop.f32.mrb[0].mxu0
      %v4326 = vadd.f32 %v4280, %v4325
      %v4327 = vpop.f32.mrb[0].mxu0
      %v4328 = vadd.f32 %v4280, %v4327
      %v4329 = vpop.f32.mrb[0].mxu0
      %v4330 = vpop.f32.mrb[0].mxu0
      %4331 = vdwg.mxu0
      %v4332 = vld [vmem:[%s6] sm:$0xff]
      %v4333 = vld [vmem:[%s6 + $0x8] sm:$0xff]
      %v4334 = vld [vmem:[%s6 + $0x10] sm:$0xff]
      %v4335 = vld [vmem:[%s7] sm:$0xff]
      %v4336 = vld [vmem:[%s7 + $0x8] sm:$0xff]
      %v4337 = vld [vmem:[%s7 + $0x10] sm:$0xff]
      %v4338 = vld [vmem:[%s9] sm:$0xff]
      %v4339 = vld [vmem:[%s10] sm:$0xff]
      %v4340 = vpack.c.bf16 %v4333, %v4332
      %v4341 = vpack.c.bf16 %v4334, %v4334
      %4343 = vset.pattern.permute.xlu0 0
      %4344 = vperm.xlu0 %4343, %v4335
      %v4345 = vpop.permute.xlu0 %4344
      %4348 = vset.pattern.permute.xlu0 0
      %4349 = vperm.xlu0 %4348, %v4336
      %v4350 = vpop.permute.xlu0 %4349
      %4353 = vset.pattern.permute.xlu0 0
      %4354 = vperm.xlu0 %4353, %v4337
      %v4355 = vpop.permute.xlu0 %4354
      %v4358 = vsel %vm552, %v4340, 0
      %v4361 = vsel %vm552, %v4341, 0
      %4363 = vmatprep.subr.bf16.mxu0 %v564
      %4364 = vmatpush1.bf16.msra.mxu0 %v561
      %4365 = vmatprep.subr.bf16.mxu0 0
      %4366 = vmatpush1.bf16.msra.mxu0 0
      %4367 = vmatprep.subr.bf16.mxu0 0
      %4368 = vmatpush1.bf16.msra.mxu0 0
      %4369 = vmatprep.subr.bf16.mxu0 0
      %4370 = vmatpush1.bf16.msra.mxu0 0
      %4371 = vmatprep.subr.bf16.mxu0 0
      %4372 = vmatpush1.bf16.msra.mxu0 0
      %4373 = vmatprep.subr.bf16.mxu0 0
      %4374 = vmatpush1.bf16.msra.mxu0 0
      %4375 = vmatprep.subr.bf16.mxu0 0
      %4376 = vmatpush1.bf16.msra.mxu0 0
      %4377 = vmatprep.subr.bf16.mxu0 0
      %4378 = vmatpush1.bf16.msra.mxu0 0
      %4379 = vmatprep.subr.bf16.mxu0 0
      %4380 = vmatpush1.bf16.msra.mxu0 0
      %4381 = vmatprep.subr.bf16.mxu0 0
      %4382 = vmatpush1.bf16.msra.mxu0 0
      %4383 = vmatprep.subr.bf16.mxu0 0
      %4384 = vmatpush1.bf16.msra.mxu0 0
      %4385 = vmatprep.subr.bf16.mxu0 0
      %4386 = vmatpush1.bf16.msra.mxu0 0
      %4387 = vmatprep.subr.bf16.mxu0 0
      %4388 = vmatpush1.bf16.msra.mxu0 0
      %4389 = vmatprep.subr.bf16.mxu0 0
      %4390 = vmatpush1.bf16.msra.mxu0 0
      %4391 = vmatprep.subr.bf16.mxu0 0
      %4392 = vmatpush1.bf16.msra.mxu0 0
      %4393 = vmatprep.subr.bf16.mxu0 0
      %4394 = vmatpush1.bf16.msra.mxu0 0
      %4395 = vmatprep.mubr.bf16.mxu0 0
      %4396 = vmatmul.mubr.bf16.gmra.mrb[0].mxu0 %v4358
      %v4397 = vpop.f32.mrb[0].mxu0
      %v4398 = vadd.f32 %v4345, %v4397
      %v4399 = vpop.f32.mrb[0].mxu0
      %v4400 = vadd.f32 %v4345, %v4399
      %v4401 = vpop.f32.mrb[0].mxu0
      %v4402 = vadd.f32 %v4350, %v4401
      %v4403 = vpop.f32.mrb[0].mxu0
      %v4404 = vadd.f32 %v4350, %v4403
      %4405 = vmatprep.mubr.bf16.mxu0 0
      %4406 = vmatmul.mubr.bf16.gmra.mrb[0].mxu0 %v4361
      %v4407 = vpop.f32.mrb[0].mxu0
      %v4408 = vadd.f32 %v4355, %v4407
      %v4409 = vpop.f32.mrb[0].mxu0
      %v4410 = vadd.f32 %v4355, %v4409
      %v4411 = vpop.f32.mrb[0].mxu0
      %v4412 = vpop.f32.mrb[0].mxu0
      %4413 = vdwg.mxu0
      %v4414 = vpack.c.bf16 %v4398, %v4398
      %v4415 = vpack.c.bf16 %v4400, %v4400
      %v4416 = vpack.c.bf16 %v4402, %v4402
      %v4417 = vpack.c.bf16 %v4404, %v4404
      %v4418 = vpack.c.bf16 %v4408, %v4408
      %v4419 = vpack.c.bf16 %v4410, %v4410
      %v4420 = vld [vmem:[%s8] sm:$0xff]
      %v4421 = vld [vmem:[%s8 + $0x8] sm:$0xff]
      %v4422 = vld [vmem:[%s8 + $0x10] sm:$0xff]
      %v4423 = vld [vmem:[%s8 + $0x18] sm:$0xff]
      %v4424 = vld [vmem:[%s8 + $0x20] sm:$0xff]
      %v4425 = vld [vmem:[%s8 + $0x28] sm:$0xff]
      %v4426 = vld [vmem:[%s8 + $0x30] sm:$0xff]
      %v4427 = vld [vmem:[%s8 + $0x38] sm:$0xff]
      %v4428 = vld [vmem:[%s8 + $0x40] sm:$0xff]
      %v4429 = vld [vmem:[%s8 + $0x48] sm:$0xff]
      %v4430 = vld [vmem:[%s8 + $0x50] sm:$0xff]
      %v4431 = vld [vmem:[%s8 + $0x58] sm:$0xff]
      %v4432 = vld [vmem:[%s8 + $0x60] sm:$0xff]
      %v4433 = vld [vmem:[%s8 + $0x68] sm:$0xff]
      %v4434 = vld [vmem:[%s8 + $0x70] sm:$0xff]
      %v4435 = vld [vmem:[%s8 + $0x78] sm:$0xff]
      %v4436 = vld [vmem:[%s8 + $0x80] sm:$0xff]
      %v4437 = vld [vmem:[%s8 + $0x88] sm:$0xff]
      %v4438 = vld [vmem:[%s8 + $0x90] sm:$0xff]
      %v4439 = vld [vmem:[%s8 + $0x98] sm:$0xff]
      %v4440 = vld [vmem:[%s8 + $0xa0] sm:$0xff]
      %v4441 = vld [vmem:[%s8 + $0xa8] sm:$0xff]
      %v4442 = vld [vmem:[%s8 + $0xb0] sm:$0xff]
      %v4443 = vld [vmem:[%s8 + $0xb8] sm:$0xff]
      %v4444 = vld [vmem:[%s8 + $0xc0] sm:$0xff]
      %v4445 = vld [vmem:[%s8 + $0xc8] sm:$0xff]
      %v4446 = vld [vmem:[%s8 + $0xd0] sm:$0xff]
      %v4447 = vld [vmem:[%s8 + $0xd8] sm:$0xff]
      %v4448 = vld [vmem:[%s8 + $0xe0] sm:$0xff]
      %v4449 = vld [vmem:[%s8 + $0xe8] sm:$0xff]
      %v4450 = vld [vmem:[%s8 + $0xf0] sm:$0xff]
      %v4451 = vld [vmem:[%s8 + $0xf8] sm:$0xff]
      %v4452 = vld [vmem:[%s8 + $0x100] sm:$0xff]
      %v4453 = vld [vmem:[%s8 + $0x108] sm:$0xff]
      %v4454 = vld [vmem:[%s8 + $0x110] sm:$0xff]
      %v4455 = vld [vmem:[%s8 + $0x118] sm:$0xff]
      %v4456 = vld [vmem:[%s8 + $0x120] sm:$0xff]
      %v4457 = vld [vmem:[%s8 + $0x128] sm:$0xff]
      %v4458 = vld [vmem:[%s8 + $0x130] sm:$0xff]
      %v4459 = vld [vmem:[%s8 + $0x138] sm:$0xff]
      %v4460 = vld [vmem:[%s8 + $0x140] sm:$0xff]
      %v4461 = vld [vmem:[%s8 + $0x148] sm:$0xff]
      %v4462 = vld [vmem:[%s8 + $0x150] sm:$0xff]
      %v4463 = vld [vmem:[%s8 + $0x158] sm:$0xff]
      %v4464 = vld [vmem:[%s8 + $0x160] sm:$0xff]
      %v4465 = vld [vmem:[%s8 + $0x168] sm:$0xff]
      %v4466 = vld [vmem:[%s8 + $0x170] sm:$0xff]
      %v4467 = vld [vmem:[%s8 + $0x178] sm:$0xff]
      %v4468 = vld [vmem:[%s8 + $0x180] sm:$0xff]
      %v4469 = vld [vmem:[%s8 + $0x188] sm:$0xff]
      %v4470 = vld [vmem:[%s8 + $0x190] sm:$0xff]
      %v4471 = vld [vmem:[%s8 + $0x198] sm:$0xff]
      %v4472 = vld [vmem:[%s8 + $0x1a0] sm:$0xff]
      %v4473 = vld [vmem:[%s8 + $0x1a8] sm:$0xff]
      %v4474 = vld [vmem:[%s8 + $0x1b0] sm:$0xff]
      %v4475 = vld [vmem:[%s8 + $0x1b8] sm:$0xff]
      %v4476 = vld [vmem:[%s8 + $0x1c0] sm:$0xff]
      %v4477 = vld [vmem:[%s8 + $0x1c8] sm:$0xff]
      %v4478 = vld [vmem:[%s8 + $0x1d0] sm:$0xff]
      %v4479 = vld [vmem:[%s8 + $0x1d8] sm:$0xff]
      %v4480 = vld [vmem:[%s8 + $0x1e0] sm:$0xff]
      %v4481 = vld [vmem:[%s8 + $0x1e8] sm:$0xff]
      %v4482 = vld [vmem:[%s8 + $0x1f0] sm:$0xff]
      %v4483 = vld [vmem:[%s8 + $0x1f8] sm:$0xff]
      %4484 = vxpose.xlu0.c.b16.start [1/8] %v4414, 128
      %4485 = vxpose.xlu0.c.b16.cont [2/8] 0, 128
      %4486 = vxpose.xlu0.c.b16.cont [3/8] 0, 128
      %4487 = vxpose.xlu0.c.b16.cont [4/8] 0, 128
      %4488 = vxpose.xlu0.c.b16.cont [5/8] 0, 128
      %4489 = vxpose.xlu0.c.b16.cont [6/8] 0, 128
      %4490 = vxpose.xlu0.c.b16.cont [7/8] 0, 128
      %4491 = vxpose.xlu0.c.b16.end [8/8] 0, 128
      %v4492 = vpop.trf.xlu0
      %v4493 = vpop.trf.xlu0
      %v4494 = vpop.trf.xlu0
      %v4495 = vpop.trf.xlu0
      %v4496 = vpop.trf.xlu0
      %v4497 = vpop.trf.xlu0
      %v4498 = vpop.trf.xlu0
      %v4499 = vpop.trf.xlu0
      %4500 = vxpose.xlu0.c.b16.start [1/8] %v4415, 128
      %4501 = vxpose.xlu0.c.b16.cont [2/8] 0, 128
      %4502 = vxpose.xlu0.c.b16.cont [3/8] 0, 128
      %4503 = vxpose.xlu0.c.b16.cont [4/8] 0, 128
      %4504 = vxpose.xlu0.c.b16.cont [5/8] 0, 128
      %4505 = vxpose.xlu0.c.b16.cont [6/8] 0, 128
      %4506 = vxpose.xlu0.c.b16.cont [7/8] 0, 128
      %4507 = vxpose.xlu0.c.b16.end [8/8] 0, 128
      %v4508 = vpop.trf.xlu0
      %v4509 = vpop.trf.xlu0
      %v4510 = vpop.trf.xlu0
      %v4511 = vpop.trf.xlu0
      %v4512 = vpop.trf.xlu0
      %v4513 = vpop.trf.xlu0
      %v4514 = vpop.trf.xlu0
      %v4515 = vpop.trf.xlu0
      %v4517 = vsel %vm719, %v4492, 0
      %v4520 = vsel %vm719, %v4493, 0
      %v4523 = vsel %vm719, %v4494, 0
      %v4526 = vsel %vm719, %v4495, 0
      %v4529 = vsel %vm719, %v4496, 0
      %v4532 = vsel %vm719, %v4497, 0
      %v4535 = vsel %vm719, %v4498, 0
      %v4538 = vsel %vm719, %v4499, 0
      %v4541 = vsel %vm719, %v4508, 0
      %v4544 = vsel %vm719, %v4509, 0
      %v4547 = vsel %vm719, %v4510, 0
      %v4550 = vsel %vm719, %v4511, 0
      %v4553 = vsel %vm719, %v4512, 0
      %v4556 = vsel %vm719, %v4513, 0
      %v4559 = vsel %vm719, %v4514, 0
      %v4562 = vsel %vm719, %v4515, 0
      %v4565 = vsel %vm768, %v4416, 0
      %v4568 = vsel %vm768, %v4417, 0
      %4570 = vmatprep.subr.bf16.mxu0 %v4568
      %4571 = vmatpush1.bf16.msra.mxu0 %v4565
      %4572 = vmatprep.subr.bf16.mxu0 0
      %4573 = vmatpush1.bf16.msra.mxu0 0
      %4574 = vmatprep.subr.bf16.mxu0 0
      %4575 = vmatpush1.bf16.msra.mxu0 0
      %4576 = vmatprep.subr.bf16.mxu0 0
      %4577 = vmatpush1.bf16.msra.mxu0 0
      %4578 = vmatprep.subr.bf16.mxu0 0
      %4579 = vmatpush1.bf16.msra.mxu0 0
      %4580 = vmatprep.subr.bf16.mxu0 0
      %4581 = vmatpush1.bf16.msra.mxu0 0
      %4582 = vmatprep.subr.bf16.mxu0 0
      %4583 = vmatpush1.bf16.msra.mxu0 0
      %4584 = vmatprep.subr.bf16.mxu0 0
      %4585 = vmatpush1.bf16.msra.mxu0 0
      %4586 = vmatprep.subr.bf16.mxu0 0
      %4587 = vmatpush1.bf16.msra.mxu0 0
      %4588 = vmatprep.subr.bf16.mxu0 0
      %4589 = vmatpush1.bf16.msra.mxu0 0
      %4590 = vmatprep.subr.bf16.mxu0 0
      %4591 = vmatpush1.bf16.msra.mxu0 0
      %4592 = vmatprep.subr.bf16.mxu0 0
      %4593 = vmatpush1.bf16.msra.mxu0 0
      %4594 = vmatprep.subr.bf16.mxu0 0
      %4595 = vmatpush1.bf16.msra.mxu0 0
      %4596 = vmatprep.subr.bf16.mxu0 0
      %4597 = vmatpush1.bf16.msra.mxu0 0
      %4598 = vmatprep.subr.bf16.mxu0 0
      %4599 = vmatpush1.bf16.msra.mxu0 0
      %4600 = vmatprep.subr.bf16.mxu0 0
      %4601 = vmatpush1.bf16.msra.mxu0 0
      %4602 = vmatprep.mubr.bf16.mxu0 0
      %4603 = vmatmul.mubr.bf16.gmra.mrb[0].mxu0 %v4517
      %v4604 = vpop.f32.mrb[0].mxu0
      %v4605 = vadd.f32 %v4420, %v4604
      %v4606 = vpop.f32.mrb[0].mxu0
      %v4607 = vadd.f32 %v4421, %v4606
      %v4608 = vpop.f32.mrb[0].mxu0
      %v4609 = vadd.f32 %v4422, %v4608
      %v4610 = vpop.f32.mrb[0].mxu0
      %v4611 = vadd.f32 %v4423, %v4610
      %4612 = vmatprep.mubr.bf16.mxu0 0
      %4613 = vmatmul.mubr.bf16.gmra.mrb[0].mxu0 %v4520
      %v4614 = vpop.f32.mrb[0].mxu0
      %v4615 = vadd.f32 %v4424, %v4614
      %v4616 = vpop.f32.mrb[0].mxu0
      %v4617 = vadd.f32 %v4425, %v4616
      %v4618 = vpop.f32.mrb[0].mxu0
      %v4619 = vadd.f32 %v4426, %v4618
      %v4620 = vpop.f32.mrb[0].mxu0
      %v4621 = vadd.f32 %v4427, %v4620
      %4622 = vmatprep.mubr.bf16.mxu0 0
      %4623 = vmatmul.mubr.bf16.gmra.mrb[0].mxu0 %v4523
      %v4624 = vpop.f32.mrb[0].mxu0
      %v4625 = vadd.f32 %v4428, %v4624
      %v4626 = vpop.f32.mrb[0].mxu0
      %v4627 = vadd.f32 %v4429, %v4626
      %v4628 = vpop.f32.mrb[0].mxu0
      %v4629 = vadd.f32 %v4430, %v4628
      %v4630 = vpop.f32.mrb[0].mxu0
      %v4631 = vadd.f32 %v4431, %v4630
      %4632 = vmatprep.mubr.bf16.mxu0 0
      %4633 = vmatmul.mubr.bf16.gmra.mrb[0].mxu0 %v4526
      %v4634 = vpop.f32.mrb[0].mxu0
      %v4635 = vadd.f32 %v4432, %v4634
      %v4636 = vpop.f32.mrb[0].mxu0
      %v4637 = vadd.f32 %v4433, %v4636
      %v4638 = vpop.f32.mrb[0].mxu0
      %v4639 = vadd.f32 %v4434, %v4638
      %v4640 = vpop.f32.mrb[0].mxu0
      %v4641 = vadd.f32 %v4435, %v4640
      %4642 = vmatprep.mubr.bf16.mxu0 0
      %4643 = vmatmul.mubr.bf16.gmra.mrb[0].mxu0 %v4529
      %v4644 = vpop.f32.mrb[0].mxu0
      %v4645 = vadd.f32 %v4436, %v4644
      %v4646 = vpop.f32.mrb[0].mxu0
      %v4647 = vadd.f32 %v4437, %v4646
      %v4648 = vpop.f32.mrb[0].mxu0
      %v4649 = vadd.f32 %v4438, %v4648
      %v4650 = vpop.f32.mrb[0].mxu0
      %v4651 = vadd.f32 %v4439, %v4650
      %4652 = vmatprep.mubr.bf16.mxu0 0
      %4653 = vmatmul.mubr.bf16.gmra.mrb[0].mxu0 %v4532
      %v4654 = vpop.f32.mrb[0].mxu0
      %v4655 = vadd.f32 %v4440, %v4654
      %v4656 = vpop.f32.mrb[0].mxu0
      %v4657 = vadd.f32 %v4441, %v4656
      %v4658 = vpop.f32.mrb[0].mxu0
      %v4659 = vadd.f32 %v4442, %v4658
      %v4660 = vpop.f32.mrb[0].mxu0
      %v4661 = vadd.f32 %v4443, %v4660
      %4662 = vmatprep.mubr.bf16.mxu0 0
      %4663 = vmatmul.mubr.bf16.gmra.mrb[0].mxu0 %v4535
      %v4664 = vpop.f32.mrb[0].mxu0
      %v4665 = vadd.f32 %v4444, %v4664
      %v4666 = vpop.f32.mrb[0].mxu0
      %v4667 = vadd.f32 %v4445, %v4666
      %v4668 = vpop.f32.mrb[0].mxu0
      %v4669 = vadd.f32 %v4446, %v4668
      %v4670 = vpop.f32.mrb[0].mxu0
      %v4671 = vadd.f32 %v4447, %v4670
      %4672 = vmatprep.mubr.bf16.mxu0 0
      %4673 = vmatmul.mubr.bf16.gmra.mrb[0].mxu0 %v4538
      %v4674 = vpop.f32.mrb[0].mxu0
      %v4675 = vadd.f32 %v4448, %v4674
      %v4676 = vpop.f32.mrb[0].mxu0
      %v4677 = vadd.f32 %v4449, %v4676
      %v4678 = vpop.f32.mrb[0].mxu0
      %v4679 = vadd.f32 %v4450, %v4678
      %v4680 = vpop.f32.mrb[0].mxu0
      %v4681 = vadd.f32 %v4451, %v4680
      %4682 = vmatprep.mubr.bf16.mxu0 0
      %4683 = vmatmul.mubr.bf16.gmra.mrb[0].mxu0 %v4541
      %v4684 = vpop.f32.mrb[0].mxu0
      %v4685 = vadd.f32 %v4452, %v4684
      %v4686 = vpop.f32.mrb[0].mxu0
      %v4687 = vadd.f32 %v4453, %v4686
      %v4688 = vpop.f32.mrb[0].mxu0
      %v4689 = vadd.f32 %v4454, %v4688
      %v4690 = vpop.f32.mrb[0].mxu0
      %v4691 = vadd.f32 %v4455, %v4690
      %4692 = vmatprep.mubr.bf16.mxu0 0
      %4693 = vmatmul.mubr.bf16.gmra.mrb[0].mxu0 %v4544
      %v4694 = vpop.f32.mrb[0].mxu0
      %v4695 = vadd.f32 %v4456, %v4694
      %v4696 = vpop.f32.mrb[0].mxu0
      %v4697 = vadd.f32 %v4457, %v4696
      %v4698 = vpop.f32.mrb[0].mxu0
      %v4699 = vadd.f32 %v4458, %v4698
      %v4700 = vpop.f32.mrb[0].mxu0
      %v4701 = vadd.f32 %v4459, %v4700
      %4702 = vmatprep.mubr.bf16.mxu0 0
      %4703 = vmatmul.mubr.bf16.gmra.mrb[0].mxu0 %v4547
      %v4704 = vpop.f32.mrb[0].mxu0
      %v4705 = vadd.f32 %v4460, %v4704
      %v4706 = vpop.f32.mrb[0].mxu0
      %v4707 = vadd.f32 %v4461, %v4706
      %v4708 = vpop.f32.mrb[0].mxu0
      %v4709 = vadd.f32 %v4462, %v4708
      %v4710 = vpop.f32.mrb[0].mxu0
      %v4711 = vadd.f32 %v4463, %v4710
      %4712 = vmatprep.mubr.bf16.mxu0 0
      %4713 = vmatmul.mubr.bf16.gmra.mrb[0].mxu0 %v4550
      %v4714 = vpop.f32.mrb[0].mxu0
      %v4715 = vadd.f32 %v4464, %v4714
      %v4716 = vpop.f32.mrb[0].mxu0
      %v4717 = vadd.f32 %v4465, %v4716
      %v4718 = vpop.f32.mrb[0].mxu0
      %v4719 = vadd.f32 %v4466, %v4718
      %v4720 = vpop.f32.mrb[0].mxu0
      %v4721 = vadd.f32 %v4467, %v4720
      %4722 = vmatprep.mubr.bf16.mxu0 0
      %4723 = vmatmul.mubr.bf16.gmra.mrb[0].mxu0 %v4553
      %v4724 = vpop.f32.mrb[0].mxu0
      %v4725 = vadd.f32 %v4468, %v4724
      %v4726 = vpop.f32.mrb[0].mxu0
      %v4727 = vadd.f32 %v4469, %v4726
      %v4728 = vpop.f32.mrb[0].mxu0
      %v4729 = vadd.f32 %v4470, %v4728
      %v4730 = vpop.f32.mrb[0].mxu0
      %v4731 = vadd.f32 %v4471, %v4730
      %4732 = vmatprep.mubr.bf16.mxu0 0
      %4733 = vmatmul.mubr.bf16.gmra.mrb[0].mxu0 %v4556
      %v4734 = vpop.f32.mrb[0].mxu0
      %v4735 = vadd.f32 %v4472, %v4734
      %v4736 = vpop.f32.mrb[0].mxu0
      %v4737 = vadd.f32 %v4473, %v4736
      %v4738 = vpop.f32.mrb[0].mxu0
      %v4739 = vadd.f32 %v4474, %v4738
      %v4740 = vpop.f32.mrb[0].mxu0
      %v4741 = vadd.f32 %v4475, %v4740
      %4742 = vmatprep.mubr.bf16.mxu0 0
      %4743 = vmatmul.mubr.bf16.gmra.mrb[0].mxu0 %v4559
      %v4744 = vpop.f32.mrb[0].mxu0
      %v4745 = vadd.f32 %v4476, %v4744
      %v4746 = vpop.f32.mrb[0].mxu0
      %v4747 = vadd.f32 %v4477, %v4746
      %v4748 = vpop.f32.mrb[0].mxu0
      %v4749 = vadd.f32 %v4478, %v4748
      %v4750 = vpop.f32.mrb[0].mxu0
      %v4751 = vadd.f32 %v4479, %v4750
      %4752 = vmatprep.mubr.bf16.mxu0 0
      %4753 = vmatmul.mubr.bf16.gmra.mrb[0].mxu0 %v4562
      %v4754 = vpop.f32.mrb[0].mxu0
      %v4755 = vadd.f32 %v4480, %v4754
      %v4756 = vpop.f32.mrb[0].mxu0
      %v4757 = vadd.f32 %v4481, %v4756
      %v4758 = vpop.f32.mrb[0].mxu0
      %v4759 = vadd.f32 %v4482, %v4758
      %v4760 = vpop.f32.mrb[0].mxu0
      %v4761 = vadd.f32 %v4483, %v4760
      %4762 = vdwg.mxu0
      %v4763 = vmax.f32 %v4605, %v4607
      %4764 = vmax.xlane.f32.xlu0 %v4763
      %v4765 = vpop.xlane.xlu0 %4764
      %v4766 = vmax.f32 %v4609, %v4611
      %4767 = vmax.xlane.f32.xlu0 %v4766
      %v4768 = vpop.xlane.xlu0 %4767
      %v4769 = vmax.f32 %v4615, %v4617
      %4770 = vmax.xlane.f32.xlu0 %v4769
      %v4771 = vpop.xlane.xlu0 %4770
      %v4772 = vmax.f32 %v4619, %v4621
      %4773 = vmax.xlane.f32.xlu0 %v4772
      %v4774 = vpop.xlane.xlu0 %4773
      %v4775 = vmax.f32 %v4625, %v4627
      %4776 = vmax.xlane.f32.xlu0 %v4775
      %v4777 = vpop.xlane.xlu0 %4776
      %v4778 = vmax.f32 %v4629, %v4631
      %4779 = vmax.xlane.f32.xlu0 %v4778
      %v4780 = vpop.xlane.xlu0 %4779
      %v4781 = vmax.f32 %v4635, %v4637
      %4782 = vmax.xlane.f32.xlu0 %v4781
      %v4783 = vpop.xlane.xlu0 %4782
      %v4784 = vmax.f32 %v4639, %v4641
      %4785 = vmax.xlane.f32.xlu0 %v4784
      %v4786 = vpop.xlane.xlu0 %4785
      %v4787 = vmax.f32 %v4645, %v4647
      %4788 = vmax.xlane.f32.xlu0 %v4787
      %v4789 = vpop.xlane.xlu0 %4788
      %v4790 = vmax.f32 %v4649, %v4651
      %4791 = vmax.xlane.f32.xlu0 %v4790
      %v4792 = vpop.xlane.xlu0 %4791
      %v4793 = vmax.f32 %v4655, %v4657
      %4794 = vmax.xlane.f32.xlu0 %v4793
      %v4795 = vpop.xlane.xlu0 %4794
      %v4796 = vmax.f32 %v4659, %v4661
      %4797 = vmax.xlane.f32.xlu0 %v4796
      %v4798 = vpop.xlane.xlu0 %4797
      %v4799 = vmax.f32 %v4665, %v4667
      %4800 = vmax.xlane.f32.xlu0 %v4799
      %v4801 = vpop.xlane.xlu0 %4800
      %v4802 = vmax.f32 %v4669, %v4671
      %4803 = vmax.xlane.f32.xlu0 %v4802
      %v4804 = vpop.xlane.xlu0 %4803
      %v4805 = vmax.f32 %v4675, %v4677
      %4806 = vmax.xlane.f32.xlu0 %v4805
      %v4807 = vpop.xlane.xlu0 %4806
      %v4808 = vmax.f32 %v4679, %v4681
      %4809 = vmax.xlane.f32.xlu0 %v4808
      %v4810 = vpop.xlane.xlu0 %4809
      %v4811 = vmax.f32 %v4685, %v4687
      %4812 = vmax.xlane.f32.xlu0 %v4811
      %v4813 = vpop.xlane.xlu0 %4812
      %v4814 = vmax.f32 %v4689, %v4691
      %4815 = vmax.xlane.f32.xlu0 %v4814
      %v4816 = vpop.xlane.xlu0 %4815
      %v4817 = vmax.f32 %v4695, %v4697
      %4818 = vmax.xlane.f32.xlu0 %v4817
      %v4819 = vpop.xlane.xlu0 %4818
      %v4820 = vmax.f32 %v4699, %v4701
      %4821 = vmax.xlane.f32.xlu0 %v4820
      %v4822 = vpop.xlane.xlu0 %4821
      %v4823 = vmax.f32 %v4705, %v4707
      %4824 = vmax.xlane.f32.xlu0 %v4823
      %v4825 = vpop.xlane.xlu0 %4824
      %v4826 = vmax.f32 %v4709, %v4711
      %4827 = vmax.xlane.f32.xlu0 %v4826
      %v4828 = vpop.xlane.xlu0 %4827
      %v4829 = vmax.f32 %v4715, %v4717
      %4830 = vmax.xlane.f32.xlu0 %v4829
      %v4831 = vpop.xlane.xlu0 %4830
      %v4832 = vmax.f32 %v4719, %v4721
      %4833 = vmax.xlane.f32.xlu0 %v4832
      %v4834 = vpop.xlane.xlu0 %4833
      %v4835 = vmax.f32 %v4725, %v4727
      %4836 = vmax.xlane.f32.xlu0 %v4835
      %v4837 = vpop.xlane.xlu0 %4836
      %v4838 = vmax.f32 %v4729, %v4731
      %4839 = vmax.xlane.f32.xlu0 %v4838
      %v4840 = vpop.xlane.xlu0 %4839
      %v4841 = vmax.f32 %v4735, %v4737
      %4842 = vmax.xlane.f32.xlu0 %v4841
      %v4843 = vpop.xlane.xlu0 %4842
      %v4844 = vmax.f32 %v4739, %v4741
      %4845 = vmax.xlane.f32.xlu0 %v4844
      %v4846 = vpop.xlane.xlu0 %4845
      %v4847 = vmax.f32 %v4745, %v4747
      %4848 = vmax.xlane.f32.xlu0 %v4847
      %v4849 = vpop.xlane.xlu0 %4848
      %v4850 = vmax.f32 %v4749, %v4751
      %4851 = vmax.xlane.f32.xlu0 %v4850
      %v4852 = vpop.xlane.xlu0 %4851
      %v4853 = vmax.f32 %v4755, %v4757
      %4854 = vmax.xlane.f32.xlu0 %v4853
      %v4855 = vpop.xlane.xlu0 %4854
      %v4856 = vmax.f32 %v4759, %v4761
      %4857 = vmax.xlane.f32.xlu0 %v4856
      %v4858 = vpop.xlane.xlu0 %4857
      %v4859 = vsub.f32 %v4605, %v4765
      %v4860 = vsub.f32 %v4607, %v4765
      %v4861 = vsub.f32 %v4609, %v4768
      %v4862 = vsub.f32 %v4611, %v4768
      %v4863 = vsub.f32 %v4615, %v4771
      %v4864 = vsub.f32 %v4617, %v4771
      %v4865 = vsub.f32 %v4619, %v4774
      %v4866 = vsub.f32 %v4621, %v4774
      %v4867 = vsub.f32 %v4625, %v4777
      %v4868 = vsub.f32 %v4627, %v4777
      %v4869 = vsub.f32 %v4629, %v4780
      %v4870 = vsub.f32 %v4631, %v4780
      %v4871 = vsub.f32 %v4635, %v4783
      %v4872 = vsub.f32 %v4637, %v4783
      %v4873 = vsub.f32 %v4639, %v4786
      %v4874 = vsub.f32 %v4641, %v4786
      %v4875 = vsub.f32 %v4645, %v4789
      %v4876 = vsub.f32 %v4647, %v4789
      %v4877 = vsub.f32 %v4649, %v4792
      %v4878 = vsub.f32 %v4651, %v4792
      %v4879 = vsub.f32 %v4655, %v4795
      %v4880 = vsub.f32 %v4657, %v4795
      %v4881 = vsub.f32 %v4659, %v4798
      %v4882 = vsub.f32 %v4661, %v4798
      %v4883 = vsub.f32 %v4665, %v4801
      %v4884 = vsub.f32 %v4667, %v4801
      %v4885 = vsub.f32 %v4669, %v4804
      %v4886 = vsub.f32 %v4671, %v4804
      %v4887 = vsub.f32 %v4675, %v4807
      %v4888 = vsub.f32 %v4677, %v4807
      %v4889 = vsub.f32 %v4679, %v4810
      %v4890 = vsub.f32 %v4681, %v4810
      %v4891 = vsub.f32 %v4685, %v4813
      %v4892 = vsub.f32 %v4687, %v4813
      %v4893 = vsub.f32 %v4689, %v4816
      %v4894 = vsub.f32 %v4691, %v4816
      %v4895 = vsub.f32 %v4695, %v4819
      %v4896 = vsub.f32 %v4697, %v4819
      %v4897 = vsub.f32 %v4699, %v4822
      %v4898 = vsub.f32 %v4701, %v4822
      %v4899 = vsub.f32 %v4705, %v4825
      %v4900 = vsub.f32 %v4707, %v4825
      %v4901 = vsub.f32 %v4709, %v4828
      %v4902 = vsub.f32 %v4711, %v4828
      %v4903 = vsub.f32 %v4715, %v4831
      %v4904 = vsub.f32 %v4717, %v4831
      %v4905 = vsub.f32 %v4719, %v4834
      %v4906 = vsub.f32 %v4721, %v4834
      %v4907 = vsub.f32 %v4725, %v4837
      %v4908 = vsub.f32 %v4727, %v4837
      %v4909 = vsub.f32 %v4729, %v4840
      %v4910 = vsub.f32 %v4731, %v4840
      %v4911 = vsub.f32 %v4735, %v4843
      %v4912 = vsub.f32 %v4737, %v4843
      %v4913 = vsub.f32 %v4739, %v4846
      %v4914 = vsub.f32 %v4741, %v4846
      %v4915 = vsub.f32 %v4745, %v4849
      %v4916 = vsub.f32 %v4747, %v4849
      %v4917 = vsub.f32 %v4749, %v4852
      %v4918 = vsub.f32 %v4751, %v4852
      %v4919 = vsub.f32 %v4755, %v4855
      %v4920 = vsub.f32 %v4757, %v4855
      %v4921 = vsub.f32 %v4759, %v4858
      %v4922 = vsub.f32 %v4761, %v4858
      %v4923 = vmul.f32 %v4859, 1.442695
      %v4924 = vpow.pop %v4923
      %v4925 = vmul.f32 %v4860, 1.442695
      %v4926 = vpow.pop %v4925
      %v4927 = vmul.f32 %v4861, 1.442695
      %v4928 = vpow.pop %v4927
      %v4929 = vmul.f32 %v4862, 1.442695
      %v4930 = vpow.pop %v4929
      %v4931 = vmul.f32 %v4863, 1.442695
      %v4932 = vpow.pop %v4931
      %v4933 = vmul.f32 %v4864, 1.442695
      %v4934 = vpow.pop %v4933
      %v4935 = vmul.f32 %v4865, 1.442695
      %v4936 = vpow.pop %v4935
      %v4937 = vmul.f32 %v4866, 1.442695
      %v4938 = vpow.pop %v4937
      %v4939 = vmul.f32 %v4867, 1.442695
      %v4940 = vpow.pop %v4939
      %v4941 = vmul.f32 %v4868, 1.442695
      %v4942 = vpow.pop %v4941
      %v4943 = vmul.f32 %v4869, 1.442695
      %v4944 = vpow.pop %v4943
      %v4945 = vmul.f32 %v4870, 1.442695
      %v4946 = vpow.pop %v4945
      %v4947 = vmul.f32 %v4871, 1.442695
      %v4948 = vpow.pop %v4947
      %v4949 = vmul.f32 %v4872, 1.442695
      %v4950 = vpow.pop %v4949
      %v4951 = vmul.f32 %v4873, 1.442695
      %v4952 = vpow.pop %v4951
      %v4953 = vmul.f32 %v4874, 1.442695
      %v4954 = vpow.pop %v4953
      %v4955 = vmul.f32 %v4875, 1.442695
      %v4956 = vpow.pop %v4955
      %v4957 = vmul.f32 %v4876, 1.442695
      %v4958 = vpow.pop %v4957
      %v4959 = vmul.f32 %v4877, 1.442695
      %v4960 = vpow.pop %v4959
      %v4961 = vmul.f32 %v4878, 1.442695
      %v4962 = vpow.pop %v4961
      %v4963 = vmul.f32 %v4879, 1.442695
      %v4964 = vpow.pop %v4963
      %v4965 = vmul.f32 %v4880, 1.442695
      %v4966 = vpow.pop %v4965
      %v4967 = vmul.f32 %v4881, 1.442695
      %v4968 = vpow.pop %v4967
      %v4969 = vmul.f32 %v4882, 1.442695
      %v4970 = vpow.pop %v4969
      %v4971 = vmul.f32 %v4883, 1.442695
      %v4972 = vpow.pop %v4971
      %v4973 = vmul.f32 %v4884, 1.442695
      %v4974 = vpow.pop %v4973
      %v4975 = vmul.f32 %v4885, 1.442695
      %v4976 = vpow.pop %v4975
      %v4977 = vmul.f32 %v4886, 1.442695
      %v4978 = vpow.pop %v4977
      %v4979 = vmul.f32 %v4887, 1.442695
      %v4980 = vpow.pop %v4979
      %v4981 = vmul.f32 %v4888, 1.442695
      %v4982 = vpow.pop %v4981
      %v4983 = vmul.f32 %v4889, 1.442695
      %v4984 = vpow.pop %v4983
      %v4985 = vmul.f32 %v4890, 1.442695
      %v4986 = vpow.pop %v4985
      %v4987 = vmul.f32 %v4891, 1.442695
      %v4988 = vpow.pop %v4987
      %v4989 = vmul.f32 %v4892, 1.442695
      %v4990 = vpow.pop %v4989
      %v4991 = vmul.f32 %v4893, 1.442695
      %v4992 = vpow.pop %v4991
      %v4993 = vmul.f32 %v4894, 1.442695
      %v4994 = vpow.pop %v4993
      %v4995 = vmul.f32 %v4895, 1.442695
      %v4996 = vpow.pop %v4995
      %v4997 = vmul.f32 %v4896, 1.442695
      %v4998 = vpow.pop %v4997
      %v4999 = vmul.f32 %v4897, 1.442695
      %v5000 = vpow.pop %v4999
      %v5001 = vmul.f32 %v4898, 1.442695
      %v5002 = vpow.pop %v5001
      %v5003 = vmul.f32 %v4899, 1.442695
      %v5004 = vpow.pop %v5003
      %v5005 = vmul.f32 %v4900, 1.442695
      %v5006 = vpow.pop %v5005
      %v5007 = vmul.f32 %v4901, 1.442695
      %v5008 = vpow.pop %v5007
      %v5009 = vmul.f32 %v4902, 1.442695
      %v5010 = vpow.pop %v5009
      %v5011 = vmul.f32 %v4903, 1.442695
      %v5012 = vpow.pop %v5011
      %v5013 = vmul.f32 %v4904, 1.442695
      %v5014 = vpow.pop %v5013
      %v5015 = vmul.f32 %v4905, 1.442695
      %v5016 = vpow.pop %v5015
      %v5017 = vmul.f32 %v4906, 1.442695
      %v5018 = vpow.pop %v5017
      %v5019 = vmul.f32 %v4907, 1.442695
      %v5020 = vpow.pop %v5019
      %v5021 = vmul.f32 %v4908, 1.442695
      %v5022 = vpow.pop %v5021
      %v5023 = vmul.f32 %v4909, 1.442695
      %v5024 = vpow.pop %v5023
      %v5025 = vmul.f32 %v4910, 1.442695
      %v5026 = vpow.pop %v5025
      %v5027 = vmul.f32 %v4911, 1.442695
      %v5028 = vpow.pop %v5027
      %v5029 = vmul.f32 %v4912, 1.442695
      %v5030 = vpow.pop %v5029
      %v5031 = vmul.f32 %v4913, 1.442695
      %v5032 = vpow.pop %v5031
      %v5033 = vmul.f32 %v4914, 1.442695
      %v5034 = vpow.pop %v5033
      %v5035 = vmul.f32 %v4915, 1.442695
      %v5036 = vpow.pop %v5035
      %v5037 = vmul.f32 %v4916, 1.442695
      %v5038 = vpow.pop %v5037
      %v5039 = vmul.f32 %v4917, 1.442695
      %v5040 = vpow.pop %v5039
      %v5041 = vmul.f32 %v4918, 1.442695
      %v5042 = vpow.pop %v5041
      %v5043 = vmul.f32 %v4919, 1.442695
      %v5044 = vpow.pop %v5043
      %v5045 = vmul.f32 %v4920, 1.442695
      %v5046 = vpow.pop %v5045
      %v5047 = vmul.f32 %v4921, 1.442695
      %v5048 = vpow.pop %v5047
      %v5049 = vmul.f32 %v4922, 1.442695
      %v5050 = vpow.pop %v5049
      %v5051 = vadd.f32 %v4924, %v4926
      %5052 = vadd.xlane.f32.xlu0 %v5051
      %v5053 = vpop.xlane.xlu0 %5052
      %v5054 = vadd.f32 %v4928, %v4930
      %5055 = vadd.xlane.f32.xlu0 %v5054
      %v5056 = vpop.xlane.xlu0 %5055
      %v5057 = vadd.f32 %v4932, %v4934
      %5058 = vadd.xlane.f32.xlu0 %v5057
      %v5059 = vpop.xlane.xlu0 %5058
      %v5060 = vadd.f32 %v4936, %v4938
      %5061 = vadd.xlane.f32.xlu0 %v5060
      %v5062 = vpop.xlane.xlu0 %5061
      %v5063 = vadd.f32 %v4940, %v4942
      %5064 = vadd.xlane.f32.xlu0 %v5063
      %v5065 = vpop.xlane.xlu0 %5064
      %v5066 = vadd.f32 %v4944, %v4946
      %5067 = vadd.xlane.f32.xlu0 %v5066
      %v5068 = vpop.xlane.xlu0 %5067
      %v5069 = vadd.f32 %v4948, %v4950
      %5070 = vadd.xlane.f32.xlu0 %v5069
      %v5071 = vpop.xlane.xlu0 %5070
      %v5072 = vadd.f32 %v4952, %v4954
      %5073 = vadd.xlane.f32.xlu0 %v5072
      %v5074 = vpop.xlane.xlu0 %5073
      %v5075 = vadd.f32 %v4956, %v4958
      %5076 = vadd.xlane.f32.xlu0 %v5075
      %v5077 = vpop.xlane.xlu0 %5076
      %v5078 = vadd.f32 %v4960, %v4962
      %5079 = vadd.xlane.f32.xlu0 %v5078
      %v5080 = vpop.xlane.xlu0 %5079
      %v5081 = vadd.f32 %v4964, %v4966
      %5082 = vadd.xlane.f32.xlu0 %v5081
      %v5083 = vpop.xlane.xlu0 %5082
      %v5084 = vadd.f32 %v4968, %v4970
      %5085 = vadd.xlane.f32.xlu0 %v5084
      %v5086 = vpop.xlane.xlu0 %5085
      %v5087 = vadd.f32 %v4972, %v4974
      %5088 = vadd.xlane.f32.xlu0 %v5087
      %v5089 = vpop.xlane.xlu0 %5088
      %v5090 = vadd.f32 %v4976, %v4978
      %5091 = vadd.xlane.f32.xlu0 %v5090
      %v5092 = vpop.xlane.xlu0 %5091
      %v5093 = vadd.f32 %v4980, %v4982
      %5094 = vadd.xlane.f32.xlu0 %v5093
      %v5095 = vpop.xlane.xlu0 %5094
      %v5096 = vadd.f32 %v4984, %v4986
      %5097 = vadd.xlane.f32.xlu0 %v5096
      %v5098 = vpop.xlane.xlu0 %5097
      %v5099 = vadd.f32 %v4988, %v4990
      %5100 = vadd.xlane.f32.xlu0 %v5099
      %v5101 = vpop.xlane.xlu0 %5100
      %v5102 = vadd.f32 %v4992, %v4994
      %5103 = vadd.xlane.f32.xlu0 %v5102
      %v5104 = vpop.xlane.xlu0 %5103
      %v5105 = vadd.f32 %v4996, %v4998
      %5106 = vadd.xlane.f32.xlu0 %v5105
      %v5107 = vpop.xlane.xlu0 %5106
      %v5108 = vadd.f32 %v5000, %v5002
      %5109 = vadd.xlane.f32.xlu0 %v5108
      %v5110 = vpop.xlane.xlu0 %5109
      %v5111 = vadd.f32 %v5004, %v5006
      %5112 = vadd.xlane.f32.xlu0 %v5111
      %v5113 = vpop.xlane.xlu0 %5112
      %v5114 = vadd.f32 %v5008, %v5010
      %5115 = vadd.xlane.f32.xlu0 %v5114
      %v5116 = vpop.xlane.xlu0 %5115
      %v5117 = vadd.f32 %v5012, %v5014
      %5118 = vadd.xlane.f32.xlu0 %v5117
      %v5119 = vpop.xlane.xlu0 %5118
      %v5120 = vadd.f32 %v5016, %v5018
      %5121 = vadd.xlane.f32.xlu0 %v5120
      %v5122 = vpop.xlane.xlu0 %5121
      %v5123 = vadd.f32 %v5020, %v5022
      %5124 = vadd.xlane.f32.xlu0 %v5123
      %v5125 = vpop.xlane.xlu0 %5124
      %v5126 = vadd.f32 %v5024, %v5026
      %5127 = vadd.xlane.f32.xlu0 %v5126
      %v5128 = vpop.xlane.xlu0 %5127
      %v5129 = vadd.f32 %v5028, %v5030
      %5130 = vadd.xlane.f32.xlu0 %v5129
      %v5131 = vpop.xlane.xlu0 %5130
      %v5132 = vadd.f32 %v5032, %v5034
      %5133 = vadd.xlane.f32.xlu0 %v5132
      %v5134 = vpop.xlane.xlu0 %5133
      %v5135 = vadd.f32 %v5036, %v5038
      %5136 = vadd.xlane.f32.xlu0 %v5135
      %v5137 = vpop.xlane.xlu0 %5136
      %v5138 = vadd.f32 %v5040, %v5042
      %5139 = vadd.xlane.f32.xlu0 %v5138
      %v5140 = vpop.xlane.xlu0 %5139
      %v5141 = vadd.f32 %v5044, %v5046
      %5142 = vadd.xlane.f32.xlu0 %v5141
      %v5143 = vpop.xlane.xlu0 %5142
      %v5144 = vadd.f32 %v5048, %v5050
      %5145 = vadd.xlane.f32.xlu0 %v5144
      %v5146 = vpop.xlane.xlu0 %5145
      %v5147 = vrcp.pop %v5053
      %v5148 = vrcp.pop %v5056
      %v5149 = vrcp.pop %v5059
      %v5150 = vrcp.pop %v5062
      %v5151 = vrcp.pop %v5065
      %v5152 = vrcp.pop %v5068
      %v5153 = vrcp.pop %v5071
      %v5154 = vrcp.pop %v5074
      %v5155 = vrcp.pop %v5077
      %v5156 = vrcp.pop %v5080
      %v5157 = vrcp.pop %v5083
      %v5158 = vrcp.pop %v5086
      %v5159 = vrcp.pop %v5089
      %v5160 = vrcp.pop %v5092
      %v5161 = vrcp.pop %v5095
      %v5162 = vrcp.pop %v5098
      %v5163 = vrcp.pop %v5101
      %v5164 = vrcp.pop %v5104
      %v5165 = vrcp.pop %v5107
      %v5166 = vrcp.pop %v5110
      %v5167 = vrcp.pop %v5113
      %v5168 = vrcp.pop %v5116
      %v5169 = vrcp.pop %v5119
      %v5170 = vrcp.pop %v5122
      %v5171 = vrcp.pop %v5125
      %v5172 = vrcp.pop %v5128
      %v5173 = vrcp.pop %v5131
      %v5174 = vrcp.pop %v5134
      %v5175 = vrcp.pop %v5137
      %v5176 = vrcp.pop %v5140
      %v5177 = vrcp.pop %v5143
      %v5178 = vrcp.pop %v5146
      %v5179 = vmul.f32 %v4924, %v5147
      %v5180 = vmul.f32 %v4926, %v5147
      %v5181 = vmul.f32 %v4928, %v5148
      %v5182 = vmul.f32 %v4930, %v5148
      %v5183 = vmul.f32 %v4932, %v5149
      %v5184 = vmul.f32 %v4934, %v5149
      %v5185 = vmul.f32 %v4936, %v5150
      %v5186 = vmul.f32 %v4938, %v5150
      %v5187 = vmul.f32 %v4940, %v5151
      %v5188 = vmul.f32 %v4942, %v5151
      %v5189 = vmul.f32 %v4944, %v5152
      %v5190 = vmul.f32 %v4946, %v5152
      %v5191 = vmul.f32 %v4948, %v5153
      %v5192 = vmul.f32 %v4950, %v5153
      %v5193 = vmul.f32 %v4952, %v5154
      %v5194 = vmul.f32 %v4954, %v5154
      %v5195 = vmul.f32 %v4956, %v5155
      %v5196 = vmul.f32 %v4958, %v5155
      %v5197 = vmul.f32 %v4960, %v5156
      %v5198 = vmul.f32 %v4962, %v5156
      %v5199 = vmul.f32 %v4964, %v5157
      %v5200 = vmul.f32 %v4966, %v5157
      %v5201 = vmul.f32 %v4968, %v5158
      %v5202 = vmul.f32 %v4970, %v5158
      %v5203 = vmul.f32 %v4972, %v5159
      %v5204 = vmul.f32 %v4974, %v5159
      %v5205 = vmul.f32 %v4976, %v5160
      %v5206 = vmul.f32 %v4978, %v5160
      %v5207 = vmul.f32 %v4980, %v5161
      %v5208 = vmul.f32 %v4982, %v5161
      %v5209 = vmul.f32 %v4984, %v5162
      %v5210 = vmul.f32 %v4986, %v5162
      %v5211 = vmul.f32 %v4988, %v5163
      %v5212 = vmul.f32 %v4990, %v5163
      %v5213 = vmul.f32 %v4992, %v5164
      %v5214 = vmul.f32 %v4994, %v5164
      %v5215 = vmul.f32 %v4996, %v5165
      %v5216 = vmul.f32 %v4998, %v5165
      %v5217 = vmul.f32 %v5000, %v5166
      %v5218 = vmul.f32 %v5002, %v5166
      %v5219 = vmul.f32 %v5004, %v5167
      %v5220 = vmul.f32 %v5006, %v5167
      %v5221 = vmul.f32 %v5008, %v5168
      %v5222 = vmul.f32 %v5010, %v5168
      %v5223 = vmul.f32 %v5012, %v5169
      %v5224 = vmul.f32 %v5014, %v5169
      %v5225 = vmul.f32 %v5016, %v5170
      %v5226 = vmul.f32 %v5018, %v5170
      %v5227 = vmul.f32 %v5020, %v5171
      %v5228 = vmul.f32 %v5022, %v5171
      %v5229 = vmul.f32 %v5024, %v5172
      %v5230 = vmul.f32 %v5026, %v5172
      %v5231 = vmul.f32 %v5028, %v5173
      %v5232 = vmul.f32 %v5030, %v5173
      %v5233 = vmul.f32 %v5032, %v5174
      %v5234 = vmul.f32 %v5034, %v5174
      %v5235 = vmul.f32 %v5036, %v5175
      %v5236 = vmul.f32 %v5038, %v5175
      %v5237 = vmul.f32 %v5040, %v5176
      %v5238 = vmul.f32 %v5042, %v5176
      %v5239 = vmul.f32 %v5044, %v5177
      %v5240 = vmul.f32 %v5046, %v5177
      %v5241 = vmul.f32 %v5048, %v5178
      %v5242 = vmul.f32 %v5050, %v5178
      %v5243 = vpack.c.bf16 %v5181, %v5179
      %v5244 = vpack.c.bf16 %v5182, %v5180
      %v5245 = vpack.c.bf16 %v5185, %v5183
      %v5246 = vpack.c.bf16 %v5186, %v5184
      %v5247 = vpack.c.bf16 %v5189, %v5187
      %v5248 = vpack.c.bf16 %v5190, %v5188
      %v5249 = vpack.c.bf16 %v5193, %v5191
      %v5250 = vpack.c.bf16 %v5194, %v5192
      %v5251 = vpack.c.bf16 %v5197, %v5195
      %v5252 = vpack.c.bf16 %v5198, %v5196
      %v5253 = vpack.c.bf16 %v5201, %v5199
      %v5254 = vpack.c.bf16 %v5202, %v5200
      %v5255 = vpack.c.bf16 %v5205, %v5203
      %v5256 = vpack.c.bf16 %v5206, %v5204
      %v5257 = vpack.c.bf16 %v5209, %v5207
      %v5258 = vpack.c.bf16 %v5210, %v5208
      %v5259 = vpack.c.bf16 %v5213, %v5211
      %v5260 = vpack.c.bf16 %v5214, %v5212
      %v5261 = vpack.c.bf16 %v5217, %v5215
      %v5262 = vpack.c.bf16 %v5218, %v5216
      %v5263 = vpack.c.bf16 %v5221, %v5219
      %v5264 = vpack.c.bf16 %v5222, %v5220
      %v5265 = vpack.c.bf16 %v5225, %v5223
      %v5266 = vpack.c.bf16 %v5226, %v5224
      %v5267 = vpack.c.bf16 %v5229, %v5227
      %v5268 = vpack.c.bf16 %v5230, %v5228
      %v5269 = vpack.c.bf16 %v5233, %v5231
      %v5270 = vpack.c.bf16 %v5234, %v5232
      %v5271 = vpack.c.bf16 %v5237, %v5235
      %v5272 = vpack.c.bf16 %v5238, %v5236
      %v5273 = vpack.c.bf16 %v5241, %v5239
      %v5274 = vpack.c.bf16 %v5242, %v5240
      %5275 = vmatprep.subr.bf16.mxu0 %v5244
      %5276 = vmatpush1.bf16.xpose.msra.mxu0 %v5243
      %5277 = vmatprep.subr.bf16.mxu0 %v5246
      %5278 = vmatpush1.bf16.xpose.msra.mxu0 %v5245
      %5279 = vmatprep.subr.bf16.mxu0 %v5248
      %5280 = vmatpush1.bf16.xpose.msra.mxu0 %v5247
      %5281 = vmatprep.subr.bf16.mxu0 %v5250
      %5282 = vmatpush1.bf16.xpose.msra.mxu0 %v5249
      %5283 = vmatprep.subr.bf16.mxu0 %v5252
      %5284 = vmatpush1.bf16.xpose.msra.mxu0 %v5251
      %5285 = vmatprep.subr.bf16.mxu0 %v5254
      %5286 = vmatpush1.bf16.xpose.msra.mxu0 %v5253
      %5287 = vmatprep.subr.bf16.mxu0 %v5256
      %5288 = vmatpush1.bf16.xpose.msra.mxu0 %v5255
      %5289 = vmatprep.subr.bf16.mxu0 %v5258
      %5290 = vmatpush1.bf16.xpose.msra.mxu0 %v5257
      %5291 = vmatprep.subr.bf16.mxu0 %v5260
      %5292 = vmatpush1.bf16.xpose.msra.mxu0 %v5259
      %5293 = vmatprep.subr.bf16.mxu0 %v5262
      %5294 = vmatpush1.bf16.xpose.msra.mxu0 %v5261
      %5295 = vmatprep.subr.bf16.mxu0 %v5264
      %5296 = vmatpush1.bf16.xpose.msra.mxu0 %v5263
      %5297 = vmatprep.subr.bf16.mxu0 %v5266
      %5298 = vmatpush1.bf16.xpose.msra.mxu0 %v5265
      %5299 = vmatprep.subr.bf16.mxu0 %v5268
      %5300 = vmatpush1.bf16.xpose.msra.mxu0 %v5267
      %5301 = vmatprep.subr.bf16.mxu0 %v5270
      %5302 = vmatpush1.bf16.xpose.msra.mxu0 %v5269
      %5303 = vmatprep.subr.bf16.mxu0 %v5272
      %5304 = vmatpush1.bf16.xpose.msra.mxu0 %v5271
      %5305 = vmatprep.subr.bf16.mxu0 %v5274
      %5306 = vmatpush1.bf16.xpose.msra.mxu0 %v5273
      %5307 = vmatprep.mubr.bf16.mxu0 %v4419
      %5308 = vmatmul.mubr.bf16.gmra.mrb[0].mxu0 %v4418
      %v5309 = vpop.f32.mrb[0].mxu0
      %v5310 = vadd.f32 0.0, %v5309
      %v5311 = vpop.f32.mrb[0].mxu0
      %v5312 = vadd.f32 0.0, %v5311
      %v5313 = vpop.f32.mrb[0].mxu0
      %v5314 = vpop.f32.mrb[0].mxu0
      %5315 = vdwg.mxu0
      %s5316 = scalar_lea.vmem %s8, 512
      %v5317 = vld [vmem:[%s5316] sm:$0xff]
      %v5318 = vld [vmem:[%s5316 + $0x8] sm:$0xff]
      %v5319 = vld [vmem:[%s5316 + $0x10] sm:$0xff]
      %v5320 = vld [vmem:[%s5316 + $0x18] sm:$0xff]
      %v5321 = vld [vmem:[%s5316 + $0x20] sm:$0xff]
      %v5322 = vld [vmem:[%s5316 + $0x28] sm:$0xff]
      %v5323 = vld [vmem:[%s5316 + $0x30] sm:$0xff]
      %v5324 = vld [vmem:[%s5316 + $0x38] sm:$0xff]
      %v5325 = vld [vmem:[%s5316 + $0x40] sm:$0xff]
      %v5326 = vld [vmem:[%s5316 + $0x48] sm:$0xff]
      %v5327 = vld [vmem:[%s5316 + $0x50] sm:$0xff]
      %v5328 = vld [vmem:[%s5316 + $0x58] sm:$0xff]
      %v5329 = vld [vmem:[%s5316 + $0x60] sm:$0xff]
      %v5330 = vld [vmem:[%s5316 + $0x68] sm:$0xff]
      %v5331 = vld [vmem:[%s5316 + $0x70] sm:$0xff]
      %v5332 = vld [vmem:[%s5316 + $0x78] sm:$0xff]
      %v5333 = vld [vmem:[%s5316 + $0x80] sm:$0xff]
      %v5334 = vld [vmem:[%s5316 + $0x88] sm:$0xff]
      %v5335 = vld [vmem:[%s5316 + $0x90] sm:$0xff]
      %v5336 = vld [vmem:[%s5316 + $0x98] sm:$0xff]
      %v5337 = vld [vmem:[%s5316 + $0xa0] sm:$0xff]
      %v5338 = vld [vmem:[%s5316 + $0xa8] sm:$0xff]
      %v5339 = vld [vmem:[%s5316 + $0xb0] sm:$0xff]
      %v5340 = vld [vmem:[%s5316 + $0xb8] sm:$0xff]
      %v5341 = vld [vmem:[%s5316 + $0xc0] sm:$0xff]
      %v5342 = vld [vmem:[%s5316 + $0xc8] sm:$0xff]
      %v5343 = vld [vmem:[%s5316 + $0xd0] sm:$0xff]
      %v5344 = vld [vmem:[%s5316 + $0xd8] sm:$0xff]
      %v5345 = vld [vmem:[%s5316 + $0xe0] sm:$0xff]
      %v5346 = vld [vmem:[%s5316 + $0xe8] sm:$0xff]
      %v5347 = vld [vmem:[%s5316 + $0xf0] sm:$0xff]
      %v5348 = vld [vmem:[%s5316 + $0xf8] sm:$0xff]
      %v5349 = vld [vmem:[%s5316 + $0x100] sm:$0xff]
      %v5350 = vld [vmem:[%s5316 + $0x108] sm:$0xff]
      %v5351 = vld [vmem:[%s5316 + $0x110] sm:$0xff]
      %v5352 = vld [vmem:[%s5316 + $0x118] sm:$0xff]
      %v5353 = vld [vmem:[%s5316 + $0x120] sm:$0xff]
      %v5354 = vld [vmem:[%s5316 + $0x128] sm:$0xff]
      %v5355 = vld [vmem:[%s5316 + $0x130] sm:$0xff]
      %v5356 = vld [vmem:[%s5316 + $0x138] sm:$0xff]
      %v5357 = vld [vmem:[%s5316 + $0x140] sm:$0xff]
      %v5358 = vld [vmem:[%s5316 + $0x148] sm:$0xff]
      %v5359 = vld [vmem:[%s5316 + $0x150] sm:$0xff]
      %v5360 = vld [vmem:[%s5316 + $0x158] sm:$0xff]
      %v5361 = vld [vmem:[%s5316 + $0x160] sm:$0xff]
      %v5362 = vld [vmem:[%s5316 + $0x168] sm:$0xff]
      %v5363 = vld [vmem:[%s5316 + $0x170] sm:$0xff]
      %v5364 = vld [vmem:[%s5316 + $0x178] sm:$0xff]
      %v5365 = vld [vmem:[%s5316 + $0x180] sm:$0xff]
      %v5366 = vld [vmem:[%s5316 + $0x188] sm:$0xff]
      %v5367 = vld [vmem:[%s5316 + $0x190] sm:$0xff]
      %v5368 = vld [vmem:[%s5316 + $0x198] sm:$0xff]
      %v5369 = vld [vmem:[%s5316 + $0x1a0] sm:$0xff]
      %v5370 = vld [vmem:[%s5316 + $0x1a8] sm:$0xff]
      %v5371 = vld [vmem:[%s5316 + $0x1b0] sm:$0xff]
      %v5372 = vld [vmem:[%s5316 + $0x1b8] sm:$0xff]
      %v5373 = vld [vmem:[%s5316 + $0x1c0] sm:$0xff]
      %v5374 = vld [vmem:[%s5316 + $0x1c8] sm:$0xff]
      %v5375 = vld [vmem:[%s5316 + $0x1d0] sm:$0xff]
      %v5376 = vld [vmem:[%s5316 + $0x1d8] sm:$0xff]
      %v5377 = vld [vmem:[%s5316 + $0x1e0] sm:$0xff]
      %v5378 = vld [vmem:[%s5316 + $0x1e8] sm:$0xff]
      %v5379 = vld [vmem:[%s5316 + $0x1f0] sm:$0xff]
      %v5380 = vld [vmem:[%s5316 + $0x1f8] sm:$0xff]
      %v5383 = vrot.slane %v4414, 1
      %v5384 = vrot.slane %v4415, 1
      %5387 = vxpose.xlu0.c.b16.start [1/8] %v5383, 128
      %5388 = vxpose.xlu0.c.b16.cont [2/8] 0, 128
      %5389 = vxpose.xlu0.c.b16.cont [3/8] 0, 128
      %5390 = vxpose.xlu0.c.b16.cont [4/8] 0, 128
      %5391 = vxpose.xlu0.c.b16.cont [5/8] 0, 128
      %5392 = vxpose.xlu0.c.b16.cont [6/8] 0, 128
      %5393 = vxpose.xlu0.c.b16.cont [7/8] 0, 128
      %5394 = vxpose.xlu0.c.b16.end [8/8] 0, 128
      %v5395 = vpop.trf.xlu0
      %v5396 = vpop.trf.xlu0
      %v5397 = vpop.trf.xlu0
      %v5398 = vpop.trf.xlu0
      %v5399 = vpop.trf.xlu0
      %v5400 = vpop.trf.xlu0
      %v5401 = vpop.trf.xlu0
      %v5402 = vpop.trf.xlu0
      %5403 = vxpose.xlu0.c.b16.start [1/8] %v5384, 128
      %5404 = vxpose.xlu0.c.b16.cont [2/8] 0, 128
      %5405 = vxpose.xlu0.c.b16.cont [3/8] 0, 128
      %5406 = vxpose.xlu0.c.b16.cont [4/8] 0, 128
      %5407 = vxpose.xlu0.c.b16.cont [5/8] 0, 128
      %5408 = vxpose.xlu0.c.b16.cont [6/8] 0, 128
      %5409 = vxpose.xlu0.c.b16.cont [7/8] 0, 128
      %5410 = vxpose.xlu0.c.b16.end [8/8] 0, 128
      %v5411 = vpop.trf.xlu0
      %v5412 = vpop.trf.xlu0
      %v5413 = vpop.trf.xlu0
      %v5414 = vpop.trf.xlu0
      %v5415 = vpop.trf.xlu0
      %v5416 = vpop.trf.xlu0
      %v5417 = vpop.trf.xlu0
      %v5418 = vpop.trf.xlu0
      %v5421 = vrot.slane %v4416, 1
      %v5422 = vrot.slane %v4417, 1
      %v5424 = vsel %vm719, %v5395, 0
      %v5427 = vsel %vm719, %v5396, 0
      %v5430 = vsel %vm719, %v5397, 0
      %v5433 = vsel %vm719, %v5398, 0
      %v5436 = vsel %vm719, %v5399, 0
      %v5439 = vsel %vm719, %v5400, 0
      %v5442 = vsel %vm719, %v5401, 0
      %v5445 = vsel %vm719, %v5402, 0
      %v5448 = vsel %vm719, %v5411, 0
      %v5451 = vsel %vm719, %v5412, 0
      %v5454 = vsel %vm719, %v5413, 0
      %v5457 = vsel %vm719, %v5414, 0
      %v5460 = vsel %vm719, %v5415, 0
      %v5463 = vsel %vm719, %v5416, 0
      %v5466 = vsel %vm719, %v5417, 0
      %v5469 = vsel %vm719, %v5418, 0
      %v5472 = vsel %vm768, %v5421, 0
      %v5475 = vsel %vm768, %v5422, 0
      %5477 = vmatprep.subr.bf16.mxu0 %v5475
      %5478 = vmatpush1.bf16.msra.mxu0 %v5472
      %5479 = vmatprep.subr.bf16.mxu0 0
      %5480 = vmatpush1.bf16.msra.mxu0 0
      %5481 = vmatprep.subr.bf16.mxu0 0
      %5482 = vmatpush1.bf16.msra.mxu0 0
      %5483 = vmatprep.subr.bf16.mxu0 0
      %5484 = vmatpush1.bf16.msra.mxu0 0
      %5485 = vmatprep.subr.bf16.mxu0 0
      %5486 = vmatpush1.bf16.msra.mxu0 0
      %5487 = vmatprep.subr.bf16.mxu0 0
      %5488 = vmatpush1.bf16.msra.mxu0 0
      %5489 = vmatprep.subr.bf16.mxu0 0
      %5490 = vmatpush1.bf16.msra.mxu0 0
      %5491 = vmatprep.subr.bf16.mxu0 0
      %5492 = vmatpush1.bf16.msra.mxu0 0
      %5493 = vmatprep.subr.bf16.mxu0 0
      %5494 = vmatpush1.bf16.msra.mxu0 0
      %5495 = vmatprep.subr.bf16.mxu0 0
      %5496 = vmatpush1.bf16.msra.mxu0 0
      %5497 = vmatprep.subr.bf16.mxu0 0
      %5498 = vmatpush1.bf16.msra.mxu0 0
      %5499 = vmatprep.subr.bf16.mxu0 0
      %5500 = vmatpush1.bf16.msra.mxu0 0
      %5501 = vmatprep.subr.bf16.mxu0 0
      %5502 = vmatpush1.bf16.msra.mxu0 0
      %5503 = vmatprep.subr.bf16.mxu0 0
      %5504 = vmatpush1.bf16.msra.mxu0 0
      %5505 = vmatprep.subr.bf16.mxu0 0
      %5506 = vmatpush1.bf16.msra.mxu0 0
      %5507 = vmatprep.subr.bf16.mxu0 0
      %5508 = vmatpush1.bf16.msra.mxu0 0
      %5509 = vmatprep.mubr.bf16.mxu0 0
      %5510 = vmatmul.mubr.bf16.gmra.mrb[0].mxu0 %v5424
      %v5511 = vpop.f32.mrb[0].mxu0
      %v5512 = vadd.f32 %v5317, %v5511
      %v5513 = vpop.f32.mrb[0].mxu0
      %v5514 = vadd.f32 %v5318, %v5513
      %v5515 = vpop.f32.mrb[0].mxu0
      %v5516 = vadd.f32 %v5319, %v5515
      %v5517 = vpop.f32.mrb[0].mxu0
      %v5518 = vadd.f32 %v5320, %v5517
      %5519 = vmatprep.mubr.bf16.mxu0 0
      %5520 = vmatmul.mubr.bf16.gmra.mrb[0].mxu0 %v5427
      %v5521 = vpop.f32.mrb[0].mxu0
      %v5522 = vadd.f32 %v5321, %v5521
      %v5523 = vpop.f32.mrb[0].mxu0
      %v5524 = vadd.f32 %v5322, %v5523
      %v5525 = vpop.f32.mrb[0].mxu0
      %v5526 = vadd.f32 %v5323, %v5525
      %v5527 = vpop.f32.mrb[0].mxu0
      %v5528 = vadd.f32 %v5324, %v5527
      %5529 = vmatprep.mubr.bf16.mxu0 0
      %5530 = vmatmul.mubr.bf16.gmra.mrb[0].mxu0 %v5430
      %v5531 = vpop.f32.mrb[0].mxu0
      %v5532 = vadd.f32 %v5325, %v5531
      %v5533 = vpop.f32.mrb[0].mxu0
      %v5534 = vadd.f32 %v5326, %v5533
      %v5535 = vpop.f32.mrb[0].mxu0
      %v5536 = vadd.f32 %v5327, %v5535
      %v5537 = vpop.f32.mrb[0].mxu0
      %v5538 = vadd.f32 %v5328, %v5537
      %5539 = vmatprep.mubr.bf16.mxu0 0
      %5540 = vmatmul.mubr.bf16.gmra.mrb[0].mxu0 %v5433
      %v5541 = vpop.f32.mrb[0].mxu0
      %v5542 = vadd.f32 %v5329, %v5541
      %v5543 = vpop.f32.mrb[0].mxu0
      %v5544 = vadd.f32 %v5330, %v5543
      %v5545 = vpop.f32.mrb[0].mxu0
      %v5546 = vadd.f32 %v5331, %v5545
      %v5547 = vpop.f32.mrb[0].mxu0
      %v5548 = vadd.f32 %v5332, %v5547
      %5549 = vmatprep.mubr.bf16.mxu0 0
      %5550 = vmatmul.mubr.bf16.gmra.mrb[0].mxu0 %v5436
      %v5551 = vpop.f32.mrb[0].mxu0
      %v5552 = vadd.f32 %v5333, %v5551
      %v5553 = vpop.f32.mrb[0].mxu0
      %v5554 = vadd.f32 %v5334, %v5553
      %v5555 = vpop.f32.mrb[0].mxu0
      %v5556 = vadd.f32 %v5335, %v5555
      %v5557 = vpop.f32.mrb[0].mxu0
      %v5558 = vadd.f32 %v5336, %v5557
      %5559 = vmatprep.mubr.bf16.mxu0 0
      %5560 = vmatmul.mubr.bf16.gmra.mrb[0].mxu0 %v5439
      %v5561 = vpop.f32.mrb[0].mxu0
      %v5562 = vadd.f32 %v5337, %v5561
      %v5563 = vpop.f32.mrb[0].mxu0
      %v5564 = vadd.f32 %v5338, %v5563
      %v5565 = vpop.f32.mrb[0].mxu0
      %v5566 = vadd.f32 %v5339, %v5565
      %v5567 = vpop.f32.mrb[0].mxu0
      %v5568 = vadd.f32 %v5340, %v5567
      %5569 = vmatprep.mubr.bf16.mxu0 0
      %5570 = vmatmul.mubr.bf16.gmra.mrb[0].mxu0 %v5442
      %v5571 = vpop.f32.mrb[0].mxu0
      %v5572 = vadd.f32 %v5341, %v5571
      %v5573 = vpop.f32.mrb[0].mxu0
      %v5574 = vadd.f32 %v5342, %v5573
      %v5575 = vpop.f32.mrb[0].mxu0
      %v5576 = vadd.f32 %v5343, %v5575
      %v5577 = vpop.f32.mrb[0].mxu0
      %v5578 = vadd.f32 %v5344, %v5577
      %5579 = vmatprep.mubr.bf16.mxu0 0
      %5580 = vmatmul.mubr.bf16.gmra.mrb[0].mxu0 %v5445
      %v5581 = vpop.f32.mrb[0].mxu0
      %v5582 = vadd.f32 %v5345, %v5581
      %v5583 = vpop.f32.mrb[0].mxu0
      %v5584 = vadd.f32 %v5346, %v5583
      %v5585 = vpop.f32.mrb[0].mxu0
      %v5586 = vadd.f32 %v5347, %v5585
      %v5587 = vpop.f32.mrb[0].mxu0
      %v5588 = vadd.f32 %v5348, %v5587
      %5589 = vmatprep.mubr.bf16.mxu0 0
      %5590 = vmatmul.mubr.bf16.gmra.mrb[0].mxu0 %v5448
      %v5591 = vpop.f32.mrb[0].mxu0
      %v5592 = vadd.f32 %v5349, %v5591
      %v5593 = vpop.f32.mrb[0].mxu0
      %v5594 = vadd.f32 %v5350, %v5593
      %v5595 = vpop.f32.mrb[0].mxu0
      %v5596 = vadd.f32 %v5351, %v5595
      %v5597 = vpop.f32.mrb[0].mxu0
      %v5598 = vadd.f32 %v5352, %v5597
      %5599 = vmatprep.mubr.bf16.mxu0 0
      %5600 = vmatmul.mubr.bf16.gmra.mrb[0].mxu0 %v5451
      %v5601 = vpop.f32.mrb[0].mxu0
      %v5602 = vadd.f32 %v5353, %v5601
      %v5603 = vpop.f32.mrb[0].mxu0
      %v5604 = vadd.f32 %v5354, %v5603
      %v5605 = vpop.f32.mrb[0].mxu0
      %v5606 = vadd.f32 %v5355, %v5605
      %v5607 = vpop.f32.mrb[0].mxu0
      %v5608 = vadd.f32 %v5356, %v5607
      %5609 = vmatprep.mubr.bf16.mxu0 0
      %5610 = vmatmul.mubr.bf16.gmra.mrb[0].mxu0 %v5454
      %v5611 = vpop.f32.mrb[0].mxu0
      %v5612 = vadd.f32 %v5357, %v5611
      %v5613 = vpop.f32.mrb[0].mxu0
      %v5614 = vadd.f32 %v5358, %v5613
      %v5615 = vpop.f32.mrb[0].mxu0
      %v5616 = vadd.f32 %v5359, %v5615
      %v5617 = vpop.f32.mrb[0].mxu0
      %v5618 = vadd.f32 %v5360, %v5617
      %5619 = vmatprep.mubr.bf16.mxu0 0
      %5620 = vmatmul.mubr.bf16.gmra.mrb[0].mxu0 %v5457
      %v5621 = vpop.f32.mrb[0].mxu0
      %v5622 = vadd.f32 %v5361, %v5621
      %v5623 = vpop.f32.mrb[0].mxu0
      %v5624 = vadd.f32 %v5362, %v5623
      %v5625 = vpop.f32.mrb[0].mxu0
      %v5626 = vadd.f32 %v5363, %v5625
      %v5627 = vpop.f32.mrb[0].mxu0
      %v5628 = vadd.f32 %v5364, %v5627
      %5629 = vmatprep.mubr.bf16.mxu0 0
      %5630 = vmatmul.mubr.bf16.gmra.mrb[0].mxu0 %v5460
      %v5631 = vpop.f32.mrb[0].mxu0
      %v5632 = vadd.f32 %v5365, %v5631
      %v5633 = vpop.f32.mrb[0].mxu0
      %v5634 = vadd.f32 %v5366, %v5633
      %v5635 = vpop.f32.mrb[0].mxu0
      %v5636 = vadd.f32 %v5367, %v5635
      %v5637 = vpop.f32.mrb[0].mxu0
      %v5638 = vadd.f32 %v5368, %v5637
      %5639 = vmatprep.mubr.bf16.mxu0 0
      %5640 = vmatmul.mubr.bf16.gmra.mrb[0].mxu0 %v5463
      %v5641 = vpop.f32.mrb[0].mxu0
      %v5642 = vadd.f32 %v5369, %v5641
      %v5643 = vpop.f32.mrb[0].mxu0
      %v5644 = vadd.f32 %v5370, %v5643
      %v5645 = vpop.f32.mrb[0].mxu0
      %v5646 = vadd.f32 %v5371, %v5645
      %v5647 = vpop.f32.mrb[0].mxu0
      %v5648 = vadd.f32 %v5372, %v5647
      %5649 = vmatprep.mubr.bf16.mxu0 0
      %5650 = vmatmul.mubr.bf16.gmra.mrb[0].mxu0 %v5466
      %v5651 = vpop.f32.mrb[0].mxu0
      %v5652 = vadd.f32 %v5373, %v5651
      %v5653 = vpop.f32.mrb[0].mxu0
      %v5654 = vadd.f32 %v5374, %v5653
      %v5655 = vpop.f32.mrb[0].mxu0
      %v5656 = vadd.f32 %v5375, %v5655
      %v5657 = vpop.f32.mrb[0].mxu0
      %v5658 = vadd.f32 %v5376, %v5657
      %5659 = vmatprep.mubr.bf16.mxu0 0
      %5660 = vmatmul.mubr.bf16.gmra.mrb[0].mxu0 %v5469
      %v5661 = vpop.f32.mrb[0].mxu0
      %v5662 = vadd.f32 %v5377, %v5661
      %v5663 = vpop.f32.mrb[0].mxu0
      %v5664 = vadd.f32 %v5378, %v5663
      %v5665 = vpop.f32.mrb[0].mxu0
      %v5666 = vadd.f32 %v5379, %v5665
      %v5667 = vpop.f32.mrb[0].mxu0
      %v5668 = vadd.f32 %v5380, %v5667
      %5669 = vdwg.mxu0
      %v5670 = vmax.f32 %v5512, %v5514
      %5671 = vmax.xlane.f32.xlu0 %v5670
      %v5672 = vpop.xlane.xlu0 %5671
      %v5673 = vmax.f32 %v5516, %v5518
      %5674 = vmax.xlane.f32.xlu0 %v5673
      %v5675 = vpop.xlane.xlu0 %5674
      %v5676 = vmax.f32 %v5522, %v5524
      %5677 = vmax.xlane.f32.xlu0 %v5676
      %v5678 = vpop.xlane.xlu0 %5677
      %v5679 = vmax.f32 %v5526, %v5528
      %5680 = vmax.xlane.f32.xlu0 %v5679
      %v5681 = vpop.xlane.xlu0 %5680
      %v5682 = vmax.f32 %v5532, %v5534
      %5683 = vmax.xlane.f32.xlu0 %v5682
      %v5684 = vpop.xlane.xlu0 %5683
      %v5685 = vmax.f32 %v5536, %v5538
      %5686 = vmax.xlane.f32.xlu0 %v5685
      %v5687 = vpop.xlane.xlu0 %5686
      %v5688 = vmax.f32 %v5542, %v5544
      %5689 = vmax.xlane.f32.xlu0 %v5688
      %v5690 = vpop.xlane.xlu0 %5689
      %v5691 = vmax.f32 %v5546, %v5548
      %5692 = vmax.xlane.f32.xlu0 %v5691
      %v5693 = vpop.xlane.xlu0 %5692
      %v5694 = vmax.f32 %v5552, %v5554
      %5695 = vmax.xlane.f32.xlu0 %v5694
      %v5696 = vpop.xlane.xlu0 %5695
      %v5697 = vmax.f32 %v5556, %v5558
      %5698 = vmax.xlane.f32.xlu0 %v5697
      %v5699 = vpop.xlane.xlu0 %5698
      %v5700 = vmax.f32 %v5562, %v5564
      %5701 = vmax.xlane.f32.xlu0 %v5700
      %v5702 = vpop.xlane.xlu0 %5701
      %v5703 = vmax.f32 %v5566, %v5568
      %5704 = vmax.xlane.f32.xlu0 %v5703
      %v5705 = vpop.xlane.xlu0 %5704
      %v5706 = vmax.f32 %v5572, %v5574
      %5707 = vmax.xlane.f32.xlu0 %v5706
      %v5708 = vpop.xlane.xlu0 %5707
      %v5709 = vmax.f32 %v5576, %v5578
      %5710 = vmax.xlane.f32.xlu0 %v5709
      %v5711 = vpop.xlane.xlu0 %5710
      %v5712 = vmax.f32 %v5582, %v5584
      %5713 = vmax.xlane.f32.xlu0 %v5712
      %v5714 = vpop.xlane.xlu0 %5713
      %v5715 = vmax.f32 %v5586, %v5588
      %5716 = vmax.xlane.f32.xlu0 %v5715
      %v5717 = vpop.xlane.xlu0 %5716
      %v5718 = vmax.f32 %v5592, %v5594
      %5719 = vmax.xlane.f32.xlu0 %v5718
      %v5720 = vpop.xlane.xlu0 %5719
      %v5721 = vmax.f32 %v5596, %v5598
      %5722 = vmax.xlane.f32.xlu0 %v5721
      %v5723 = vpop.xlane.xlu0 %5722
      %v5724 = vmax.f32 %v5602, %v5604
      %5725 = vmax.xlane.f32.xlu0 %v5724
      %v5726 = vpop.xlane.xlu0 %5725
      %v5727 = vmax.f32 %v5606, %v5608
      %5728 = vmax.xlane.f32.xlu0 %v5727
      %v5729 = vpop.xlane.xlu0 %5728
      %v5730 = vmax.f32 %v5612, %v5614
      %5731 = vmax.xlane.f32.xlu0 %v5730
      %v5732 = vpop.xlane.xlu0 %5731
      %v5733 = vmax.f32 %v5616, %v5618
      %5734 = vmax.xlane.f32.xlu0 %v5733
      %v5735 = vpop.xlane.xlu0 %5734
      %v5736 = vmax.f32 %v5622, %v5624
      %5737 = vmax.xlane.f32.xlu0 %v5736
      %v5738 = vpop.xlane.xlu0 %5737
      %v5739 = vmax.f32 %v5626, %v5628
      %5740 = vmax.xlane.f32.xlu0 %v5739
      %v5741 = vpop.xlane.xlu0 %5740
      %v5742 = vmax.f32 %v5632, %v5634
      %5743 = vmax.xlane.f32.xlu0 %v5742
      %v5744 = vpop.xlane.xlu0 %5743
      %v5745 = vmax.f32 %v5636, %v5638
      %5746 = vmax.xlane.f32.xlu0 %v5745
      %v5747 = vpop.xlane.xlu0 %5746
      %v5748 = vmax.f32 %v5642, %v5644
      %5749 = vmax.xlane.f32.xlu0 %v5748
      %v5750 = vpop.xlane.xlu0 %5749
      %v5751 = vmax.f32 %v5646, %v5648
      %5752 = vmax.xlane.f32.xlu0 %v5751
      %v5753 = vpop.xlane.xlu0 %5752
      %v5754 = vmax.f32 %v5652, %v5654
      %5755 = vmax.xlane.f32.xlu0 %v5754
      %v5756 = vpop.xlane.xlu0 %5755
      %v5757 = vmax.f32 %v5656, %v5658
      %5758 = vmax.xlane.f32.xlu0 %v5757
      %v5759 = vpop.xlane.xlu0 %5758
      %v5760 = vmax.f32 %v5662, %v5664
      %5761 = vmax.xlane.f32.xlu0 %v5760
      %v5762 = vpop.xlane.xlu0 %5761
      %v5763 = vmax.f32 %v5666, %v5668
      %5764 = vmax.xlane.f32.xlu0 %v5763
      %v5765 = vpop.xlane.xlu0 %5764
      %v5766 = vsub.f32 %v5512, %v5672
      %v5767 = vsub.f32 %v5514, %v5672
      %v5768 = vsub.f32 %v5516, %v5675
      %v5769 = vsub.f32 %v5518, %v5675
      %v5770 = vsub.f32 %v5522, %v5678
      %v5771 = vsub.f32 %v5524, %v5678
      %v5772 = vsub.f32 %v5526, %v5681
      %v5773 = vsub.f32 %v5528, %v5681
      %v5774 = vsub.f32 %v5532, %v5684
      %v5775 = vsub.f32 %v5534, %v5684
      %v5776 = vsub.f32 %v5536, %v5687
      %v5777 = vsub.f32 %v5538, %v5687
      %v5778 = vsub.f32 %v5542, %v5690
      %v5779 = vsub.f32 %v5544, %v5690
      %v5780 = vsub.f32 %v5546, %v5693
      %v5781 = vsub.f32 %v5548, %v5693
      %v5782 = vsub.f32 %v5552, %v5696
      %v5783 = vsub.f32 %v5554, %v5696
      %v5784 = vsub.f32 %v5556, %v5699
      %v5785 = vsub.f32 %v5558, %v5699
      %v5786 = vsub.f32 %v5562, %v5702
      %v5787 = vsub.f32 %v5564, %v5702
      %v5788 = vsub.f32 %v5566, %v5705
      %v5789 = vsub.f32 %v5568, %v5705
      %v5790 = vsub.f32 %v5572, %v5708
      %v5791 = vsub.f32 %v5574, %v5708
      %v5792 = vsub.f32 %v5576, %v5711
      %v5793 = vsub.f32 %v5578, %v5711
      %v5794 = vsub.f32 %v5582, %v5714
      %v5795 = vsub.f32 %v5584, %v5714
      %v5796 = vsub.f32 %v5586, %v5717
      %v5797 = vsub.f32 %v5588, %v5717
      %v5798 = vsub.f32 %v5592, %v5720
      %v5799 = vsub.f32 %v5594, %v5720
      %v5800 = vsub.f32 %v5596, %v5723
      %v5801 = vsub.f32 %v5598, %v5723
      %v5802 = vsub.f32 %v5602, %v5726
      %v5803 = vsub.f32 %v5604, %v5726
      %v5804 = vsub.f32 %v5606, %v5729
      %v5805 = vsub.f32 %v5608, %v5729
      %v5806 = vsub.f32 %v5612, %v5732
      %v5807 = vsub.f32 %v5614, %v5732
      %v5808 = vsub.f32 %v5616, %v5735
      %v5809 = vsub.f32 %v5618, %v5735
      %v5810 = vsub.f32 %v5622, %v5738
      %v5811 = vsub.f32 %v5624, %v5738
      %v5812 = vsub.f32 %v5626, %v5741
      %v5813 = vsub.f32 %v5628, %v5741
      %v5814 = vsub.f32 %v5632, %v5744
      %v5815 = vsub.f32 %v5634, %v5744
      %v5816 = vsub.f32 %v5636, %v5747
      %v5817 = vsub.f32 %v5638, %v5747
      %v5818 = vsub.f32 %v5642, %v5750
      %v5819 = vsub.f32 %v5644, %v5750
      %v5820 = vsub.f32 %v5646, %v5753
      %v5821 = vsub.f32 %v5648, %v5753
      %v5822 = vsub.f32 %v5652, %v5756
      %v5823 = vsub.f32 %v5654, %v5756
      %v5824 = vsub.f32 %v5656, %v5759
      %v5825 = vsub.f32 %v5658, %v5759
      %v5826 = vsub.f32 %v5662, %v5762
      %v5827 = vsub.f32 %v5664, %v5762
      %v5828 = vsub.f32 %v5666, %v5765
      %v5829 = vsub.f32 %v5668, %v5765
      %v5830 = vmul.f32 %v5766, 1.442695
      %v5831 = vpow.pop %v5830
      %v5832 = vmul.f32 %v5767, 1.442695
      %v5833 = vpow.pop %v5832
      %v5834 = vmul.f32 %v5768, 1.442695
      %v5835 = vpow.pop %v5834
      %v5836 = vmul.f32 %v5769, 1.442695
      %v5837 = vpow.pop %v5836
      %v5838 = vmul.f32 %v5770, 1.442695
      %v5839 = vpow.pop %v5838
      %v5840 = vmul.f32 %v5771, 1.442695
      %v5841 = vpow.pop %v5840
      %v5842 = vmul.f32 %v5772, 1.442695
      %v5843 = vpow.pop %v5842
      %v5844 = vmul.f32 %v5773, 1.442695
      %v5845 = vpow.pop %v5844
      %v5846 = vmul.f32 %v5774, 1.442695
      %v5847 = vpow.pop %v5846
      %v5848 = vmul.f32 %v5775, 1.442695
      %v5849 = vpow.pop %v5848
      %v5850 = vmul.f32 %v5776, 1.442695
      %v5851 = vpow.pop %v5850
      %v5852 = vmul.f32 %v5777, 1.442695
      %v5853 = vpow.pop %v5852
      %v5854 = vmul.f32 %v5778, 1.442695
      %v5855 = vpow.pop %v5854
      %v5856 = vmul.f32 %v5779, 1.442695
      %v5857 = vpow.pop %v5856
      %v5858 = vmul.f32 %v5780, 1.442695
      %v5859 = vpow.pop %v5858
      %v5860 = vmul.f32 %v5781, 1.442695
      %v5861 = vpow.pop %v5860
      %v5862 = vmul.f32 %v5782, 1.442695
      %v5863 = vpow.pop %v5862
      %v5864 = vmul.f32 %v5783, 1.442695
      %v5865 = vpow.pop %v5864
      %v5866 = vmul.f32 %v5784, 1.442695
      %v5867 = vpow.pop %v5866
      %v5868 = vmul.f32 %v5785, 1.442695
      %v5869 = vpow.pop %v5868
      %v5870 = vmul.f32 %v5786, 1.442695
      %v5871 = vpow.pop %v5870
      %v5872 = vmul.f32 %v5787, 1.442695
      %v5873 = vpow.pop %v5872
      %v5874 = vmul.f32 %v5788, 1.442695
      %v5875 = vpow.pop %v5874
      %v5876 = vmul.f32 %v5789, 1.442695
      %v5877 = vpow.pop %v5876
      %v5878 = vmul.f32 %v5790, 1.442695
      %v5879 = vpow.pop %v5878
      %v5880 = vmul.f32 %v5791, 1.442695
      %v5881 = vpow.pop %v5880
      %v5882 = vmul.f32 %v5792, 1.442695
      %v5883 = vpow.pop %v5882
      %v5884 = vmul.f32 %v5793, 1.442695
      %v5885 = vpow.pop %v5884
      %v5886 = vmul.f32 %v5794, 1.442695
      %v5887 = vpow.pop %v5886
      %v5888 = vmul.f32 %v5795, 1.442695
      %v5889 = vpow.pop %v5888
      %v5890 = vmul.f32 %v5796, 1.442695
      %v5891 = vpow.pop %v5890
      %v5892 = vmul.f32 %v5797, 1.442695
      %v5893 = vpow.pop %v5892
      %v5894 = vmul.f32 %v5798, 1.442695
      %v5895 = vpow.pop %v5894
      %v5896 = vmul.f32 %v5799, 1.442695
      %v5897 = vpow.pop %v5896
      %v5898 = vmul.f32 %v5800, 1.442695
      %v5899 = vpow.pop %v5898
      %v5900 = vmul.f32 %v5801, 1.442695
      %v5901 = vpow.pop %v5900
      %v5902 = vmul.f32 %v5802, 1.442695
      %v5903 = vpow.pop %v5902
      %v5904 = vmul.f32 %v5803, 1.442695
      %v5905 = vpow.pop %v5904
      %v5906 = vmul.f32 %v5804, 1.442695
      %v5907 = vpow.pop %v5906
      %v5908 = vmul.f32 %v5805, 1.442695
      %v5909 = vpow.pop %v5908
      %v5910 = vmul.f32 %v5806, 1.442695
      %v5911 = vpow.pop %v5910
      %v5912 = vmul.f32 %v5807, 1.442695
      %v5913 = vpow.pop %v5912
      %v5914 = vmul.f32 %v5808, 1.442695
      %v5915 = vpow.pop %v5914
      %v5916 = vmul.f32 %v5809, 1.442695
      %v5917 = vpow.pop %v5916
      %v5918 = vmul.f32 %v5810, 1.442695
      %v5919 = vpow.pop %v5918
      %v5920 = vmul.f32 %v5811, 1.442695
      %v5921 = vpow.pop %v5920
      %v5922 = vmul.f32 %v5812, 1.442695
      %v5923 = vpow.pop %v5922
      %v5924 = vmul.f32 %v5813, 1.442695
      %v5925 = vpow.pop %v5924
      %v5926 = vmul.f32 %v5814, 1.442695
      %v5927 = vpow.pop %v5926
      %v5928 = vmul.f32 %v5815, 1.442695
      %v5929 = vpow.pop %v5928
      %v5930 = vmul.f32 %v5816, 1.442695
      %v5931 = vpow.pop %v5930
      %v5932 = vmul.f32 %v5817, 1.442695
      %v5933 = vpow.pop %v5932
      %v5934 = vmul.f32 %v5818, 1.442695
      %v5935 = vpow.pop %v5934
      %v5936 = vmul.f32 %v5819, 1.442695
      %v5937 = vpow.pop %v5936
      %v5938 = vmul.f32 %v5820, 1.442695
      %v5939 = vpow.pop %v5938
      %v5940 = vmul.f32 %v5821, 1.442695
      %v5941 = vpow.pop %v5940
      %v5942 = vmul.f32 %v5822, 1.442695
      %v5943 = vpow.pop %v5942
      %v5944 = vmul.f32 %v5823, 1.442695
      %v5945 = vpow.pop %v5944
      %v5946 = vmul.f32 %v5824, 1.442695
      %v5947 = vpow.pop %v5946
      %v5948 = vmul.f32 %v5825, 1.442695
      %v5949 = vpow.pop %v5948
      %v5950 = vmul.f32 %v5826, 1.442695
      %v5951 = vpow.pop %v5950
      %v5952 = vmul.f32 %v5827, 1.442695
      %v5953 = vpow.pop %v5952
      %v5954 = vmul.f32 %v5828, 1.442695
      %v5955 = vpow.pop %v5954
      %v5956 = vmul.f32 %v5829, 1.442695
      %v5957 = vpow.pop %v5956
      %v5958 = vadd.f32 %v5831, %v5833
      %5959 = vadd.xlane.f32.xlu0 %v5958
      %v5960 = vpop.xlane.xlu0 %5959
      %v5961 = vadd.f32 %v5835, %v5837
      %5962 = vadd.xlane.f32.xlu0 %v5961
      %v5963 = vpop.xlane.xlu0 %5962
      %v5964 = vadd.f32 %v5839, %v5841
      %5965 = vadd.xlane.f32.xlu0 %v5964
      %v5966 = vpop.xlane.xlu0 %5965
      %v5967 = vadd.f32 %v5843, %v5845
      %5968 = vadd.xlane.f32.xlu0 %v5967
      %v5969 = vpop.xlane.xlu0 %5968
      %v5970 = vadd.f32 %v5847, %v5849
      %5971 = vadd.xlane.f32.xlu0 %v5970
      %v5972 = vpop.xlane.xlu0 %5971
      %v5973 = vadd.f32 %v5851, %v5853
      %5974 = vadd.xlane.f32.xlu0 %v5973
      %v5975 = vpop.xlane.xlu0 %5974
      %v5976 = vadd.f32 %v5855, %v5857
      %5977 = vadd.xlane.f32.xlu0 %v5976
      %v5978 = vpop.xlane.xlu0 %5977
      %v5979 = vadd.f32 %v5859, %v5861
      %5980 = vadd.xlane.f32.xlu0 %v5979
      %v5981 = vpop.xlane.xlu0 %5980
      %v5982 = vadd.f32 %v5863, %v5865
      %5983 = vadd.xlane.f32.xlu0 %v5982
      %v5984 = vpop.xlane.xlu0 %5983
      %v5985 = vadd.f32 %v5867, %v5869
      %5986 = vadd.xlane.f32.xlu0 %v5985
      %v5987 = vpop.xlane.xlu0 %5986
      %v5988 = vadd.f32 %v5871, %v5873
      %5989 = vadd.xlane.f32.xlu0 %v5988
      %v5990 = vpop.xlane.xlu0 %5989
      %v5991 = vadd.f32 %v5875, %v5877
      %5992 = vadd.xlane.f32.xlu0 %v5991
      %v5993 = vpop.xlane.xlu0 %5992
      %v5994 = vadd.f32 %v5879, %v5881
      %5995 = vadd.xlane.f32.xlu0 %v5994
      %v5996 = vpop.xlane.xlu0 %5995
      %v5997 = vadd.f32 %v5883, %v5885
      %5998 = vadd.xlane.f32.xlu0 %v5997
      %v5999 = vpop.xlane.xlu0 %5998
      %v6000 = vadd.f32 %v5887, %v5889
      %6001 = vadd.xlane.f32.xlu0 %v6000
      %v6002 = vpop.xlane.xlu0 %6001
      %v6003 = vadd.f32 %v5891, %v5893
      %6004 = vadd.xlane.f32.xlu0 %v6003
      %v6005 = vpop.xlane.xlu0 %6004
      %v6006 = vadd.f32 %v5895, %v5897
      %6007 = vadd.xlane.f32.xlu0 %v6006
      %v6008 = vpop.xlane.xlu0 %6007
      %v6009 = vadd.f32 %v5899, %v5901
      %6010 = vadd.xlane.f32.xlu0 %v6009
      %v6011 = vpop.xlane.xlu0 %6010
      %v6012 = vadd.f32 %v5903, %v5905
      %6013 = vadd.xlane.f32.xlu0 %v6012
      %v6014 = vpop.xlane.xlu0 %6013
      %v6015 = vadd.f32 %v5907, %v5909
      %6016 = vadd.xlane.f32.xlu0 %v6015
      %v6017 = vpop.xlane.xlu0 %6016
      %v6018 = vadd.f32 %v5911, %v5913
      %6019 = vadd.xlane.f32.xlu0 %v6018
      %v6020 = vpop.xlane.xlu0 %6019
      %v6021 = vadd.f32 %v5915, %v5917
      %6022 = vadd.xlane.f32.xlu0 %v6021
      %v6023 = vpop.xlane.xlu0 %6022
      %v6024 = vadd.f32 %v5919, %v5921
      %6025 = vadd.xlane.f32.xlu0 %v6024
      %v6026 = vpop.xlane.xlu0 %6025
      %v6027 = vadd.f32 %v5923, %v5925
      %6028 = vadd.xlane.f32.xlu0 %v6027
      %v6029 = vpop.xlane.xlu0 %6028
      %v6030 = vadd.f32 %v5927, %v5929
      %6031 = vadd.xlane.f32.xlu0 %v6030
      %v6032 = vpop.xlane.xlu0 %6031
      %v6033 = vadd.f32 %v5931, %v5933
      %6034 = vadd.xlane.f32.xlu0 %v6033
      %v6035 = vpop.xlane.xlu0 %6034
      %v6036 = vadd.f32 %v5935, %v5937
      %6037 = vadd.xlane.f32.xlu0 %v6036
      %v6038 = vpop.xlane.xlu0 %6037
      %v6039 = vadd.f32 %v5939, %v5941
      %6040 = vadd.xlane.f32.xlu0 %v6039
      %v6041 = vpop.xlane.xlu0 %6040
      %v6042 = vadd.f32 %v5943, %v5945
      %6043 = vadd.xlane.f32.xlu0 %v6042
      %v6044 = vpop.xlane.xlu0 %6043
      %v6045 = vadd.f32 %v5947, %v5949
      %6046 = vadd.xlane.f32.xlu0 %v6045
      %v6047 = vpop.xlane.xlu0 %6046
      %v6048 = vadd.f32 %v5951, %v5953
      %6049 = vadd.xlane.f32.xlu0 %v6048
      %v6050 = vpop.xlane.xlu0 %6049
      %v6051 = vadd.f32 %v5955, %v5957
      %6052 = vadd.xlane.f32.xlu0 %v6051
      %v6053 = vpop.xlane.xlu0 %6052
      %v6054 = vrcp.pop %v5960
      %v6055 = vrcp.pop %v5963
      %v6056 = vrcp.pop %v5966
      %v6057 = vrcp.pop %v5969
      %v6058 = vrcp.pop %v5972
      %v6059 = vrcp.pop %v5975
      %v6060 = vrcp.pop %v5978
      %v6061 = vrcp.pop %v5981
      %v6062 = vrcp.pop %v5984
      %v6063 = vrcp.pop %v5987
      %v6064 = vrcp.pop %v5990
      %v6065 = vrcp.pop %v5993
      %v6066 = vrcp.pop %v5996
      %v6067 = vrcp.pop %v5999
      %v6068 = vrcp.pop %v6002
      %v6069 = vrcp.pop %v6005
      %v6070 = vrcp.pop %v6008
      %v6071 = vrcp.pop %v6011
      %v6072 = vrcp.pop %v6014
      %v6073 = vrcp.pop %v6017
      %v6074 = vrcp.pop %v6020
      %v6075 = vrcp.pop %v6023
      %v6076 = vrcp.pop %v6026
      %v6077 = vrcp.pop %v6029
      %v6078 = vrcp.pop %v6032
      %v6079 = vrcp.pop %v6035
      %v6080 = vrcp.pop %v6038
      %v6081 = vrcp.pop %v6041
      %v6082 = vrcp.pop %v6044
      %v6083 = vrcp.pop %v6047
      %v6084 = vrcp.pop %v6050
      %v6085 = vrcp.pop %v6053
      %v6086 = vmul.f32 %v5831, %v6054
      %v6087 = vmul.f32 %v5833, %v6054
      %v6088 = vmul.f32 %v5835, %v6055
      %v6089 = vmul.f32 %v5837, %v6055
      %v6090 = vmul.f32 %v5839, %v6056
      %v6091 = vmul.f32 %v5841, %v6056
      %v6092 = vmul.f32 %v5843, %v6057
      %v6093 = vmul.f32 %v5845, %v6057
      %v6094 = vmul.f32 %v5847, %v6058
      %v6095 = vmul.f32 %v5849, %v6058
      %v6096 = vmul.f32 %v5851, %v6059
      %v6097 = vmul.f32 %v5853, %v6059
      %v6098 = vmul.f32 %v5855, %v6060
      %v6099 = vmul.f32 %v5857, %v6060
      %v6100 = vmul.f32 %v5859, %v6061
      %v6101 = vmul.f32 %v5861, %v6061
      %v6102 = vmul.f32 %v5863, %v6062
      %v6103 = vmul.f32 %v5865, %v6062
      %v6104 = vmul.f32 %v5867, %v6063
      %v6105 = vmul.f32 %v5869, %v6063
      %v6106 = vmul.f32 %v5871, %v6064
      %v6107 = vmul.f32 %v5873, %v6064
      %v6108 = vmul.f32 %v5875, %v6065
      %v6109 = vmul.f32 %v5877, %v6065
      %v6110 = vmul.f32 %v5879, %v6066
      %v6111 = vmul.f32 %v5881, %v6066
      %v6112 = vmul.f32 %v5883, %v6067
      %v6113 = vmul.f32 %v5885, %v6067
      %v6114 = vmul.f32 %v5887, %v6068
      %v6115 = vmul.f32 %v5889, %v6068
      %v6116 = vmul.f32 %v5891, %v6069
      %v6117 = vmul.f32 %v5893, %v6069
      %v6118 = vmul.f32 %v5895, %v6070
      %v6119 = vmul.f32 %v5897, %v6070
      %v6120 = vmul.f32 %v5899, %v6071
      %v6121 = vmul.f32 %v5901, %v6071
      %v6122 = vmul.f32 %v5903, %v6072
      %v6123 = vmul.f32 %v5905, %v6072
      %v6124 = vmul.f32 %v5907, %v6073
      %v6125 = vmul.f32 %v5909, %v6073
      %v6126 = vmul.f32 %v5911, %v6074
      %v6127 = vmul.f32 %v5913, %v6074
      %v6128 = vmul.f32 %v5915, %v6075
      %v6129 = vmul.f32 %v5917, %v6075
      %v6130 = vmul.f32 %v5919, %v6076
      %v6131 = vmul.f32 %v5921, %v6076
      %v6132 = vmul.f32 %v5923, %v6077
      %v6133 = vmul.f32 %v5925, %v6077
      %v6134 = vmul.f32 %v5927, %v6078
      %v6135 = vmul.f32 %v5929, %v6078
      %v6136 = vmul.f32 %v5931, %v6079
      %v6137 = vmul.f32 %v5933, %v6079
      %v6138 = vmul.f32 %v5935, %v6080
      %v6139 = vmul.f32 %v5937, %v6080
      %v6140 = vmul.f32 %v5939, %v6081
      %v6141 = vmul.f32 %v5941, %v6081
      %v6142 = vmul.f32 %v5943, %v6082
      %v6143 = vmul.f32 %v5945, %v6082
      %v6144 = vmul.f32 %v5947, %v6083
      %v6145 = vmul.f32 %v5949, %v6083
      %v6146 = vmul.f32 %v5951, %v6084
      %v6147 = vmul.f32 %v5953, %v6084
      %v6148 = vmul.f32 %v5955, %v6085
      %v6149 = vmul.f32 %v5957, %v6085
      %v6150 = vpack.c.bf16 %v6088, %v6086
      %v6151 = vpack.c.bf16 %v6089, %v6087
      %v6152 = vpack.c.bf16 %v6092, %v6090
      %v6153 = vpack.c.bf16 %v6093, %v6091
      %v6154 = vpack.c.bf16 %v6096, %v6094
      %v6155 = vpack.c.bf16 %v6097, %v6095
      %v6156 = vpack.c.bf16 %v6100, %v6098
      %v6157 = vpack.c.bf16 %v6101, %v6099
      %v6158 = vpack.c.bf16 %v6104, %v6102
      %v6159 = vpack.c.bf16 %v6105, %v6103
      %v6160 = vpack.c.bf16 %v6108, %v6106
      %v6161 = vpack.c.bf16 %v6109, %v6107
      %v6162 = vpack.c.bf16 %v6112, %v6110
      %v6163 = vpack.c.bf16 %v6113, %v6111
      %v6164 = vpack.c.bf16 %v6116, %v6114
      %v6165 = vpack.c.bf16 %v6117, %v6115
      %v6166 = vpack.c.bf16 %v6120, %v6118
      %v6167 = vpack.c.bf16 %v6121, %v6119
      %v6168 = vpack.c.bf16 %v6124, %v6122
      %v6169 = vpack.c.bf16 %v6125, %v6123
      %v6170 = vpack.c.bf16 %v6128, %v6126
      %v6171 = vpack.c.bf16 %v6129, %v6127
      %v6172 = vpack.c.bf16 %v6132, %v6130
      %v6173 = vpack.c.bf16 %v6133, %v6131
      %v6174 = vpack.c.bf16 %v6136, %v6134
      %v6175 = vpack.c.bf16 %v6137, %v6135
      %v6176 = vpack.c.bf16 %v6140, %v6138
      %v6177 = vpack.c.bf16 %v6141, %v6139
      %v6178 = vpack.c.bf16 %v6144, %v6142
      %v6179 = vpack.c.bf16 %v6145, %v6143
      %v6180 = vpack.c.bf16 %v6148, %v6146
      %v6181 = vpack.c.bf16 %v6149, %v6147
      %v6184 = vrot.slane %v4418, 1
      %v6185 = vrot.slane %v4419, 1
      %6188 = vmatprep.subr.bf16.mxu0 %v6151
      %6189 = vmatpush1.bf16.xpose.msra.mxu0 %v6150
      %6190 = vmatprep.subr.bf16.mxu0 %v6153
      %6191 = vmatpush1.bf16.xpose.msra.mxu0 %v6152
      %6192 = vmatprep.subr.bf16.mxu0 %v6155
      %6193 = vmatpush1.bf16.xpose.msra.mxu0 %v6154
      %6194 = vmatprep.subr.bf16.mxu0 %v6157
      %6195 = vmatpush1.bf16.xpose.msra.mxu0 %v6156
      %6196 = vmatprep.subr.bf16.mxu0 %v6159
      %6197 = vmatpush1.bf16.xpose.msra.mxu0 %v6158
      %6198 = vmatprep.subr.bf16.mxu0 %v6161
      %6199 = vmatpush1.bf16.xpose.msra.mxu0 %v6160
      %6200 = vmatprep.subr.bf16.mxu0 %v6163
      %6201 = vmatpush1.bf16.xpose.msra.mxu0 %v6162
      %6202 = vmatprep.subr.bf16.mxu0 %v6165
      %6203 = vmatpush1.bf16.xpose.msra.mxu0 %v6164
      %6204 = vmatprep.subr.bf16.mxu0 %v6167
      %6205 = vmatpush1.bf16.xpose.msra.mxu0 %v6166
      %6206 = vmatprep.subr.bf16.mxu0 %v6169
      %6207 = vmatpush1.bf16.xpose.msra.mxu0 %v6168
      %6208 = vmatprep.subr.bf16.mxu0 %v6171
      %6209 = vmatpush1.bf16.xpose.msra.mxu0 %v6170
      %6210 = vmatprep.subr.bf16.mxu0 %v6173
      %6211 = vmatpush1.bf16.xpose.msra.mxu0 %v6172
      %6212 = vmatprep.subr.bf16.mxu0 %v6175
      %6213 = vmatpush1.bf16.xpose.msra.mxu0 %v6174
      %6214 = vmatprep.subr.bf16.mxu0 %v6177
      %6215 = vmatpush1.bf16.xpose.msra.mxu0 %v6176
      %6216 = vmatprep.subr.bf16.mxu0 %v6179
      %6217 = vmatpush1.bf16.xpose.msra.mxu0 %v6178
      %6218 = vmatprep.subr.bf16.mxu0 %v6181
      %6219 = vmatpush1.bf16.xpose.msra.mxu0 %v6180
      %6220 = vmatprep.mubr.bf16.mxu0 %v6185
      %6221 = vmatmul.mubr.bf16.gmra.mrb[0].mxu0 %v6184
      %v6222 = vpop.f32.mrb[0].mxu0
      %v6223 = vadd.f32 0.0, %v6222
      %v6224 = vpop.f32.mrb[0].mxu0
      %v6225 = vadd.f32 0.0, %v6224
      %v6226 = vpop.f32.mrb[0].mxu0
      %v6227 = vpop.f32.mrb[0].mxu0
      %6228 = vdwg.mxu0
      %s6229 = scalar_lea.vmem %s8, 1024
      %v6230 = vld [vmem:[%s6229] sm:$0xff]
      %v6231 = vld [vmem:[%s6229 + $0x8] sm:$0xff]
      %v6232 = vld [vmem:[%s6229 + $0x10] sm:$0xff]
      %v6233 = vld [vmem:[%s6229 + $0x18] sm:$0xff]
      %v6234 = vld [vmem:[%s6229 + $0x20] sm:$0xff]
      %v6235 = vld [vmem:[%s6229 + $0x28] sm:$0xff]
      %v6236 = vld [vmem:[%s6229 + $0x30] sm:$0xff]
      %v6237 = vld [vmem:[%s6229 + $0x38] sm:$0xff]
      %v6238 = vld [vmem:[%s6229 + $0x40] sm:$0xff]
      %v6239 = vld [vmem:[%s6229 + $0x48] sm:$0xff]
      %v6240 = vld [vmem:[%s6229 + $0x50] sm:$0xff]
      %v6241 = vld [vmem:[%s6229 + $0x58] sm:$0xff]
      %v6242 = vld [vmem:[%s6229 + $0x60] sm:$0xff]
      %v6243 = vld [vmem:[%s6229 + $0x68] sm:$0xff]
      %v6244 = vld [vmem:[%s6229 + $0x70] sm:$0xff]
      %v6245 = vld [vmem:[%s6229 + $0x78] sm:$0xff]
      %v6246 = vld [vmem:[%s6229 + $0x80] sm:$0xff]
      %v6247 = vld [vmem:[%s6229 + $0x88] sm:$0xff]
      %v6248 = vld [vmem:[%s6229 + $0x90] sm:$0xff]
      %v6249 = vld [vmem:[%s6229 + $0x98] sm:$0xff]
      %v6250 = vld [vmem:[%s6229 + $0xa0] sm:$0xff]
      %v6251 = vld [vmem:[%s6229 + $0xa8] sm:$0xff]
      %v6252 = vld [vmem:[%s6229 + $0xb0] sm:$0xff]
      %v6253 = vld [vmem:[%s6229 + $0xb8] sm:$0xff]
      %v6254 = vld [vmem:[%s6229 + $0xc0] sm:$0xff]
      %v6255 = vld [vmem:[%s6229 + $0xc8] sm:$0xff]
      %v6256 = vld [vmem:[%s6229 + $0xd0] sm:$0xff]
      %v6257 = vld [vmem:[%s6229 + $0xd8] sm:$0xff]
      %v6258 = vld [vmem:[%s6229 + $0xe0] sm:$0xff]
      %v6259 = vld [vmem:[%s6229 + $0xe8] sm:$0xff]
      %v6260 = vld [vmem:[%s6229 + $0xf0] sm:$0xff]
      %v6261 = vld [vmem:[%s6229 + $0xf8] sm:$0xff]
      %v6262 = vld [vmem:[%s6229 + $0x100] sm:$0xff]
      %v6263 = vld [vmem:[%s6229 + $0x108] sm:$0xff]
      %v6264 = vld [vmem:[%s6229 + $0x110] sm:$0xff]
      %v6265 = vld [vmem:[%s6229 + $0x118] sm:$0xff]
      %v6266 = vld [vmem:[%s6229 + $0x120] sm:$0xff]
      %v6267 = vld [vmem:[%s6229 + $0x128] sm:$0xff]
      %v6268 = vld [vmem:[%s6229 + $0x130] sm:$0xff]
      %v6269 = vld [vmem:[%s6229 + $0x138] sm:$0xff]
      %v6270 = vld [vmem:[%s6229 + $0x140] sm:$0xff]
      %v6271 = vld [vmem:[%s6229 + $0x148] sm:$0xff]
      %v6272 = vld [vmem:[%s6229 + $0x150] sm:$0xff]
      %v6273 = vld [vmem:[%s6229 + $0x158] sm:$0xff]
      %v6274 = vld [vmem:[%s6229 + $0x160] sm:$0xff]
      %v6275 = vld [vmem:[%s6229 + $0x168] sm:$0xff]
      %v6276 = vld [vmem:[%s6229 + $0x170] sm:$0xff]
      %v6277 = vld [vmem:[%s6229 + $0x178] sm:$0xff]
      %v6278 = vld [vmem:[%s6229 + $0x180] sm:$0xff]
      %v6279 = vld [vmem:[%s6229 + $0x188] sm:$0xff]
      %v6280 = vld [vmem:[%s6229 + $0x190] sm:$0xff]
      %v6281 = vld [vmem:[%s6229 + $0x198] sm:$0xff]
      %v6282 = vld [vmem:[%s6229 + $0x1a0] sm:$0xff]
      %v6283 = vld [vmem:[%s6229 + $0x1a8] sm:$0xff]
      %v6284 = vld [vmem:[%s6229 + $0x1b0] sm:$0xff]
      %v6285 = vld [vmem:[%s6229 + $0x1b8] sm:$0xff]
      %v6286 = vld [vmem:[%s6229 + $0x1c0] sm:$0xff]
      %v6287 = vld [vmem:[%s6229 + $0x1c8] sm:$0xff]
      %v6288 = vld [vmem:[%s6229 + $0x1d0] sm:$0xff]
      %v6289 = vld [vmem:[%s6229 + $0x1d8] sm:$0xff]
      %v6290 = vld [vmem:[%s6229 + $0x1e0] sm:$0xff]
      %v6291 = vld [vmem:[%s6229 + $0x1e8] sm:$0xff]
      %v6292 = vld [vmem:[%s6229 + $0x1f0] sm:$0xff]
      %v6293 = vld [vmem:[%s6229 + $0x1f8] sm:$0xff]
      %v6294 = vrot.slane %v4414, 2
      %v6295 = vrot.slane %v4415, 2
      %6298 = vxpose.xlu0.c.b16.start [1/8] %v6294, 128
      %6299 = vxpose.xlu0.c.b16.cont [2/8] 0, 128
      %6300 = vxpose.xlu0.c.b16.cont [3/8] 0, 128
      %6301 = vxpose.xlu0.c.b16.cont [4/8] 0, 128
      %6302 = vxpose.xlu0.c.b16.cont [5/8] 0, 128
      %6303 = vxpose.xlu0.c.b16.cont [6/8] 0, 128
      %6304 = vxpose.xlu0.c.b16.cont [7/8] 0, 128
      %6305 = vxpose.xlu0.c.b16.end [8/8] 0, 128
      %v6306 = vpop.trf.xlu0
      %v6307 = vpop.trf.xlu0
      %v6308 = vpop.trf.xlu0
      %v6309 = vpop.trf.xlu0
      %v6310 = vpop.trf.xlu0
      %v6311 = vpop.trf.xlu0
      %v6312 = vpop.trf.xlu0
      %v6313 = vpop.trf.xlu0
      %6314 = vxpose.xlu0.c.b16.start [1/8] %v6295, 128
      %6315 = vxpose.xlu0.c.b16.cont [2/8] 0, 128
      %6316 = vxpose.xlu0.c.b16.cont [3/8] 0, 128
      %6317 = vxpose.xlu0.c.b16.cont [4/8] 0, 128
      %6318 = vxpose.xlu0.c.b16.cont [5/8] 0, 128
      %6319 = vxpose.xlu0.c.b16.cont [6/8] 0, 128
      %6320 = vxpose.xlu0.c.b16.cont [7/8] 0, 128
      %6321 = vxpose.xlu0.c.b16.end [8/8] 0, 128
      %v6322 = vpop.trf.xlu0
      %v6323 = vpop.trf.xlu0
      %v6324 = vpop.trf.xlu0
      %v6325 = vpop.trf.xlu0
      %v6326 = vpop.trf.xlu0
      %v6327 = vpop.trf.xlu0
      %v6328 = vpop.trf.xlu0
      %v6329 = vpop.trf.xlu0
      %v6330 = vrot.slane %v4416, 2
      %v6331 = vrot.slane %v4417, 2
      %v6333 = vsel %vm719, %v6306, 0
      %v6336 = vsel %vm719, %v6307, 0
      %v6339 = vsel %vm719, %v6308, 0
      %v6342 = vsel %vm719, %v6309, 0
      %v6345 = vsel %vm719, %v6310, 0
      %v6348 = vsel %vm719, %v6311, 0
      %v6351 = vsel %vm719, %v6312, 0
      %v6354 = vsel %vm719, %v6313, 0
      %v6357 = vsel %vm719, %v6322, 0
      %v6360 = vsel %vm719, %v6323, 0
      %v6363 = vsel %vm719, %v6324, 0
      %v6366 = vsel %vm719, %v6325, 0
      %v6369 = vsel %vm719, %v6326, 0
      %v6372 = vsel %vm719, %v6327, 0
      %v6375 = vsel %vm719, %v6328, 0
      %v6378 = vsel %vm719, %v6329, 0
      %v6381 = vsel %vm768, %v6330, 0
      %v6384 = vsel %vm768, %v6331, 0
      %6386 = vmatprep.subr.bf16.mxu0 %v6384
      %6387 = vmatpush1.bf16.msra.mxu0 %v6381
      %6388 = vmatprep.subr.bf16.mxu0 0
      %6389 = vmatpush1.bf16.msra.mxu0 0
      %6390 = vmatprep.subr.bf16.mxu0 0
      %6391 = vmatpush1.bf16.msra.mxu0 0
      %6392 = vmatprep.subr.bf16.mxu0 0
      %6393 = vmatpush1.bf16.msra.mxu0 0
      %6394 = vmatprep.subr.bf16.mxu0 0
      %6395 = vmatpush1.bf16.msra.mxu0 0
      %6396 = vmatprep.subr.bf16.mxu0 0
      %6397 = vmatpush1.bf16.msra.mxu0 0
      %6398 = vmatprep.subr.bf16.mxu0 0
      %6399 = vmatpush1.bf16.msra.mxu0 0
      %6400 = vmatprep.subr.bf16.mxu0 0
      %6401 = vmatpush1.bf16.msra.mxu0 0
      %6402 = vmatprep.subr.bf16.mxu0 0
      %6403 = vmatpush1.bf16.msra.mxu0 0
      %6404 = vmatprep.subr.bf16.mxu0 0
      %6405 = vmatpush1.bf16.msra.mxu0 0
      %6406 = vmatprep.subr.bf16.mxu0 0
      %6407 = vmatpush1.bf16.msra.mxu0 0
      %6408 = vmatprep.subr.bf16.mxu0 0
      %6409 = vmatpush1.bf16.msra.mxu0 0
      %6410 = vmatprep.subr.bf16.mxu0 0
      %6411 = vmatpush1.bf16.msra.mxu0 0
      %6412 = vmatprep.subr.bf16.mxu0 0
      %6413 = vmatpush1.bf16.msra.mxu0 0
      %6414 = vmatprep.subr.bf16.mxu0 0
      %6415 = vmatpush1.bf16.msra.mxu0 0
      %6416 = vmatprep.subr.bf16.mxu0 0
      %6417 = vmatpush1.bf16.msra.mxu0 0
      %6418 = vmatprep.mubr.bf16.mxu0 0
      %6419 = vmatmul.mubr.bf16.gmra.mrb[0].mxu0 %v6333
      %v6420 = vpop.f32.mrb[0].mxu0
      %v6421 = vadd.f32 %v6230, %v6420
      %v6422 = vpop.f32.mrb[0].mxu0
      %v6423 = vadd.f32 %v6231, %v6422
      %v6424 = vpop.f32.mrb[0].mxu0
      %v6425 = vadd.f32 %v6232, %v6424
      %v6426 = vpop.f32.mrb[0].mxu0
      %v6427 = vadd.f32 %v6233, %v6426
      %6428 = vmatprep.mubr.bf16.mxu0 0
      %6429 = vmatmul.mubr.bf16.gmra.mrb[0].mxu0 %v6336
      %v6430 = vpop.f32.mrb[0].mxu0
      %v6431 = vadd.f32 %v6234, %v6430
      %v6432 = vpop.f32.mrb[0].mxu0
      %v6433 = vadd.f32 %v6235, %v6432
      %v6434 = vpop.f32.mrb[0].mxu0
      %v6435 = vadd.f32 %v6236, %v6434
      %v6436 = vpop.f32.mrb[0].mxu0
      %v6437 = vadd.f32 %v6237, %v6436
      %6438 = vmatprep.mubr.bf16.mxu0 0
      %6439 = vmatmul.mubr.bf16.gmra.mrb[0].mxu0 %v6339
      %v6440 = vpop.f32.mrb[0].mxu0
      %v6441 = vadd.f32 %v6238, %v6440
      %v6442 = vpop.f32.mrb[0].mxu0
      %v6443 = vadd.f32 %v6239, %v6442
      %v6444 = vpop.f32.mrb[0].mxu0
      %v6445 = vadd.f32 %v6240, %v6444
      %v6446 = vpop.f32.mrb[0].mxu0
      %v6447 = vadd.f32 %v6241, %v6446
      %6448 = vmatprep.mubr.bf16.mxu0 0
      %6449 = vmatmul.mubr.bf16.gmra.mrb[0].mxu0 %v6342
      %v6450 = vpop.f32.mrb[0].mxu0
      %v6451 = vadd.f32 %v6242, %v6450
      %v6452 = vpop.f32.mrb[0].mxu0
      %v6453 = vadd.f32 %v6243, %v6452
      %v6454 = vpop.f32.mrb[0].mxu0
      %v6455 = vadd.f32 %v6244, %v6454
      %v6456 = vpop.f32.mrb[0].mxu0
      %v6457 = vadd.f32 %v6245, %v6456
      %6458 = vmatprep.mubr.bf16.mxu0 0
      %6459 = vmatmul.mubr.bf16.gmra.mrb[0].mxu0 %v6345
      %v6460 = vpop.f32.mrb[0].mxu0
      %v6461 = vadd.f32 %v6246, %v6460
      %v6462 = vpop.f32.mrb[0].mxu0
      %v6463 = vadd.f32 %v6247, %v6462
      %v6464 = vpop.f32.mrb[0].mxu0
      %v6465 = vadd.f32 %v6248, %v6464
      %v6466 = vpop.f32.mrb[0].mxu0
      %v6467 = vadd.f32 %v6249, %v6466
      %6468 = vmatprep.mubr.bf16.mxu0 0
      %6469 = vmatmul.mubr.bf16.gmra.mrb[0].mxu0 %v6348
      %v6470 = vpop.f32.mrb[0].mxu0
      %v6471 = vadd.f32 %v6250, %v6470
      %v6472 = vpop.f32.mrb[0].mxu0
      %v6473 = vadd.f32 %v6251, %v6472
      %v6474 = vpop.f32.mrb[0].mxu0
      %v6475 = vadd.f32 %v6252, %v6474
      %v6476 = vpop.f32.mrb[0].mxu0
      %v6477 = vadd.f32 %v6253, %v6476
      %6478 = vmatprep.mubr.bf16.mxu0 0
      %6479 = vmatmul.mubr.bf16.gmra.mrb[0].mxu0 %v6351
      %v6480 = vpop.f32.mrb[0].mxu0
      %v6481 = vadd.f32 %v6254, %v6480
      %v6482 = vpop.f32.mrb[0].mxu0
      %v6483 = vadd.f32 %v6255, %v6482
      %v6484 = vpop.f32.mrb[0].mxu0
      %v6485 = vadd.f32 %v6256, %v6484
      %v6486 = vpop.f32.mrb[0].mxu0
      %v6487 = vadd.f32 %v6257, %v6486
      %6488 = vmatprep.mubr.bf16.mxu0 0
      %6489 = vmatmul.mubr.bf16.gmra.mrb[0].mxu0 %v6354
      %v6490 = vpop.f32.mrb[0].mxu0
      %v6491 = vadd.f32 %v6258, %v6490
      %v6492 = vpop.f32.mrb[0].mxu0
      %v6493 = vadd.f32 %v6259, %v6492
      %v6494 = vpop.f32.mrb[0].mxu0
      %v6495 = vadd.f32 %v6260, %v6494
      %v6496 = vpop.f32.mrb[0].mxu0
      %v6497 = vadd.f32 %v6261, %v6496
      %6498 = vmatprep.mubr.bf16.mxu0 0
      %6499 = vmatmul.mubr.bf16.gmra.mrb[0].mxu0 %v6357
      %v6500 = vpop.f32.mrb[0].mxu0
      %v6501 = vadd.f32 %v6262, %v6500
      %v6502 = vpop.f32.mrb[0].mxu0
      %v6503 = vadd.f32 %v6263, %v6502
      %v6504 = vpop.f32.mrb[0].mxu0
      %v6505 = vadd.f32 %v6264, %v6504
      %v6506 = vpop.f32.mrb[0].mxu0
      %v6507 = vadd.f32 %v6265, %v6506
      %6508 = vmatprep.mubr.bf16.mxu0 0
      %6509 = vmatmul.mubr.bf16.gmra.mrb[0].mxu0 %v6360
      %v6510 = vpop.f32.mrb[0].mxu0
      %v6511 = vadd.f32 %v6266, %v6510
      %v6512 = vpop.f32.mrb[0].mxu0
      %v6513 = vadd.f32 %v6267, %v6512
      %v6514 = vpop.f32.mrb[0].mxu0
      %v6515 = vadd.f32 %v6268, %v6514
      %v6516 = vpop.f32.mrb[0].mxu0
      %v6517 = vadd.f32 %v6269, %v6516
      %6518 = vmatprep.mubr.bf16.mxu0 0
      %6519 = vmatmul.mubr.bf16.gmra.mrb[0].mxu0 %v6363
      %v6520 = vpop.f32.mrb[0].mxu0
      %v6521 = vadd.f32 %v6270, %v6520
      %v6522 = vpop.f32.mrb[0].mxu0
      %v6523 = vadd.f32 %v6271, %v6522
      %v6524 = vpop.f32.mrb[0].mxu0
      %v6525 = vadd.f32 %v6272, %v6524
      %v6526 = vpop.f32.mrb[0].mxu0
      %v6527 = vadd.f32 %v6273, %v6526
      %6528 = vmatprep.mubr.bf16.mxu0 0
      %6529 = vmatmul.mubr.bf16.gmra.mrb[0].mxu0 %v6366
      %v6530 = vpop.f32.mrb[0].mxu0
      %v6531 = vadd.f32 %v6274, %v6530
      %v6532 = vpop.f32.mrb[0].mxu0
      %v6533 = vadd.f32 %v6275, %v6532
      %v6534 = vpop.f32.mrb[0].mxu0
      %v6535 = vadd.f32 %v6276, %v6534
      %v6536 = vpop.f32.mrb[0].mxu0
      %v6537 = vadd.f32 %v6277, %v6536
      %6538 = vmatprep.mubr.bf16.mxu0 0
      %6539 = vmatmul.mubr.bf16.gmra.mrb[0].mxu0 %v6369
      %v6540 = vpop.f32.mrb[0].mxu0
      %v6541 = vadd.f32 %v6278, %v6540
      %v6542 = vpop.f32.mrb[0].mxu0
      %v6543 = vadd.f32 %v6279, %v6542
      %v6544 = vpop.f32.mrb[0].mxu0
      %v6545 = vadd.f32 %v6280, %v6544
      %v6546 = vpop.f32.mrb[0].mxu0
      %v6547 = vadd.f32 %v6281, %v6546
      %6548 = vmatprep.mubr.bf16.mxu0 0
      %6549 = vmatmul.mubr.bf16.gmra.mrb[0].mxu0 %v6372
      %v6550 = vpop.f32.mrb[0].mxu0
      %v6551 = vadd.f32 %v6282, %v6550
      %v6552 = vpop.f32.mrb[0].mxu0
      %v6553 = vadd.f32 %v6283, %v6552
      %v6554 = vpop.f32.mrb[0].mxu0
      %v6555 = vadd.f32 %v6284, %v6554
      %v6556 = vpop.f32.mrb[0].mxu0
      %v6557 = vadd.f32 %v6285, %v6556
      %6558 = vmatprep.mubr.bf16.mxu0 0
      %6559 = vmatmul.mubr.bf16.gmra.mrb[0].mxu0 %v6375
      %v6560 = vpop.f32.mrb[0].mxu0
      %v6561 = vadd.f32 %v6286, %v6560
      %v6562 = vpop.f32.mrb[0].mxu0
      %v6563 = vadd.f32 %v6287, %v6562
      %v6564 = vpop.f32.mrb[0].mxu0
      %v6565 = vadd.f32 %v6288, %v6564
      %v6566 = vpop.f32.mrb[0].mxu0
      %v6567 = vadd.f32 %v6289, %v6566
      %6568 = vmatprep.mubr.bf16.mxu0 0
      %6569 = vmatmul.mubr.bf16.gmra.mrb[0].mxu0 %v6378
      %v6570 = vpop.f32.mrb[0].mxu0
      %v6571 = vadd.f32 %v6290, %v6570
      %v6572 = vpop.f32.mrb[0].mxu0
      %v6573 = vadd.f32 %v6291, %v6572
      %v6574 = vpop.f32.mrb[0].mxu0
      %v6575 = vadd.f32 %v6292, %v6574
      %v6576 = vpop.f32.mrb[0].mxu0
      %v6577 = vadd.f32 %v6293, %v6576
      %6578 = vdwg.mxu0
      %v6579 = vmax.f32 %v6421, %v6423
      %6580 = vmax.xlane.f32.xlu0 %v6579
      %v6581 = vpop.xlane.xlu0 %6580
      %v6582 = vmax.f32 %v6425, %v6427
      %6583 = vmax.xlane.f32.xlu0 %v6582
      %v6584 = vpop.xlane.xlu0 %6583
      %v6585 = vmax.f32 %v6431, %v6433
      %6586 = vmax.xlane.f32.xlu0 %v6585
      %v6587 = vpop.xlane.xlu0 %6586
      %v6588 = vmax.f32 %v6435, %v6437
      %6589 = vmax.xlane.f32.xlu0 %v6588
      %v6590 = vpop.xlane.xlu0 %6589
      %v6591 = vmax.f32 %v6441, %v6443
      %6592 = vmax.xlane.f32.xlu0 %v6591
      %v6593 = vpop.xlane.xlu0 %6592
      %v6594 = vmax.f32 %v6445, %v6447
      %6595 = vmax.xlane.f32.xlu0 %v6594
      %v6596 = vpop.xlane.xlu0 %6595
      %v6597 = vmax.f32 %v6451, %v6453
      %6598 = vmax.xlane.f32.xlu0 %v6597
      %v6599 = vpop.xlane.xlu0 %6598
      %v6600 = vmax.f32 %v6455, %v6457
      %6601 = vmax.xlane.f32.xlu0 %v6600
      %v6602 = vpop.xlane.xlu0 %6601
      %v6603 = vmax.f32 %v6461, %v6463
      %6604 = vmax.xlane.f32.xlu0 %v6603
      %v6605 = vpop.xlane.xlu0 %6604
      %v6606 = vmax.f32 %v6465, %v6467
      %6607 = vmax.xlane.f32.xlu0 %v6606
      %v6608 = vpop.xlane.xlu0 %6607
      %v6609 = vmax.f32 %v6471, %v6473
      %6610 = vmax.xlane.f32.xlu0 %v6609
      %v6611 = vpop.xlane.xlu0 %6610
      %v6612 = vmax.f32 %v6475, %v6477
      %6613 = vmax.xlane.f32.xlu0 %v6612
      %v6614 = vpop.xlane.xlu0 %6613
      %v6615 = vmax.f32 %v6481, %v6483
      %6616 = vmax.xlane.f32.xlu0 %v6615
      %v6617 = vpop.xlane.xlu0 %6616
      %v6618 = vmax.f32 %v6485, %v6487
      %6619 = vmax.xlane.f32.xlu0 %v6618
      %v6620 = vpop.xlane.xlu0 %6619
      %v6621 = vmax.f32 %v6491, %v6493
      %6622 = vmax.xlane.f32.xlu0 %v6621
      %v6623 = vpop.xlane.xlu0 %6622
      %v6624 = vmax.f32 %v6495, %v6497
      %6625 = vmax.xlane.f32.xlu0 %v6624
      %v6626 = vpop.xlane.xlu0 %6625
      %v6627 = vmax.f32 %v6501, %v6503
      %6628 = vmax.xlane.f32.xlu0 %v6627
      %v6629 = vpop.xlane.xlu0 %6628
      %v6630 = vmax.f32 %v6505, %v6507
      %6631 = vmax.xlane.f32.xlu0 %v6630
      %v6632 = vpop.xlane.xlu0 %6631
      %v6633 = vmax.f32 %v6511, %v6513
      %6634 = vmax.xlane.f32.xlu0 %v6633
      %v6635 = vpop.xlane.xlu0 %6634
      %v6636 = vmax.f32 %v6515, %v6517
      %6637 = vmax.xlane.f32.xlu0 %v6636
      %v6638 = vpop.xlane.xlu0 %6637
      %v6639 = vmax.f32 %v6521, %v6523
      %6640 = vmax.xlane.f32.xlu0 %v6639
      %v6641 = vpop.xlane.xlu0 %6640
      %v6642 = vmax.f32 %v6525, %v6527
      %6643 = vmax.xlane.f32.xlu0 %v6642
      %v6644 = vpop.xlane.xlu0 %6643
      %v6645 = vmax.f32 %v6531, %v6533
      %6646 = vmax.xlane.f32.xlu0 %v6645
      %v6647 = vpop.xlane.xlu0 %6646
      %v6648 = vmax.f32 %v6535, %v6537
      %6649 = vmax.xlane.f32.xlu0 %v6648
      %v6650 = vpop.xlane.xlu0 %6649
      %v6651 = vmax.f32 %v6541, %v6543
      %6652 = vmax.xlane.f32.xlu0 %v6651
      %v6653 = vpop.xlane.xlu0 %6652
      %v6654 = vmax.f32 %v6545, %v6547
      %6655 = vmax.xlane.f32.xlu0 %v6654
      %v6656 = vpop.xlane.xlu0 %6655
      %v6657 = vmax.f32 %v6551, %v6553
      %6658 = vmax.xlane.f32.xlu0 %v6657
      %v6659 = vpop.xlane.xlu0 %6658
      %v6660 = vmax.f32 %v6555, %v6557
      %6661 = vmax.xlane.f32.xlu0 %v6660
      %v6662 = vpop.xlane.xlu0 %6661
      %v6663 = vmax.f32 %v6561, %v6563
      %6664 = vmax.xlane.f32.xlu0 %v6663
      %v6665 = vpop.xlane.xlu0 %6664
      %v6666 = vmax.f32 %v6565, %v6567
      %6667 = vmax.xlane.f32.xlu0 %v6666
      %v6668 = vpop.xlane.xlu0 %6667
      %v6669 = vmax.f32 %v6571, %v6573
      %6670 = vmax.xlane.f32.xlu0 %v6669
      %v6671 = vpop.xlane.xlu0 %6670
      %v6672 = vmax.f32 %v6575, %v6577
      %6673 = vmax.xlane.f32.xlu0 %v6672
      %v6674 = vpop.xlane.xlu0 %6673
      %v6675 = vsub.f32 %v6421, %v6581
      %v6676 = vsub.f32 %v6423, %v6581
      %v6677 = vsub.f32 %v6425, %v6584
      %v6678 = vsub.f32 %v6427, %v6584
      %v6679 = vsub.f32 %v6431, %v6587
      %v6680 = vsub.f32 %v6433, %v6587
      %v6681 = vsub.f32 %v6435, %v6590
      %v6682 = vsub.f32 %v6437, %v6590
      %v6683 = vsub.f32 %v6441, %v6593
      %v6684 = vsub.f32 %v6443, %v6593
      %v6685 = vsub.f32 %v6445, %v6596
      %v6686 = vsub.f32 %v6447, %v6596
      %v6687 = vsub.f32 %v6451, %v6599
      %v6688 = vsub.f32 %v6453, %v6599
      %v6689 = vsub.f32 %v6455, %v6602
      %v6690 = vsub.f32 %v6457, %v6602
      %v6691 = vsub.f32 %v6461, %v6605
      %v6692 = vsub.f32 %v6463, %v6605
      %v6693 = vsub.f32 %v6465, %v6608
      %v6694 = vsub.f32 %v6467, %v6608
      %v6695 = vsub.f32 %v6471, %v6611
      %v6696 = vsub.f32 %v6473, %v6611
      %v6697 = vsub.f32 %v6475, %v6614
      %v6698 = vsub.f32 %v6477, %v6614
      %v6699 = vsub.f32 %v6481, %v6617
      %v6700 = vsub.f32 %v6483, %v6617
      %v6701 = vsub.f32 %v6485, %v6620
      %v6702 = vsub.f32 %v6487, %v6620
      %v6703 = vsub.f32 %v6491, %v6623
      %v6704 = vsub.f32 %v6493, %v6623
      %v6705 = vsub.f32 %v6495, %v6626
      %v6706 = vsub.f32 %v6497, %v6626
      %v6707 = vsub.f32 %v6501, %v6629
      %v6708 = vsub.f32 %v6503, %v6629
      %v6709 = vsub.f32 %v6505, %v6632
      %v6710 = vsub.f32 %v6507, %v6632
      %v6711 = vsub.f32 %v6511, %v6635
      %v6712 = vsub.f32 %v6513, %v6635
      %v6713 = vsub.f32 %v6515, %v6638
      %v6714 = vsub.f32 %v6517, %v6638
      %v6715 = vsub.f32 %v6521, %v6641
      %v6716 = vsub.f32 %v6523, %v6641
      %v6717 = vsub.f32 %v6525, %v6644
      %v6718 = vsub.f32 %v6527, %v6644
      %v6719 = vsub.f32 %v6531, %v6647
      %v6720 = vsub.f32 %v6533, %v6647
      %v6721 = vsub.f32 %v6535, %v6650
      %v6722 = vsub.f32 %v6537, %v6650
      %v6723 = vsub.f32 %v6541, %v6653
      %v6724 = vsub.f32 %v6543, %v6653
      %v6725 = vsub.f32 %v6545, %v6656
      %v6726 = vsub.f32 %v6547, %v6656
      %v6727 = vsub.f32 %v6551, %v6659
      %v6728 = vsub.f32 %v6553, %v6659
      %v6729 = vsub.f32 %v6555, %v6662
      %v6730 = vsub.f32 %v6557, %v6662
      %v6731 = vsub.f32 %v6561, %v6665
      %v6732 = vsub.f32 %v6563, %v6665
      %v6733 = vsub.f32 %v6565, %v6668
      %v6734 = vsub.f32 %v6567, %v6668
      %v6735 = vsub.f32 %v6571, %v6671
      %v6736 = vsub.f32 %v6573, %v6671
      %v6737 = vsub.f32 %v6575, %v6674
      %v6738 = vsub.f32 %v6577, %v6674
      %v6739 = vmul.f32 %v6675, 1.442695
      %v6740 = vpow.pop %v6739
      %v6741 = vmul.f32 %v6676, 1.442695
      %v6742 = vpow.pop %v6741
      %v6743 = vmul.f32 %v6677, 1.442695
      %v6744 = vpow.pop %v6743
      %v6745 = vmul.f32 %v6678, 1.442695
      %v6746 = vpow.pop %v6745
      %v6747 = vmul.f32 %v6679, 1.442695
      %v6748 = vpow.pop %v6747
      %v6749 = vmul.f32 %v6680, 1.442695
      %v6750 = vpow.pop %v6749
      %v6751 = vmul.f32 %v6681, 1.442695
      %v6752 = vpow.pop %v6751
      %v6753 = vmul.f32 %v6682, 1.442695
      %v6754 = vpow.pop %v6753
      %v6755 = vmul.f32 %v6683, 1.442695
      %v6756 = vpow.pop %v6755
      %v6757 = vmul.f32 %v6684, 1.442695
      %v6758 = vpow.pop %v6757
      %v6759 = vmul.f32 %v6685, 1.442695
      %v6760 = vpow.pop %v6759
      %v6761 = vmul.f32 %v6686, 1.442695
      %v6762 = vpow.pop %v6761
      %v6763 = vmul.f32 %v6687, 1.442695
      %v6764 = vpow.pop %v6763
      %v6765 = vmul.f32 %v6688, 1.442695
      %v6766 = vpow.pop %v6765
      %v6767 = vmul.f32 %v6689, 1.442695
      %v6768 = vpow.pop %v6767
      %v6769 = vmul.f32 %v6690, 1.442695
      %v6770 = vpow.pop %v6769
      %v6771 = vmul.f32 %v6691, 1.442695
      %v6772 = vpow.pop %v6771
      %v6773 = vmul.f32 %v6692, 1.442695
      %v6774 = vpow.pop %v6773
      %v6775 = vmul.f32 %v6693, 1.442695
      %v6776 = vpow.pop %v6775
      %v6777 = vmul.f32 %v6694, 1.442695
      %v6778 = vpow.pop %v6777
      %v6779 = vmul.f32 %v6695, 1.442695
      %v6780 = vpow.pop %v6779
      %v6781 = vmul.f32 %v6696, 1.442695
      %v6782 = vpow.pop %v6781
      %v6783 = vmul.f32 %v6697, 1.442695
      %v6784 = vpow.pop %v6783
      %v6785 = vmul.f32 %v6698, 1.442695
      %v6786 = vpow.pop %v6785
      %v6787 = vmul.f32 %v6699, 1.442695
      %v6788 = vpow.pop %v6787
      %v6789 = vmul.f32 %v6700, 1.442695
      %v6790 = vpow.pop %v6789
      %v6791 = vmul.f32 %v6701, 1.442695
      %v6792 = vpow.pop %v6791
      %v6793 = vmul.f32 %v6702, 1.442695
      %v6794 = vpow.pop %v6793
      %v6795 = vmul.f32 %v6703, 1.442695
      %v6796 = vpow.pop %v6795
      %v6797 = vmul.f32 %v6704, 1.442695
      %v6798 = vpow.pop %v6797
      %v6799 = vmul.f32 %v6705, 1.442695
      %v6800 = vpow.pop %v6799
      %v6801 = vmul.f32 %v6706, 1.442695
      %v6802 = vpow.pop %v6801
      %v6803 = vmul.f32 %v6707, 1.442695
      %v6804 = vpow.pop %v6803
      %v6805 = vmul.f32 %v6708, 1.442695
      %v6806 = vpow.pop %v6805
      %v6807 = vmul.f32 %v6709, 1.442695
      %v6808 = vpow.pop %v6807
      %v6809 = vmul.f32 %v6710, 1.442695
      %v6810 = vpow.pop %v6809
      %v6811 = vmul.f32 %v6711, 1.442695
      %v6812 = vpow.pop %v6811
      %v6813 = vmul.f32 %v6712, 1.442695
      %v6814 = vpow.pop %v6813
      %v6815 = vmul.f32 %v6713, 1.442695
      %v6816 = vpow.pop %v6815
      %v6817 = vmul.f32 %v6714, 1.442695
      %v6818 = vpow.pop %v6817
      %v6819 = vmul.f32 %v6715, 1.442695
      %v6820 = vpow.pop %v6819
      %v6821 = vmul.f32 %v6716, 1.442695
      %v6822 = vpow.pop %v6821
      %v6823 = vmul.f32 %v6717, 1.442695
      %v6824 = vpow.pop %v6823
      %v6825 = vmul.f32 %v6718, 1.442695
      %v6826 = vpow.pop %v6825
      %v6827 = vmul.f32 %v6719, 1.442695
      %v6828 = vpow.pop %v6827
      %v6829 = vmul.f32 %v6720, 1.442695
      %v6830 = vpow.pop %v6829
      %v6831 = vmul.f32 %v6721, 1.442695
      %v6832 = vpow.pop %v6831
      %v6833 = vmul.f32 %v6722, 1.442695
      %v6834 = vpow.pop %v6833
      %v6835 = vmul.f32 %v6723, 1.442695
      %v6836 = vpow.pop %v6835
      %v6837 = vmul.f32 %v6724, 1.442695
      %v6838 = vpow.pop %v6837
      %v6839 = vmul.f32 %v6725, 1.442695
      %v6840 = vpow.pop %v6839
      %v6841 = vmul.f32 %v6726, 1.442695
      %v6842 = vpow.pop %v6841
      %v6843 = vmul.f32 %v6727, 1.442695
      %v6844 = vpow.pop %v6843
      %v6845 = vmul.f32 %v6728, 1.442695
      %v6846 = vpow.pop %v6845
      %v6847 = vmul.f32 %v6729, 1.442695
      %v6848 = vpow.pop %v6847
      %v6849 = vmul.f32 %v6730, 1.442695
      %v6850 = vpow.pop %v6849
      %v6851 = vmul.f32 %v6731, 1.442695
      %v6852 = vpow.pop %v6851
      %v6853 = vmul.f32 %v6732, 1.442695
      %v6854 = vpow.pop %v6853
      %v6855 = vmul.f32 %v6733, 1.442695
      %v6856 = vpow.pop %v6855
      %v6857 = vmul.f32 %v6734, 1.442695
      %v6858 = vpow.pop %v6857
      %v6859 = vmul.f32 %v6735, 1.442695
      %v6860 = vpow.pop %v6859
      %v6861 = vmul.f32 %v6736, 1.442695
      %v6862 = vpow.pop %v6861
      %v6863 = vmul.f32 %v6737, 1.442695
      %v6864 = vpow.pop %v6863
      %v6865 = vmul.f32 %v6738, 1.442695
      %v6866 = vpow.pop %v6865
      %v6867 = vadd.f32 %v6740, %v6742
      %6868 = vadd.xlane.f32.xlu0 %v6867
      %v6869 = vpop.xlane.xlu0 %6868
      %v6870 = vadd.f32 %v6744, %v6746
      %6871 = vadd.xlane.f32.xlu0 %v6870
      %v6872 = vpop.xlane.xlu0 %6871
      %v6873 = vadd.f32 %v6748, %v6750
      %6874 = vadd.xlane.f32.xlu0 %v6873
      %v6875 = vpop.xlane.xlu0 %6874
      %v6876 = vadd.f32 %v6752, %v6754
      %6877 = vadd.xlane.f32.xlu0 %v6876
      %v6878 = vpop.xlane.xlu0 %6877
      %v6879 = vadd.f32 %v6756, %v6758
      %6880 = vadd.xlane.f32.xlu0 %v6879
      %v6881 = vpop.xlane.xlu0 %6880
      %v6882 = vadd.f32 %v6760, %v6762
      %6883 = vadd.xlane.f32.xlu0 %v6882
      %v6884 = vpop.xlane.xlu0 %6883
      %v6885 = vadd.f32 %v6764, %v6766
      %6886 = vadd.xlane.f32.xlu0 %v6885
      %v6887 = vpop.xlane.xlu0 %6886
      %v6888 = vadd.f32 %v6768, %v6770
      %6889 = vadd.xlane.f32.xlu0 %v6888
      %v6890 = vpop.xlane.xlu0 %6889
      %v6891 = vadd.f32 %v6772, %v6774
      %6892 = vadd.xlane.f32.xlu0 %v6891
      %v6893 = vpop.xlane.xlu0 %6892
      %v6894 = vadd.f32 %v6776, %v6778
      %6895 = vadd.xlane.f32.xlu0 %v6894
      %v6896 = vpop.xlane.xlu0 %6895
      %v6897 = vadd.f32 %v6780, %v6782
      %6898 = vadd.xlane.f32.xlu0 %v6897
      %v6899 = vpop.xlane.xlu0 %6898
      %v6900 = vadd.f32 %v6784, %v6786
      %6901 = vadd.xlane.f32.xlu0 %v6900
      %v6902 = vpop.xlane.xlu0 %6901
      %v6903 = vadd.f32 %v6788, %v6790
      %6904 = vadd.xlane.f32.xlu0 %v6903
      %v6905 = vpop.xlane.xlu0 %6904
      %v6906 = vadd.f32 %v6792, %v6794
      %6907 = vadd.xlane.f32.xlu0 %v6906
      %v6908 = vpop.xlane.xlu0 %6907
      %v6909 = vadd.f32 %v6796, %v6798
      %6910 = vadd.xlane.f32.xlu0 %v6909
      %v6911 = vpop.xlane.xlu0 %6910
      %v6912 = vadd.f32 %v6800, %v6802
      %6913 = vadd.xlane.f32.xlu0 %v6912
      %v6914 = vpop.xlane.xlu0 %6913
      %v6915 = vadd.f32 %v6804, %v6806
      %6916 = vadd.xlane.f32.xlu0 %v6915
      %v6917 = vpop.xlane.xlu0 %6916
      %v6918 = vadd.f32 %v6808, %v6810
      %6919 = vadd.xlane.f32.xlu0 %v6918
      %v6920 = vpop.xlane.xlu0 %6919
      %v6921 = vadd.f32 %v6812, %v6814
      %6922 = vadd.xlane.f32.xlu0 %v6921
      %v6923 = vpop.xlane.xlu0 %6922
      %v6924 = vadd.f32 %v6816, %v6818
      %6925 = vadd.xlane.f32.xlu0 %v6924
      %v6926 = vpop.xlane.xlu0 %6925
      %v6927 = vadd.f32 %v6820, %v6822
      %6928 = vadd.xlane.f32.xlu0 %v6927
      %v6929 = vpop.xlane.xlu0 %6928
      %v6930 = vadd.f32 %v6824, %v6826
      %6931 = vadd.xlane.f32.xlu0 %v6930
      %v6932 = vpop.xlane.xlu0 %6931
      %v6933 = vadd.f32 %v6828, %v6830
      %6934 = vadd.xlane.f32.xlu0 %v6933
      %v6935 = vpop.xlane.xlu0 %6934
      %v6936 = vadd.f32 %v6832, %v6834
      %6937 = vadd.xlane.f32.xlu0 %v6936
      %v6938 = vpop.xlane.xlu0 %6937
      %v6939 = vadd.f32 %v6836, %v6838
      %6940 = vadd.xlane.f32.xlu0 %v6939
      %v6941 = vpop.xlane.xlu0 %6940
      %v6942 = vadd.f32 %v6840, %v6842
      %6943 = vadd.xlane.f32.xlu0 %v6942
      %v6944 = vpop.xlane.xlu0 %6943
      %v6945 = vadd.f32 %v6844, %v6846
      %6946 = vadd.xlane.f32.xlu0 %v6945
      %v6947 = vpop.xlane.xlu0 %6946
      %v6948 = vadd.f32 %v6848, %v6850
      %6949 = vadd.xlane.f32.xlu0 %v6948
      %v6950 = vpop.xlane.xlu0 %6949
      %v6951 = vadd.f32 %v6852, %v6854
      %6952 = vadd.xlane.f32.xlu0 %v6951
      %v6953 = vpop.xlane.xlu0 %6952
      %v6954 = vadd.f32 %v6856, %v6858
      %6955 = vadd.xlane.f32.xlu0 %v6954
      %v6956 = vpop.xlane.xlu0 %6955
      %v6957 = vadd.f32 %v6860, %v6862
      %6958 = vadd.xlane.f32.xlu0 %v6957
      %v6959 = vpop.xlane.xlu0 %6958
      %v6960 = vadd.f32 %v6864, %v6866
      %6961 = vadd.xlane.f32.xlu0 %v6960
      %v6962 = vpop.xlane.xlu0 %6961
      %v6963 = vrcp.pop %v6869
      %v6964 = vrcp.pop %v6872
      %v6965 = vrcp.pop %v6875
      %v6966 = vrcp.pop %v6878
      %v6967 = vrcp.pop %v6881
      %v6968 = vrcp.pop %v6884
      %v6969 = vrcp.pop %v6887
      %v6970 = vrcp.pop %v6890
      %v6971 = vrcp.pop %v6893
      %v6972 = vrcp.pop %v6896
      %v6973 = vrcp.pop %v6899
      %v6974 = vrcp.pop %v6902
      %v6975 = vrcp.pop %v6905
      %v6976 = vrcp.pop %v6908
      %v6977 = vrcp.pop %v6911
      %v6978 = vrcp.pop %v6914
      %v6979 = vrcp.pop %v6917
      %v6980 = vrcp.pop %v6920
      %v6981 = vrcp.pop %v6923
      %v6982 = vrcp.pop %v6926
      %v6983 = vrcp.pop %v6929
      %v6984 = vrcp.pop %v6932
      %v6985 = vrcp.pop %v6935
      %v6986 = vrcp.pop %v6938
      %v6987 = vrcp.pop %v6941
      %v6988 = vrcp.pop %v6944
      %v6989 = vrcp.pop %v6947
      %v6990 = vrcp.pop %v6950
      %v6991 = vrcp.pop %v6953
      %v6992 = vrcp.pop %v6956
      %v6993 = vrcp.pop %v6959
      %v6994 = vrcp.pop %v6962
      %v6995 = vmul.f32 %v6740, %v6963
      %v6996 = vmul.f32 %v6742, %v6963
      %v6997 = vmul.f32 %v6744, %v6964
      %v6998 = vmul.f32 %v6746, %v6964
      %v6999 = vmul.f32 %v6748, %v6965
      %v7000 = vmul.f32 %v6750, %v6965
      %v7001 = vmul.f32 %v6752, %v6966
      %v7002 = vmul.f32 %v6754, %v6966
      %v7003 = vmul.f32 %v6756, %v6967
      %v7004 = vmul.f32 %v6758, %v6967
      %v7005 = vmul.f32 %v6760, %v6968
      %v7006 = vmul.f32 %v6762, %v6968
      %v7007 = vmul.f32 %v6764, %v6969
      %v7008 = vmul.f32 %v6766, %v6969
      %v7009 = vmul.f32 %v6768, %v6970
      %v7010 = vmul.f32 %v6770, %v6970
      %v7011 = vmul.f32 %v6772, %v6971
      %v7012 = vmul.f32 %v6774, %v6971
      %v7013 = vmul.f32 %v6776, %v6972
      %v7014 = vmul.f32 %v6778, %v6972
      %v7015 = vmul.f32 %v6780, %v6973
      %v7016 = vmul.f32 %v6782, %v6973
      %v7017 = vmul.f32 %v6784, %v6974
      %v7018 = vmul.f32 %v6786, %v6974
      %v7019 = vmul.f32 %v6788, %v6975
      %v7020 = vmul.f32 %v6790, %v6975
      %v7021 = vmul.f32 %v6792, %v6976
      %v7022 = vmul.f32 %v6794, %v6976
      %v7023 = vmul.f32 %v6796, %v6977
      %v7024 = vmul.f32 %v6798, %v6977
      %v7025 = vmul.f32 %v6800, %v6978
      %v7026 = vmul.f32 %v6802, %v6978
      %v7027 = vmul.f32 %v6804, %v6979
      %v7028 = vmul.f32 %v6806, %v6979
      %v7029 = vmul.f32 %v6808, %v6980
      %v7030 = vmul.f32 %v6810, %v6980
      %v7031 = vmul.f32 %v6812, %v6981
      %v7032 = vmul.f32 %v6814, %v6981
      %v7033 = vmul.f32 %v6816, %v6982
      %v7034 = vmul.f32 %v6818, %v6982
      %v7035 = vmul.f32 %v6820, %v6983
      %v7036 = vmul.f32 %v6822, %v6983
      %v7037 = vmul.f32 %v6824, %v6984
      %v7038 = vmul.f32 %v6826, %v6984
      %v7039 = vmul.f32 %v6828, %v6985
      %v7040 = vmul.f32 %v6830, %v6985
      %v7041 = vmul.f32 %v6832, %v6986
      %v7042 = vmul.f32 %v6834, %v6986
      %v7043 = vmul.f32 %v6836, %v6987
      %v7044 = vmul.f32 %v6838, %v6987
      %v7045 = vmul.f32 %v6840, %v6988
      %v7046 = vmul.f32 %v6842, %v6988
      %v7047 = vmul.f32 %v6844, %v6989
      %v7048 = vmul.f32 %v6846, %v6989
      %v7049 = vmul.f32 %v6848, %v6990
      %v7050 = vmul.f32 %v6850, %v6990
      %v7051 = vmul.f32 %v6852, %v6991
      %v7052 = vmul.f32 %v6854, %v6991
      %v7053 = vmul.f32 %v6856, %v6992
      %v7054 = vmul.f32 %v6858, %v6992
      %v7055 = vmul.f32 %v6860, %v6993
      %v7056 = vmul.f32 %v6862, %v6993
      %v7057 = vmul.f32 %v6864, %v6994
      %v7058 = vmul.f32 %v6866, %v6994
      %v7059 = vpack.c.bf16 %v6997, %v6995
      %v7060 = vpack.c.bf16 %v6998, %v6996
      %v7061 = vpack.c.bf16 %v7001, %v6999
      %v7062 = vpack.c.bf16 %v7002, %v7000
      %v7063 = vpack.c.bf16 %v7005, %v7003
      %v7064 = vpack.c.bf16 %v7006, %v7004
      %v7065 = vpack.c.bf16 %v7009, %v7007
      %v7066 = vpack.c.bf16 %v7010, %v7008
      %v7067 = vpack.c.bf16 %v7013, %v7011
      %v7068 = vpack.c.bf16 %v7014, %v7012
      %v7069 = vpack.c.bf16 %v7017, %v7015
      %v7070 = vpack.c.bf16 %v7018, %v7016
      %v7071 = vpack.c.bf16 %v7021, %v7019
      %v7072 = vpack.c.bf16 %v7022, %v7020
      %v7073 = vpack.c.bf16 %v7025, %v7023
      %v7074 = vpack.c.bf16 %v7026, %v7024
      %v7075 = vpack.c.bf16 %v7029, %v7027
      %v7076 = vpack.c.bf16 %v7030, %v7028
      %v7077 = vpack.c.bf16 %v7033, %v7031
      %v7078 = vpack.c.bf16 %v7034, %v7032
      %v7079 = vpack.c.bf16 %v7037, %v7035
      %v7080 = vpack.c.bf16 %v7038, %v7036
      %v7081 = vpack.c.bf16 %v7041, %v7039
      %v7082 = vpack.c.bf16 %v7042, %v7040
      %v7083 = vpack.c.bf16 %v7045, %v7043
      %v7084 = vpack.c.bf16 %v7046, %v7044
      %v7085 = vpack.c.bf16 %v7049, %v7047
      %v7086 = vpack.c.bf16 %v7050, %v7048
      %v7087 = vpack.c.bf16 %v7053, %v7051
      %v7088 = vpack.c.bf16 %v7054, %v7052
      %v7089 = vpack.c.bf16 %v7057, %v7055
      %v7090 = vpack.c.bf16 %v7058, %v7056
      %v7091 = vrot.slane %v4418, 2
      %v7092 = vrot.slane %v4419, 2
      %7095 = vmatprep.subr.bf16.mxu0 %v7060
      %7096 = vmatpush1.bf16.xpose.msra.mxu0 %v7059
      %7097 = vmatprep.subr.bf16.mxu0 %v7062
      %7098 = vmatpush1.bf16.xpose.msra.mxu0 %v7061
      %7099 = vmatprep.subr.bf16.mxu0 %v7064
      %7100 = vmatpush1.bf16.xpose.msra.mxu0 %v7063
      %7101 = vmatprep.subr.bf16.mxu0 %v7066
      %7102 = vmatpush1.bf16.xpose.msra.mxu0 %v7065
      %7103 = vmatprep.subr.bf16.mxu0 %v7068
      %7104 = vmatpush1.bf16.xpose.msra.mxu0 %v7067
      %7105 = vmatprep.subr.bf16.mxu0 %v7070
      %7106 = vmatpush1.bf16.xpose.msra.mxu0 %v7069
      %7107 = vmatprep.subr.bf16.mxu0 %v7072
      %7108 = vmatpush1.bf16.xpose.msra.mxu0 %v7071
      %7109 = vmatprep.subr.bf16.mxu0 %v7074
      %7110 = vmatpush1.bf16.xpose.msra.mxu0 %v7073
      %7111 = vmatprep.subr.bf16.mxu0 %v7076
      %7112 = vmatpush1.bf16.xpose.msra.mxu0 %v7075
      %7113 = vmatprep.subr.bf16.mxu0 %v7078
      %7114 = vmatpush1.bf16.xpose.msra.mxu0 %v7077
      %7115 = vmatprep.subr.bf16.mxu0 %v7080
      %7116 = vmatpush1.bf16.xpose.msra.mxu0 %v7079
      %7117 = vmatprep.subr.bf16.mxu0 %v7082
      %7118 = vmatpush1.bf16.xpose.msra.mxu0 %v7081
      %7119 = vmatprep.subr.bf16.mxu0 %v7084
      %7120 = vmatpush1.bf16.xpose.msra.mxu0 %v7083
      %7121 = vmatprep.subr.bf16.mxu0 %v7086
      %7122 = vmatpush1.bf16.xpose.msra.mxu0 %v7085
      %7123 = vmatprep.subr.bf16.mxu0 %v7088
      %7124 = vmatpush1.bf16.xpose.msra.mxu0 %v7087
      %7125 = vmatprep.subr.bf16.mxu0 %v7090
      %7126 = vmatpush1.bf16.xpose.msra.mxu0 %v7089
      %7127 = vmatprep.mubr.bf16.mxu0 %v7092
      %7128 = vmatmul.mubr.bf16.gmra.mrb[0].mxu0 %v7091
      %v7129 = vpop.f32.mrb[0].mxu0
      %v7130 = vadd.f32 0.0, %v7129
      %v7131 = vpop.f32.mrb[0].mxu0
      %v7132 = vadd.f32 0.0, %v7131
      %v7133 = vpop.f32.mrb[0].mxu0
      %v7134 = vpop.f32.mrb[0].mxu0
      %7135 = vdwg.mxu0
      %s7136 = scalar_lea.vmem %s8, 1536
      %v7137 = vld [vmem:[%s7136] sm:$0xff]
      %v7138 = vld [vmem:[%s7136 + $0x8] sm:$0xff]
      %v7139 = vld [vmem:[%s7136 + $0x10] sm:$0xff]
      %v7140 = vld [vmem:[%s7136 + $0x18] sm:$0xff]
      %v7141 = vld [vmem:[%s7136 + $0x20] sm:$0xff]
      %v7142 = vld [vmem:[%s7136 + $0x28] sm:$0xff]
      %v7143 = vld [vmem:[%s7136 + $0x30] sm:$0xff]
      %v7144 = vld [vmem:[%s7136 + $0x38] sm:$0xff]
      %v7145 = vld [vmem:[%s7136 + $0x40] sm:$0xff]
      %v7146 = vld [vmem:[%s7136 + $0x48] sm:$0xff]
      %v7147 = vld [vmem:[%s7136 + $0x50] sm:$0xff]
      %v7148 = vld [vmem:[%s7136 + $0x58] sm:$0xff]
      %v7149 = vld [vmem:[%s7136 + $0x60] sm:$0xff]
      %v7150 = vld [vmem:[%s7136 + $0x68] sm:$0xff]
      %v7151 = vld [vmem:[%s7136 + $0x70] sm:$0xff]
      %v7152 = vld [vmem:[%s7136 + $0x78] sm:$0xff]
      %v7153 = vld [vmem:[%s7136 + $0x80] sm:$0xff]
      %v7154 = vld [vmem:[%s7136 + $0x88] sm:$0xff]
      %v7155 = vld [vmem:[%s7136 + $0x90] sm:$0xff]
      %v7156 = vld [vmem:[%s7136 + $0x98] sm:$0xff]
      %v7157 = vld [vmem:[%s7136 + $0xa0] sm:$0xff]
      %v7158 = vld [vmem:[%s7136 + $0xa8] sm:$0xff]
      %v7159 = vld [vmem:[%s7136 + $0xb0] sm:$0xff]
      %v7160 = vld [vmem:[%s7136 + $0xb8] sm:$0xff]
      %v7161 = vld [vmem:[%s7136 + $0xc0] sm:$0xff]
      %v7162 = vld [vmem:[%s7136 + $0xc8] sm:$0xff]
      %v7163 = vld [vmem:[%s7136 + $0xd0] sm:$0xff]
      %v7164 = vld [vmem:[%s7136 + $0xd8] sm:$0xff]
      %v7165 = vld [vmem:[%s7136 + $0xe0] sm:$0xff]
      %v7166 = vld [vmem:[%s7136 + $0xe8] sm:$0xff]
      %v7167 = vld [vmem:[%s7136 + $0xf0] sm:$0xff]
      %v7168 = vld [vmem:[%s7136 + $0xf8] sm:$0xff]
      %v7169 = vld [vmem:[%s7136 + $0x100] sm:$0xff]
      %v7170 = vld [vmem:[%s7136 + $0x108] sm:$0xff]
      %v7171 = vld [vmem:[%s7136 + $0x110] sm:$0xff]
      %v7172 = vld [vmem:[%s7136 + $0x118] sm:$0xff]
      %v7173 = vld [vmem:[%s7136 + $0x120] sm:$0xff]
      %v7174 = vld [vmem:[%s7136 + $0x128] sm:$0xff]
      %v7175 = vld [vmem:[%s7136 + $0x130] sm:$0xff]
      %v7176 = vld [vmem:[%s7136 + $0x138] sm:$0xff]
      %v7177 = vld [vmem:[%s7136 + $0x140] sm:$0xff]
      %v7178 = vld [vmem:[%s7136 + $0x148] sm:$0xff]
      %v7179 = vld [vmem:[%s7136 + $0x150] sm:$0xff]
      %v7180 = vld [vmem:[%s7136 + $0x158] sm:$0xff]
      %v7181 = vld [vmem:[%s7136 + $0x160] sm:$0xff]
      %v7182 = vld [vmem:[%s7136 + $0x168] sm:$0xff]
      %v7183 = vld [vmem:[%s7136 + $0x170] sm:$0xff]
      %v7184 = vld [vmem:[%s7136 + $0x178] sm:$0xff]
      %v7185 = vld [vmem:[%s7136 + $0x180] sm:$0xff]
      %v7186 = vld [vmem:[%s7136 + $0x188] sm:$0xff]
      %v7187 = vld [vmem:[%s7136 + $0x190] sm:$0xff]
      %v7188 = vld [vmem:[%s7136 + $0x198] sm:$0xff]
      %v7189 = vld [vmem:[%s7136 + $0x1a0] sm:$0xff]
      %v7190 = vld [vmem:[%s7136 + $0x1a8] sm:$0xff]
      %v7191 = vld [vmem:[%s7136 + $0x1b0] sm:$0xff]
      %v7192 = vld [vmem:[%s7136 + $0x1b8] sm:$0xff]
      %v7193 = vld [vmem:[%s7136 + $0x1c0] sm:$0xff]
      %v7194 = vld [vmem:[%s7136 + $0x1c8] sm:$0xff]
      %v7195 = vld [vmem:[%s7136 + $0x1d0] sm:$0xff]
      %v7196 = vld [vmem:[%s7136 + $0x1d8] sm:$0xff]
      %v7197 = vld [vmem:[%s7136 + $0x1e0] sm:$0xff]
      %v7198 = vld [vmem:[%s7136 + $0x1e8] sm:$0xff]
      %v7199 = vld [vmem:[%s7136 + $0x1f0] sm:$0xff]
      %v7200 = vld [vmem:[%s7136 + $0x1f8] sm:$0xff]
      %v7201 = vrot.slane %v4414, 3
      %v7202 = vrot.slane %v4415, 3
      %7205 = vxpose.xlu0.c.b16.start [1/8] %v7201, 128
      %7206 = vxpose.xlu0.c.b16.cont [2/8] 0, 128
      %7207 = vxpose.xlu0.c.b16.cont [3/8] 0, 128
      %7208 = vxpose.xlu0.c.b16.cont [4/8] 0, 128
      %7209 = vxpose.xlu0.c.b16.cont [5/8] 0, 128
      %7210 = vxpose.xlu0.c.b16.cont [6/8] 0, 128
      %7211 = vxpose.xlu0.c.b16.cont [7/8] 0, 128
      %7212 = vxpose.xlu0.c.b16.end [8/8] 0, 128
      %v7213 = vpop.trf.xlu0
      %v7214 = vpop.trf.xlu0
      %v7215 = vpop.trf.xlu0
      %v7216 = vpop.trf.xlu0
      %v7217 = vpop.trf.xlu0
      %v7218 = vpop.trf.xlu0
      %v7219 = vpop.trf.xlu0
      %v7220 = vpop.trf.xlu0
      %7221 = vxpose.xlu0.c.b16.start [1/8] %v7202, 128
      %7222 = vxpose.xlu0.c.b16.cont [2/8] 0, 128
      %7223 = vxpose.xlu0.c.b16.cont [3/8] 0, 128
      %7224 = vxpose.xlu0.c.b16.cont [4/8] 0, 128
      %7225 = vxpose.xlu0.c.b16.cont [5/8] 0, 128
      %7226 = vxpose.xlu0.c.b16.cont [6/8] 0, 128
      %7227 = vxpose.xlu0.c.b16.cont [7/8] 0, 128
      %7228 = vxpose.xlu0.c.b16.end [8/8] 0, 128
      %v7229 = vpop.trf.xlu0
      %v7230 = vpop.trf.xlu0
      %v7231 = vpop.trf.xlu0
      %v7232 = vpop.trf.xlu0
      %v7233 = vpop.trf.xlu0
      %v7234 = vpop.trf.xlu0
      %v7235 = vpop.trf.xlu0
      %v7236 = vpop.trf.xlu0
      %v7237 = vrot.slane %v4416, 3
      %v7238 = vrot.slane %v4417, 3
      %v7240 = vsel %vm719, %v7213, 0
      %v7243 = vsel %vm719, %v7214, 0
      %v7246 = vsel %vm719, %v7215, 0
      %v7249 = vsel %vm719, %v7216, 0
      %v7252 = vsel %vm719, %v7217, 0
      %v7255 = vsel %vm719, %v7218, 0
      %v7258 = vsel %vm719, %v7219, 0
      %v7261 = vsel %vm719, %v7220, 0
      %v7264 = vsel %vm719, %v7229, 0
      %v7267 = vsel %vm719, %v7230, 0
      %v7270 = vsel %vm719, %v7231, 0
      %v7273 = vsel %vm719, %v7232, 0
      %v7276 = vsel %vm719, %v7233, 0
      %v7279 = vsel %vm719, %v7234, 0
      %v7282 = vsel %vm719, %v7235, 0
      %v7285 = vsel %vm719, %v7236, 0
      %v7288 = vsel %vm768, %v7237, 0
      %v7291 = vsel %vm768, %v7238, 0
      %7293 = vmatprep.subr.bf16.mxu0 %v7291
      %7294 = vmatpush1.bf16.msra.mxu0 %v7288
      %7295 = vmatprep.subr.bf16.mxu0 0
      %7296 = vmatpush1.bf16.msra.mxu0 0
      %7297 = vmatprep.subr.bf16.mxu0 0
      %7298 = vmatpush1.bf16.msra.mxu0 0
      %7299 = vmatprep.subr.bf16.mxu0 0
      %7300 = vmatpush1.bf16.msra.mxu0 0
      %7301 = vmatprep.subr.bf16.mxu0 0
      %7302 = vmatpush1.bf16.msra.mxu0 0
      %7303 = vmatprep.subr.bf16.mxu0 0
      %7304 = vmatpush1.bf16.msra.mxu0 0
      %7305 = vmatprep.subr.bf16.mxu0 0
      %7306 = vmatpush1.bf16.msra.mxu0 0
      %7307 = vmatprep.subr.bf16.mxu0 0
      %7308 = vmatpush1.bf16.msra.mxu0 0
      %7309 = vmatprep.subr.bf16.mxu0 0
      %7310 = vmatpush1.bf16.msra.mxu0 0
      %7311 = vmatprep.subr.bf16.mxu0 0
      %7312 = vmatpush1.bf16.msra.mxu0 0
      %7313 = vmatprep.subr.bf16.mxu0 0
      %7314 = vmatpush1.bf16.msra.mxu0 0
      %7315 = vmatprep.subr.bf16.mxu0 0
      %7316 = vmatpush1.bf16.msra.mxu0 0
      %7317 = vmatprep.subr.bf16.mxu0 0
      %7318 = vmatpush1.bf16.msra.mxu0 0
      %7319 = vmatprep.subr.bf16.mxu0 0
      %7320 = vmatpush1.bf16.msra.mxu0 0
      %7321 = vmatprep.subr.bf16.mxu0 0
      %7322 = vmatpush1.bf16.msra.mxu0 0
      %7323 = vmatprep.subr.bf16.mxu0 0
      %7324 = vmatpush1.bf16.msra.mxu0 0
      %7325 = vmatprep.mubr.bf16.mxu0 0
      %7326 = vmatmul.mubr.bf16.gmra.mrb[0].mxu0 %v7240
      %v7327 = vpop.f32.mrb[0].mxu0
      %v7328 = vadd.f32 %v7137, %v7327
      %v7329 = vpop.f32.mrb[0].mxu0
      %v7330 = vadd.f32 %v7138, %v7329
      %v7331 = vpop.f32.mrb[0].mxu0
      %v7332 = vadd.f32 %v7139, %v7331
      %v7333 = vpop.f32.mrb[0].mxu0
      %v7334 = vadd.f32 %v7140, %v7333
      %7335 = vmatprep.mubr.bf16.mxu0 0
      %7336 = vmatmul.mubr.bf16.gmra.mrb[0].mxu0 %v7243
      %v7337 = vpop.f32.mrb[0].mxu0
      %v7338 = vadd.f32 %v7141, %v7337
      %v7339 = vpop.f32.mrb[0].mxu0
      %v7340 = vadd.f32 %v7142, %v7339
      %v7341 = vpop.f32.mrb[0].mxu0
      %v7342 = vadd.f32 %v7143, %v7341
      %v7343 = vpop.f32.mrb[0].mxu0
      %v7344 = vadd.f32 %v7144, %v7343
      %7345 = vmatprep.mubr.bf16.mxu0 0
      %7346 = vmatmul.mubr.bf16.gmra.mrb[0].mxu0 %v7246
      %v7347 = vpop.f32.mrb[0].mxu0
      %v7348 = vadd.f32 %v7145, %v7347
      %v7349 = vpop.f32.mrb[0].mxu0
      %v7350 = vadd.f32 %v7146, %v7349
      %v7351 = vpop.f32.mrb[0].mxu0
      %v7352 = vadd.f32 %v7147, %v7351
      %v7353 = vpop.f32.mrb[0].mxu0
      %v7354 = vadd.f32 %v7148, %v7353
      %7355 = vmatprep.mubr.bf16.mxu0 0
      %7356 = vmatmul.mubr.bf16.gmra.mrb[0].mxu0 %v7249
      %v7357 = vpop.f32.mrb[0].mxu0
      %v7358 = vadd.f32 %v7149, %v7357
      %v7359 = vpop.f32.mrb[0].mxu0
      %v7360 = vadd.f32 %v7150, %v7359
      %v7361 = vpop.f32.mrb[0].mxu0
      %v7362 = vadd.f32 %v7151, %v7361
      %v7363 = vpop.f32.mrb[0].mxu0
      %v7364 = vadd.f32 %v7152, %v7363
      %7365 = vmatprep.mubr.bf16.mxu0 0
      %7366 = vmatmul.mubr.bf16.gmra.mrb[0].mxu0 %v7252
      %v7367 = vpop.f32.mrb[0].mxu0
      %v7368 = vadd.f32 %v7153, %v7367
      %v7369 = vpop.f32.mrb[0].mxu0
      %v7370 = vadd.f32 %v7154, %v7369
      %v7371 = vpop.f32.mrb[0].mxu0
      %v7372 = vadd.f32 %v7155, %v7371
      %v7373 = vpop.f32.mrb[0].mxu0
      %v7374 = vadd.f32 %v7156, %v7373
      %7375 = vmatprep.mubr.bf16.mxu0 0
      %7376 = vmatmul.mubr.bf16.gmra.mrb[0].mxu0 %v7255
      %v7377 = vpop.f32.mrb[0].mxu0
      %v7378 = vadd.f32 %v7157, %v7377
      %v7379 = vpop.f32.mrb[0].mxu0
      %v7380 = vadd.f32 %v7158, %v7379
      %v7381 = vpop.f32.mrb[0].mxu0
      %v7382 = vadd.f32 %v7159, %v7381
      %v7383 = vpop.f32.mrb[0].mxu0
      %v7384 = vadd.f32 %v7160, %v7383
      %7385 = vmatprep.mubr.bf16.mxu0 0
      %7386 = vmatmul.mubr.bf16.gmra.mrb[0].mxu0 %v7258
      %v7387 = vpop.f32.mrb[0].mxu0
      %v7388 = vadd.f32 %v7161, %v7387
      %v7389 = vpop.f32.mrb[0].mxu0
      %v7390 = vadd.f32 %v7162, %v7389
      %v7391 = vpop.f32.mrb[0].mxu0
      %v7392 = vadd.f32 %v7163, %v7391
      %v7393 = vpop.f32.mrb[0].mxu0
      %v7394 = vadd.f32 %v7164, %v7393
      %7395 = vmatprep.mubr.bf16.mxu0 0
      %7396 = vmatmul.mubr.bf16.gmra.mrb[0].mxu0 %v7261
      %v7397 = vpop.f32.mrb[0].mxu0
      %v7398 = vadd.f32 %v7165, %v7397
      %v7399 = vpop.f32.mrb[0].mxu0
      %v7400 = vadd.f32 %v7166, %v7399
      %v7401 = vpop.f32.mrb[0].mxu0
      %v7402 = vadd.f32 %v7167, %v7401
      %v7403 = vpop.f32.mrb[0].mxu0
      %v7404 = vadd.f32 %v7168, %v7403
      %7405 = vmatprep.mubr.bf16.mxu0 0
      %7406 = vmatmul.mubr.bf16.gmra.mrb[0].mxu0 %v7264
      %v7407 = vpop.f32.mrb[0].mxu0
      %v7408 = vadd.f32 %v7169, %v7407
      %v7409 = vpop.f32.mrb[0].mxu0
      %v7410 = vadd.f32 %v7170, %v7409
      %v7411 = vpop.f32.mrb[0].mxu0
      %v7412 = vadd.f32 %v7171, %v7411
      %v7413 = vpop.f32.mrb[0].mxu0
      %v7414 = vadd.f32 %v7172, %v7413
      %7415 = vmatprep.mubr.bf16.mxu0 0
      %7416 = vmatmul.mubr.bf16.gmra.mrb[0].mxu0 %v7267
      %v7417 = vpop.f32.mrb[0].mxu0
      %v7418 = vadd.f32 %v7173, %v7417
      %v7419 = vpop.f32.mrb[0].mxu0
      %v7420 = vadd.f32 %v7174, %v7419
      %v7421 = vpop.f32.mrb[0].mxu0
      %v7422 = vadd.f32 %v7175, %v7421
      %v7423 = vpop.f32.mrb[0].mxu0
      %v7424 = vadd.f32 %v7176, %v7423
      %7425 = vmatprep.mubr.bf16.mxu0 0
      %7426 = vmatmul.mubr.bf16.gmra.mrb[0].mxu0 %v7270
      %v7427 = vpop.f32.mrb[0].mxu0
      %v7428 = vadd.f32 %v7177, %v7427
      %v7429 = vpop.f32.mrb[0].mxu0
      %v7430 = vadd.f32 %v7178, %v7429
      %v7431 = vpop.f32.mrb[0].mxu0
      %v7432 = vadd.f32 %v7179, %v7431
      %v7433 = vpop.f32.mrb[0].mxu0
      %v7434 = vadd.f32 %v7180, %v7433
      %7435 = vmatprep.mubr.bf16.mxu0 0
      %7436 = vmatmul.mubr.bf16.gmra.mrb[0].mxu0 %v7273
      %v7437 = vpop.f32.mrb[0].mxu0
      %v7438 = vadd.f32 %v7181, %v7437
      %v7439 = vpop.f32.mrb[0].mxu0
      %v7440 = vadd.f32 %v7182, %v7439
      %v7441 = vpop.f32.mrb[0].mxu0
      %v7442 = vadd.f32 %v7183, %v7441
      %v7443 = vpop.f32.mrb[0].mxu0
      %v7444 = vadd.f32 %v7184, %v7443
      %7445 = vmatprep.mubr.bf16.mxu0 0
      %7446 = vmatmul.mubr.bf16.gmra.mrb[0].mxu0 %v7276
      %v7447 = vpop.f32.mrb[0].mxu0
      %v7448 = vadd.f32 %v7185, %v7447
      %v7449 = vpop.f32.mrb[0].mxu0
      %v7450 = vadd.f32 %v7186, %v7449
      %v7451 = vpop.f32.mrb[0].mxu0
      %v7452 = vadd.f32 %v7187, %v7451
      %v7453 = vpop.f32.mrb[0].mxu0
      %v7454 = vadd.f32 %v7188, %v7453
      %7455 = vmatprep.mubr.bf16.mxu0 0
      %7456 = vmatmul.mubr.bf16.gmra.mrb[0].mxu0 %v7279
      %v7457 = vpop.f32.mrb[0].mxu0
      %v7458 = vadd.f32 %v7189, %v7457
      %v7459 = vpop.f32.mrb[0].mxu0
      %v7460 = vadd.f32 %v7190, %v7459
      %v7461 = vpop.f32.mrb[0].mxu0
      %v7462 = vadd.f32 %v7191, %v7461
      %v7463 = vpop.f32.mrb[0].mxu0
      %v7464 = vadd.f32 %v7192, %v7463
      %7465 = vmatprep.mubr.bf16.mxu0 0
      %7466 = vmatmul.mubr.bf16.gmra.mrb[0].mxu0 %v7282
      %v7467 = vpop.f32.mrb[0].mxu0
      %v7468 = vadd.f32 %v7193, %v7467
      %v7469 = vpop.f32.mrb[0].mxu0
      %v7470 = vadd.f32 %v7194, %v7469
      %v7471 = vpop.f32.mrb[0].mxu0
      %v7472 = vadd.f32 %v7195, %v7471
      %v7473 = vpop.f32.mrb[0].mxu0
      %v7474 = vadd.f32 %v7196, %v7473
      %7475 = vmatprep.mubr.bf16.mxu0 0
      %7476 = vmatmul.mubr.bf16.gmra.mrb[0].mxu0 %v7285
      %v7477 = vpop.f32.mrb[0].mxu0
      %v7478 = vadd.f32 %v7197, %v7477
      %v7479 = vpop.f32.mrb[0].mxu0
      %v7480 = vadd.f32 %v7198, %v7479
      %v7481 = vpop.f32.mrb[0].mxu0
      %v7482 = vadd.f32 %v7199, %v7481
      %v7483 = vpop.f32.mrb[0].mxu0
      %v7484 = vadd.f32 %v7200, %v7483
      %7485 = vdwg.mxu0
      %v7486 = vmax.f32 %v7328, %v7330
      %7487 = vmax.xlane.f32.xlu0 %v7486
      %v7488 = vpop.xlane.xlu0 %7487
      %v7489 = vmax.f32 %v7332, %v7334
      %7490 = vmax.xlane.f32.xlu0 %v7489
      %v7491 = vpop.xlane.xlu0 %7490
      %v7492 = vmax.f32 %v7338, %v7340
      %7493 = vmax.xlane.f32.xlu0 %v7492
      %v7494 = vpop.xlane.xlu0 %7493
      %v7495 = vmax.f32 %v7342, %v7344
      %7496 = vmax.xlane.f32.xlu0 %v7495
      %v7497 = vpop.xlane.xlu0 %7496
      %v7498 = vmax.f32 %v7348, %v7350
      %7499 = vmax.xlane.f32.xlu0 %v7498
      %v7500 = vpop.xlane.xlu0 %7499
      %v7501 = vmax.f32 %v7352, %v7354
      %7502 = vmax.xlane.f32.xlu0 %v7501
      %v7503 = vpop.xlane.xlu0 %7502
      %v7504 = vmax.f32 %v7358, %v7360
      %7505 = vmax.xlane.f32.xlu0 %v7504
      %v7506 = vpop.xlane.xlu0 %7505
      %v7507 = vmax.f32 %v7362, %v7364
      %7508 = vmax.xlane.f32.xlu0 %v7507
      %v7509 = vpop.xlane.xlu0 %7508
      %v7510 = vmax.f32 %v7368, %v7370
      %7511 = vmax.xlane.f32.xlu0 %v7510
      %v7512 = vpop.xlane.xlu0 %7511
      %v7513 = vmax.f32 %v7372, %v7374
      %7514 = vmax.xlane.f32.xlu0 %v7513
      %v7515 = vpop.xlane.xlu0 %7514
      %v7516 = vmax.f32 %v7378, %v7380
      %7517 = vmax.xlane.f32.xlu0 %v7516
      %v7518 = vpop.xlane.xlu0 %7517
      %v7519 = vmax.f32 %v7382, %v7384
      %7520 = vmax.xlane.f32.xlu0 %v7519
      %v7521 = vpop.xlane.xlu0 %7520
      %v7522 = vmax.f32 %v7388, %v7390
      %7523 = vmax.xlane.f32.xlu0 %v7522
      %v7524 = vpop.xlane.xlu0 %7523
      %v7525 = vmax.f32 %v7392, %v7394
      %7526 = vmax.xlane.f32.xlu0 %v7525
      %v7527 = vpop.xlane.xlu0 %7526
      %v7528 = vmax.f32 %v7398, %v7400
      %7529 = vmax.xlane.f32.xlu0 %v7528
      %v7530 = vpop.xlane.xlu0 %7529
      %v7531 = vmax.f32 %v7402, %v7404
      %7532 = vmax.xlane.f32.xlu0 %v7531
      %v7533 = vpop.xlane.xlu0 %7532
      %v7534 = vmax.f32 %v7408, %v7410
      %7535 = vmax.xlane.f32.xlu0 %v7534
      %v7536 = vpop.xlane.xlu0 %7535
      %v7537 = vmax.f32 %v7412, %v7414
      %7538 = vmax.xlane.f32.xlu0 %v7537
      %v7539 = vpop.xlane.xlu0 %7538
      %v7540 = vmax.f32 %v7418, %v7420
      %7541 = vmax.xlane.f32.xlu0 %v7540
      %v7542 = vpop.xlane.xlu0 %7541
      %v7543 = vmax.f32 %v7422, %v7424
      %7544 = vmax.xlane.f32.xlu0 %v7543
      %v7545 = vpop.xlane.xlu0 %7544
      %v7546 = vmax.f32 %v7428, %v7430
      %7547 = vmax.xlane.f32.xlu0 %v7546
      %v7548 = vpop.xlane.xlu0 %7547
      %v7549 = vmax.f32 %v7432, %v7434
      %7550 = vmax.xlane.f32.xlu0 %v7549
      %v7551 = vpop.xlane.xlu0 %7550
      %v7552 = vmax.f32 %v7438, %v7440
      %7553 = vmax.xlane.f32.xlu0 %v7552
      %v7554 = vpop.xlane.xlu0 %7553
      %v7555 = vmax.f32 %v7442, %v7444
      %7556 = vmax.xlane.f32.xlu0 %v7555
      %v7557 = vpop.xlane.xlu0 %7556
      %v7558 = vmax.f32 %v7448, %v7450
      %7559 = vmax.xlane.f32.xlu0 %v7558
      %v7560 = vpop.xlane.xlu0 %7559
      %v7561 = vmax.f32 %v7452, %v7454
      %7562 = vmax.xlane.f32.xlu0 %v7561
      %v7563 = vpop.xlane.xlu0 %7562
      %v7564 = vmax.f32 %v7458, %v7460
      %7565 = vmax.xlane.f32.xlu0 %v7564
      %v7566 = vpop.xlane.xlu0 %7565
      %v7567 = vmax.f32 %v7462, %v7464
      %7568 = vmax.xlane.f32.xlu0 %v7567
      %v7569 = vpop.xlane.xlu0 %7568
      %v7570 = vmax.f32 %v7468, %v7470
      %7571 = vmax.xlane.f32.xlu0 %v7570
      %v7572 = vpop.xlane.xlu0 %7571
      %v7573 = vmax.f32 %v7472, %v7474
      %7574 = vmax.xlane.f32.xlu0 %v7573
      %v7575 = vpop.xlane.xlu0 %7574
      %v7576 = vmax.f32 %v7478, %v7480
      %7577 = vmax.xlane.f32.xlu0 %v7576
      %v7578 = vpop.xlane.xlu0 %7577
      %v7579 = vmax.f32 %v7482, %v7484
      %7580 = vmax.xlane.f32.xlu0 %v7579
      %v7581 = vpop.xlane.xlu0 %7580
      %v7582 = vsub.f32 %v7328, %v7488
      %v7583 = vsub.f32 %v7330, %v7488
      %v7584 = vsub.f32 %v7332, %v7491
      %v7585 = vsub.f32 %v7334, %v7491
      %v7586 = vsub.f32 %v7338, %v7494
      %v7587 = vsub.f32 %v7340, %v7494
      %v7588 = vsub.f32 %v7342, %v7497
      %v7589 = vsub.f32 %v7344, %v7497
      %v7590 = vsub.f32 %v7348, %v7500
      %v7591 = vsub.f32 %v7350, %v7500
      %v7592 = vsub.f32 %v7352, %v7503
      %v7593 = vsub.f32 %v7354, %v7503
      %v7594 = vsub.f32 %v7358, %v7506
      %v7595 = vsub.f32 %v7360, %v7506
      %v7596 = vsub.f32 %v7362, %v7509
      %v7597 = vsub.f32 %v7364, %v7509
      %v7598 = vsub.f32 %v7368, %v7512
      %v7599 = vsub.f32 %v7370, %v7512
      %v7600 = vsub.f32 %v7372, %v7515
      %v7601 = vsub.f32 %v7374, %v7515
      %v7602 = vsub.f32 %v7378, %v7518
      %v7603 = vsub.f32 %v7380, %v7518
      %v7604 = vsub.f32 %v7382, %v7521
      %v7605 = vsub.f32 %v7384, %v7521
      %v7606 = vsub.f32 %v7388, %v7524
      %v7607 = vsub.f32 %v7390, %v7524
      %v7608 = vsub.f32 %v7392, %v7527
      %v7609 = vsub.f32 %v7394, %v7527
      %v7610 = vsub.f32 %v7398, %v7530
      %v7611 = vsub.f32 %v7400, %v7530
      %v7612 = vsub.f32 %v7402, %v7533
      %v7613 = vsub.f32 %v7404, %v7533
      %v7614 = vsub.f32 %v7408, %v7536
      %v7615 = vsub.f32 %v7410, %v7536
      %v7616 = vsub.f32 %v7412, %v7539
      %v7617 = vsub.f32 %v7414, %v7539
      %v7618 = vsub.f32 %v7418, %v7542
      %v7619 = vsub.f32 %v7420, %v7542
      %v7620 = vsub.f32 %v7422, %v7545
      %v7621 = vsub.f32 %v7424, %v7545
      %v7622 = vsub.f32 %v7428, %v7548
      %v7623 = vsub.f32 %v7430, %v7548
      %v7624 = vsub.f32 %v7432, %v7551
      %v7625 = vsub.f32 %v7434, %v7551
      %v7626 = vsub.f32 %v7438, %v7554
      %v7627 = vsub.f32 %v7440, %v7554
      %v7628 = vsub.f32 %v7442, %v7557
      %v7629 = vsub.f32 %v7444, %v7557
      %v7630 = vsub.f32 %v7448, %v7560
      %v7631 = vsub.f32 %v7450, %v7560
      %v7632 = vsub.f32 %v7452, %v7563
      %v7633 = vsub.f32 %v7454, %v7563
      %v7634 = vsub.f32 %v7458, %v7566
      %v7635 = vsub.f32 %v7460, %v7566
      %v7636 = vsub.f32 %v7462, %v7569
      %v7637 = vsub.f32 %v7464, %v7569
      %v7638 = vsub.f32 %v7468, %v7572
      %v7639 = vsub.f32 %v7470, %v7572
      %v7640 = vsub.f32 %v7472, %v7575
      %v7641 = vsub.f32 %v7474, %v7575
      %v7642 = vsub.f32 %v7478, %v7578
      %v7643 = vsub.f32 %v7480, %v7578
      %v7644 = vsub.f32 %v7482, %v7581
      %v7645 = vsub.f32 %v7484, %v7581
      %v7646 = vmul.f32 %v7582, 1.442695
      %v7647 = vpow.pop %v7646
      %v7648 = vmul.f32 %v7583, 1.442695
      %v7649 = vpow.pop %v7648
      %v7650 = vmul.f32 %v7584, 1.442695
      %v7651 = vpow.pop %v7650
      %v7652 = vmul.f32 %v7585, 1.442695
      %v7653 = vpow.pop %v7652
      %v7654 = vmul.f32 %v7586, 1.442695
      %v7655 = vpow.pop %v7654
      %v7656 = vmul.f32 %v7587, 1.442695
      %v7657 = vpow.pop %v7656
      %v7658 = vmul.f32 %v7588, 1.442695
      %v7659 = vpow.pop %v7658
      %v7660 = vmul.f32 %v7589, 1.442695
      %v7661 = vpow.pop %v7660
      %v7662 = vmul.f32 %v7590, 1.442695
      %v7663 = vpow.pop %v7662
      %v7664 = vmul.f32 %v7591, 1.442695
      %v7665 = vpow.pop %v7664
      %v7666 = vmul.f32 %v7592, 1.442695
      %v7667 = vpow.pop %v7666
      %v7668 = vmul.f32 %v7593, 1.442695
      %v7669 = vpow.pop %v7668
      %v7670 = vmul.f32 %v7594, 1.442695
      %v7671 = vpow.pop %v7670
      %v7672 = vmul.f32 %v7595, 1.442695
      %v7673 = vpow.pop %v7672
      %v7674 = vmul.f32 %v7596, 1.442695
      %v7675 = vpow.pop %v7674
      %v7676 = vmul.f32 %v7597, 1.442695
      %v7677 = vpow.pop %v7676
      %v7678 = vmul.f32 %v7598, 1.442695
      %v7679 = vpow.pop %v7678
      %v7680 = vmul.f32 %v7599, 1.442695
      %v7681 = vpow.pop %v7680
      %v7682 = vmul.f32 %v7600, 1.442695
      %v7683 = vpow.pop %v7682
      %v7684 = vmul.f32 %v7601, 1.442695
      %v7685 = vpow.pop %v7684
      %v7686 = vmul.f32 %v7602, 1.442695
      %v7687 = vpow.pop %v7686
      %v7688 = vmul.f32 %v7603, 1.442695
      %v7689 = vpow.pop %v7688
      %v7690 = vmul.f32 %v7604, 1.442695
      %v7691 = vpow.pop %v7690
      %v7692 = vmul.f32 %v7605, 1.442695
      %v7693 = vpow.pop %v7692
      %v7694 = vmul.f32 %v7606, 1.442695
      %v7695 = vpow.pop %v7694
      %v7696 = vmul.f32 %v7607, 1.442695
      %v7697 = vpow.pop %v7696
      %v7698 = vmul.f32 %v7608, 1.442695
      %v7699 = vpow.pop %v7698
      %v7700 = vmul.f32 %v7609, 1.442695
      %v7701 = vpow.pop %v7700
      %v7702 = vmul.f32 %v7610, 1.442695
      %v7703 = vpow.pop %v7702
      %v7704 = vmul.f32 %v7611, 1.442695
      %v7705 = vpow.pop %v7704
      %v7706 = vmul.f32 %v7612, 1.442695
      %v7707 = vpow.pop %v7706
      %v7708 = vmul.f32 %v7613, 1.442695
      %v7709 = vpow.pop %v7708
      %v7710 = vmul.f32 %v7614, 1.442695
      %v7711 = vpow.pop %v7710
      %v7712 = vmul.f32 %v7615, 1.442695
      %v7713 = vpow.pop %v7712
      %v7714 = vmul.f32 %v7616, 1.442695
      %v7715 = vpow.pop %v7714
      %v7716 = vmul.f32 %v7617, 1.442695
      %v7717 = vpow.pop %v7716
      %v7718 = vmul.f32 %v7618, 1.442695
      %v7719 = vpow.pop %v7718
      %v7720 = vmul.f32 %v7619, 1.442695
      %v7721 = vpow.pop %v7720
      %v7722 = vmul.f32 %v7620, 1.442695
      %v7723 = vpow.pop %v7722
      %v7724 = vmul.f32 %v7621, 1.442695
      %v7725 = vpow.pop %v7724
      %v7726 = vmul.f32 %v7622, 1.442695
      %v7727 = vpow.pop %v7726
      %v7728 = vmul.f32 %v7623, 1.442695
      %v7729 = vpow.pop %v7728
      %v7730 = vmul.f32 %v7624, 1.442695
      %v7731 = vpow.pop %v7730
      %v7732 = vmul.f32 %v7625, 1.442695
      %v7733 = vpow.pop %v7732
      %v7734 = vmul.f32 %v7626, 1.442695
      %v7735 = vpow.pop %v7734
      %v7736 = vmul.f32 %v7627, 1.442695
      %v7737 = vpow.pop %v7736
      %v7738 = vmul.f32 %v7628, 1.442695
      %v7739 = vpow.pop %v7738
      %v7740 = vmul.f32 %v7629, 1.442695
      %v7741 = vpow.pop %v7740
      %v7742 = vmul.f32 %v7630, 1.442695
      %v7743 = vpow.pop %v7742
      %v7744 = vmul.f32 %v7631, 1.442695
      %v7745 = vpow.pop %v7744
      %v7746 = vmul.f32 %v7632, 1.442695
      %v7747 = vpow.pop %v7746
      %v7748 = vmul.f32 %v7633, 1.442695
      %v7749 = vpow.pop %v7748
      %v7750 = vmul.f32 %v7634, 1.442695
      %v7751 = vpow.pop %v7750
      %v7752 = vmul.f32 %v7635, 1.442695
      %v7753 = vpow.pop %v7752
      %v7754 = vmul.f32 %v7636, 1.442695
      %v7755 = vpow.pop %v7754
      %v7756 = vmul.f32 %v7637, 1.442695
      %v7757 = vpow.pop %v7756
      %v7758 = vmul.f32 %v7638, 1.442695
      %v7759 = vpow.pop %v7758
      %v7760 = vmul.f32 %v7639, 1.442695
      %v7761 = vpow.pop %v7760
      %v7762 = vmul.f32 %v7640, 1.442695
      %v7763 = vpow.pop %v7762
      %v7764 = vmul.f32 %v7641, 1.442695
      %v7765 = vpow.pop %v7764
      %v7766 = vmul.f32 %v7642, 1.442695
      %v7767 = vpow.pop %v7766
      %v7768 = vmul.f32 %v7643, 1.442695
      %v7769 = vpow.pop %v7768
      %v7770 = vmul.f32 %v7644, 1.442695
      %v7771 = vpow.pop %v7770
      %v7772 = vmul.f32 %v7645, 1.442695
      %v7773 = vpow.pop %v7772
      %v7774 = vadd.f32 %v7647, %v7649
      %7775 = vadd.xlane.f32.xlu0 %v7774
      %v7776 = vpop.xlane.xlu0 %7775
      %v7777 = vadd.f32 %v7651, %v7653
      %7778 = vadd.xlane.f32.xlu0 %v7777
      %v7779 = vpop.xlane.xlu0 %7778
      %v7780 = vadd.f32 %v7655, %v7657
      %7781 = vadd.xlane.f32.xlu0 %v7780
      %v7782 = vpop.xlane.xlu0 %7781
      %v7783 = vadd.f32 %v7659, %v7661
      %7784 = vadd.xlane.f32.xlu0 %v7783
      %v7785 = vpop.xlane.xlu0 %7784
      %v7786 = vadd.f32 %v7663, %v7665
      %7787 = vadd.xlane.f32.xlu0 %v7786
      %v7788 = vpop.xlane.xlu0 %7787
      %v7789 = vadd.f32 %v7667, %v7669
      %7790 = vadd.xlane.f32.xlu0 %v7789
      %v7791 = vpop.xlane.xlu0 %7790
      %v7792 = vadd.f32 %v7671, %v7673
      %7793 = vadd.xlane.f32.xlu0 %v7792
      %v7794 = vpop.xlane.xlu0 %7793
      %v7795 = vadd.f32 %v7675, %v7677
      %7796 = vadd.xlane.f32.xlu0 %v7795
      %v7797 = vpop.xlane.xlu0 %7796
      %v7798 = vadd.f32 %v7679, %v7681
      %7799 = vadd.xlane.f32.xlu0 %v7798
      %v7800 = vpop.xlane.xlu0 %7799
      %v7801 = vadd.f32 %v7683, %v7685
      %7802 = vadd.xlane.f32.xlu0 %v7801
      %v7803 = vpop.xlane.xlu0 %7802
      %v7804 = vadd.f32 %v7687, %v7689
      %7805 = vadd.xlane.f32.xlu0 %v7804
      %v7806 = vpop.xlane.xlu0 %7805
      %v7807 = vadd.f32 %v7691, %v7693
      %7808 = vadd.xlane.f32.xlu0 %v7807
      %v7809 = vpop.xlane.xlu0 %7808
      %v7810 = vadd.f32 %v7695, %v7697
      %7811 = vadd.xlane.f32.xlu0 %v7810
      %v7812 = vpop.xlane.xlu0 %7811
      %v7813 = vadd.f32 %v7699, %v7701
      %7814 = vadd.xlane.f32.xlu0 %v7813
      %v7815 = vpop.xlane.xlu0 %7814
      %v7816 = vadd.f32 %v7703, %v7705
      %7817 = vadd.xlane.f32.xlu0 %v7816
      %v7818 = vpop.xlane.xlu0 %7817
      %v7819 = vadd.f32 %v7707, %v7709
      %7820 = vadd.xlane.f32.xlu0 %v7819
      %v7821 = vpop.xlane.xlu0 %7820
      %v7822 = vadd.f32 %v7711, %v7713
      %7823 = vadd.xlane.f32.xlu0 %v7822
      %v7824 = vpop.xlane.xlu0 %7823
      %v7825 = vadd.f32 %v7715, %v7717
      %7826 = vadd.xlane.f32.xlu0 %v7825
      %v7827 = vpop.xlane.xlu0 %7826
      %v7828 = vadd.f32 %v7719, %v7721
      %7829 = vadd.xlane.f32.xlu0 %v7828
      %v7830 = vpop.xlane.xlu0 %7829
      %v7831 = vadd.f32 %v7723, %v7725
      %7832 = vadd.xlane.f32.xlu0 %v7831
      %v7833 = vpop.xlane.xlu0 %7832
      %v7834 = vadd.f32 %v7727, %v7729
      %7835 = vadd.xlane.f32.xlu0 %v7834
      %v7836 = vpop.xlane.xlu0 %7835
      %v7837 = vadd.f32 %v7731, %v7733
      %7838 = vadd.xlane.f32.xlu0 %v7837
      %v7839 = vpop.xlane.xlu0 %7838
      %v7840 = vadd.f32 %v7735, %v7737
      %7841 = vadd.xlane.f32.xlu0 %v7840
      %v7842 = vpop.xlane.xlu0 %7841
      %v7843 = vadd.f32 %v7739, %v7741
      %7844 = vadd.xlane.f32.xlu0 %v7843
      %v7845 = vpop.xlane.xlu0 %7844
      %v7846 = vadd.f32 %v7743, %v7745
      %7847 = vadd.xlane.f32.xlu0 %v7846
      %v7848 = vpop.xlane.xlu0 %7847
      %v7849 = vadd.f32 %v7747, %v7749
      %7850 = vadd.xlane.f32.xlu0 %v7849
      %v7851 = vpop.xlane.xlu0 %7850
      %v7852 = vadd.f32 %v7751, %v7753
      %7853 = vadd.xlane.f32.xlu0 %v7852
      %v7854 = vpop.xlane.xlu0 %7853
      %v7855 = vadd.f32 %v7755, %v7757
      %7856 = vadd.xlane.f32.xlu0 %v7855
      %v7857 = vpop.xlane.xlu0 %7856
      %v7858 = vadd.f32 %v7759, %v7761
      %7859 = vadd.xlane.f32.xlu0 %v7858
      %v7860 = vpop.xlane.xlu0 %7859
      %v7861 = vadd.f32 %v7763, %v7765
      %7862 = vadd.xlane.f32.xlu0 %v7861
      %v7863 = vpop.xlane.xlu0 %7862
      %v7864 = vadd.f32 %v7767, %v7769
      %7865 = vadd.xlane.f32.xlu0 %v7864
      %v7866 = vpop.xlane.xlu0 %7865
      %v7867 = vadd.f32 %v7771, %v7773
      %7868 = vadd.xlane.f32.xlu0 %v7867
      %v7869 = vpop.xlane.xlu0 %7868
      %v7870 = vrcp.pop %v7776
      %v7871 = vrcp.pop %v7779
      %v7872 = vrcp.pop %v7782
      %v7873 = vrcp.pop %v7785
      %v7874 = vrcp.pop %v7788
      %v7875 = vrcp.pop %v7791
      %v7876 = vrcp.pop %v7794
      %v7877 = vrcp.pop %v7797
      %v7878 = vrcp.pop %v7800
      %v7879 = vrcp.pop %v7803
      %v7880 = vrcp.pop %v7806
      %v7881 = vrcp.pop %v7809
      %v7882 = vrcp.pop %v7812
      %v7883 = vrcp.pop %v7815
      %v7884 = vrcp.pop %v7818
      %v7885 = vrcp.pop %v7821
      %v7886 = vrcp.pop %v7824
      %v7887 = vrcp.pop %v7827
      %v7888 = vrcp.pop %v7830
      %v7889 = vrcp.pop %v7833
      %v7890 = vrcp.pop %v7836
      %v7891 = vrcp.pop %v7839
      %v7892 = vrcp.pop %v7842
      %v7893 = vrcp.pop %v7845
      %v7894 = vrcp.pop %v7848
      %v7895 = vrcp.pop %v7851
      %v7896 = vrcp.pop %v7854
      %v7897 = vrcp.pop %v7857
      %v7898 = vrcp.pop %v7860
      %v7899 = vrcp.pop %v7863
      %v7900 = vrcp.pop %v7866
      %v7901 = vrcp.pop %v7869
      %v7902 = vmul.f32 %v7647, %v7870
      %v7903 = vmul.f32 %v7649, %v7870
      %v7904 = vmul.f32 %v7651, %v7871
      %v7905 = vmul.f32 %v7653, %v7871
      %v7906 = vmul.f32 %v7655, %v7872
      %v7907 = vmul.f32 %v7657, %v7872
      %v7908 = vmul.f32 %v7659, %v7873
      %v7909 = vmul.f32 %v7661, %v7873
      %v7910 = vmul.f32 %v7663, %v7874
      %v7911 = vmul.f32 %v7665, %v7874
      %v7912 = vmul.f32 %v7667, %v7875
      %v7913 = vmul.f32 %v7669, %v7875
      %v7914 = vmul.f32 %v7671, %v7876
      %v7915 = vmul.f32 %v7673, %v7876
      %v7916 = vmul.f32 %v7675, %v7877
      %v7917 = vmul.f32 %v7677, %v7877
      %v7918 = vmul.f32 %v7679, %v7878
      %v7919 = vmul.f32 %v7681, %v7878
      %v7920 = vmul.f32 %v7683, %v7879
      %v7921 = vmul.f32 %v7685, %v7879
      %v7922 = vmul.f32 %v7687, %v7880
      %v7923 = vmul.f32 %v7689, %v7880
      %v7924 = vmul.f32 %v7691, %v7881
      %v7925 = vmul.f32 %v7693, %v7881
      %v7926 = vmul.f32 %v7695, %v7882
      %v7927 = vmul.f32 %v7697, %v7882
      %v7928 = vmul.f32 %v7699, %v7883
      %v7929 = vmul.f32 %v7701, %v7883
      %v7930 = vmul.f32 %v7703, %v7884
      %v7931 = vmul.f32 %v7705, %v7884
      %v7932 = vmul.f32 %v7707, %v7885
      %v7933 = vmul.f32 %v7709, %v7885
      %v7934 = vmul.f32 %v7711, %v7886
      %v7935 = vmul.f32 %v7713, %v7886
      %v7936 = vmul.f32 %v7715, %v7887
      %v7937 = vmul.f32 %v7717, %v7887
      %v7938 = vmul.f32 %v7719, %v7888
      %v7939 = vmul.f32 %v7721, %v7888
      %v7940 = vmul.f32 %v7723, %v7889
      %v7941 = vmul.f32 %v7725, %v7889
      %v7942 = vmul.f32 %v7727, %v7890
      %v7943 = vmul.f32 %v7729, %v7890
      %v7944 = vmul.f32 %v7731, %v7891
      %v7945 = vmul.f32 %v7733, %v7891
      %v7946 = vmul.f32 %v7735, %v7892
      %v7947 = vmul.f32 %v7737, %v7892
      %v7948 = vmul.f32 %v7739, %v7893
      %v7949 = vmul.f32 %v7741, %v7893
      %v7950 = vmul.f32 %v7743, %v7894
      %v7951 = vmul.f32 %v7745, %v7894
      %v7952 = vmul.f32 %v7747, %v7895
      %v7953 = vmul.f32 %v7749, %v7895
      %v7954 = vmul.f32 %v7751, %v7896
      %v7955 = vmul.f32 %v7753, %v7896
      %v7956 = vmul.f32 %v7755, %v7897
      %v7957 = vmul.f32 %v7757, %v7897
      %v7958 = vmul.f32 %v7759, %v7898
      %v7959 = vmul.f32 %v7761, %v7898
      %v7960 = vmul.f32 %v7763, %v7899
      %v7961 = vmul.f32 %v7765, %v7899
      %v7962 = vmul.f32 %v7767, %v7900
      %v7963 = vmul.f32 %v7769, %v7900
      %v7964 = vmul.f32 %v7771, %v7901
      %v7965 = vmul.f32 %v7773, %v7901
      %v7966 = vpack.c.bf16 %v7904, %v7902
      %v7967 = vpack.c.bf16 %v7905, %v7903
      %v7968 = vpack.c.bf16 %v7908, %v7906
      %v7969 = vpack.c.bf16 %v7909, %v7907
      %v7970 = vpack.c.bf16 %v7912, %v7910
      %v7971 = vpack.c.bf16 %v7913, %v7911
      %v7972 = vpack.c.bf16 %v7916, %v7914
      %v7973 = vpack.c.bf16 %v7917, %v7915
      %v7974 = vpack.c.bf16 %v7920, %v7918
      %v7975 = vpack.c.bf16 %v7921, %v7919
      %v7976 = vpack.c.bf16 %v7924, %v7922
      %v7977 = vpack.c.bf16 %v7925, %v7923
      %v7978 = vpack.c.bf16 %v7928, %v7926
      %v7979 = vpack.c.bf16 %v7929, %v7927
      %v7980 = vpack.c.bf16 %v7932, %v7930
      %v7981 = vpack.c.bf16 %v7933, %v7931
      %v7982 = vpack.c.bf16 %v7936, %v7934
      %v7983 = vpack.c.bf16 %v7937, %v7935
      %v7984 = vpack.c.bf16 %v7940, %v7938
      %v7985 = vpack.c.bf16 %v7941, %v7939
      %v7986 = vpack.c.bf16 %v7944, %v7942
      %v7987 = vpack.c.bf16 %v7945, %v7943
      %v7988 = vpack.c.bf16 %v7948, %v7946
      %v7989 = vpack.c.bf16 %v7949, %v7947
      %v7990 = vpack.c.bf16 %v7952, %v7950
      %v7991 = vpack.c.bf16 %v7953, %v7951
      %v7992 = vpack.c.bf16 %v7956, %v7954
      %v7993 = vpack.c.bf16 %v7957, %v7955
      %v7994 = vpack.c.bf16 %v7960, %v7958
      %v7995 = vpack.c.bf16 %v7961, %v7959
      %v7996 = vpack.c.bf16 %v7964, %v7962
      %v7997 = vpack.c.bf16 %v7965, %v7963
      %v7998 = vrot.slane %v4418, 3
      %v7999 = vrot.slane %v4419, 3
      %8002 = vmatprep.subr.bf16.mxu0 %v7967
      %8003 = vmatpush1.bf16.xpose.msra.mxu0 %v7966
      %8004 = vmatprep.subr.bf16.mxu0 %v7969
      %8005 = vmatpush1.bf16.xpose.msra.mxu0 %v7968
      %8006 = vmatprep.subr.bf16.mxu0 %v7971
      %8007 = vmatpush1.bf16.xpose.msra.mxu0 %v7970
      %8008 = vmatprep.subr.bf16.mxu0 %v7973
      %8009 = vmatpush1.bf16.xpose.msra.mxu0 %v7972
      %8010 = vmatprep.subr.bf16.mxu0 %v7975
      %8011 = vmatpush1.bf16.xpose.msra.mxu0 %v7974
      %8012 = vmatprep.subr.bf16.mxu0 %v7977
      %8013 = vmatpush1.bf16.xpose.msra.mxu0 %v7976
      %8014 = vmatprep.subr.bf16.mxu0 %v7979
      %8015 = vmatpush1.bf16.xpose.msra.mxu0 %v7978
      %8016 = vmatprep.subr.bf16.mxu0 %v7981
      %8017 = vmatpush1.bf16.xpose.msra.mxu0 %v7980
      %8018 = vmatprep.subr.bf16.mxu0 %v7983
      %8019 = vmatpush1.bf16.xpose.msra.mxu0 %v7982
      %8020 = vmatprep.subr.bf16.mxu0 %v7985
      %8021 = vmatpush1.bf16.xpose.msra.mxu0 %v7984
      %8022 = vmatprep.subr.bf16.mxu0 %v7987
      %8023 = vmatpush1.bf16.xpose.msra.mxu0 %v7986
      %8024 = vmatprep.subr.bf16.mxu0 %v7989
      %8025 = vmatpush1.bf16.xpose.msra.mxu0 %v7988
      %8026 = vmatprep.subr.bf16.mxu0 %v7991
      %8027 = vmatpush1.bf16.xpose.msra.mxu0 %v7990
      %8028 = vmatprep.subr.bf16.mxu0 %v7993
      %8029 = vmatpush1.bf16.xpose.msra.mxu0 %v7992
      %8030 = vmatprep.subr.bf16.mxu0 %v7995
      %8031 = vmatpush1.bf16.xpose.msra.mxu0 %v7994
      %8032 = vmatprep.subr.bf16.mxu0 %v7997
      %8033 = vmatpush1.bf16.xpose.msra.mxu0 %v7996
      %8034 = vmatprep.mubr.bf16.mxu0 %v7999
      %8035 = vmatmul.mubr.bf16.gmra.mrb[0].mxu0 %v7998
      %v8036 = vpop.f32.mrb[0].mxu0
      %v8037 = vadd.f32 0.0, %v8036
      %v8038 = vpop.f32.mrb[0].mxu0
      %v8039 = vadd.f32 0.0, %v8038
      %v8040 = vpop.f32.mrb[0].mxu0
      %v8041 = vpop.f32.mrb[0].mxu0
      %8042 = vdwg.mxu0
      %v8045 = vrot.slane %v6223, 6
      %v8046 = vrot.slane %v6225, 6
      %v8051 = vrot.slane %v7130, 4
      %v8052 = vrot.slane %v7132, 4
      %v8057 = vrot.slane %v8037, 2
      %v8058 = vrot.slane %v8039, 2
      %v8061 = vsel %vm4266, %v5310, %v8045
      %v8062 = vsel %vm4266, %v5312, %v8046
      %v8063 = vsel %vm559, %v8061, %v8051
      %v8064 = vsel %vm559, %v8062, %v8052
      %v8065 = vsel %vm4271, %v8063, %v8057
      %v8066 = vsel %vm4271, %v8064, %v8058
      %v8067 = vpack.c.bf16 %v8065, %v8065
      %v8068 = vpack.c.bf16 %v8066, %v8066
      %v8069 = vpack.c.bf16 %v4338, %v4338
      %8071 = vset.pattern.permute.xlu0 0
      %8072 = vperm.xlu0 %8071, %v4339
      %v8073 = vpop.permute.xlu0 %8072
      %v8076 = vsel %vm552, %v8069, 0
      %v8079 = vsel %vm559, %v8067, 0
      %v8082 = vsel %vm559, %v8068, 0
      %8084 = vmatprep.subr.bf16.mxu0 %v8082
      %8085 = vmatpush1.bf16.msra.mxu0 %v8079
      %8086 = vmatprep.subr.bf16.mxu0 0
      %8087 = vmatpush1.bf16.msra.mxu0 0
      %8088 = vmatprep.subr.bf16.mxu0 0
      %8089 = vmatpush1.bf16.msra.mxu0 0
      %8090 = vmatprep.subr.bf16.mxu0 0
      %8091 = vmatpush1.bf16.msra.mxu0 0
      %8092 = vmatprep.subr.bf16.mxu0 0
      %8093 = vmatpush1.bf16.msra.mxu0 0
      %8094 = vmatprep.subr.bf16.mxu0 0
      %8095 = vmatpush1.bf16.msra.mxu0 0
      %8096 = vmatprep.subr.bf16.mxu0 0
      %8097 = vmatpush1.bf16.msra.mxu0 0
      %8098 = vmatprep.subr.bf16.mxu0 0
      %8099 = vmatpush1.bf16.msra.mxu0 0
      %8100 = vmatprep.subr.bf16.mxu0 0
      %8101 = vmatpush1.bf16.msra.mxu0 0
      %8102 = vmatprep.subr.bf16.mxu0 0
      %8103 = vmatpush1.bf16.msra.mxu0 0
      %8104 = vmatprep.subr.bf16.mxu0 0
      %8105 = vmatpush1.bf16.msra.mxu0 0
      %8106 = vmatprep.subr.bf16.mxu0 0
      %8107 = vmatpush1.bf16.msra.mxu0 0
      %8108 = vmatprep.subr.bf16.mxu0 0
      %8109 = vmatpush1.bf16.msra.mxu0 0
      %8110 = vmatprep.subr.bf16.mxu0 0
      %8111 = vmatpush1.bf16.msra.mxu0 0
      %8112 = vmatprep.subr.bf16.mxu0 0
      %8113 = vmatpush1.bf16.msra.mxu0 0
      %8114 = vmatprep.subr.bf16.mxu0 0
      %8115 = vmatpush1.bf16.msra.mxu0 0
      %8116 = vmatprep.mubr.bf16.mxu0 0
      %8117 = vmatmul.mubr.bf16.gmra.mrb[0].mxu0 %v8076
      %v8118 = vpop.f32.mrb[0].mxu0
      %v8119 = vadd.f32 %v8073, %v8118
      %v8120 = vpop.f32.mrb[0].mxu0
      %v8121 = vadd.f32 %v8073, %v8120
      %v8122 = vpop.f32.mrb[0].mxu0
      %v8123 = vpop.f32.mrb[0].mxu0
      %8124 = vdwg.mxu0
      %v8125 = vld [vmem:[%s11] sm:$0xff]
      %v8126 = vpack.c.bf16 %v8125, %v8125
      %v8127 = vpack.c.bf16 %v8119, %v8119
      %v8128 = vpack.c.bf16 %v8121, %v8121
      %v8129 = vld [vmem:[%s12] sm:$0xff]
      %v8130 = vpack.c.bf16 %v8129, %v8129
      %v8131 = vpack.c.bf16 %v4326, %v4326
      %v8132 = vpack.c.bf16 %v4328, %v4328
      %v8134 = vsel %vm552, %v8130, 0
      %v8137 = vsel %vm559, %v8131, 0
      %v8140 = vsel %vm559, %v8132, 0
      %8142 = vmatprep.subr.bf16.mxu0 %v8140
      %8143 = vmatpush1.bf16.msra.mxu0 %v8137
      %8144 = vmatprep.subr.bf16.mxu0 0
      %8145 = vmatpush1.bf16.msra.mxu0 0
      %8146 = vmatprep.subr.bf16.mxu0 0
      %8147 = vmatpush1.bf16.msra.mxu0 0
      %8148 = vmatprep.subr.bf16.mxu0 0
      %8149 = vmatpush1.bf16.msra.mxu0 0
      %8150 = vmatprep.subr.bf16.mxu0 0
      %8151 = vmatpush1.bf16.msra.mxu0 0
      %8152 = vmatprep.subr.bf16.mxu0 0
      %8153 = vmatpush1.bf16.msra.mxu0 0
      %8154 = vmatprep.subr.bf16.mxu0 0
      %8155 = vmatpush1.bf16.msra.mxu0 0
      %8156 = vmatprep.subr.bf16.mxu0 0
      %8157 = vmatpush1.bf16.msra.mxu0 0
      %8158 = vmatprep.subr.bf16.mxu0 0
      %8159 = vmatpush1.bf16.msra.mxu0 0
      %8160 = vmatprep.subr.bf16.mxu0 0
      %8161 = vmatpush1.bf16.msra.mxu0 0
      %8162 = vmatprep.subr.bf16.mxu0 0
      %8163 = vmatpush1.bf16.msra.mxu0 0
      %8164 = vmatprep.subr.bf16.mxu0 0
      %8165 = vmatpush1.bf16.msra.mxu0 0
      %8166 = vmatprep.subr.bf16.mxu0 0
      %8167 = vmatpush1.bf16.msra.mxu0 0
      %8168 = vmatprep.subr.bf16.mxu0 0
      %8169 = vmatpush1.bf16.msra.mxu0 0
      %8170 = vmatprep.subr.bf16.mxu0 0
      %8171 = vmatpush1.bf16.msra.mxu0 0
      %8172 = vmatprep.subr.bf16.mxu0 0
      %8173 = vmatpush1.bf16.msra.mxu0 0
      %8174 = vmatprep.mubr.bf16.mxu0 0
      %8175 = vmatmul.mubr.bf16.gmra.mrb[0].mxu0 %v8134
      %v8176 = vpop.f32.mrb[0].mxu0
      %v8177 = vadd.f32 0.0, %v8176
      %v8178 = vpop.f32.mrb[0].mxu0
      %v8179 = vadd.f32 0.0, %v8178
      %v8180 = vpop.f32.mrb[0].mxu0
      %v8181 = vpop.f32.mrb[0].mxu0
      %8182 = vdwg.mxu0
      %v8184 = vsel %vm552, %v8126, 0
      %v8187 = vsel %vm559, %v8127, 0
      %v8190 = vsel %vm559, %v8128, 0
      %8192 = vmatprep.subr.bf16.mxu0 %v8190
      %8193 = vmatpush1.bf16.msra.mxu0 %v8187
      %8194 = vmatprep.subr.bf16.mxu0 0
      %8195 = vmatpush1.bf16.msra.mxu0 0
      %8196 = vmatprep.subr.bf16.mxu0 0
      %8197 = vmatpush1.bf16.msra.mxu0 0
      %8198 = vmatprep.subr.bf16.mxu0 0
      %8199 = vmatpush1.bf16.msra.mxu0 0
      %8200 = vmatprep.subr.bf16.mxu0 0
      %8201 = vmatpush1.bf16.msra.mxu0 0
      %8202 = vmatprep.subr.bf16.mxu0 0
      %8203 = vmatpush1.bf16.msra.mxu0 0
      %8204 = vmatprep.subr.bf16.mxu0 0
      %8205 = vmatpush1.bf16.msra.mxu0 0
      %8206 = vmatprep.subr.bf16.mxu0 0
      %8207 = vmatpush1.bf16.msra.mxu0 0
      %8208 = vmatprep.subr.bf16.mxu0 0
      %8209 = vmatpush1.bf16.msra.mxu0 0
      %8210 = vmatprep.subr.bf16.mxu0 0
      %8211 = vmatpush1.bf16.msra.mxu0 0
      %8212 = vmatprep.subr.bf16.mxu0 0
      %8213 = vmatpush1.bf16.msra.mxu0 0
      %8214 = vmatprep.subr.bf16.mxu0 0
      %8215 = vmatpush1.bf16.msra.mxu0 0
      %8216 = vmatprep.subr.bf16.mxu0 0
      %8217 = vmatpush1.bf16.msra.mxu0 0
      %8218 = vmatprep.subr.bf16.mxu0 0
      %8219 = vmatpush1.bf16.msra.mxu0 0
      %8220 = vmatprep.subr.bf16.mxu0 0
      %8221 = vmatpush1.bf16.msra.mxu0 0
      %8222 = vmatprep.subr.bf16.mxu0 0
      %8223 = vmatpush1.bf16.msra.mxu0 0
      %8224 = vmatprep.mubr.bf16.mxu0 0
      %8225 = vmatmul.mubr.bf16.gmra.mrb[0].mxu0 %v8184
      %v8226 = vpop.f32.mrb[0].mxu0
      %v8227 = vadd.f32 %v8177, %v8226
      %v8228 = vpop.f32.mrb[0].mxu0
      %v8229 = vadd.f32 %v8179, %v8228
      %v8230 = vpop.f32.mrb[0].mxu0
      %v8231 = vpop.f32.mrb[0].mxu0
      %8232 = vdwg.mxu0
      %v8233 = vld [vmem:[%s13] sm:$0xff]
      %8235 = vset.pattern.permute.xlu0 0
      %8236 = vperm.xlu0 %8235, %v8233
      %v8237 = vpop.permute.xlu0 %8236
      %v8239 = vadd.f32 %v8227, %v8237
      %v8240 = vadd.f32 %v8229, %v8237
      %v8241 = vmax.f32 %v8239, 0.0
      %v8242 = vmax.f32 %v8240, 0.0
      %v8243 = vld [vmem:[%s14] sm:$0xff]
      %v8244 = vpack.c.bf16 %v8243, %v8243
      %v8245 = vpack.c.bf16 %v8241, %v8241
      %v8246 = vpack.c.bf16 %v8242, %v8242
      %v8247 = vld [vmem:[%s15] sm:$0xff]
      %8249 = vset.pattern.permute.xlu0 0
      %8250 = vperm.xlu0 %8249, %v8247
      %v8251 = vpop.permute.xlu0 %8250
      %v8254 = vsel %vm552, %v8244, 0
      %v8257 = vsel %vm559, %v8245, 0
      %v8260 = vsel %vm559, %v8246, 0
      %8262 = vmatprep.subr.bf16.mxu0 %v8260
      %8263 = vmatpush1.bf16.msra.mxu0 %v8257
      %8264 = vmatprep.subr.bf16.mxu0 0
      %8265 = vmatpush1.bf16.msra.mxu0 0
      %8266 = vmatprep.subr.bf16.mxu0 0
      %8267 = vmatpush1.bf16.msra.mxu0 0
      %8268 = vmatprep.subr.bf16.mxu0 0
      %8269 = vmatpush1.bf16.msra.mxu0 0
      %8270 = vmatprep.subr.bf16.mxu0 0
      %8271 = vmatpush1.bf16.msra.mxu0 0
      %8272 = vmatprep.subr.bf16.mxu0 0
      %8273 = vmatpush1.bf16.msra.mxu0 0
      %8274 = vmatprep.subr.bf16.mxu0 0
      %8275 = vmatpush1.bf16.msra.mxu0 0
      %8276 = vmatprep.subr.bf16.mxu0 0
      %8277 = vmatpush1.bf16.msra.mxu0 0
      %8278 = vmatprep.subr.bf16.mxu0 0
      %8279 = vmatpush1.bf16.msra.mxu0 0
      %8280 = vmatprep.subr.bf16.mxu0 0
      %8281 = vmatpush1.bf16.msra.mxu0 0
      %8282 = vmatprep.subr.bf16.mxu0 0
      %8283 = vmatpush1.bf16.msra.mxu0 0
      %8284 = vmatprep.subr.bf16.mxu0 0
      %8285 = vmatpush1.bf16.msra.mxu0 0
      %8286 = vmatprep.subr.bf16.mxu0 0
      %8287 = vmatpush1.bf16.msra.mxu0 0
      %8288 = vmatprep.subr.bf16.mxu0 0
      %8289 = vmatpush1.bf16.msra.mxu0 0
      %8290 = vmatprep.subr.bf16.mxu0 0
      %8291 = vmatpush1.bf16.msra.mxu0 0
      %8292 = vmatprep.subr.bf16.mxu0 0
      %8293 = vmatpush1.bf16.msra.mxu0 0
      %8294 = vmatprep.mubr.bf16.mxu0 0
      %8295 = vmatmul.mubr.bf16.gmra.mrb[0].mxu0 %v8254
      %v8296 = vpop.f32.mrb[0].mxu0
      %v8297 = vadd.f32 %v8251, %v8296
      %v8298 = vpop.f32.mrb[0].mxu0
      %v8299 = vadd.f32 %v8251, %v8298
      %v8300 = vpop.f32.mrb[0].mxu0
      %v8301 = vpop.f32.mrb[0].mxu0
      %8302 = vdwg.mxu0
      %v8303 = vadd.f32 %v8297, %v523
      %v8304 = vadd.f32 %v8299, %v524
      %8305 = vst [vmem:[%s521] sm:$0xff] %v8303
      %8306 = vst [vmem:[%s521 + $0x8] sm:$0xff] %v8304
      %p8307 = scmp.lt.s32.totalorder %s27, 1
      %s8308 = scalar_select %p8307, %s27, 1
      %s8309 = smul.addr %s8308, 2
      %s8310 = smul.addr %s8309, 8
      %s8311 = scalar_lea.vmem %s16, %s8310
      // Predicated region
      $region85: #{attention_enhanced_sfvnn_forward.1} parent=83 // pred_check
        %p8312 = pneg %p386
      $region86: #{attention_enhanced_sfvnn_forward.1} parent=83 // pred_check_branch
        %8314 = sbr.rel (%p8312) target = $region88
      $region87: #{attention_enhanced_sfvnn_forward.1} parent=83 // pred_region
        _
      $region88: #{attention_enhanced_sfvnn_forward.1} parent=83 // pred_fallthru
        _
    $region84: #{attention_enhanced_sfvnn_forward.1} parent=5 // pred_fallthru
      _
    %p8315 = scmp.le.s32.totalorder 2, %s22
    // Predicated region
    $region89: #{attention_enhanced_sfvnn_forward.1} parent=5 // pred_check
      %p8316 = pneg %p8315
    $region90: #{attention_enhanced_sfvnn_forward.1} parent=5 // pred_check_branch
      %8318 = sbr.rel (%p8316) target = $region92
    $region91: #{attention_enhanced_sfvnn_forward.1} parent=5 // pred_region
      %s8319 = ssub.s32 %s22, 2
      // Predicated region
      $region93: #{attention_enhanced_sfvnn_forward.1} parent=91 // pred_check
        %p8320 = pneg %p392
      $region94: #{attention_enhanced_sfvnn_forward.1} parent=91 // pred_check_branch
        %8322 = sbr.rel (%p8320) target = $region96
      $region95: #{attention_enhanced_sfvnn_forward.1} parent=91 // pred_region
        %p8323 = scmp.lt.s32.totalorder %s28, 1
        %s8324 = scalar_select %p8323, %s28, 1
        %s8325 = smul.addr %s8324, 2
        %s8326 = smul.addr %s8325, 8
        %s8327 = scalar_lea.vmem %s16, %s8326
      $region96: #{attention_enhanced_sfvnn_forward.1} parent=91 // pred_fallthru
        _
    $region92: #{attention_enhanced_sfvnn_forward.1} parent=5 // pred_fallthru
      _
  $region6: #{attention_enhanced_sfvnn_forward.1} parent=0 // loop_footer
    %s26 = sadd.s32 1, %s22
  $region7: #{attention_enhanced_sfvnn_forward.1} parent=0 // loop_footer_branch
    %21 = sbr.rel target = $region3
  $region8: #{attention_enhanced_sfvnn_forward.1} parent=0 // loop_exit
    _

</llo_original>
